<compile_context>
chip_gen: v5e
topology: v5e:2x2
jax: 0.10.0
libtpu: 0.0.40
codegen_flags: <defaults>
</compile_context>

<pallas_src>
from functools import partial

import jax
import jax.numpy as jnp
from jax.experimental import pallas as pl
from jax.experimental.pallas import tpu as pltpu


# ----------------------------------------------------------------------------
# Fused forward kernel.  One grid step processes BN patches, stacked on the
# matmul M dimension.  All intermediates live in VMEM scratch.
#
#   conv1:  col1 (BN*64, 72)   @ W1band (72, 256)   -> h1 (BN*64, 256)
#   conv2:  col2 (BN*64, 2304) @ W2band (2304, 256) -> h2 (BN*64, 256)
#   pred+pool: row-sum(h2) (BN, 256) @ Wp (256, 2)  -> out (BN, 2)
#
# where the 256-wide N axis is the fused (w, channel) axis and the banded
# weight matrices fold the kw taps (and the w zero-padding) of the 3x3x3 conv.
# ----------------------------------------------------------------------------
def fused_kernel(x_ref, w1b_ref, b1_ref, w2b_ref, b2_ref, wpb_ref, bp_ref,
                 o_ref, xpad_ref, h1pad_ref, col1_ref, col2_ref):
    BN, D, H, W = x_ref.shape
    WC = h1pad_ref.shape[-1]          # W * C  (fused (w, channel) lane axis)
    DH = D * H

    # ---------------- conv1: pad (d,h only), direct-store im2col, 1 matmul --
    for b in range(BN):
        # Zero only the d/h halo faces; the interior is fully overwritten
        # below.  Done every step (cheap: ~10 small stores) so it is safe
        # regardless of how the "parallel" grid is sharded across cores.
        xpad_ref[b, pl.ds(0, 1), :, :] = jnp.zeros((1, H + 2, W), jnp.float32)
        xpad_ref[b, pl.ds(D + 1, 1), :, :] = jnp.zeros((1, H + 2, W), jnp.float32)
        xpad_ref[b, pl.ds(1, D), pl.ds(0, 1), :] = jnp.zeros((D, 1, W), jnp.float32)
        xpad_ref[b, pl.ds(1, D), pl.ds(H + 1, 1), :] = jnp.zeros((D, 1, W), jnp.float32)
        xpad_ref[b, pl.ds(1, D), pl.ds(1, H), :] = x_ref[b]

    # 9 direct slab stores per patch: tap (kd, kh) -> columns [blk*W, blk*W+W)
    for b in range(BN):
        for kd in range(3):
            for kh in range(3):
                blk = kd * 3 + kh
                slab = xpad_ref[b, pl.ds(kd, D), pl.ds(kh, H), :]      # (D,H,W)
                col1_ref[pl.ds(b * DH, DH), pl.ds(blk * W, W)] = (
                    slab.reshape(DH, W))

    h1 = jnp.dot(col1_ref[...], w1b_ref[...],
                 preferred_element_type=jnp.float32)                   # (BN*DH, WC)
    h1 = jnp.maximum(h1 + b1_ref[...], 0.0)

    # ---------------- conv2: scatter h1 into padded scratch, im2col, matmul -
    h1_blk = h1.reshape(BN, D, H, WC)
    for b in range(BN):
        h1pad_ref[b, pl.ds(0, 1), :, :] = jnp.zeros((1, H + 2, WC), jnp.float32)
        h1pad_ref[b, pl.ds(D + 1, 1), :, :] = jnp.zeros((1, H + 2, WC), jnp.float32)
        h1pad_ref[b, pl.ds(1, D), pl.ds(0, 1), :] = jnp.zeros((D, 1, WC), jnp.float32)
        h1pad_ref[b, pl.ds(1, D), pl.ds(H + 1, 1), :] = jnp.zeros((D, 1, WC), jnp.float32)
        h1pad_ref[b, pl.ds(1, D), pl.ds(1, H), :] = h1_blk[b]          # full-lane store

    # 9 direct slab stores per patch, each 256 lanes wide at a 256-aligned
    # lane offset -> unmasked, rotate-free vst.
    for b in range(BN):
        for kd in range(3):
            for kh in range(3):
                blk = kd * 3 + kh
                slab = h1pad_ref[b, pl.ds(kd, D), pl.ds(kh, H), :]     # (D,H,WC)
                col2_ref[pl.ds(b * DH, DH), pl.ds(blk * WC, WC)] = (
                    slab.reshape(DH, WC))

    h2 = jnp.dot(col2_ref[...], w2b_ref[...],
                 preferred_element_type=jnp.float32)                   # (BN*DH, WC)
    h2 = jnp.maximum(h2 + b2_ref[...], 0.0)

    # ---------------- pred (1x1x1 conv) + AdaptiveAvgPool3d(1) --------------
    # Pool first (exact by linearity); wpb already carries the 1/(D*H*W)
    # factor and the per-w replication of the pred weight.
    pooled = jnp.sum(h2.reshape(BN, DH, WC), axis=1)                   # (BN, WC)
    o_ref[...] = (jnp.dot(pooled, wpb_ref[...],
                          preferred_element_type=jnp.float32) + bp_ref[...])


# ----------------------------------------------------------------------------
# pallas_call wrapper.  `bn` patches per grid step (static).
# ----------------------------------------------------------------------------
@partial(jax.jit, static_argnames=("bn",))
def _forward_impl(x, w1b, b1r, w2b, b2r, wpb, bpr, *, bn):
    N, D, H, W = x.shape
    WC = b1r.shape[-1]                 # W * C = 256
    Cout = bpr.shape[-1]               # 2
    G = N // bn

    grid_spec = pltpu.PrefetchScalarGridSpec(
        num_scalar_prefetch=0,
        grid=(G,),
        in_specs=[
            pl.BlockSpec((bn, D, H, W), lambda g: (g, 0, 0, 0)),
            pl.BlockSpec(w1b.shape, lambda g: (0, 0)),
            pl.BlockSpec(b1r.shape, lambda g: (0, 0)),
            pl.BlockSpec(w2b.shape, lambda g: (0, 0)),
            pl.BlockSpec(b2r.shape, lambda g: (0, 0)),
            pl.BlockSpec(wpb.shape, lambda g: (0, 0)),
            pl.BlockSpec(bpr.shape, lambda g: (0, 0)),
        ],
        out_specs=pl.BlockSpec((bn, Cout), lambda g: (g, 0)),
        scratch_shapes=[
            pltpu.VMEM((bn, D + 2, H + 2, W), jnp.float32),    # xpad  (d/h halo only)
            pltpu.VMEM((bn, D + 2, H + 2, WC), jnp.float32),   # h1pad (d/h halo only)
            pltpu.VMEM((bn * D * H, 9 * W), jnp.float32),      # col1
            pltpu.VMEM((bn * D * H, 9 * WC), jnp.float32),     # col2
        ],
    )
    return pl.pallas_call(
        fused_kernel,
        out_shape=jax.ShapeDtypeStruct((N, Cout), jnp.float32),
        grid_spec=grid_spec,
        compiler_params=pltpu.CompilerParams(
            dimension_semantics=("parallel",)),   # batch over v7x's 2 TCs
    )(x, w1b, b1r, w2b, b2r, wpb, bpr)


def patch_predictor_forward(patch_ncdhw, prepared, patches_per_step=None):
    """Matches patchPredictor.forward semantics (NCDHW in, .squeeze() out)."""
    N, Cin, D, H, W = patch_ncdhw.shape
    assert Cin == 1
    if patches_per_step is None:
        # v7x has 2 TensorCores/chip -> keep a 2-way "parallel" grid there;
        # single-TC chips (v5e/v6e) process the whole batch in one grid step
        # (patches stacked on the matmul M dimension).
        kind = jax.devices()[0].device_kind.lower()
        two_core = "v7" in kind
        patches_per_step = N // 2 if (two_core and N % 2 == 0 and N >= 2) else N
    bn = patches_per_step
    assert N % bn == 0, (N, bn)

    x = patch_ncdhw.reshape(N, D, H, W).astype(jnp.float32)
    out = _forward_impl(x, prepared["w1b"], prepared["b1r"], prepared["w2b"],
                        prepared["b2r"], prepared["wpb"], prepared["bpr"], bn=bn)
    return jnp.squeeze(out)            # mimic torch .squeeze()


# ----------------------------------------------------------------------------
# Host-side parameter preparation: fold the kw taps (and implicit w-padding)
# of both 3x3x3 convs into banded weight matrices, tile the biases over the
# fused (w, channel) axis, and fold the 1/(D*H*W) pool factor into pred.
# Run once, outside the jitted forward.
# ----------------------------------------------------------------------------
def prepare_params(params, D, H, W):
    C = params["b1"].shape[0]          # 32
    Cout = params["bp"].shape[0]       # 2
    f32 = jnp.float32

    w1_ = params["w1"][:, :, :, 0, :].astype(f32)        # (3,3,3,C)  [kd,kh,kw,co]
    w2_ = params["w2"].astype(f32)                       # (3,3,3,C,C)[kd,kh,kw,ci,co]

    w1b = jnp.zeros((3, 3, W, W, C), f32)                # [kd,kh,w_in,w_out,co]
    w2b = jnp.zeros((3, 3, W, C, W, C), f32)             # [kd,kh,w_in,ci,w_out,co]
    for kw in range(3):
        for w in range(W):
            w_in = w + kw - 1                            # padding=1 indexing
            if 0 <= w_in < W:                            # out-of-range == zero pad
                w1b = w1b.at[:, :, w_in, w, :].set(w1_[:, :, kw, :])
                w2b = w2b.at[:, :, w_in, :, w, :].set(w2_[:, :, kw, :, :])

    return {
        "w1b": w1b.reshape(9 * W, W * C),                          # (72, 256)
        "b1r": jnp.tile(params["b1"].astype(f32), W).reshape(1, W * C),
        "w2b": w2b.reshape(9 * W * C, W * C),                      # (2304, 256)
        "b2r": jnp.tile(params["b2"].astype(f32), W).reshape(1, W * C),
        "wpb": jnp.tile(params["wp"].astype(f32), (W, 1)) / float(D * H * W),
        "bpr": params["bp"].astype(f32).reshape(1, Cout),
    }


# ----------------------------------------------------------------------------
# Deterministic synthetic parameters (shapes from patchPredictor.__init__),
# stored channels-last / DHWIO.
# ----------------------------------------------------------------------------
def make_params():
    k = jax.random.PRNGKey(42)
    k1, k2, k3, k4, k5, k6 = jax.random.split(k, 6)
    return {
        # encoder[0]: Conv3d(1 -> 32, 3x3x3), DHWIO
        "w1": 0.2 * jax.random.normal(k1, (3, 3, 3, 1, 32), jnp.float32),
        "b1": 0.05 * jax.random.normal(k2, (32,), jnp.float32),
        # encoder[2]: Conv3d(32 -> 32, 3x3x3), DHWIO
        "w2": 0.05 * jax.random.normal(k3, (3, 3, 3, 32, 32), jnp.float32),
        "b2": 0.05 * jax.random.normal(k4, (32,), jnp.float32),
        # pred: Conv3d(32 -> 2, 1x1x1) == channel matmul (Cin, Cout)
        "wp": 0.1 * jax.random.normal(k5, (32, 2), jnp.float32),
        "bp": 0.05 * jax.random.normal(k6, (2,), jnp.float32),
    }


def reference_forward(patch_ncdhw, params):
    # Pure-JAX reference for correctness checking.
    dn = ("NDHWC", "DHWIO", "NDHWC")
    x = jnp.transpose(patch_ncdhw, (0, 2, 3, 4, 1))
    h = jax.lax.conv_general_dilated(x, params["w1"], (1, 1, 1), "SAME",
                                     dimension_numbers=dn) + params["b1"]
    h = jnp.maximum(h, 0.0)
    h = jax.lax.conv_general_dilated(h, params["w2"], (1, 1, 1), "SAME",
                                     dimension_numbers=dn) + params["b2"]
    h = jnp.maximum(h, 0.0)
    y = jnp.einsum("ndhwc,co->ndhwo", h, params["wp"]) + params["bp"]
    y = jnp.mean(y, axis=(1, 2, 3))
    return jnp.squeeze(y)


if __name__ == "__main__":
    # Small shapes consistent with the module: batch=2, 1 channel, 8^3 patch.
    patch = jax.random.normal(jax.random.PRNGKey(0), (2, 1, 8, 8, 8), jnp.float32)
    params = make_params()
    prepared = prepare_params(params, 8, 8, 8)

    out = jax.block_until_ready(patch_predictor_forward(patch, prepared))
    ref = jax.block_until_ready(reference_forward(patch, params))

    assert out.shape == ref.shape == (2, 2), (out.shape, ref.shape)
    assert jnp.allclose(out, ref, atol=1e-3, rtol=1e-3), (out, ref)

    # TODO(synk): load_best()/unlock_all() are checkpoint-I/O / requires_grad
    # utilities with no forward-pass compute; intentionally not translated.
    print("KERNEL_OK")
</pallas_src>

<mosaic_0001>
module attributes {stable_mosaic.version = 11 : i64} {
  func.func @fused_kernel(%arg0: i32, %arg1: memref<2x8x8x8xf32, #tpu.memory_space<vmem>>, %arg2: memref<72x256xf32, #tpu.memory_space<vmem>>, %arg3: memref<1x256xf32, #tpu.memory_space<vmem>>, %arg4: memref<2304x256xf32, #tpu.memory_space<vmem>>, %arg5: memref<1x256xf32, #tpu.memory_space<vmem>>, %arg6: memref<256x2xf32, #tpu.memory_space<vmem>>, %arg7: memref<1x2xf32, #tpu.memory_space<vmem>>, %arg8: memref<2x2xf32, #tpu.memory_space<vmem>>, %arg9: memref<2x10x10x8xf32, #tpu.memory_space<vmem>>, %arg10: memref<2x10x10x256xf32, #tpu.memory_space<vmem>>, %arg11: memref<128x72xf32, #tpu.memory_space<vmem>>, %arg12: memref<128x2304xf32, #tpu.memory_space<vmem>>) attributes {dimension_semantics = [#tpu.dimension_semantics<parallel>], iteration_bounds = array<i64: 1>, scalar_prefetch = 0 : i64, scratch_operands = 4 : i64, tpu.core_type = #tpu.core_type<tc>, window_params = [{transform_indices = @transform_0, window_bounds = array<i64: 2, 8, 8, 8>}, {pipeline_mode = #tpu.pipeline_mode<synchronous>, transform_indices = @transform_1, window_bounds = array<i64: 72, 256>}, {pipeline_mode = #tpu.pipeline_mode<synchronous>, transform_indices = @transform_2, window_bounds = array<i64: 1, 256>}, {pipeline_mode = #tpu.pipeline_mode<synchronous>, transform_indices = @transform_3, window_bounds = array<i64: 2304, 256>}, {pipeline_mode = #tpu.pipeline_mode<synchronous>, transform_indices = @transform_4, window_bounds = array<i64: 1, 256>}, {pipeline_mode = #tpu.pipeline_mode<synchronous>, transform_indices = @transform_5, window_bounds = array<i64: 256, 2>}, {pipeline_mode = #tpu.pipeline_mode<synchronous>, transform_indices = @transform_6, window_bounds = array<i64: 1, 2>}, {transform_indices = @transform_7, window_bounds = array<i64: 2, 2>}]} {
    %cst = arith.constant 0.000000e+00 : f32
    %0 = vector.broadcast %cst : f32 to vector<1x10x8xf32>
    %c0 = arith.constant 0 : index
    %c0_0 = arith.constant 0 : index
    %c0_1 = arith.constant 0 : index
    %c0_2 = arith.constant 0 : index
    %1 = vector.load %arg9[%c0, %c0_0, %c0_1, %c0_2] : memref<2x10x10x8xf32, #tpu.memory_space<vmem>>, vector<1x1x10x8xf32>
    %2 = vector.shape_cast %1 : vector<1x1x10x8xf32> to vector<1x10x8xf32>
    %3 = vector.shape_cast %0 : vector<1x10x8xf32> to vector<1x1x10x8xf32>
    tpu.vector_store %arg9[%c0, %c0_0, %c0_1, %c0_2], %3 {strides = array<i32>} : memref<2x10x10x8xf32, #tpu.memory_space<vmem>>, vector<1x1x10x8xf32>,
    %cst_3 = arith.constant 0.000000e+00 : f32
    %4 = vector.broadcast %cst_3 : f32 to vector<1x10x8xf32>
    %c0_4 = arith.constant 0 : index
    %c9 = arith.constant 9 : index
    %c0_5 = arith.constant 0 : index
    %c0_6 = arith.constant 0 : index
    %5 = vector.load %arg9[%c0_4, %c9, %c0_5, %c0_6] : memref<2x10x10x8xf32, #tpu.memory_space<vmem>>, vector<1x1x10x8xf32>
    %6 = vector.shape_cast %5 : vector<1x1x10x8xf32> to vector<1x10x8xf32>
    %7 = vector.shape_cast %4 : vector<1x10x8xf32> to vector<1x1x10x8xf32>
    tpu.vector_store %arg9[%c0_4, %c9, %c0_5, %c0_6], %7 {strides = array<i32>} : memref<2x10x10x8xf32, #tpu.memory_space<vmem>>, vector<1x1x10x8xf32>,
    %cst_7 = arith.constant 0.000000e+00 : f32
    %8 = vector.broadcast %cst_7 : f32 to vector<8x1x8xf32>
    %c0_8 = arith.constant 0 : index
    %c1 = arith.constant 1 : index
    %c0_9 = arith.constant 0 : index
    %c0_10 = arith.constant 0 : index
    %9 = vector.load %arg9[%c0_8, %c1, %c0_9, %c0_10] : memref<2x10x10x8xf32, #tpu.memory_space<vmem>>, vector<1x8x1x8xf32>
    %10 = vector.shape_cast %9 : vector<1x8x1x8xf32> to vector<8x1x8xf32>
    %11 = vector.shape_cast %8 : vector<8x1x8xf32> to vector<1x8x1x8xf32>
    tpu.vector_store %arg9[%c0_8, %c1, %c0_9, %c0_10], %11 {strides = array<i32>} : memref<2x10x10x8xf32, #tpu.memory_space<vmem>>, vector<1x8x1x8xf32>,
    %cst_11 = arith.constant 0.000000e+00 : f32
    %12 = vector.broadcast %cst_11 : f32 to vector<8x1x8xf32>
    %c0_12 = arith.constant 0 : index
    %c1_13 = arith.constant 1 : index
    %c9_14 = arith.constant 9 : index
    %c0_15 = arith.constant 0 : index
    %13 = vector.load %arg9[%c0_12, %c1_13, %c9_14, %c0_15] : memref<2x10x10x8xf32, #tpu.memory_space<vmem>>, vector<1x8x1x8xf32>
    %14 = vector.shape_cast %13 : vector<1x8x1x8xf32> to vector<8x1x8xf32>
    %15 = vector.shape_cast %12 : vector<8x1x8xf32> to vector<1x8x1x8xf32>
    tpu.vector_store %arg9[%c0_12, %c1_13, %c9_14, %c0_15], %15 {strides = array<i32>} : memref<2x10x10x8xf32, #tpu.memory_space<vmem>>, vector<1x8x1x8xf32>,
    %c0_16 = arith.constant 0 : index
    %c0_17 = arith.constant 0 : index
    %c0_18 = arith.constant 0 : index
    %c0_19 = arith.constant 0 : index
    %16 = vector.load %arg1[%c0_16, %c0_17, %c0_18, %c0_19] : memref<2x8x8x8xf32, #tpu.memory_space<vmem>>, vector<1x8x8x8xf32>
    %17 = vector.shape_cast %16 : vector<1x8x8x8xf32> to vector<8x8x8xf32>
    %c0_20 = arith.constant 0 : index
    %c1_21 = arith.constant 1 : index
    %c1_22 = arith.constant 1 : index
    %c0_23 = arith.constant 0 : index
    %18 = vector.load %arg9[%c0_20, %c1_21, %c1_22, %c0_23] : memref<2x10x10x8xf32, #tpu.memory_space<vmem>>, vector<1x8x8x8xf32>
    %19 = vector.shape_cast %18 : vector<1x8x8x8xf32> to vector<8x8x8xf32>
    %20 = vector.shape_cast %17 : vector<8x8x8xf32> to vector<1x8x8x8xf32>
    tpu.vector_store %arg9[%c0_20, %c1_21, %c1_22, %c0_23], %20 {strides = array<i32>} : memref<2x10x10x8xf32, #tpu.memory_space<vmem>>, vector<1x8x8x8xf32>,
    %cst_24 = arith.constant 0.000000e+00 : f32
    %21 = vector.broadcast %cst_24 : f32 to vector<1x10x8xf32>
    %c1_25 = arith.constant 1 : index
    %c0_26 = arith.constant 0 : index
    %c0_27 = arith.constant 0 : index
    %c0_28 = arith.constant 0 : index
    %22 = vector.load %arg9[%c1_25, %c0_26, %c0_27, %c0_28] : memref<2x10x10x8xf32, #tpu.memory_space<vmem>>, vector<1x1x10x8xf32>
    %23 = vector.shape_cast %22 : vector<1x1x10x8xf32> to vector<1x10x8xf32>
    %24 = vector.shape_cast %21 : vector<1x10x8xf32> to vector<1x1x10x8xf32>
    tpu.vector_store %arg9[%c1_25, %c0_26, %c0_27, %c0_28], %24 {strides = array<i32>} : memref<2x10x10x8xf32, #tpu.memory_space<vmem>>, vector<1x1x10x8xf32>,
    %cst_29 = arith.constant 0.000000e+00 : f32
    %25 = vector.broadcast %cst_29 : f32 to vector<1x10x8xf32>
    %c1_30 = arith.constant 1 : index
    %c9_31 = arith.constant 9 : index
    %c0_32 = arith.constant 0 : index
    %c0_33 = arith.constant 0 : index
    %26 = vector.load %arg9[%c1_30, %c9_31, %c0_32, %c0_33] : memref<2x10x10x8xf32, #tpu.memory_space<vmem>>, vector<1x1x10x8xf32>
    %27 = vector.shape_cast %26 : vector<1x1x10x8xf32> to vector<1x10x8xf32>
    %28 = vector.shape_cast %25 : vector<1x10x8xf32> to vector<1x1x10x8xf32>
    tpu.vector_store %arg9[%c1_30, %c9_31, %c0_32, %c0_33], %28 {strides = array<i32>} : memref<2x10x10x8xf32, #tpu.memory_space<vmem>>, vector<1x1x10x8xf32>,
    %cst_34 = arith.constant 0.000000e+00 : f32
    %29 = vector.broadcast %cst_34 : f32 to vector<8x1x8xf32>
    %c1_35 = arith.constant 1 : index
    %c1_36 = arith.constant 1 : index
    %c0_37 = arith.constant 0 : index
    %c0_38 = arith.constant 0 : index
    %30 = vector.load %arg9[%c1_35, %c1_36, %c0_37, %c0_38] : memref<2x10x10x8xf32, #tpu.memory_space<vmem>>, vector<1x8x1x8xf32>
    %31 = vector.shape_cast %30 : vector<1x8x1x8xf32> to vector<8x1x8xf32>
    %32 = vector.shape_cast %29 : vector<8x1x8xf32> to vector<1x8x1x8xf32>
    tpu.vector_store %arg9[%c1_35, %c1_36, %c0_37, %c0_38], %32 {strides = array<i32>} : memref<2x10x10x8xf32, #tpu.memory_space<vmem>>, vector<1x8x1x8xf32>,
    %cst_39 = arith.constant 0.000000e+00 : f32
    %33 = vector.broadcast %cst_39 : f32 to vector<8x1x8xf32>
    %c1_40 = arith.constant 1 : index
    %c1_41 = arith.constant 1 : index
    %c9_42 = arith.constant 9 : index
    %c0_43 = arith.constant 0 : index
    %34 = vector.load %arg9[%c1_40, %c1_41, %c9_42, %c0_43] : memref<2x10x10x8xf32, #tpu.memory_space<vmem>>, vector<1x8x1x8xf32>
    %35 = vector.shape_cast %34 : vector<1x8x1x8xf32> to vector<8x1x8xf32>
    %36 = vector.shape_cast %33 : vector<8x1x8xf32> to vector<1x8x1x8xf32>
    tpu.vector_store %arg9[%c1_40, %c1_41, %c9_42, %c0_43], %36 {strides = array<i32>} : memref<2x10x10x8xf32, #tpu.memory_space<vmem>>, vector<1x8x1x8xf32>,
    %c1_44 = arith.constant 1 : index
    %c0_45 = arith.constant 0 : index
    %c0_46 = arith.constant 0 : index
    %c0_47 = arith.constant 0 : index
    %37 = vector.load %arg1[%c1_44, %c0_45, %c0_46, %c0_47] : memref<2x8x8x8xf32, #tpu.memory_space<vmem>>, vector<1x8x8x8xf32>
    %38 = vector.shape_cast %37 : vector<1x8x8x8xf32> to vector<8x8x8xf32>
    %c1_48 = arith.constant 1 : index
    %c1_49 = arith.constant 1 : index
    %c1_50 = arith.constant 1 : index
    %c0_51 = arith.constant 0 : index
    %39 = vector.load %arg9[%c1_48, %c1_49, %c1_50, %c0_51] : memref<2x10x10x8xf32, #tpu.memory_space<vmem>>, vector<1x8x8x8xf32>
    %40 = vector.shape_cast %39 : vector<1x8x8x8xf32> to vector<8x8x8xf32>
    %41 = vector.shape_cast %38 : vector<8x8x8xf32> to vector<1x8x8x8xf32>
    tpu.vector_store %arg9[%c1_48, %c1_49, %c1_50, %c0_51], %41 {strides = array<i32>} : memref<2x10x10x8xf32, #tpu.memory_space<vmem>>, vector<1x8x8x8xf32>,
    %c0_52 = arith.constant 0 : index
    %c0_53 = arith.constant 0 : index
    %c0_54 = arith.constant 0 : index
    %c0_55 = arith.constant 0 : index
    %42 = vector.load %arg9[%c0_52, %c0_53, %c0_54, %c0_55] : memref<2x10x10x8xf32, #tpu.memory_space<vmem>>, vector<1x8x8x8xf32>
    %43 = vector.shape_cast %42 : vector<1x8x8x8xf32> to vector<8x8x8xf32>
    %44 = vector.shape_cast %43 : vector<8x8x8xf32> to vector<64x8xf32>
    %c0_56 = arith.constant 0 : index
    %c0_57 = arith.constant 0 : index
    %45 = vector.load %arg11[%c0_56, %c0_57] : memref<128x72xf32, #tpu.memory_space<vmem>>, vector<64x8xf32>
    tpu.vector_store %arg11[%c0_56, %c0_57], %44 {strides = array<i32>} : memref<128x72xf32, #tpu.memory_space<vmem>>, vector<64x8xf32>,
    %c0_58 = arith.constant 0 : index
    %c0_59 = arith.constant 0 : index
    %c1_60 = arith.constant 1 : index
    %c0_61 = arith.constant 0 : index
    %46 = vector.load %arg9[%c0_58, %c0_59, %c1_60, %c0_61] : memref<2x10x10x8xf32, #tpu.memory_space<vmem>>, vector<1x8x8x8xf32>
    %47 = vector.shape_cast %46 : vector<1x8x8x8xf32> to vector<8x8x8xf32>
    %48 = vector.shape_cast %47 : vector<8x8x8xf32> to vector<64x8xf32>
    %c0_62 = arith.constant 0 : index
    %c8 = arith.constant 8 : index
    %49 = vector.load %arg11[%c0_62, %c8] : memref<128x72xf32, #tpu.memory_space<vmem>>, vector<64x8xf32>
    tpu.vector_store %arg11[%c0_62, %c8], %48 {strides = array<i32>} : memref<128x72xf32, #tpu.memory_space<vmem>>, vector<64x8xf32>,
    %c0_63 = arith.constant 0 : index
    %c0_64 = arith.constant 0 : index
    %c2 = arith.constant 2 : index
    %c0_65 = arith.constant 0 : index
    %50 = vector.load %arg9[%c0_63, %c0_64, %c2, %c0_65] : memref<2x10x10x8xf32, #tpu.memory_space<vmem>>, vector<1x8x8x8xf32>
    %51 = vector.shape_cast %50 : vector<1x8x8x8xf32> to vector<8x8x8xf32>
    %52 = vector.shape_cast %51 : vector<8x8x8xf32> to vector<64x8xf32>
    %c0_66 = arith.constant 0 : index
    %c16 = arith.constant 16 : index
    %53 = vector.load %arg11[%c0_66, %c16] : memref<128x72xf32, #tpu.memory_space<vmem>>, vector<64x8xf32>
    tpu.vector_store %arg11[%c0_66, %c16], %52 {strides = array<i32>} : memref<128x72xf32, #tpu.memory_space<vmem>>, vector<64x8xf32>,
    %c0_67 = arith.constant 0 : index
    %c1_68 = arith.constant 1 : index
    %c0_69 = arith.constant 0 : index
    %c0_70 = arith.constant 0 : index
    %54 = vector.load %arg9[%c0_67, %c1_68, %c0_69, %c0_70] : memref<2x10x10x8xf32, #tpu.memory_space<vmem>>, vector<1x8x8x8xf32>
    %55 = vector.shape_cast %54 : vector<1x8x8x8xf32> to vector<8x8x8xf32>
    %56 = vector.shape_cast %55 : vector<8x8x8xf32> to vector<64x8xf32>
    %c0_71 = arith.constant 0 : index
    %c24 = arith.constant 24 : index
    %57 = vector.load %arg11[%c0_71, %c24] : memref<128x72xf32, #tpu.memory_space<vmem>>, vector<64x8xf32>
    tpu.vector_store %arg11[%c0_71, %c24], %56 {strides = array<i32>} : memref<128x72xf32, #tpu.memory_space<vmem>>, vector<64x8xf32>,
    %c0_72 = arith.constant 0 : index
    %c1_73 = arith.constant 1 : index
    %c1_74 = arith.constant 1 : index
    %c0_75 = arith.constant 0 : index
    %58 = vector.load %arg9[%c0_72, %c1_73, %c1_74, %c0_75] : memref<2x10x10x8xf32, #tpu.memory_space<vmem>>, vector<1x8x8x8xf32>
    %59 = vector.shape_cast %58 : vector<1x8x8x8xf32> to vector<8x8x8xf32>
    %60 = vector.shape_cast %59 : vector<8x8x8xf32> to vector<64x8xf32>
    %c0_76 = arith.constant 0 : index
    %c32 = arith.constant 32 : index
    %61 = vector.load %arg11[%c0_76, %c32] : memref<128x72xf32, #tpu.memory_space<vmem>>, vector<64x8xf32>
    tpu.vector_store %arg11[%c0_76, %c32], %60 {strides = array<i32>} : memref<128x72xf32, #tpu.memory_space<vmem>>, vector<64x8xf32>,
    %c0_77 = arith.constant 0 : index
    %c1_78 = arith.constant 1 : index
    %c2_79 = arith.constant 2 : index
    %c0_80 = arith.constant 0 : index
    %62 = vector.load %arg9[%c0_77, %c1_78, %c2_79, %c0_80] : memref<2x10x10x8xf32, #tpu.memory_space<vmem>>, vector<1x8x8x8xf32>
    %63 = vector.shape_cast %62 : vector<1x8x8x8xf32> to vector<8x8x8xf32>
    %64 = vector.shape_cast %63 : vector<8x8x8xf32> to vector<64x8xf32>
    %c0_81 = arith.constant 0 : index
    %c40 = arith.constant 40 : index
    %65 = vector.load %arg11[%c0_81, %c40] : memref<128x72xf32, #tpu.memory_space<vmem>>, vector<64x8xf32>
    tpu.vector_store %arg11[%c0_81, %c40], %64 {strides = array<i32>} : memref<128x72xf32, #tpu.memory_space<vmem>>, vector<64x8xf32>,
    %c0_82 = arith.constant 0 : index
    %c2_83 = arith.constant 2 : index
    %c0_84 = arith.constant 0 : index
    %c0_85 = arith.constant 0 : index
    %66 = vector.load %arg9[%c0_82, %c2_83, %c0_84, %c0_85] : memref<2x10x10x8xf32, #tpu.memory_space<vmem>>, vector<1x8x8x8xf32>
    %67 = vector.shape_cast %66 : vector<1x8x8x8xf32> to vector<8x8x8xf32>
    %68 = vector.shape_cast %67 : vector<8x8x8xf32> to vector<64x8xf32>
    %c0_86 = arith.constant 0 : index
    %c48 = arith.constant 48 : index
    %69 = vector.load %arg11[%c0_86, %c48] : memref<128x72xf32, #tpu.memory_space<vmem>>, vector<64x8xf32>
    tpu.vector_store %arg11[%c0_86, %c48], %68 {strides = array<i32>} : memref<128x72xf32, #tpu.memory_space<vmem>>, vector<64x8xf32>,
    %c0_87 = arith.constant 0 : index
    %c2_88 = arith.constant 2 : index
    %c1_89 = arith.constant 1 : index
    %c0_90 = arith.constant 0 : index
    %70 = vector.load %arg9[%c0_87, %c2_88, %c1_89, %c0_90] : memref<2x10x10x8xf32, #tpu.memory_space<vmem>>, vector<1x8x8x8xf32>
    %71 = vector.shape_cast %70 : vector<1x8x8x8xf32> to vector<8x8x8xf32>
    %72 = vector.shape_cast %71 : vector<8x8x8xf32> to vector<64x8xf32>
    %c0_91 = arith.constant 0 : index
    %c56 = arith.constant 56 : index
    %73 = vector.load %arg11[%c0_91, %c56] : memref<128x72xf32, #tpu.memory_space<vmem>>, vector<64x8xf32>
    tpu.vector_store %arg11[%c0_91, %c56], %72 {strides = array<i32>} : memref<128x72xf32, #tpu.memory_space<vmem>>, vector<64x8xf32>,
    %c0_92 = arith.constant 0 : index
    %c2_93 = arith.constant 2 : index
    %c2_94 = arith.constant 2 : index
    %c0_95 = arith.constant 0 : index
    %74 = vector.load %arg9[%c0_92, %c2_93, %c2_94, %c0_95] : memref<2x10x10x8xf32, #tpu.memory_space<vmem>>, vector<1x8x8x8xf32>
    %75 = vector.shape_cast %74 : vector<1x8x8x8xf32> to vector<8x8x8xf32>
    %76 = vector.shape_cast %75 : vector<8x8x8xf32> to vector<64x8xf32>
    %c0_96 = arith.constant 0 : index
    %c64 = arith.constant 64 : index
    %77 = vector.load %arg11[%c0_96, %c64] : memref<128x72xf32, #tpu.memory_space<vmem>>, vector<64x8xf32>
    tpu.vector_store %arg11[%c0_96, %c64], %76 {strides = array<i32>} : memref<128x72xf32, #tpu.memory_space<vmem>>, vector<64x8xf32>,
    %c1_97 = arith.constant 1 : index
    %c0_98 = arith.constant 0 : index
    %c0_99 = arith.constant 0 : index
    %c0_100 = arith.constant 0 : index
    %78 = vector.load %arg9[%c1_97, %c0_98, %c0_99, %c0_100] : memref<2x10x10x8xf32, #tpu.memory_space<vmem>>, vector<1x8x8x8xf32>
    %79 = vector.shape_cast %78 : vector<1x8x8x8xf32> to vector<8x8x8xf32>
    %80 = vector.shape_cast %79 : vector<8x8x8xf32> to vector<64x8xf32>
    %c64_101 = arith.constant 64 : index
    %c0_102 = arith.constant 0 : index
    %81 = vector.load %arg11[%c64_101, %c0_102] : memref<128x72xf32, #tpu.memory_space<vmem>>, vector<64x8xf32>
    tpu.vector_store %arg11[%c64_101, %c0_102], %80 {strides = array<i32>} : memref<128x72xf32, #tpu.memory_space<vmem>>, vector<64x8xf32>,
    %c1_103 = arith.constant 1 : index
    %c0_104 = arith.constant 0 : index
    %c1_105 = arith.constant 1 : index
    %c0_106 = arith.constant 0 : index
    %82 = vector.load %arg9[%c1_103, %c0_104, %c1_105, %c0_106] : memref<2x10x10x8xf32, #tpu.memory_space<vmem>>, vector<1x8x8x8xf32>
    %83 = vector.shape_cast %82 : vector<1x8x8x8xf32> to vector<8x8x8xf32>
    %84 = vector.shape_cast %83 : vector<8x8x8xf32> to vector<64x8xf32>
    %c64_107 = arith.constant 64 : index
    %c8_108 = arith.constant 8 : index
    %85 = vector.load %arg11[%c64_107, %c8_108] : memref<128x72xf32, #tpu.memory_space<vmem>>, vector<64x8xf32>
    tpu.vector_store %arg11[%c64_107, %c8_108], %84 {strides = array<i32>} : memref<128x72xf32, #tpu.memory_space<vmem>>, vector<64x8xf32>,
    %c1_109 = arith.constant 1 : index
    %c0_110 = arith.constant 0 : index
    %c2_111 = arith.constant 2 : index
    %c0_112 = arith.constant 0 : index
    %86 = vector.load %arg9[%c1_109, %c0_110, %c2_111, %c0_112] : memref<2x10x10x8xf32, #tpu.memory_space<vmem>>, vector<1x8x8x8xf32>
    %87 = vector.shape_cast %86 : vector<1x8x8x8xf32> to vector<8x8x8xf32>
    %88 = vector.shape_cast %87 : vector<8x8x8xf32> to vector<64x8xf32>
    %c64_113 = arith.constant 64 : index
    %c16_114 = arith.constant 16 : index
    %89 = vector.load %arg11[%c64_113, %c16_114] : memref<128x72xf32, #tpu.memory_space<vmem>>, vector<64x8xf32>
    tpu.vector_store %arg11[%c64_113, %c16_114], %88 {strides = array<i32>} : memref<128x72xf32, #tpu.memory_space<vmem>>, vector<64x8xf32>,
    %c1_115 = arith.constant 1 : index
    %c1_116 = arith.constant 1 : index
    %c0_117 = arith.constant 0 : index
    %c0_118 = arith.constant 0 : index
    %90 = vector.load %arg9[%c1_115, %c1_116, %c0_117, %c0_118] : memref<2x10x10x8xf32, #tpu.memory_space<vmem>>, vector<1x8x8x8xf32>
    %91 = vector.shape_cast %90 : vector<1x8x8x8xf32> to vector<8x8x8xf32>
    %92 = vector.shape_cast %91 : vector<8x8x8xf32> to vector<64x8xf32>
    %c64_119 = arith.constant 64 : index
    %c24_120 = arith.constant 24 : index
    %93 = vector.load %arg11[%c64_119, %c24_120] : memref<128x72xf32, #tpu.memory_space<vmem>>, vector<64x8xf32>
    tpu.vector_store %arg11[%c64_119, %c24_120], %92 {strides = array<i32>} : memref<128x72xf32, #tpu.memory_space<vmem>>, vector<64x8xf32>,
    %c1_121 = arith.constant 1 : index
    %c1_122 = arith.constant 1 : index
    %c1_123 = arith.constant 1 : index
    %c0_124 = arith.constant 0 : index
    %94 = vector.load %arg9[%c1_121, %c1_122, %c1_123, %c0_124] : memref<2x10x10x8xf32, #tpu.memory_space<vmem>>, vector<1x8x8x8xf32>
    %95 = vector.shape_cast %94 : vector<1x8x8x8xf32> to vector<8x8x8xf32>
    %96 = vector.shape_cast %95 : vector<8x8x8xf32> to vector<64x8xf32>
    %c64_125 = arith.constant 64 : index
    %c32_126 = arith.constant 32 : index
    %97 = vector.load %arg11[%c64_125, %c32_126] : memref<128x72xf32, #tpu.memory_space<vmem>>, vector<64x8xf32>
    tpu.vector_store %arg11[%c64_125, %c32_126], %96 {strides = array<i32>} : memref<128x72xf32, #tpu.memory_space<vmem>>, vector<64x8xf32>,
    %c1_127 = arith.constant 1 : index
    %c1_128 = arith.constant 1 : index
    %c2_129 = arith.constant 2 : index
    %c0_130 = arith.constant 0 : index
    %98 = vector.load %arg9[%c1_127, %c1_128, %c2_129, %c0_130] : memref<2x10x10x8xf32, #tpu.memory_space<vmem>>, vector<1x8x8x8xf32>
    %99 = vector.shape_cast %98 : vector<1x8x8x8xf32> to vector<8x8x8xf32>
    %100 = vector.shape_cast %99 : vector<8x8x8xf32> to vector<64x8xf32>
    %c64_131 = arith.constant 64 : index
    %c40_132 = arith.constant 40 : index
    %101 = vector.load %arg11[%c64_131, %c40_132] : memref<128x72xf32, #tpu.memory_space<vmem>>, vector<64x8xf32>
    tpu.vector_store %arg11[%c64_131, %c40_132], %100 {strides = array<i32>} : memref<128x72xf32, #tpu.memory_space<vmem>>, vector<64x8xf32>,
    %c1_133 = arith.constant 1 : index
    %c2_134 = arith.constant 2 : index
    %c0_135 = arith.constant 0 : index
    %c0_136 = arith.constant 0 : index
    %102 = vector.load %arg9[%c1_133, %c2_134, %c0_135, %c0_136] : memref<2x10x10x8xf32, #tpu.memory_space<vmem>>, vector<1x8x8x8xf32>
    %103 = vector.shape_cast %102 : vector<1x8x8x8xf32> to vector<8x8x8xf32>
    %104 = vector.shape_cast %103 : vector<8x8x8xf32> to vector<64x8xf32>
    %c64_137 = arith.constant 64 : index
    %c48_138 = arith.constant 48 : index
    %105 = vector.load %arg11[%c64_137, %c48_138] : memref<128x72xf32, #tpu.memory_space<vmem>>, vector<64x8xf32>
    tpu.vector_store %arg11[%c64_137, %c48_138], %104 {strides = array<i32>} : memref<128x72xf32, #tpu.memory_space<vmem>>, vector<64x8xf32>,
    %c1_139 = arith.constant 1 : index
    %c2_140 = arith.constant 2 : index
    %c1_141 = arith.constant 1 : index
    %c0_142 = arith.constant 0 : index
    %106 = vector.load %arg9[%c1_139, %c2_140, %c1_141, %c0_142] : memref<2x10x10x8xf32, #tpu.memory_space<vmem>>, vector<1x8x8x8xf32>
    %107 = vector.shape_cast %106 : vector<1x8x8x8xf32> to vector<8x8x8xf32>
    %108 = vector.shape_cast %107 : vector<8x8x8xf32> to vector<64x8xf32>
    %c64_143 = arith.constant 64 : index
    %c56_144 = arith.constant 56 : index
    %109 = vector.load %arg11[%c64_143, %c56_144] : memref<128x72xf32, #tpu.memory_space<vmem>>, vector<64x8xf32>
    tpu.vector_store %arg11[%c64_143, %c56_144], %108 {strides = array<i32>} : memref<128x72xf32, #tpu.memory_space<vmem>>, vector<64x8xf32>,
    %c1_145 = arith.constant 1 : index
    %c2_146 = arith.constant 2 : index
    %c2_147 = arith.constant 2 : index
    %c0_148 = arith.constant 0 : index
    %110 = vector.load %arg9[%c1_145, %c2_146, %c2_147, %c0_148] : memref<2x10x10x8xf32, #tpu.memory_space<vmem>>, vector<1x8x8x8xf32>
    %111 = vector.shape_cast %110 : vector<1x8x8x8xf32> to vector<8x8x8xf32>
    %112 = vector.shape_cast %111 : vector<8x8x8xf32> to vector<64x8xf32>
    %c64_149 = arith.constant 64 : index
    %c64_150 = arith.constant 64 : index
    %113 = vector.load %arg11[%c64_149, %c64_150] : memref<128x72xf32, #tpu.memory_space<vmem>>, vector<64x8xf32>
    tpu.vector_store %arg11[%c64_149, %c64_150], %112 {strides = array<i32>} : memref<128x72xf32, #tpu.memory_space<vmem>>, vector<64x8xf32>,
    %c0_151 = arith.constant 0 : index
    %c0_152 = arith.constant 0 : index
    %114 = vector.load %arg11[%c0_151, %c0_152] : memref<128x72xf32, #tpu.memory_space<vmem>>, vector<128x72xf32>
    %c0_153 = arith.constant 0 : index
    %c0_154 = arith.constant 0 : index
    %115 = vector.load %arg2[%c0_153, %c0_154] : memref<72x256xf32, #tpu.memory_space<vmem>>, vector<72x256xf32>
    %cst_155 = arith.constant dense<0.000000e+00> : vector<128x256xf32>
    %116 = tpu.matmul %114, %115, %cst_155 {dimension_numbers = #tpu.dot_dimension_numbers<[1], [0], [0], [1], [0, 0, 1, 1], [], []>} : vector<128x72xf32>, vector<72x256xf32>, vector<128x256xf32> -> vector<128x256xf32>
    %c0_156 = arith.constant 0 : index
    %c0_157 = arith.constant 0 : index
    %117 = vector.load %arg3[%c0_156, %c0_157] : memref<1x256xf32, #tpu.memory_space<vmem>>, vector<1x256xf32>
    %118 = vector.broadcast %117 : vector<1x256xf32> to vector<128x256xf32>
    %119 = arith.addf %116, %118 : vector<128x256xf32>
    %cst_158 = arith.constant 0.000000e+00 : f32
    %120 = vector.broadcast %cst_158 : f32 to vector<128x256xf32>
    %121 = arith.maximumf %119, %120 : vector<128x256xf32>
    %122 = vector.shape_cast %121 : vector<128x256xf32> to vector<2x8x8x256xf32>
    %cst_159 = arith.constant 0.000000e+00 : f32
    %123 = vector.broadcast %cst_159 : f32 to vector<1x10x256xf32>
    %c0_160 = arith.constant 0 : index
    %c0_161 = arith.constant 0 : index
    %c0_162 = arith.constant 0 : index
    %c0_163 = arith.constant 0 : index
    %124 = vector.load %arg10[%c0_160, %c0_161, %c0_162, %c0_163] : memref<2x10x10x256xf32, #tpu.memory_space<vmem>>, vector<1x1x10x256xf32>
    %125 = vector.shape_cast %124 : vector<1x1x10x256xf32> to vector<1x10x256xf32>
    %126 = vector.shape_cast %123 : vector<1x10x256xf32> to vector<1x1x10x256xf32>
    tpu.vector_store %arg10[%c0_160, %c0_161, %c0_162, %c0_163], %126 {strides = array<i32>} : memref<2x10x10x256xf32, #tpu.memory_space<vmem>>, vector<1x1x10x256xf32>,
    %cst_164 = arith.constant 0.000000e+00 : f32
    %127 = vector.broadcast %cst_164 : f32 to vector<1x10x256xf32>
    %c0_165 = arith.constant 0 : index
    %c9_166 = arith.constant 9 : index
    %c0_167 = arith.constant 0 : index
    %c0_168 = arith.constant 0 : index
    %128 = vector.load %arg10[%c0_165, %c9_166, %c0_167, %c0_168] : memref<2x10x10x256xf32, #tpu.memory_space<vmem>>, vector<1x1x10x256xf32>
    %129 = vector.shape_cast %128 : vector<1x1x10x256xf32> to vector<1x10x256xf32>
    %130 = vector.shape_cast %127 : vector<1x10x256xf32> to vector<1x1x10x256xf32>
    tpu.vector_store %arg10[%c0_165, %c9_166, %c0_167, %c0_168], %130 {strides = array<i32>} : memref<2x10x10x256xf32, #tpu.memory_space<vmem>>, vector<1x1x10x256xf32>,
    %cst_169 = arith.constant 0.000000e+00 : f32
    %131 = vector.broadcast %cst_169 : f32 to vector<8x1x256xf32>
    %c0_170 = arith.constant 0 : index
    %c1_171 = arith.constant 1 : index
    %c0_172 = arith.constant 0 : index
    %c0_173 = arith.constant 0 : index
    %132 = vector.load %arg10[%c0_170, %c1_171, %c0_172, %c0_173] : memref<2x10x10x256xf32, #tpu.memory_space<vmem>>, vector<1x8x1x256xf32>
    %133 = vector.shape_cast %132 : vector<1x8x1x256xf32> to vector<8x1x256xf32>
    %134 = vector.shape_cast %131 : vector<8x1x256xf32> to vector<1x8x1x256xf32>
    tpu.vector_store %arg10[%c0_170, %c1_171, %c0_172, %c0_173], %134 {strides = array<i32>} : memref<2x10x10x256xf32, #tpu.memory_space<vmem>>, vector<1x8x1x256xf32>,
    %cst_174 = arith.constant 0.000000e+00 : f32
    %135 = vector.broadcast %cst_174 : f32 to vector<8x1x256xf32>
    %c0_175 = arith.constant 0 : index
    %c1_176 = arith.constant 1 : index
    %c9_177 = arith.constant 9 : index
    %c0_178 = arith.constant 0 : index
    %136 = vector.load %arg10[%c0_175, %c1_176, %c9_177, %c0_178] : memref<2x10x10x256xf32, #tpu.memory_space<vmem>>, vector<1x8x1x256xf32>
    %137 = vector.shape_cast %136 : vector<1x8x1x256xf32> to vector<8x1x256xf32>
    %138 = vector.shape_cast %135 : vector<8x1x256xf32> to vector<1x8x1x256xf32>
    tpu.vector_store %arg10[%c0_175, %c1_176, %c9_177, %c0_178], %138 {strides = array<i32>} : memref<2x10x10x256xf32, #tpu.memory_space<vmem>>, vector<1x8x1x256xf32>,
    %139 = vector.extract_strided_slice %122 {offsets = [0, 0, 0, 0], sizes = [1, 8, 8, 256], strides = [1, 1, 1, 1]} : vector<2x8x8x256xf32> to vector<1x8x8x256xf32>
    %140 = vector.shape_cast %139 : vector<1x8x8x256xf32> to vector<8x8x256xf32>
    %c0_179 = arith.constant 0 : index
    %c1_180 = arith.constant 1 : index
    %c1_181 = arith.constant 1 : index
    %c0_182 = arith.constant 0 : index
    %141 = vector.load %arg10[%c0_179, %c1_180, %c1_181, %c0_182] : memref<2x10x10x256xf32, #tpu.memory_space<vmem>>, vector<1x8x8x256xf32>
    %142 = vector.shape_cast %141 : vector<1x8x8x256xf32> to vector<8x8x256xf32>
    %143 = vector.shape_cast %140 : vector<8x8x256xf32> to vector<1x8x8x256xf32>
    tpu.vector_store %arg10[%c0_179, %c1_180, %c1_181, %c0_182], %143 {strides = array<i32>} : memref<2x10x10x256xf32, #tpu.memory_space<vmem>>, vector<1x8x8x256xf32>,
    %cst_183 = arith.constant 0.000000e+00 : f32
    %144 = vector.broadcast %cst_183 : f32 to vector<1x10x256xf32>
    %c1_184 = arith.constant 1 : index
    %c0_185 = arith.constant 0 : index
    %c0_186 = arith.constant 0 : index
    %c0_187 = arith.constant 0 : index
    %145 = vector.load %arg10[%c1_184, %c0_185, %c0_186, %c0_187] : memref<2x10x10x256xf32, #tpu.memory_space<vmem>>, vector<1x1x10x256xf32>
    %146 = vector.shape_cast %145 : vector<1x1x10x256xf32> to vector<1x10x256xf32>
    %147 = vector.shape_cast %144 : vector<1x10x256xf32> to vector<1x1x10x256xf32>
    tpu.vector_store %arg10[%c1_184, %c0_185, %c0_186, %c0_187], %147 {strides = array<i32>} : memref<2x10x10x256xf32, #tpu.memory_space<vmem>>, vector<1x1x10x256xf32>,
    %cst_188 = arith.constant 0.000000e+00 : f32
    %148 = vector.broadcast %cst_188 : f32 to vector<1x10x256xf32>
    %c1_189 = arith.constant 1 : index
    %c9_190 = arith.constant 9 : index
    %c0_191 = arith.constant 0 : index
    %c0_192 = arith.constant 0 : index
    %149 = vector.load %arg10[%c1_189, %c9_190, %c0_191, %c0_192] : memref<2x10x10x256xf32, #tpu.memory_space<vmem>>, vector<1x1x10x256xf32>
    %150 = vector.shape_cast %149 : vector<1x1x10x256xf32> to vector<1x10x256xf32>
    %151 = vector.shape_cast %148 : vector<1x10x256xf32> to vector<1x1x10x256xf32>
    tpu.vector_store %arg10[%c1_189, %c9_190, %c0_191, %c0_192], %151 {strides = array<i32>} : memref<2x10x10x256xf32, #tpu.memory_space<vmem>>, vector<1x1x10x256xf32>,
    %cst_193 = arith.constant 0.000000e+00 : f32
    %152 = vector.broadcast %cst_193 : f32 to vector<8x1x256xf32>
    %c1_194 = arith.constant 1 : index
    %c1_195 = arith.constant 1 : index
    %c0_196 = arith.constant 0 : index
    %c0_197 = arith.constant 0 : index
    %153 = vector.load %arg10[%c1_194, %c1_195, %c0_196, %c0_197] : memref<2x10x10x256xf32, #tpu.memory_space<vmem>>, vector<1x8x1x256xf32>
    %154 = vector.shape_cast %153 : vector<1x8x1x256xf32> to vector<8x1x256xf32>
    %155 = vector.shape_cast %152 : vector<8x1x256xf32> to vector<1x8x1x256xf32>
    tpu.vector_store %arg10[%c1_194, %c1_195, %c0_196, %c0_197], %155 {strides = array<i32>} : memref<2x10x10x256xf32, #tpu.memory_space<vmem>>, vector<1x8x1x256xf32>,
    %cst_198 = arith.constant 0.000000e+00 : f32
    %156 = vector.broadcast %cst_198 : f32 to vector<8x1x256xf32>
    %c1_199 = arith.constant 1 : index
    %c1_200 = arith.constant 1 : index
    %c9_201 = arith.constant 9 : index
    %c0_202 = arith.constant 0 : index
    %157 = vector.load %arg10[%c1_199, %c1_200, %c9_201, %c0_202] : memref<2x10x10x256xf32, #tpu.memory_space<vmem>>, vector<1x8x1x256xf32>
    %158 = vector.shape_cast %157 : vector<1x8x1x256xf32> to vector<8x1x256xf32>
    %159 = vector.shape_cast %156 : vector<8x1x256xf32> to vector<1x8x1x256xf32>
    tpu.vector_store %arg10[%c1_199, %c1_200, %c9_201, %c0_202], %159 {strides = array<i32>} : memref<2x10x10x256xf32, #tpu.memory_space<vmem>>, vector<1x8x1x256xf32>,
    %160 = vector.extract_strided_slice %122 {offsets = [1, 0, 0, 0], sizes = [1, 8, 8, 256], strides = [1, 1, 1, 1]} : vector<2x8x8x256xf32> to vector<1x8x8x256xf32>
    %161 = vector.shape_cast %160 : vector<1x8x8x256xf32> to vector<8x8x256xf32>
    %c1_203 = arith.constant 1 : index
    %c1_204 = arith.constant 1 : index
    %c1_205 = arith.constant 1 : index
    %c0_206 = arith.constant 0 : index
    %162 = vector.load %arg10[%c1_203, %c1_204, %c1_205, %c0_206] : memref<2x10x10x256xf32, #tpu.memory_space<vmem>>, vector<1x8x8x256xf32>
    %163 = vector.shape_cast %162 : vector<1x8x8x256xf32> to vector<8x8x256xf32>
    %164 = vector.shape_cast %161 : vector<8x8x256xf32> to vector<1x8x8x256xf32>
    tpu.vector_store %arg10[%c1_203, %c1_204, %c1_205, %c0_206], %164 {strides = array<i32>} : memref<2x10x10x256xf32, #tpu.memory_space<vmem>>, vector<1x8x8x256xf32>,
    %c0_207 = arith.constant 0 : index
    %c0_208 = arith.constant 0 : index
    %c0_209 = arith.constant 0 : index
    %c0_210 = arith.constant 0 : index
    %165 = vector.load %arg10[%c0_207, %c0_208, %c0_209, %c0_210] : memref<2x10x10x256xf32, #tpu.memory_space<vmem>>, vector<1x8x8x256xf32>
    %166 = vector.shape_cast %165 : vector<1x8x8x256xf32> to vector<8x8x256xf32>
    %167 = vector.shape_cast %166 : vector<8x8x256xf32> to vector<64x256xf32>
    %c0_211 = arith.constant 0 : index
    %c0_212 = arith.constant 0 : index
    %168 = vector.load %arg12[%c0_211, %c0_212] : memref<128x2304xf32, #tpu.memory_space<vmem>>, vector<64x256xf32>
    tpu.vector_store %arg12[%c0_211, %c0_212], %167 {strides = array<i32>} : memref<128x2304xf32, #tpu.memory_space<vmem>>, vector<64x256xf32>,
    %c0_213 = arith.constant 0 : index
    %c0_214 = arith.constant 0 : index
    %c1_215 = arith.constant 1 : index
    %c0_216 = arith.constant 0 : index
    %169 = vector.load %arg10[%c0_213, %c0_214, %c1_215, %c0_216] : memref<2x10x10x256xf32, #tpu.memory_space<vmem>>, vector<1x8x8x256xf32>
    %170 = vector.shape_cast %169 : vector<1x8x8x256xf32> to vector<8x8x256xf32>
    %171 = vector.shape_cast %170 : vector<8x8x256xf32> to vector<64x256xf32>
    %c0_217 = arith.constant 0 : index
    %c256 = arith.constant 256 : index
    %172 = vector.load %arg12[%c0_217, %c256] : memref<128x2304xf32, #tpu.memory_space<vmem>>, vector<64x256xf32>
    tpu.vector_store %arg12[%c0_217, %c256], %171 {strides = array<i32>} : memref<128x2304xf32, #tpu.memory_space<vmem>>, vector<64x256xf32>,
    %c0_218 = arith.constant 0 : index
    %c0_219 = arith.constant 0 : index
    %c2_220 = arith.constant 2 : index
    %c0_221 = arith.constant 0 : index
    %173 = vector.load %arg10[%c0_218, %c0_219, %c2_220, %c0_221] : memref<2x10x10x256xf32, #tpu.memory_space<vmem>>, vector<1x8x8x256xf32>
    %174 = vector.shape_cast %173 : vector<1x8x8x256xf32> to vector<8x8x256xf32>
    %175 = vector.shape_cast %174 : vector<8x8x256xf32> to vector<64x256xf32>
    %c0_222 = arith.constant 0 : index
    %c512 = arith.constant 512 : index
    %176 = vector.load %arg12[%c0_222, %c512] : memref<128x2304xf32, #tpu.memory_space<vmem>>, vector<64x256xf32>
    tpu.vector_store %arg12[%c0_222, %c512], %175 {strides = array<i32>} : memref<128x2304xf32, #tpu.memory_space<vmem>>, vector<64x256xf32>,
    %c0_223 = arith.constant 0 : index
    %c1_224 = arith.constant 1 : index
    %c0_225 = arith.constant 0 : index
    %c0_226 = arith.constant 0 : index
    %177 = vector.load %arg10[%c0_223, %c1_224, %c0_225, %c0_226] : memref<2x10x10x256xf32, #tpu.memory_space<vmem>>, vector<1x8x8x256xf32>
    %178 = vector.shape_cast %177 : vector<1x8x8x256xf32> to vector<8x8x256xf32>
    %179 = vector.shape_cast %178 : vector<8x8x256xf32> to vector<64x256xf32>
    %c0_227 = arith.constant 0 : index
    %c768 = arith.constant 768 : index
    %180 = vector.load %arg12[%c0_227, %c768] : memref<128x2304xf32, #tpu.memory_space<vmem>>, vector<64x256xf32>
    tpu.vector_store %arg12[%c0_227, %c768], %179 {strides = array<i32>} : memref<128x2304xf32, #tpu.memory_space<vmem>>, vector<64x256xf32>,
    %c0_228 = arith.constant 0 : index
    %c1_229 = arith.constant 1 : index
    %c1_230 = arith.constant 1 : index
    %c0_231 = arith.constant 0 : index
    %181 = vector.load %arg10[%c0_228, %c1_229, %c1_230, %c0_231] : memref<2x10x10x256xf32, #tpu.memory_space<vmem>>, vector<1x8x8x256xf32>
    %182 = vector.shape_cast %181 : vector<1x8x8x256xf32> to vector<8x8x256xf32>
    %183 = vector.shape_cast %182 : vector<8x8x256xf32> to vector<64x256xf32>
    %c0_232 = arith.constant 0 : index
    %c1024 = arith.constant 1024 : index
    %184 = vector.load %arg12[%c0_232, %c1024] : memref<128x2304xf32, #tpu.memory_space<vmem>>, vector<64x256xf32>
    tpu.vector_store %arg12[%c0_232, %c1024], %183 {strides = array<i32>} : memref<128x2304xf32, #tpu.memory_space<vmem>>, vector<64x256xf32>,
    %c0_233 = arith.constant 0 : index
    %c1_234 = arith.constant 1 : index
    %c2_235 = arith.constant 2 : index
    %c0_236 = arith.constant 0 : index
    %185 = vector.load %arg10[%c0_233, %c1_234, %c2_235, %c0_236] : memref<2x10x10x256xf32, #tpu.memory_space<vmem>>, vector<1x8x8x256xf32>
    %186 = vector.shape_cast %185 : vector<1x8x8x256xf32> to vector<8x8x256xf32>
    %187 = vector.shape_cast %186 : vector<8x8x256xf32> to vector<64x256xf32>
    %c0_237 = arith.constant 0 : index
    %c1280 = arith.constant 1280 : index
    %188 = vector.load %arg12[%c0_237, %c1280] : memref<128x2304xf32, #tpu.memory_space<vmem>>, vector<64x256xf32>
    tpu.vector_store %arg12[%c0_237, %c1280], %187 {strides = array<i32>} : memref<128x2304xf32, #tpu.memory_space<vmem>>, vector<64x256xf32>,
    %c0_238 = arith.constant 0 : index
    %c2_239 = arith.constant 2 : index
    %c0_240 = arith.constant 0 : index
    %c0_241 = arith.constant 0 : index
    %189 = vector.load %arg10[%c0_238, %c2_239, %c0_240, %c0_241] : memref<2x10x10x256xf32, #tpu.memory_space<vmem>>, vector<1x8x8x256xf32>
    %190 = vector.shape_cast %189 : vector<1x8x8x256xf32> to vector<8x8x256xf32>
    %191 = vector.shape_cast %190 : vector<8x8x256xf32> to vector<64x256xf32>
    %c0_242 = arith.constant 0 : index
    %c1536 = arith.constant 1536 : index
    %192 = vector.load %arg12[%c0_242, %c1536] : memref<128x2304xf32, #tpu.memory_space<vmem>>, vector<64x256xf32>
    tpu.vector_store %arg12[%c0_242, %c1536], %191 {strides = array<i32>} : memref<128x2304xf32, #tpu.memory_space<vmem>>, vector<64x256xf32>,
    %c0_243 = arith.constant 0 : index
    %c2_244 = arith.constant 2 : index
    %c1_245 = arith.constant 1 : index
    %c0_246 = arith.constant 0 : index
    %193 = vector.load %arg10[%c0_243, %c2_244, %c1_245, %c0_246] : memref<2x10x10x256xf32, #tpu.memory_space<vmem>>, vector<1x8x8x256xf32>
    %194 = vector.shape_cast %193 : vector<1x8x8x256xf32> to vector<8x8x256xf32>
    %195 = vector.shape_cast %194 : vector<8x8x256xf32> to vector<64x256xf32>
    %c0_247 = arith.constant 0 : index
    %c1792 = arith.constant 1792 : index
    %196 = vector.load %arg12[%c0_247, %c1792] : memref<128x2304xf32, #tpu.memory_space<vmem>>, vector<64x256xf32>
    tpu.vector_store %arg12[%c0_247, %c1792], %195 {strides = array<i32>} : memref<128x2304xf32, #tpu.memory_space<vmem>>, vector<64x256xf32>,
    %c0_248 = arith.constant 0 : index
    %c2_249 = arith.constant 2 : index
    %c2_250 = arith.constant 2 : index
    %c0_251 = arith.constant 0 : index
    %197 = vector.load %arg10[%c0_248, %c2_249, %c2_250, %c0_251] : memref<2x10x10x256xf32, #tpu.memory_space<vmem>>, vector<1x8x8x256xf32>
    %198 = vector.shape_cast %197 : vector<1x8x8x256xf32> to vector<8x8x256xf32>
    %199 = vector.shape_cast %198 : vector<8x8x256xf32> to vector<64x256xf32>
    %c0_252 = arith.constant 0 : index
    %c2048 = arith.constant 2048 : index
    %200 = vector.load %arg12[%c0_252, %c2048] : memref<128x2304xf32, #tpu.memory_space<vmem>>, vector<64x256xf32>
    tpu.vector_store %arg12[%c0_252, %c2048], %199 {strides = array<i32>} : memref<128x2304xf32, #tpu.memory_space<vmem>>, vector<64x256xf32>,
    %c1_253 = arith.constant 1 : index
    %c0_254 = arith.constant 0 : index
    %c0_255 = arith.constant 0 : index
    %c0_256 = arith.constant 0 : index
    %201 = vector.load %arg10[%c1_253, %c0_254, %c0_255, %c0_256] : memref<2x10x10x256xf32, #tpu.memory_space<vmem>>, vector<1x8x8x256xf32>
    %202 = vector.shape_cast %201 : vector<1x8x8x256xf32> to vector<8x8x256xf32>
    %203 = vector.shape_cast %202 : vector<8x8x256xf32> to vector<64x256xf32>
    %c64_257 = arith.constant 64 : index
    %c0_258 = arith.constant 0 : index
    %204 = vector.load %arg12[%c64_257, %c0_258] : memref<128x2304xf32, #tpu.memory_space<vmem>>, vector<64x256xf32>
    tpu.vector_store %arg12[%c64_257, %c0_258], %203 {strides = array<i32>} : memref<128x2304xf32, #tpu.memory_space<vmem>>, vector<64x256xf32>,
    %c1_259 = arith.constant 1 : index
    %c0_260 = arith.constant 0 : index
    %c1_261 = arith.constant 1 : index
    %c0_262 = arith.constant 0 : index
    %205 = vector.load %arg10[%c1_259, %c0_260, %c1_261, %c0_262] : memref<2x10x10x256xf32, #tpu.memory_space<vmem>>, vector<1x8x8x256xf32>
    %206 = vector.shape_cast %205 : vector<1x8x8x256xf32> to vector<8x8x256xf32>
    %207 = vector.shape_cast %206 : vector<8x8x256xf32> to vector<64x256xf32>
    %c64_263 = arith.constant 64 : index
    %c256_264 = arith.constant 256 : index
    %208 = vector.load %arg12[%c64_263, %c256_264] : memref<128x2304xf32, #tpu.memory_space<vmem>>, vector<64x256xf32>
    tpu.vector_store %arg12[%c64_263, %c256_264], %207 {strides = array<i32>} : memref<128x2304xf32, #tpu.memory_space<vmem>>, vector<64x256xf32>,
    %c1_265 = arith.constant 1 : index
    %c0_266 = arith.constant 0 : index
    %c2_267 = arith.constant 2 : index
    %c0_268 = arith.constant 0 : index
    %209 = vector.load %arg10[%c1_265, %c0_266, %c2_267, %c0_268] : memref<2x10x10x256xf32, #tpu.memory_space<vmem>>, vector<1x8x8x256xf32>
    %210 = vector.shape_cast %209 : vector<1x8x8x256xf32> to vector<8x8x256xf32>
    %211 = vector.shape_cast %210 : vector<8x8x256xf32> to vector<64x256xf32>
    %c64_269 = arith.constant 64 : index
    %c512_270 = arith.constant 512 : index
    %212 = vector.load %arg12[%c64_269, %c512_270] : memref<128x2304xf32, #tpu.memory_space<vmem>>, vector<64x256xf32>
    tpu.vector_store %arg12[%c64_269, %c512_270], %211 {strides = array<i32>} : memref<128x2304xf32, #tpu.memory_space<vmem>>, vector<64x256xf32>,
    %c1_271 = arith.constant 1 : index
    %c1_272 = arith.constant 1 : index
    %c0_273 = arith.constant 0 : index
    %c0_274 = arith.constant 0 : index
    %213 = vector.load %arg10[%c1_271, %c1_272, %c0_273, %c0_274] : memref<2x10x10x256xf32, #tpu.memory_space<vmem>>, vector<1x8x8x256xf32>
    %214 = vector.shape_cast %213 : vector<1x8x8x256xf32> to vector<8x8x256xf32>
    %215 = vector.shape_cast %214 : vector<8x8x256xf32> to vector<64x256xf32>
    %c64_275 = arith.constant 64 : index
    %c768_276 = arith.constant 768 : index
    %216 = vector.load %arg12[%c64_275, %c768_276] : memref<128x2304xf32, #tpu.memory_space<vmem>>, vector<64x256xf32>
    tpu.vector_store %arg12[%c64_275, %c768_276], %215 {strides = array<i32>} : memref<128x2304xf32, #tpu.memory_space<vmem>>, vector<64x256xf32>,
    %c1_277 = arith.constant 1 : index
    %c1_278 = arith.constant 1 : index
    %c1_279 = arith.constant 1 : index
    %c0_280 = arith.constant 0 : index
    %217 = vector.load %arg10[%c1_277, %c1_278, %c1_279, %c0_280] : memref<2x10x10x256xf32, #tpu.memory_space<vmem>>, vector<1x8x8x256xf32>
    %218 = vector.shape_cast %217 : vector<1x8x8x256xf32> to vector<8x8x256xf32>
    %219 = vector.shape_cast %218 : vector<8x8x256xf32> to vector<64x256xf32>
    %c64_281 = arith.constant 64 : index
    %c1024_282 = arith.constant 1024 : index
    %220 = vector.load %arg12[%c64_281, %c1024_282] : memref<128x2304xf32, #tpu.memory_space<vmem>>, vector<64x256xf32>
    tpu.vector_store %arg12[%c64_281, %c1024_282], %219 {strides = array<i32>} : memref<128x2304xf32, #tpu.memory_space<vmem>>, vector<64x256xf32>,
    %c1_283 = arith.constant 1 : index
    %c1_284 = arith.constant 1 : index
    %c2_285 = arith.constant 2 : index
    %c0_286 = arith.constant 0 : index
    %221 = vector.load %arg10[%c1_283, %c1_284, %c2_285, %c0_286] : memref<2x10x10x256xf32, #tpu.memory_space<vmem>>, vector<1x8x8x256xf32>
    %222 = vector.shape_cast %221 : vector<1x8x8x256xf32> to vector<8x8x256xf32>
    %223 = vector.shape_cast %222 : vector<8x8x256xf32> to vector<64x256xf32>
    %c64_287 = arith.constant 64 : index
    %c1280_288 = arith.constant 1280 : index
    %224 = vector.load %arg12[%c64_287, %c1280_288] : memref<128x2304xf32, #tpu.memory_space<vmem>>, vector<64x256xf32>
    tpu.vector_store %arg12[%c64_287, %c1280_288], %223 {strides = array<i32>} : memref<128x2304xf32, #tpu.memory_space<vmem>>, vector<64x256xf32>,
    %c1_289 = arith.constant 1 : index
    %c2_290 = arith.constant 2 : index
    %c0_291 = arith.constant 0 : index
    %c0_292 = arith.constant 0 : index
    %225 = vector.load %arg10[%c1_289, %c2_290, %c0_291, %c0_292] : memref<2x10x10x256xf32, #tpu.memory_space<vmem>>, vector<1x8x8x256xf32>
    %226 = vector.shape_cast %225 : vector<1x8x8x256xf32> to vector<8x8x256xf32>
    %227 = vector.shape_cast %226 : vector<8x8x256xf32> to vector<64x256xf32>
    %c64_293 = arith.constant 64 : index
    %c1536_294 = arith.constant 1536 : index
    %228 = vector.load %arg12[%c64_293, %c1536_294] : memref<128x2304xf32, #tpu.memory_space<vmem>>, vector<64x256xf32>
    tpu.vector_store %arg12[%c64_293, %c1536_294], %227 {strides = array<i32>} : memref<128x2304xf32, #tpu.memory_space<vmem>>, vector<64x256xf32>,
    %c1_295 = arith.constant 1 : index
    %c2_296 = arith.constant 2 : index
    %c1_297 = arith.constant 1 : index
    %c0_298 = arith.constant 0 : index
    %229 = vector.load %arg10[%c1_295, %c2_296, %c1_297, %c0_298] : memref<2x10x10x256xf32, #tpu.memory_space<vmem>>, vector<1x8x8x256xf32>
    %230 = vector.shape_cast %229 : vector<1x8x8x256xf32> to vector<8x8x256xf32>
    %231 = vector.shape_cast %230 : vector<8x8x256xf32> to vector<64x256xf32>
    %c64_299 = arith.constant 64 : index
    %c1792_300 = arith.constant 1792 : index
    %232 = vector.load %arg12[%c64_299, %c1792_300] : memref<128x2304xf32, #tpu.memory_space<vmem>>, vector<64x256xf32>
    tpu.vector_store %arg12[%c64_299, %c1792_300], %231 {strides = array<i32>} : memref<128x2304xf32, #tpu.memory_space<vmem>>, vector<64x256xf32>,
    %c1_301 = arith.constant 1 : index
    %c2_302 = arith.constant 2 : index
    %c2_303 = arith.constant 2 : index
    %c0_304 = arith.constant 0 : index
    %233 = vector.load %arg10[%c1_301, %c2_302, %c2_303, %c0_304] : memref<2x10x10x256xf32, #tpu.memory_space<vmem>>, vector<1x8x8x256xf32>
    %234 = vector.shape_cast %233 : vector<1x8x8x256xf32> to vector<8x8x256xf32>
    %235 = vector.shape_cast %234 : vector<8x8x256xf32> to vector<64x256xf32>
    %c64_305 = arith.constant 64 : index
    %c2048_306 = arith.constant 2048 : index
    %236 = vector.load %arg12[%c64_305, %c2048_306] : memref<128x2304xf32, #tpu.memory_space<vmem>>, vector<64x256xf32>
    tpu.vector_store %arg12[%c64_305, %c2048_306], %235 {strides = array<i32>} : memref<128x2304xf32, #tpu.memory_space<vmem>>, vector<64x256xf32>,
    %c0_307 = arith.constant 0 : index
    %c0_308 = arith.constant 0 : index
    %237 = vector.load %arg12[%c0_307, %c0_308] : memref<128x2304xf32, #tpu.memory_space<vmem>>, vector<128x2304xf32>
    %c0_309 = arith.constant 0 : index
    %c0_310 = arith.constant 0 : index
    %238 = vector.load %arg4[%c0_309, %c0_310] : memref<2304x256xf32, #tpu.memory_space<vmem>>, vector<2304x256xf32>
    %cst_311 = arith.constant dense<0.000000e+00> : vector<128x256xf32>
    %239 = tpu.matmul %237, %238, %cst_311 {dimension_numbers = #tpu.dot_dimension_numbers<[1], [0], [0], [1], [0, 0, 1, 1], [], []>} : vector<128x2304xf32>, vector<2304x256xf32>, vector<128x256xf32> -> vector<128x256xf32>
    %c0_312 = arith.constant 0 : index
    %c0_313 = arith.constant 0 : index
    %240 = vector.load %arg5[%c0_312, %c0_313] : memref<1x256xf32, #tpu.memory_space<vmem>>, vector<1x256xf32>
    %241 = vector.broadcast %240 : vector<1x256xf32> to vector<128x256xf32>
    %242 = arith.addf %239, %241 : vector<128x256xf32>
    %cst_314 = arith.constant 0.000000e+00 : f32
    %243 = vector.broadcast %cst_314 : f32 to vector<128x256xf32>
    %244 = arith.maximumf %242, %243 : vector<128x256xf32>
    %245 = vector.shape_cast %244 : vector<128x256xf32> to vector<2x64x256xf32>
    %cst_315 = arith.constant dense<0.000000e+00> : vector<2x256xf32>
    %246 = vector.multi_reduction <add>, %245, %cst_315 [1] : vector<2x64x256xf32> to vector<2x256xf32>
    %c0_316 = arith.constant 0 : index
    %c0_317 = arith.constant 0 : index
    %247 = vector.load %arg6[%c0_316, %c0_317] : memref<256x2xf32, #tpu.memory_space<vmem>>, vector<256x2xf32>
    %cst_318 = arith.constant dense<0.000000e+00> : vector<2x2xf32>
    %248 = tpu.matmul %246, %247, %cst_318 {dimension_numbers = #tpu.dot_dimension_numbers<[1], [0], [0], [1], [0, 0, 1, 1], [], []>} : vector<2x256xf32>, vector<256x2xf32>, vector<2x2xf32> -> vector<2x2xf32>
    %c0_319 = arith.constant 0 : index
    %c0_320 = arith.constant 0 : index
    %249 = vector.load %arg7[%c0_319, %c0_320] : memref<1x2xf32, #tpu.memory_space<vmem>>, vector<1x2xf32>
    %250 = vector.broadcast %249 : vector<1x2xf32> to vector<2x2xf32>
    %251 = arith.addf %248, %250 : vector<2x2xf32>
    %c0_321 = arith.constant 0 : index
    %c0_322 = arith.constant 0 : index
    %252 = vector.load %arg8[%c0_321, %c0_322] : memref<2x2xf32, #tpu.memory_space<vmem>>, vector<2x2xf32>
    tpu.vector_store %arg8[%c0_321, %c0_322], %251 {strides = array<i32>} : memref<2x2xf32, #tpu.memory_space<vmem>>, vector<2x2xf32>,
    return
  }
  func.func @transform_0(%arg0: i32) -> (i32, i32, i32, i32) {
    %c0_i32 = arith.constant 0 : i32
    %c0_i32_0 = arith.constant 0 : i32
    %c0_i32_1 = arith.constant 0 : i32
    %c0_i32_2 = arith.constant 0 : i32
    return %arg0, %c0_i32, %c0_i32_0, %c0_i32_1 : i32, i32, i32, i32
  }
  func.func @transform_1(%arg0: i32) -> (i32, i32) {
    %c0_i32 = arith.constant 0 : i32
    %c0_i32_0 = arith.constant 0 : i32
    %c0_i32_1 = arith.constant 0 : i32
    return %c0_i32, %c0_i32_0 : i32, i32
  }
  func.func @transform_2(%arg0: i32) -> (i32, i32) {
    %c0_i32 = arith.constant 0 : i32
    %c0_i32_0 = arith.constant 0 : i32
    %c0_i32_1 = arith.constant 0 : i32
    return %c0_i32, %c0_i32_0 : i32, i32
  }
  func.func @transform_3(%arg0: i32) -> (i32, i32) {
    %c0_i32 = arith.constant 0 : i32
    %c0_i32_0 = arith.constant 0 : i32
    %c0_i32_1 = arith.constant 0 : i32
    return %c0_i32, %c0_i32_0 : i32, i32
  }
  func.func @transform_4(%arg0: i32) -> (i32, i32) {
    %c0_i32 = arith.constant 0 : i32
    %c0_i32_0 = arith.constant 0 : i32
    %c0_i32_1 = arith.constant 0 : i32
    return %c0_i32, %c0_i32_0 : i32, i32
  }
  func.func @transform_5(%arg0: i32) -> (i32, i32) {
    %c0_i32 = arith.constant 0 : i32
    %c0_i32_0 = arith.constant 0 : i32
    %c0_i32_1 = arith.constant 0 : i32
    return %c0_i32, %c0_i32_0 : i32, i32
  }
  func.func @transform_6(%arg0: i32) -> (i32, i32) {
    %c0_i32 = arith.constant 0 : i32
    %c0_i32_0 = arith.constant 0 : i32
    %c0_i32_1 = arith.constant 0 : i32
    return %c0_i32, %c0_i32_0 : i32, i32
  }
  func.func @transform_7(%arg0: i32) -> (i32, i32) {
    %c0_i32 = arith.constant 0 : i32
    %c0_i32_0 = arith.constant 0 : i32
    return %arg0, %c0_i32 : i32, i32
  }
}

</mosaic_0001>

<llo_original>
// kernel: _forward_impl.1
$region0: #{_forward_impl.1}
  #allocation0 [shape = 'u32[]', space=smem, size = 0x4, offset = 0x4, fixed_abs, tag = 'smem constant byte address 0x4 - core index']
  #allocation1 [shape = 'u32[72,128]{1,0:T(1,128)}', space=vmem, size = 0x9000, scoped, tag = 'internal scratch']
  #allocation2 [shape = 'f32[2,10,10,8]{3,2,1,0:T(8,128)}', space=vmem, size = 0x28000, scoped, tag = 'scratch operand']
  #allocation3 [shape = 'f32[2,10,10,256]{3,2,1,0:T(8,128)}', space=vmem, size = 0x50000, scoped, tag = 'scratch operand']
  #allocation4 [shape = 'f32[128,72]{1,0:T(8,128)}', space=vmem, size = 0x10000, scoped, tag = 'scratch operand']
  #allocation5 [shape = 'f32[128,2304]{1,0:T(8,128)}', space=vmem, size = 0x120000, scoped, tag = 'scratch operand']
  %s0 = inlined_call_operand.hbm [shape: f32[2,8,8,8], index: 0, kind: input, shape index: {}]
  %s1 = inlined_call_operand.hbm [shape: f32[72,256], index: 1, kind: input, shape index: {}]
  %s2 = inlined_call_operand.hbm [shape: f32[1,256], index: 2, kind: input, shape index: {}]
  %s3 = inlined_call_operand.hbm [shape: f32[2304,256], index: 3, kind: input, shape index: {}]
  %s4 = inlined_call_operand.hbm [shape: f32[1,256], index: 4, kind: input, shape index: {}]
  %s5 = inlined_call_operand.vmem [shape: f32[256,2], index: 5, kind: input, shape index: {}]
  %s6 = inlined_call_operand.hbm [shape: f32[1,2], index: 6, kind: input, shape index: {}]
  %s7 = inlined_call_operand.hbm [shape: f32[2,2], index: 7, kind: output, shape index: {}]
  %s8 = sld [smem:[#allocation0]]
  $region62: #{_forward_impl.1} parent=0
    _
  %s10 = ssub.s32 1, %s8
  %s11 = scalar_select 0, %s10, %s8
  $region1: #{_forward_impl.1} parent=0
    #allocation6 [shape = 'u8[65536]{0}', space=vmem, size = 0x10000, scoped, tag = 'input window, operand 0, single buffered']
    #allocation7 [shape = 's32[1]{0}', space=sflag, size = 0x4, scoped, tag = 'scoped memory for _forward_impl.1']
    #allocation8 [shape = 's32[1]{0}', space=sflag, size = 0x4, scoped, tag = 'scoped memory for _forward_impl.1']
    #allocation9 [shape = 'u8[73728]{0}', space=vmem, size = 0x12000, scoped, tag = 'input window, operand 1, single buffered']
    #allocation10 [shape = 's32[1]{0}', space=sflag, size = 0x4, scoped, tag = 'scoped memory for _forward_impl.1']
    #allocation11 [shape = 'u8[1024]{0}', space=vmem, size = 0x400, scoped, tag = 'input window, operand 2, single buffered']
    #allocation12 [shape = 'u8[2359296]{0}', space=vmem, size = 0x240000, scoped, tag = 'input window, operand 3, single buffered']
    #allocation13 [shape = 's32[1]{0}', space=sflag, size = 0x4, scoped, tag = 'scoped memory for _forward_impl.1']
    #allocation14 [shape = 'u8[1024]{0}', space=vmem, size = 0x400, scoped, tag = 'input window, operand 4, single buffered']
    #allocation15 [shape = 'u8[512]{0}', space=vmem, size = 0x400, scoped, tag = 'input window, operand 6, single buffered']
    #allocation16 [shape = 's32[1]{0}', space=sflag, size = 0x4, scoped, tag = 'scoped memory for _forward_impl.1']
    #allocation17 [shape = 'u8[1024]{0}', space=vmem, size = 0x400, scoped, tag = 'output window, operand 0, single buffered']
    %12 = vsyncpa [#allocation7], 0
    %13 = vsyncpa [#allocation10], 0
    %14 = vsyncpa [#allocation13], 0
    %15 = vsyncpa [#allocation16], 0
    %16 = vsyncpa [#allocation8], 0
    // Predicated region
    $region2: #{_forward_impl.1} parent=1 // pred_check
      _
    $region3: #{_forward_impl.1} parent=1 // pred_check_branch
      %18 = sbr.rel (0) target = $region5
    $region4: #{_forward_impl.1} parent=1 // pred_region
      %20 = vsyncadd [#allocation7], 0
      %s21 = sshll.u32 %s0, 4
      %s22 = int_to_ptr.hbm [resolvable:$true] %s21
      %s23 = sshll.u32 [#allocation6], 4
      %s24 = int_to_ptr.vmem [resolvable:$true] %s23
      %29 = dma.hbm_to_vmem [thread:$0]  %s22, 2048, %s24, [#allocation7], 128, 128, 8
    $region5: #{_forward_impl.1} parent=1 // pred_fallthru
      _
    // Predicated region
    $region6: #{_forward_impl.1} parent=1 // pred_check
      _
    $region7: #{_forward_impl.1} parent=1 // pred_check_branch
      %31 = sbr.rel (0) target = $region9
    $region8: #{_forward_impl.1} parent=1 // pred_region
      %33 = vsyncadd [#allocation10], 0
      %s34 = sshll.u32 %s1, 4
      %s35 = int_to_ptr.hbm [resolvable:$true] %s34
      %s36 = sshll.u32 [#allocation9], 4
      %s37 = int_to_ptr.vmem [resolvable:$true] %s36
      %42 = dma.hbm_to_vmem [thread:$0]  %s35, 2304, %s37, [#allocation10], 256, 256, 16
    $region9: #{_forward_impl.1} parent=1 // pred_fallthru
      _
    // Predicated region
    $region10: #{_forward_impl.1} parent=1 // pred_check
      _
    $region11: #{_forward_impl.1} parent=1 // pred_check_branch
      %44 = sbr.rel (0) target = $region13
    $region12: #{_forward_impl.1} parent=1 // pred_region
      %46 = vsyncadd [#allocation10], 0
      %s48 = sshll.u32 %s2, 4
      %s49 = int_to_ptr.hbm [resolvable:$true] %s48
      %s50 = sshll.u32 [#allocation11], 4
      %s51 = int_to_ptr.vmem [resolvable:$true] %s50
      %53 = dma.hbm_to_vmem [thread:$0]  %s49, 32, %s51, [#allocation10]
    $region13: #{_forward_impl.1} parent=1 // pred_fallthru
      _
    // Predicated region
    $region14: #{_forward_impl.1} parent=1 // pred_check
      _
    $region15: #{_forward_impl.1} parent=1 // pred_check_branch
      %55 = sbr.rel (0) target = $region17
    $region16: #{_forward_impl.1} parent=1 // pred_region
      %57 = vsyncadd [#allocation13], 0
      %s58 = sshll.u32 %s3, 4
      %s59 = int_to_ptr.hbm [resolvable:$true] %s58
      %s60 = sshll.u32 [#allocation12], 4
      %s61 = int_to_ptr.vmem [resolvable:$true] %s60
      %66 = dma.hbm_to_vmem [thread:$0]  %s59, 73728, %s61, [#allocation13], 256, 256, 16
    $region17: #{_forward_impl.1} parent=1 // pred_fallthru
      _
    // Predicated region
    $region18: #{_forward_impl.1} parent=1 // pred_check
      _
    $region19: #{_forward_impl.1} parent=1 // pred_check_branch
      %68 = sbr.rel (0) target = $region21
    $region20: #{_forward_impl.1} parent=1 // pred_region
      %70 = vsyncadd [#allocation13], 0
      %s72 = sshll.u32 %s4, 4
      %s73 = int_to_ptr.hbm [resolvable:$true] %s72
      %s74 = sshll.u32 [#allocation14], 4
      %s75 = int_to_ptr.vmem [resolvable:$true] %s74
      %77 = dma.hbm_to_vmem [thread:$0]  %s73, 32, %s75, [#allocation13]
    $region21: #{_forward_impl.1} parent=1 // pred_fallthru
      _
    // Predicated region
    $region22: #{_forward_impl.1} parent=1 // pred_check
      _
    $region23: #{_forward_impl.1} parent=1 // pred_check_branch
      %79 = sbr.rel (0) target = $region25
    $region24: #{_forward_impl.1} parent=1 // pred_region
      _
    $region25: #{_forward_impl.1} parent=1 // pred_fallthru
      _
    // Predicated region
    $region26: #{_forward_impl.1} parent=1 // pred_check
      _
    $region27: #{_forward_impl.1} parent=1 // pred_check_branch
      %81 = sbr.rel (0) target = $region29
    $region28: #{_forward_impl.1} parent=1 // pred_region
      %83 = vsyncadd [#allocation16], 0
      %s85 = sshll.u32 %s6, 4
      %s86 = int_to_ptr.hbm [resolvable:$true] %s85
      %s87 = sshll.u32 [#allocation15], 4
      %s88 = int_to_ptr.vmem [resolvable:$true] %s87
      %90 = dma.hbm_to_vmem [thread:$0]  %s86, 16, %s88, [#allocation16]
    $region29: #{_forward_impl.1} parent=1 // pred_fallthru
      _
    // Predicated region
    $region30: #{_forward_impl.1} parent=1 // pred_check
      _
    $region31: #{_forward_impl.1} parent=1 // pred_check_branch
      %92 = sbr.rel (0) target = $region33
    $region32: #{_forward_impl.1} parent=1 // pred_region
      %94 = dma.done [#allocation7], 2048
    $region33: #{_forward_impl.1} parent=1 // pred_fallthru
      _
    // Predicated region
    $region34: #{_forward_impl.1} parent=1 // pred_check
      _
    $region35: #{_forward_impl.1} parent=1 // pred_check_branch
      %96 = sbr.rel (0) target = $region37
    $region36: #{_forward_impl.1} parent=1 // pred_region
      %98 = dma.done [#allocation10], 2304
    $region37: #{_forward_impl.1} parent=1 // pred_fallthru
      _
    // Predicated region
    $region38: #{_forward_impl.1} parent=1 // pred_check
      _
    $region39: #{_forward_impl.1} parent=1 // pred_check_branch
      %100 = sbr.rel (0) target = $region41
    $region40: #{_forward_impl.1} parent=1 // pred_region
      %102 = dma.done [#allocation10], 32
    $region41: #{_forward_impl.1} parent=1 // pred_fallthru
      _
    // Predicated region
    $region42: #{_forward_impl.1} parent=1 // pred_check
      _
    $region43: #{_forward_impl.1} parent=1 // pred_check_branch
      %104 = sbr.rel (0) target = $region45
    $region44: #{_forward_impl.1} parent=1 // pred_region
      %106 = dma.done [#allocation13], 73728
    $region45: #{_forward_impl.1} parent=1 // pred_fallthru
      _
    // Predicated region
    $region46: #{_forward_impl.1} parent=1 // pred_check
      _
    $region47: #{_forward_impl.1} parent=1 // pred_check_branch
      %108 = sbr.rel (0) target = $region49
    $region48: #{_forward_impl.1} parent=1 // pred_region
      %110 = dma.done [#allocation13], 32
    $region49: #{_forward_impl.1} parent=1 // pred_fallthru
      _
    // Predicated region
    $region50: #{_forward_impl.1} parent=1 // pred_check
      _
    $region51: #{_forward_impl.1} parent=1 // pred_check_branch
      %112 = sbr.rel (0) target = $region53
    $region52: #{_forward_impl.1} parent=1 // pred_region
      %114 = dma.done [#allocation16], 16
    $region53: #{_forward_impl.1} parent=1 // pred_fallthru
      _
    %vm115 = vcmask 64512
    %116 = vst.msk [vmem:[#allocation2] sm:$0xff] %vm115, 0.0
    %vm117 = vcmask 58368
    %118 = vst.msk [vmem:[#allocation2 + $0x8] sm:$0x3] %vm117, 0.0
    %s119 = scalar_lea.vmem [#allocation2], 144
    %120 = vst.msk [vmem:[%s119] sm:$0xff] %vm115, 0.0
    %121 = vst.msk [vmem:[%s119 + $0x8] sm:$0x3] %vm117, 0.0
    %s122 = scalar_lea.vmem [#allocation2], 16
    %vm123 = vcmask 57344
    %124 = vst.msk [vmem:[%s122] sm:$0x1] %vm123, 0.0
    %125 = vst.msk [vmem:[%s122 + $0x10] sm:$0x1] %vm123, 0.0
    %126 = vst.msk [vmem:[%s122 + $0x20] sm:$0x1] %vm123, 0.0
    %127 = vst.msk [vmem:[%s122 + $0x30] sm:$0x1] %vm123, 0.0
    %128 = vst.msk [vmem:[%s122 + $0x40] sm:$0x1] %vm123, 0.0
    %129 = vst.msk [vmem:[%s122 + $0x50] sm:$0x1] %vm123, 0.0
    %130 = vst.msk [vmem:[%s122 + $0x60] sm:$0x1] %vm123, 0.0
    %131 = vst.msk [vmem:[%s122 + $0x70] sm:$0x1] %vm123, 0.0
    %132 = vst.msk [vmem:[%s122 + $0x9] sm:$0x1] %vm123, 0.0
    %133 = vst.msk [vmem:[%s122 + $0x19] sm:$0x1] %vm123, 0.0
    %134 = vst.msk [vmem:[%s122 + $0x29] sm:$0x1] %vm123, 0.0
    %135 = vst.msk [vmem:[%s122 + $0x39] sm:$0x1] %vm123, 0.0
    %136 = vst.msk [vmem:[%s122 + $0x49] sm:$0x1] %vm123, 0.0
    %137 = vst.msk [vmem:[%s122 + $0x59] sm:$0x1] %vm123, 0.0
    %138 = vst.msk [vmem:[%s122 + $0x69] sm:$0x1] %vm123, 0.0
    %139 = vst.msk [vmem:[%s122 + $0x79] sm:$0x1] %vm123, 0.0
    %v140 = vld [vmem:[#allocation6] sm:$0xff]
    %v141 = vld [vmem:[#allocation6 + $0x8] sm:$0xff]
    %v142 = vld [vmem:[#allocation6 + $0x10] sm:$0xff]
    %v143 = vld [vmem:[#allocation6 + $0x18] sm:$0xff]
    %v144 = vld [vmem:[#allocation6 + $0x20] sm:$0xff]
    %v145 = vld [vmem:[#allocation6 + $0x28] sm:$0xff]
    %v146 = vld [vmem:[#allocation6 + $0x30] sm:$0xff]
    %v147 = vld [vmem:[#allocation6 + $0x38] sm:$0xff]
    %148 = vst.msk [vmem:[%s122 + $0x1] sm:$0xff] %vm115, %v140
    %149 = vst.msk [vmem:[%s122 + $0x11] sm:$0xff] %vm115, %v141
    %150 = vst.msk [vmem:[%s122 + $0x21] sm:$0xff] %vm115, %v142
    %151 = vst.msk [vmem:[%s122 + $0x31] sm:$0xff] %vm115, %v143
    %152 = vst.msk [vmem:[%s122 + $0x41] sm:$0xff] %vm115, %v144
    %153 = vst.msk [vmem:[%s122 + $0x51] sm:$0xff] %vm115, %v145
    %154 = vst.msk [vmem:[%s122 + $0x61] sm:$0xff] %vm115, %v146
    %155 = vst.msk [vmem:[%s122 + $0x71] sm:$0xff] %vm115, %v147
    %s156 = scalar_lea.vmem [#allocation2], 160
    %157 = vst.msk [vmem:[%s156] sm:$0xff] %vm115, 0.0
    %158 = vst.msk [vmem:[%s156 + $0x8] sm:$0x3] %vm117, 0.0
    %s159 = scalar_lea.vmem [#allocation2], 304
    %160 = vst.msk [vmem:[%s159] sm:$0xff] %vm115, 0.0
    %161 = vst.msk [vmem:[%s159 + $0x8] sm:$0x3] %vm117, 0.0
    %s162 = scalar_lea.vmem [#allocation2], 176
    %163 = vst.msk [vmem:[%s162] sm:$0x1] %vm123, 0.0
    %164 = vst.msk [vmem:[%s162 + $0x10] sm:$0x1] %vm123, 0.0
    %165 = vst.msk [vmem:[%s162 + $0x20] sm:$0x1] %vm123, 0.0
    %166 = vst.msk [vmem:[%s162 + $0x30] sm:$0x1] %vm123, 0.0
    %167 = vst.msk [vmem:[%s162 + $0x40] sm:$0x1] %vm123, 0.0
    %168 = vst.msk [vmem:[%s162 + $0x50] sm:$0x1] %vm123, 0.0
    %169 = vst.msk [vmem:[%s162 + $0x60] sm:$0x1] %vm123, 0.0
    %170 = vst.msk [vmem:[%s162 + $0x70] sm:$0x1] %vm123, 0.0
    %171 = vst.msk [vmem:[%s162 + $0x9] sm:$0x1] %vm123, 0.0
    %172 = vst.msk [vmem:[%s162 + $0x19] sm:$0x1] %vm123, 0.0
    %173 = vst.msk [vmem:[%s162 + $0x29] sm:$0x1] %vm123, 0.0
    %174 = vst.msk [vmem:[%s162 + $0x39] sm:$0x1] %vm123, 0.0
    %175 = vst.msk [vmem:[%s162 + $0x49] sm:$0x1] %vm123, 0.0
    %176 = vst.msk [vmem:[%s162 + $0x59] sm:$0x1] %vm123, 0.0
    %177 = vst.msk [vmem:[%s162 + $0x69] sm:$0x1] %vm123, 0.0
    %178 = vst.msk [vmem:[%s162 + $0x79] sm:$0x1] %vm123, 0.0
    %s179 = scalar_lea.vmem [#allocation6], 64
    %v180 = vld [vmem:[%s179] sm:$0xff]
    %v181 = vld [vmem:[%s179 + $0x8] sm:$0xff]
    %v182 = vld [vmem:[%s179 + $0x10] sm:$0xff]
    %v183 = vld [vmem:[%s179 + $0x18] sm:$0xff]
    %v184 = vld [vmem:[%s179 + $0x20] sm:$0xff]
    %v185 = vld [vmem:[%s179 + $0x28] sm:$0xff]
    %v186 = vld [vmem:[%s179 + $0x30] sm:$0xff]
    %v187 = vld [vmem:[%s179 + $0x38] sm:$0xff]
    %188 = vst.msk [vmem:[%s162 + $0x1] sm:$0xff] %vm115, %v180
    %189 = vst.msk [vmem:[%s162 + $0x11] sm:$0xff] %vm115, %v181
    %190 = vst.msk [vmem:[%s162 + $0x21] sm:$0xff] %vm115, %v182
    %191 = vst.msk [vmem:[%s162 + $0x31] sm:$0xff] %vm115, %v183
    %192 = vst.msk [vmem:[%s162 + $0x41] sm:$0xff] %vm115, %v184
    %193 = vst.msk [vmem:[%s162 + $0x51] sm:$0xff] %vm115, %v185
    %194 = vst.msk [vmem:[%s162 + $0x61] sm:$0xff] %vm115, %v186
    %195 = vst.msk [vmem:[%s162 + $0x71] sm:$0xff] %vm115, %v187
    %v196 = vld [vmem:[#allocation2] sm:$0xff]
    %v197 = vld [vmem:[#allocation2 + $0x10] sm:$0xff]
    %v198 = vld [vmem:[#allocation2 + $0x20] sm:$0xff]
    %v199 = vld [vmem:[#allocation2 + $0x30] sm:$0xff]
    %v200 = vld [vmem:[#allocation2 + $0x40] sm:$0xff]
    %v201 = vld [vmem:[#allocation2 + $0x50] sm:$0xff]
    %v202 = vld [vmem:[#allocation2 + $0x60] sm:$0xff]
    %v203 = vld [vmem:[#allocation2 + $0x70] sm:$0xff]
    %204 = vst.msk [vmem:[#allocation4] sm:$0xff] %vm115, %v196
    %205 = vst.msk [vmem:[#allocation4 + $0x8] sm:$0xff] %vm115, %v197
    %206 = vst.msk [vmem:[#allocation4 + $0x10] sm:$0xff] %vm115, %v198
    %207 = vst.msk [vmem:[#allocation4 + $0x18] sm:$0xff] %vm115, %v199
    %208 = vst.msk [vmem:[#allocation4 + $0x20] sm:$0xff] %vm115, %v200
    %209 = vst.msk [vmem:[#allocation4 + $0x28] sm:$0xff] %vm115, %v201
    %210 = vst.msk [vmem:[#allocation4 + $0x30] sm:$0xff] %vm115, %v202
    %211 = vst.msk [vmem:[#allocation4 + $0x38] sm:$0xff] %vm115, %v203
    %v212 = vld [vmem:[#allocation2 + $0x1] sm:$0xff]
    %v213 = vld [vmem:[#allocation2 + $0x11] sm:$0xff]
    %v214 = vld [vmem:[#allocation2 + $0x21] sm:$0xff]
    %v215 = vld [vmem:[#allocation2 + $0x31] sm:$0xff]
    %v216 = vld [vmem:[#allocation2 + $0x41] sm:$0xff]
    %v217 = vld [vmem:[#allocation2 + $0x51] sm:$0xff]
    %v218 = vld [vmem:[#allocation2 + $0x61] sm:$0xff]
    %v219 = vld [vmem:[#allocation2 + $0x71] sm:$0xff]
    %228 = vrot.lane.b32.xlu0 %v212, 8
    %v229 = vpop.permute.xlu0 %228
    %230 = vrot.lane.b32.xlu0 %v213, 8
    %v231 = vpop.permute.xlu0 %230
    %232 = vrot.lane.b32.xlu0 %v214, 8
    %v233 = vpop.permute.xlu0 %232
    %234 = vrot.lane.b32.xlu0 %v215, 8
    %v235 = vpop.permute.xlu0 %234
    %236 = vrot.lane.b32.xlu0 %v216, 8
    %v237 = vpop.permute.xlu0 %236
    %238 = vrot.lane.b32.xlu0 %v217, 8
    %v239 = vpop.permute.xlu0 %238
    %240 = vrot.lane.b32.xlu0 %v218, 8
    %v241 = vpop.permute.xlu0 %240
    %242 = vrot.lane.b32.xlu0 %v219, 8
    %v243 = vpop.permute.xlu0 %242
    %vm252 = vcmask 130112
    %253 = vst.msk [vmem:[#allocation4] sm:$0xff] %vm252, %v229
    %254 = vst.msk [vmem:[#allocation4 + $0x8] sm:$0xff] %vm252, %v231
    %255 = vst.msk [vmem:[#allocation4 + $0x10] sm:$0xff] %vm252, %v233
    %256 = vst.msk [vmem:[#allocation4 + $0x18] sm:$0xff] %vm252, %v235
    %257 = vst.msk [vmem:[#allocation4 + $0x20] sm:$0xff] %vm252, %v237
    %258 = vst.msk [vmem:[#allocation4 + $0x28] sm:$0xff] %vm252, %v239
    %259 = vst.msk [vmem:[#allocation4 + $0x30] sm:$0xff] %vm252, %v241
    %260 = vst.msk [vmem:[#allocation4 + $0x38] sm:$0xff] %vm252, %v243
    %v261 = vld [vmem:[#allocation2 + $0x2] sm:$0xff]
    %v262 = vld [vmem:[#allocation2 + $0x12] sm:$0xff]
    %v263 = vld [vmem:[#allocation2 + $0x22] sm:$0xff]
    %v264 = vld [vmem:[#allocation2 + $0x32] sm:$0xff]
    %v265 = vld [vmem:[#allocation2 + $0x42] sm:$0xff]
    %v266 = vld [vmem:[#allocation2 + $0x52] sm:$0xff]
    %v267 = vld [vmem:[#allocation2 + $0x62] sm:$0xff]
    %v268 = vld [vmem:[#allocation2 + $0x72] sm:$0xff]
    %277 = vrot.lane.b32.xlu0 %v261, 16
    %v278 = vpop.permute.xlu0 %277
    %279 = vrot.lane.b32.xlu0 %v262, 16
    %v280 = vpop.permute.xlu0 %279
    %281 = vrot.lane.b32.xlu0 %v263, 16
    %v282 = vpop.permute.xlu0 %281
    %283 = vrot.lane.b32.xlu0 %v264, 16
    %v284 = vpop.permute.xlu0 %283
    %285 = vrot.lane.b32.xlu0 %v265, 16
    %v286 = vpop.permute.xlu0 %285
    %287 = vrot.lane.b32.xlu0 %v266, 16
    %v288 = vpop.permute.xlu0 %287
    %289 = vrot.lane.b32.xlu0 %v267, 16
    %v290 = vpop.permute.xlu0 %289
    %291 = vrot.lane.b32.xlu0 %v268, 16
    %v292 = vpop.permute.xlu0 %291
    %vm301 = vcmask 195712
    %302 = vst.msk [vmem:[#allocation4] sm:$0xff] %vm301, %v278
    %303 = vst.msk [vmem:[#allocation4 + $0x8] sm:$0xff] %vm301, %v280
    %304 = vst.msk [vmem:[#allocation4 + $0x10] sm:$0xff] %vm301, %v282
    %305 = vst.msk [vmem:[#allocation4 + $0x18] sm:$0xff] %vm301, %v284
    %306 = vst.msk [vmem:[#allocation4 + $0x20] sm:$0xff] %vm301, %v286
    %307 = vst.msk [vmem:[#allocation4 + $0x28] sm:$0xff] %vm301, %v288
    %308 = vst.msk [vmem:[#allocation4 + $0x30] sm:$0xff] %vm301, %v290
    %309 = vst.msk [vmem:[#allocation4 + $0x38] sm:$0xff] %vm301, %v292
    %v310 = vld [vmem:[%s122] sm:$0xff]
    %v311 = vld [vmem:[%s122 + $0x10] sm:$0xff]
    %v312 = vld [vmem:[%s122 + $0x20] sm:$0xff]
    %v313 = vld [vmem:[%s122 + $0x30] sm:$0xff]
    %v314 = vld [vmem:[%s122 + $0x40] sm:$0xff]
    %v315 = vld [vmem:[%s122 + $0x50] sm:$0xff]
    %v316 = vld [vmem:[%s122 + $0x60] sm:$0xff]
    %v317 = vld [vmem:[%s122 + $0x70] sm:$0xff]
    %326 = vrot.lane.b32.xlu0 %v310, 24
    %v327 = vpop.permute.xlu0 %326
    %328 = vrot.lane.b32.xlu0 %v311, 24
    %v329 = vpop.permute.xlu0 %328
    %330 = vrot.lane.b32.xlu0 %v312, 24
    %v331 = vpop.permute.xlu0 %330
    %332 = vrot.lane.b32.xlu0 %v313, 24
    %v333 = vpop.permute.xlu0 %332
    %334 = vrot.lane.b32.xlu0 %v314, 24
    %v335 = vpop.permute.xlu0 %334
    %336 = vrot.lane.b32.xlu0 %v315, 24
    %v337 = vpop.permute.xlu0 %336
    %338 = vrot.lane.b32.xlu0 %v316, 24
    %v339 = vpop.permute.xlu0 %338
    %340 = vrot.lane.b32.xlu0 %v317, 24
    %v341 = vpop.permute.xlu0 %340
    %vm350 = vcmask 261312
    %351 = vst.msk [vmem:[#allocation4] sm:$0xff] %vm350, %v327
    %352 = vst.msk [vmem:[#allocation4 + $0x8] sm:$0xff] %vm350, %v329
    %353 = vst.msk [vmem:[#allocation4 + $0x10] sm:$0xff] %vm350, %v331
    %354 = vst.msk [vmem:[#allocation4 + $0x18] sm:$0xff] %vm350, %v333
    %355 = vst.msk [vmem:[#allocation4 + $0x20] sm:$0xff] %vm350, %v335
    %356 = vst.msk [vmem:[#allocation4 + $0x28] sm:$0xff] %vm350, %v337
    %357 = vst.msk [vmem:[#allocation4 + $0x30] sm:$0xff] %vm350, %v339
    %358 = vst.msk [vmem:[#allocation4 + $0x38] sm:$0xff] %vm350, %v341
    %v359 = vld [vmem:[%s122 + $0x1] sm:$0xff]
    %v360 = vld [vmem:[%s122 + $0x11] sm:$0xff]
    %v361 = vld [vmem:[%s122 + $0x21] sm:$0xff]
    %v362 = vld [vmem:[%s122 + $0x31] sm:$0xff]
    %v363 = vld [vmem:[%s122 + $0x41] sm:$0xff]
    %v364 = vld [vmem:[%s122 + $0x51] sm:$0xff]
    %v365 = vld [vmem:[%s122 + $0x61] sm:$0xff]
    %v366 = vld [vmem:[%s122 + $0x71] sm:$0xff]
    %375 = vrot.lane.b32.xlu0 %v359, 32
    %v376 = vpop.permute.xlu0 %375
    %377 = vrot.lane.b32.xlu0 %v360, 32
    %v378 = vpop.permute.xlu0 %377
    %379 = vrot.lane.b32.xlu0 %v361, 32
    %v380 = vpop.permute.xlu0 %379
    %381 = vrot.lane.b32.xlu0 %v362, 32
    %v382 = vpop.permute.xlu0 %381
    %383 = vrot.lane.b32.xlu0 %v363, 32
    %v384 = vpop.permute.xlu0 %383
    %385 = vrot.lane.b32.xlu0 %v364, 32
    %v386 = vpop.permute.xlu0 %385
    %387 = vrot.lane.b32.xlu0 %v365, 32
    %v388 = vpop.permute.xlu0 %387
    %389 = vrot.lane.b32.xlu0 %v366, 32
    %v390 = vpop.permute.xlu0 %389
    %vm399 = vcmask 326912
    %400 = vst.msk [vmem:[#allocation4] sm:$0xff] %vm399, %v376
    %401 = vst.msk [vmem:[#allocation4 + $0x8] sm:$0xff] %vm399, %v378
    %402 = vst.msk [vmem:[#allocation4 + $0x10] sm:$0xff] %vm399, %v380
    %403 = vst.msk [vmem:[#allocation4 + $0x18] sm:$0xff] %vm399, %v382
    %404 = vst.msk [vmem:[#allocation4 + $0x20] sm:$0xff] %vm399, %v384
    %405 = vst.msk [vmem:[#allocation4 + $0x28] sm:$0xff] %vm399, %v386
    %406 = vst.msk [vmem:[#allocation4 + $0x30] sm:$0xff] %vm399, %v388
    %407 = vst.msk [vmem:[#allocation4 + $0x38] sm:$0xff] %vm399, %v390
    %v408 = vld [vmem:[%s122 + $0x2] sm:$0xff]
    %v409 = vld [vmem:[%s122 + $0x12] sm:$0xff]
    %v410 = vld [vmem:[%s122 + $0x22] sm:$0xff]
    %v411 = vld [vmem:[%s122 + $0x32] sm:$0xff]
    %v412 = vld [vmem:[%s122 + $0x42] sm:$0xff]
    %v413 = vld [vmem:[%s122 + $0x52] sm:$0xff]
    %v414 = vld [vmem:[%s122 + $0x62] sm:$0xff]
    %v415 = vld [vmem:[%s122 + $0x72] sm:$0xff]
    %424 = vrot.lane.b32.xlu0 %v408, 40
    %v425 = vpop.permute.xlu0 %424
    %426 = vrot.lane.b32.xlu0 %v409, 40
    %v427 = vpop.permute.xlu0 %426
    %428 = vrot.lane.b32.xlu0 %v410, 40
    %v429 = vpop.permute.xlu0 %428
    %430 = vrot.lane.b32.xlu0 %v411, 40
    %v431 = vpop.permute.xlu0 %430
    %432 = vrot.lane.b32.xlu0 %v412, 40
    %v433 = vpop.permute.xlu0 %432
    %434 = vrot.lane.b32.xlu0 %v413, 40
    %v435 = vpop.permute.xlu0 %434
    %436 = vrot.lane.b32.xlu0 %v414, 40
    %v437 = vpop.permute.xlu0 %436
    %438 = vrot.lane.b32.xlu0 %v415, 40
    %v439 = vpop.permute.xlu0 %438
    %vm448 = vcmask 392512
    %449 = vst.msk [vmem:[#allocation4] sm:$0xff] %vm448, %v425
    %450 = vst.msk [vmem:[#allocation4 + $0x8] sm:$0xff] %vm448, %v427
    %451 = vst.msk [vmem:[#allocation4 + $0x10] sm:$0xff] %vm448, %v429
    %452 = vst.msk [vmem:[#allocation4 + $0x18] sm:$0xff] %vm448, %v431
    %453 = vst.msk [vmem:[#allocation4 + $0x20] sm:$0xff] %vm448, %v433
    %454 = vst.msk [vmem:[#allocation4 + $0x28] sm:$0xff] %vm448, %v435
    %455 = vst.msk [vmem:[#allocation4 + $0x30] sm:$0xff] %vm448, %v437
    %456 = vst.msk [vmem:[#allocation4 + $0x38] sm:$0xff] %vm448, %v439
    %s457 = scalar_lea.vmem [#allocation2], 32
    %v458 = vld [vmem:[%s457] sm:$0xff]
    %v459 = vld [vmem:[%s457 + $0x10] sm:$0xff]
    %v460 = vld [vmem:[%s457 + $0x20] sm:$0xff]
    %v461 = vld [vmem:[%s457 + $0x30] sm:$0xff]
    %v462 = vld [vmem:[%s457 + $0x40] sm:$0xff]
    %v463 = vld [vmem:[%s457 + $0x50] sm:$0xff]
    %v464 = vld [vmem:[%s457 + $0x60] sm:$0xff]
    %v465 = vld [vmem:[%s457 + $0x70] sm:$0xff]
    %474 = vrot.lane.b32.xlu0 %v458, 48
    %v475 = vpop.permute.xlu0 %474
    %476 = vrot.lane.b32.xlu0 %v459, 48
    %v477 = vpop.permute.xlu0 %476
    %478 = vrot.lane.b32.xlu0 %v460, 48
    %v479 = vpop.permute.xlu0 %478
    %480 = vrot.lane.b32.xlu0 %v461, 48
    %v481 = vpop.permute.xlu0 %480
    %482 = vrot.lane.b32.xlu0 %v462, 48
    %v483 = vpop.permute.xlu0 %482
    %484 = vrot.lane.b32.xlu0 %v463, 48
    %v485 = vpop.permute.xlu0 %484
    %486 = vrot.lane.b32.xlu0 %v464, 48
    %v487 = vpop.permute.xlu0 %486
    %488 = vrot.lane.b32.xlu0 %v465, 48
    %v489 = vpop.permute.xlu0 %488
    %vm498 = vcmask 458112
    %499 = vst.msk [vmem:[#allocation4] sm:$0xff] %vm498, %v475
    %500 = vst.msk [vmem:[#allocation4 + $0x8] sm:$0xff] %vm498, %v477
    %501 = vst.msk [vmem:[#allocation4 + $0x10] sm:$0xff] %vm498, %v479
    %502 = vst.msk [vmem:[#allocation4 + $0x18] sm:$0xff] %vm498, %v481
    %503 = vst.msk [vmem:[#allocation4 + $0x20] sm:$0xff] %vm498, %v483
    %504 = vst.msk [vmem:[#allocation4 + $0x28] sm:$0xff] %vm498, %v485
    %505 = vst.msk [vmem:[#allocation4 + $0x30] sm:$0xff] %vm498, %v487
    %506 = vst.msk [vmem:[#allocation4 + $0x38] sm:$0xff] %vm498, %v489
    %v507 = vld [vmem:[%s457 + $0x1] sm:$0xff]
    %v508 = vld [vmem:[%s457 + $0x11] sm:$0xff]
    %v509 = vld [vmem:[%s457 + $0x21] sm:$0xff]
    %v510 = vld [vmem:[%s457 + $0x31] sm:$0xff]
    %v511 = vld [vmem:[%s457 + $0x41] sm:$0xff]
    %v512 = vld [vmem:[%s457 + $0x51] sm:$0xff]
    %v513 = vld [vmem:[%s457 + $0x61] sm:$0xff]
    %v514 = vld [vmem:[%s457 + $0x71] sm:$0xff]
    %523 = vrot.lane.b32.xlu0 %v507, 56
    %v524 = vpop.permute.xlu0 %523
    %525 = vrot.lane.b32.xlu0 %v508, 56
    %v526 = vpop.permute.xlu0 %525
    %527 = vrot.lane.b32.xlu0 %v509, 56
    %v528 = vpop.permute.xlu0 %527
    %529 = vrot.lane.b32.xlu0 %v510, 56
    %v530 = vpop.permute.xlu0 %529
    %531 = vrot.lane.b32.xlu0 %v511, 56
    %v532 = vpop.permute.xlu0 %531
    %533 = vrot.lane.b32.xlu0 %v512, 56
    %v534 = vpop.permute.xlu0 %533
    %535 = vrot.lane.b32.xlu0 %v513, 56
    %v536 = vpop.permute.xlu0 %535
    %537 = vrot.lane.b32.xlu0 %v514, 56
    %v538 = vpop.permute.xlu0 %537
    %vm547 = vcmask 523712
    %548 = vst.msk [vmem:[#allocation4] sm:$0xff] %vm547, %v524
    %549 = vst.msk [vmem:[#allocation4 + $0x8] sm:$0xff] %vm547, %v526
    %550 = vst.msk [vmem:[#allocation4 + $0x10] sm:$0xff] %vm547, %v528
    %551 = vst.msk [vmem:[#allocation4 + $0x18] sm:$0xff] %vm547, %v530
    %552 = vst.msk [vmem:[#allocation4 + $0x20] sm:$0xff] %vm547, %v532
    %553 = vst.msk [vmem:[#allocation4 + $0x28] sm:$0xff] %vm547, %v534
    %554 = vst.msk [vmem:[#allocation4 + $0x30] sm:$0xff] %vm547, %v536
    %555 = vst.msk [vmem:[#allocation4 + $0x38] sm:$0xff] %vm547, %v538
    %v556 = vld [vmem:[%s457 + $0x2] sm:$0xff]
    %v557 = vld [vmem:[%s457 + $0x12] sm:$0xff]
    %v558 = vld [vmem:[%s457 + $0x22] sm:$0xff]
    %v559 = vld [vmem:[%s457 + $0x32] sm:$0xff]
    %v560 = vld [vmem:[%s457 + $0x42] sm:$0xff]
    %v561 = vld [vmem:[%s457 + $0x52] sm:$0xff]
    %v562 = vld [vmem:[%s457 + $0x62] sm:$0xff]
    %v563 = vld [vmem:[%s457 + $0x72] sm:$0xff]
    %572 = vrot.lane.b32.xlu0 %v556, 64
    %v573 = vpop.permute.xlu0 %572
    %574 = vrot.lane.b32.xlu0 %v557, 64
    %v575 = vpop.permute.xlu0 %574
    %576 = vrot.lane.b32.xlu0 %v558, 64
    %v577 = vpop.permute.xlu0 %576
    %578 = vrot.lane.b32.xlu0 %v559, 64
    %v579 = vpop.permute.xlu0 %578
    %580 = vrot.lane.b32.xlu0 %v560, 64
    %v581 = vpop.permute.xlu0 %580
    %582 = vrot.lane.b32.xlu0 %v561, 64
    %v583 = vpop.permute.xlu0 %582
    %584 = vrot.lane.b32.xlu0 %v562, 64
    %v585 = vpop.permute.xlu0 %584
    %586 = vrot.lane.b32.xlu0 %v563, 64
    %v587 = vpop.permute.xlu0 %586
    %vm596 = vcmask 589312
    %597 = vst.msk [vmem:[#allocation4] sm:$0xff] %vm596, %v573
    %598 = vst.msk [vmem:[#allocation4 + $0x8] sm:$0xff] %vm596, %v575
    %599 = vst.msk [vmem:[#allocation4 + $0x10] sm:$0xff] %vm596, %v577
    %600 = vst.msk [vmem:[#allocation4 + $0x18] sm:$0xff] %vm596, %v579
    %601 = vst.msk [vmem:[#allocation4 + $0x20] sm:$0xff] %vm596, %v581
    %602 = vst.msk [vmem:[#allocation4 + $0x28] sm:$0xff] %vm596, %v583
    %603 = vst.msk [vmem:[#allocation4 + $0x30] sm:$0xff] %vm596, %v585
    %604 = vst.msk [vmem:[#allocation4 + $0x38] sm:$0xff] %vm596, %v587
    %v605 = vld [vmem:[%s156] sm:$0xff]
    %v606 = vld [vmem:[%s156 + $0x10] sm:$0xff]
    %v607 = vld [vmem:[%s156 + $0x20] sm:$0xff]
    %v608 = vld [vmem:[%s156 + $0x30] sm:$0xff]
    %v609 = vld [vmem:[%s156 + $0x40] sm:$0xff]
    %v610 = vld [vmem:[%s156 + $0x50] sm:$0xff]
    %v611 = vld [vmem:[%s156 + $0x60] sm:$0xff]
    %v612 = vld [vmem:[%s156 + $0x70] sm:$0xff]
    %613 = vst.msk [vmem:[#allocation4 + $0x40] sm:$0xff] %vm115, %v605
    %614 = vst.msk [vmem:[#allocation4 + $0x48] sm:$0xff] %vm115, %v606
    %615 = vst.msk [vmem:[#allocation4 + $0x50] sm:$0xff] %vm115, %v607
    %616 = vst.msk [vmem:[#allocation4 + $0x58] sm:$0xff] %vm115, %v608
    %617 = vst.msk [vmem:[#allocation4 + $0x60] sm:$0xff] %vm115, %v609
    %618 = vst.msk [vmem:[#allocation4 + $0x68] sm:$0xff] %vm115, %v610
    %619 = vst.msk [vmem:[#allocation4 + $0x70] sm:$0xff] %vm115, %v611
    %620 = vst.msk [vmem:[#allocation4 + $0x78] sm:$0xff] %vm115, %v612
    %v621 = vld [vmem:[%s156 + $0x1] sm:$0xff]
    %v622 = vld [vmem:[%s156 + $0x11] sm:$0xff]
    %v623 = vld [vmem:[%s156 + $0x21] sm:$0xff]
    %v624 = vld [vmem:[%s156 + $0x31] sm:$0xff]
    %v625 = vld [vmem:[%s156 + $0x41] sm:$0xff]
    %v626 = vld [vmem:[%s156 + $0x51] sm:$0xff]
    %v627 = vld [vmem:[%s156 + $0x61] sm:$0xff]
    %v628 = vld [vmem:[%s156 + $0x71] sm:$0xff]
    %637 = vrot.lane.b32.xlu0 %v621, 8
    %v638 = vpop.permute.xlu0 %637
    %639 = vrot.lane.b32.xlu0 %v622, 8
    %v640 = vpop.permute.xlu0 %639
    %641 = vrot.lane.b32.xlu0 %v623, 8
    %v642 = vpop.permute.xlu0 %641
    %643 = vrot.lane.b32.xlu0 %v624, 8
    %v644 = vpop.permute.xlu0 %643
    %645 = vrot.lane.b32.xlu0 %v625, 8
    %v646 = vpop.permute.xlu0 %645
    %647 = vrot.lane.b32.xlu0 %v626, 8
    %v648 = vpop.permute.xlu0 %647
    %649 = vrot.lane.b32.xlu0 %v627, 8
    %v650 = vpop.permute.xlu0 %649
    %651 = vrot.lane.b32.xlu0 %v628, 8
    %v652 = vpop.permute.xlu0 %651
    %661 = vst.msk [vmem:[#allocation4 + $0x40] sm:$0xff] %vm252, %v638
    %662 = vst.msk [vmem:[#allocation4 + $0x48] sm:$0xff] %vm252, %v640
    %663 = vst.msk [vmem:[#allocation4 + $0x50] sm:$0xff] %vm252, %v642
    %664 = vst.msk [vmem:[#allocation4 + $0x58] sm:$0xff] %vm252, %v644
    %665 = vst.msk [vmem:[#allocation4 + $0x60] sm:$0xff] %vm252, %v646
    %666 = vst.msk [vmem:[#allocation4 + $0x68] sm:$0xff] %vm252, %v648
    %667 = vst.msk [vmem:[#allocation4 + $0x70] sm:$0xff] %vm252, %v650
    %668 = vst.msk [vmem:[#allocation4 + $0x78] sm:$0xff] %vm252, %v652
    %v669 = vld [vmem:[%s156 + $0x2] sm:$0xff]
    %v670 = vld [vmem:[%s156 + $0x12] sm:$0xff]
    %v671 = vld [vmem:[%s156 + $0x22] sm:$0xff]
    %v672 = vld [vmem:[%s156 + $0x32] sm:$0xff]
    %v673 = vld [vmem:[%s156 + $0x42] sm:$0xff]
    %v674 = vld [vmem:[%s156 + $0x52] sm:$0xff]
    %v675 = vld [vmem:[%s156 + $0x62] sm:$0xff]
    %v676 = vld [vmem:[%s156 + $0x72] sm:$0xff]
    %685 = vrot.lane.b32.xlu0 %v669, 16
    %v686 = vpop.permute.xlu0 %685
    %687 = vrot.lane.b32.xlu0 %v670, 16
    %v688 = vpop.permute.xlu0 %687
    %689 = vrot.lane.b32.xlu0 %v671, 16
    %v690 = vpop.permute.xlu0 %689
    %691 = vrot.lane.b32.xlu0 %v672, 16
    %v692 = vpop.permute.xlu0 %691
    %693 = vrot.lane.b32.xlu0 %v673, 16
    %v694 = vpop.permute.xlu0 %693
    %695 = vrot.lane.b32.xlu0 %v674, 16
    %v696 = vpop.permute.xlu0 %695
    %697 = vrot.lane.b32.xlu0 %v675, 16
    %v698 = vpop.permute.xlu0 %697
    %699 = vrot.lane.b32.xlu0 %v676, 16
    %v700 = vpop.permute.xlu0 %699
    %709 = vst.msk [vmem:[#allocation4 + $0x40] sm:$0xff] %vm301, %v686
    %710 = vst.msk [vmem:[#allocation4 + $0x48] sm:$0xff] %vm301, %v688
    %711 = vst.msk [vmem:[#allocation4 + $0x50] sm:$0xff] %vm301, %v690
    %712 = vst.msk [vmem:[#allocation4 + $0x58] sm:$0xff] %vm301, %v692
    %713 = vst.msk [vmem:[#allocation4 + $0x60] sm:$0xff] %vm301, %v694
    %714 = vst.msk [vmem:[#allocation4 + $0x68] sm:$0xff] %vm301, %v696
    %715 = vst.msk [vmem:[#allocation4 + $0x70] sm:$0xff] %vm301, %v698
    %716 = vst.msk [vmem:[#allocation4 + $0x78] sm:$0xff] %vm301, %v700
    %v717 = vld [vmem:[%s162] sm:$0xff]
    %v718 = vld [vmem:[%s162 + $0x10] sm:$0xff]
    %v719 = vld [vmem:[%s162 + $0x20] sm:$0xff]
    %v720 = vld [vmem:[%s162 + $0x30] sm:$0xff]
    %v721 = vld [vmem:[%s162 + $0x40] sm:$0xff]
    %v722 = vld [vmem:[%s162 + $0x50] sm:$0xff]
    %v723 = vld [vmem:[%s162 + $0x60] sm:$0xff]
    %v724 = vld [vmem:[%s162 + $0x70] sm:$0xff]
    %733 = vrot.lane.b32.xlu0 %v717, 24
    %v734 = vpop.permute.xlu0 %733
    %735 = vrot.lane.b32.xlu0 %v718, 24
    %v736 = vpop.permute.xlu0 %735
    %737 = vrot.lane.b32.xlu0 %v719, 24
    %v738 = vpop.permute.xlu0 %737
    %739 = vrot.lane.b32.xlu0 %v720, 24
    %v740 = vpop.permute.xlu0 %739
    %741 = vrot.lane.b32.xlu0 %v721, 24
    %v742 = vpop.permute.xlu0 %741
    %743 = vrot.lane.b32.xlu0 %v722, 24
    %v744 = vpop.permute.xlu0 %743
    %745 = vrot.lane.b32.xlu0 %v723, 24
    %v746 = vpop.permute.xlu0 %745
    %747 = vrot.lane.b32.xlu0 %v724, 24
    %v748 = vpop.permute.xlu0 %747
    %757 = vst.msk [vmem:[#allocation4 + $0x40] sm:$0xff] %vm350, %v734
    %758 = vst.msk [vmem:[#allocation4 + $0x48] sm:$0xff] %vm350, %v736
    %759 = vst.msk [vmem:[#allocation4 + $0x50] sm:$0xff] %vm350, %v738
    %760 = vst.msk [vmem:[#allocation4 + $0x58] sm:$0xff] %vm350, %v740
    %761 = vst.msk [vmem:[#allocation4 + $0x60] sm:$0xff] %vm350, %v742
    %762 = vst.msk [vmem:[#allocation4 + $0x68] sm:$0xff] %vm350, %v744
    %763 = vst.msk [vmem:[#allocation4 + $0x70] sm:$0xff] %vm350, %v746
    %764 = vst.msk [vmem:[#allocation4 + $0x78] sm:$0xff] %vm350, %v748
    %v765 = vld [vmem:[%s162 + $0x1] sm:$0xff]
    %v766 = vld [vmem:[%s162 + $0x11] sm:$0xff]
    %v767 = vld [vmem:[%s162 + $0x21] sm:$0xff]
    %v768 = vld [vmem:[%s162 + $0x31] sm:$0xff]
    %v769 = vld [vmem:[%s162 + $0x41] sm:$0xff]
    %v770 = vld [vmem:[%s162 + $0x51] sm:$0xff]
    %v771 = vld [vmem:[%s162 + $0x61] sm:$0xff]
    %v772 = vld [vmem:[%s162 + $0x71] sm:$0xff]
    %781 = vrot.lane.b32.xlu0 %v765, 32
    %v782 = vpop.permute.xlu0 %781
    %783 = vrot.lane.b32.xlu0 %v766, 32
    %v784 = vpop.permute.xlu0 %783
    %785 = vrot.lane.b32.xlu0 %v767, 32
    %v786 = vpop.permute.xlu0 %785
    %787 = vrot.lane.b32.xlu0 %v768, 32
    %v788 = vpop.permute.xlu0 %787
    %789 = vrot.lane.b32.xlu0 %v769, 32
    %v790 = vpop.permute.xlu0 %789
    %791 = vrot.lane.b32.xlu0 %v770, 32
    %v792 = vpop.permute.xlu0 %791
    %793 = vrot.lane.b32.xlu0 %v771, 32
    %v794 = vpop.permute.xlu0 %793
    %795 = vrot.lane.b32.xlu0 %v772, 32
    %v796 = vpop.permute.xlu0 %795
    %805 = vst.msk [vmem:[#allocation4 + $0x40] sm:$0xff] %vm399, %v782
    %806 = vst.msk [vmem:[#allocation4 + $0x48] sm:$0xff] %vm399, %v784
    %807 = vst.msk [vmem:[#allocation4 + $0x50] sm:$0xff] %vm399, %v786
    %808 = vst.msk [vmem:[#allocation4 + $0x58] sm:$0xff] %vm399, %v788
    %809 = vst.msk [vmem:[#allocation4 + $0x60] sm:$0xff] %vm399, %v790
    %810 = vst.msk [vmem:[#allocation4 + $0x68] sm:$0xff] %vm399, %v792
    %811 = vst.msk [vmem:[#allocation4 + $0x70] sm:$0xff] %vm399, %v794
    %812 = vst.msk [vmem:[#allocation4 + $0x78] sm:$0xff] %vm399, %v796
    %v813 = vld [vmem:[%s162 + $0x2] sm:$0xff]
    %v814 = vld [vmem:[%s162 + $0x12] sm:$0xff]
    %v815 = vld [vmem:[%s162 + $0x22] sm:$0xff]
    %v816 = vld [vmem:[%s162 + $0x32] sm:$0xff]
    %v817 = vld [vmem:[%s162 + $0x42] sm:$0xff]
    %v818 = vld [vmem:[%s162 + $0x52] sm:$0xff]
    %v819 = vld [vmem:[%s162 + $0x62] sm:$0xff]
    %v820 = vld [vmem:[%s162 + $0x72] sm:$0xff]
    %829 = vrot.lane.b32.xlu0 %v813, 40
    %v830 = vpop.permute.xlu0 %829
    %831 = vrot.lane.b32.xlu0 %v814, 40
    %v832 = vpop.permute.xlu0 %831
    %833 = vrot.lane.b32.xlu0 %v815, 40
    %v834 = vpop.permute.xlu0 %833
    %835 = vrot.lane.b32.xlu0 %v816, 40
    %v836 = vpop.permute.xlu0 %835
    %837 = vrot.lane.b32.xlu0 %v817, 40
    %v838 = vpop.permute.xlu0 %837
    %839 = vrot.lane.b32.xlu0 %v818, 40
    %v840 = vpop.permute.xlu0 %839
    %841 = vrot.lane.b32.xlu0 %v819, 40
    %v842 = vpop.permute.xlu0 %841
    %843 = vrot.lane.b32.xlu0 %v820, 40
    %v844 = vpop.permute.xlu0 %843
    %853 = vst.msk [vmem:[#allocation4 + $0x40] sm:$0xff] %vm448, %v830
    %854 = vst.msk [vmem:[#allocation4 + $0x48] sm:$0xff] %vm448, %v832
    %855 = vst.msk [vmem:[#allocation4 + $0x50] sm:$0xff] %vm448, %v834
    %856 = vst.msk [vmem:[#allocation4 + $0x58] sm:$0xff] %vm448, %v836
    %857 = vst.msk [vmem:[#allocation4 + $0x60] sm:$0xff] %vm448, %v838
    %858 = vst.msk [vmem:[#allocation4 + $0x68] sm:$0xff] %vm448, %v840
    %859 = vst.msk [vmem:[#allocation4 + $0x70] sm:$0xff] %vm448, %v842
    %860 = vst.msk [vmem:[#allocation4 + $0x78] sm:$0xff] %vm448, %v844
    %s861 = scalar_lea.vmem [#allocation2], 192
    %v862 = vld [vmem:[%s861] sm:$0xff]
    %v863 = vld [vmem:[%s861 + $0x10] sm:$0xff]
    %v864 = vld [vmem:[%s861 + $0x20] sm:$0xff]
    %v865 = vld [vmem:[%s861 + $0x30] sm:$0xff]
    %v866 = vld [vmem:[%s861 + $0x40] sm:$0xff]
    %v867 = vld [vmem:[%s861 + $0x50] sm:$0xff]
    %v868 = vld [vmem:[%s861 + $0x60] sm:$0xff]
    %v869 = vld [vmem:[%s861 + $0x70] sm:$0xff]
    %878 = vrot.lane.b32.xlu0 %v862, 48
    %v879 = vpop.permute.xlu0 %878
    %880 = vrot.lane.b32.xlu0 %v863, 48
    %v881 = vpop.permute.xlu0 %880
    %882 = vrot.lane.b32.xlu0 %v864, 48
    %v883 = vpop.permute.xlu0 %882
    %884 = vrot.lane.b32.xlu0 %v865, 48
    %v885 = vpop.permute.xlu0 %884
    %886 = vrot.lane.b32.xlu0 %v866, 48
    %v887 = vpop.permute.xlu0 %886
    %888 = vrot.lane.b32.xlu0 %v867, 48
    %v889 = vpop.permute.xlu0 %888
    %890 = vrot.lane.b32.xlu0 %v868, 48
    %v891 = vpop.permute.xlu0 %890
    %892 = vrot.lane.b32.xlu0 %v869, 48
    %v893 = vpop.permute.xlu0 %892
    %902 = vst.msk [vmem:[#allocation4 + $0x40] sm:$0xff] %vm498, %v879
    %903 = vst.msk [vmem:[#allocation4 + $0x48] sm:$0xff] %vm498, %v881
    %904 = vst.msk [vmem:[#allocation4 + $0x50] sm:$0xff] %vm498, %v883
    %905 = vst.msk [vmem:[#allocation4 + $0x58] sm:$0xff] %vm498, %v885
    %906 = vst.msk [vmem:[#allocation4 + $0x60] sm:$0xff] %vm498, %v887
    %907 = vst.msk [vmem:[#allocation4 + $0x68] sm:$0xff] %vm498, %v889
    %908 = vst.msk [vmem:[#allocation4 + $0x70] sm:$0xff] %vm498, %v891
    %909 = vst.msk [vmem:[#allocation4 + $0x78] sm:$0xff] %vm498, %v893
    %v910 = vld [vmem:[%s861 + $0x1] sm:$0xff]
    %v911 = vld [vmem:[%s861 + $0x11] sm:$0xff]
    %v912 = vld [vmem:[%s861 + $0x21] sm:$0xff]
    %v913 = vld [vmem:[%s861 + $0x31] sm:$0xff]
    %v914 = vld [vmem:[%s861 + $0x41] sm:$0xff]
    %v915 = vld [vmem:[%s861 + $0x51] sm:$0xff]
    %v916 = vld [vmem:[%s861 + $0x61] sm:$0xff]
    %v917 = vld [vmem:[%s861 + $0x71] sm:$0xff]
    %926 = vrot.lane.b32.xlu0 %v910, 56
    %v927 = vpop.permute.xlu0 %926
    %928 = vrot.lane.b32.xlu0 %v911, 56
    %v929 = vpop.permute.xlu0 %928
    %930 = vrot.lane.b32.xlu0 %v912, 56
    %v931 = vpop.permute.xlu0 %930
    %932 = vrot.lane.b32.xlu0 %v913, 56
    %v933 = vpop.permute.xlu0 %932
    %934 = vrot.lane.b32.xlu0 %v914, 56
    %v935 = vpop.permute.xlu0 %934
    %936 = vrot.lane.b32.xlu0 %v915, 56
    %v937 = vpop.permute.xlu0 %936
    %938 = vrot.lane.b32.xlu0 %v916, 56
    %v939 = vpop.permute.xlu0 %938
    %940 = vrot.lane.b32.xlu0 %v917, 56
    %v941 = vpop.permute.xlu0 %940
    %950 = vst.msk [vmem:[#allocation4 + $0x40] sm:$0xff] %vm547, %v927
    %951 = vst.msk [vmem:[#allocation4 + $0x48] sm:$0xff] %vm547, %v929
    %952 = vst.msk [vmem:[#allocation4 + $0x50] sm:$0xff] %vm547, %v931
    %953 = vst.msk [vmem:[#allocation4 + $0x58] sm:$0xff] %vm547, %v933
    %954 = vst.msk [vmem:[#allocation4 + $0x60] sm:$0xff] %vm547, %v935
    %955 = vst.msk [vmem:[#allocation4 + $0x68] sm:$0xff] %vm547, %v937
    %956 = vst.msk [vmem:[#allocation4 + $0x70] sm:$0xff] %vm547, %v939
    %957 = vst.msk [vmem:[#allocation4 + $0x78] sm:$0xff] %vm547, %v941
    %v958 = vld [vmem:[%s861 + $0x2] sm:$0xff]
    %v959 = vld [vmem:[%s861 + $0x12] sm:$0xff]
    %v960 = vld [vmem:[%s861 + $0x22] sm:$0xff]
    %v961 = vld [vmem:[%s861 + $0x32] sm:$0xff]
    %v962 = vld [vmem:[%s861 + $0x42] sm:$0xff]
    %v963 = vld [vmem:[%s861 + $0x52] sm:$0xff]
    %v964 = vld [vmem:[%s861 + $0x62] sm:$0xff]
    %v965 = vld [vmem:[%s861 + $0x72] sm:$0xff]
    %974 = vrot.lane.b32.xlu0 %v958, 64
    %v975 = vpop.permute.xlu0 %974
    %976 = vrot.lane.b32.xlu0 %v959, 64
    %v977 = vpop.permute.xlu0 %976
    %978 = vrot.lane.b32.xlu0 %v960, 64
    %v979 = vpop.permute.xlu0 %978
    %980 = vrot.lane.b32.xlu0 %v961, 64
    %v981 = vpop.permute.xlu0 %980
    %982 = vrot.lane.b32.xlu0 %v962, 64
    %v983 = vpop.permute.xlu0 %982
    %984 = vrot.lane.b32.xlu0 %v963, 64
    %v985 = vpop.permute.xlu0 %984
    %986 = vrot.lane.b32.xlu0 %v964, 64
    %v987 = vpop.permute.xlu0 %986
    %988 = vrot.lane.b32.xlu0 %v965, 64
    %v989 = vpop.permute.xlu0 %988
    %998 = vst.msk [vmem:[#allocation4 + $0x40] sm:$0xff] %vm596, %v975
    %999 = vst.msk [vmem:[#allocation4 + $0x48] sm:$0xff] %vm596, %v977
    %1000 = vst.msk [vmem:[#allocation4 + $0x50] sm:$0xff] %vm596, %v979
    %1001 = vst.msk [vmem:[#allocation4 + $0x58] sm:$0xff] %vm596, %v981
    %1002 = vst.msk [vmem:[#allocation4 + $0x60] sm:$0xff] %vm596, %v983
    %1003 = vst.msk [vmem:[#allocation4 + $0x68] sm:$0xff] %vm596, %v985
    %1004 = vst.msk [vmem:[#allocation4 + $0x70] sm:$0xff] %vm596, %v987
    %1005 = vst.msk [vmem:[#allocation4 + $0x78] sm:$0xff] %vm596, %v989
    %v1006 = vld [vmem:[#allocation4] sm:$0xff]
    %v1007 = vld [vmem:[#allocation4 + $0x8] sm:$0xff]
    %v1008 = vld [vmem:[#allocation4 + $0x10] sm:$0xff]
    %v1009 = vld [vmem:[#allocation4 + $0x18] sm:$0xff]
    %v1010 = vld [vmem:[#allocation4 + $0x20] sm:$0xff]
    %v1011 = vld [vmem:[#allocation4 + $0x28] sm:$0xff]
    %v1012 = vld [vmem:[#allocation4 + $0x30] sm:$0xff]
    %v1013 = vld [vmem:[#allocation4 + $0x38] sm:$0xff]
    %v1014 = vld [vmem:[#allocation4 + $0x40] sm:$0xff]
    %v1015 = vld [vmem:[#allocation4 + $0x48] sm:$0xff]
    %v1016 = vld [vmem:[#allocation4 + $0x50] sm:$0xff]
    %v1017 = vld [vmem:[#allocation4 + $0x58] sm:$0xff]
    %v1018 = vld [vmem:[#allocation4 + $0x60] sm:$0xff]
    %v1019 = vld [vmem:[#allocation4 + $0x68] sm:$0xff]
    %v1020 = vld [vmem:[#allocation4 + $0x70] sm:$0xff]
    %v1021 = vld [vmem:[#allocation4 + $0x78] sm:$0xff]
    %v1022 = vld [vmem:[#allocation9] sm:$0xff]
    %v1023 = vld [vmem:[#allocation9 + $0x8] sm:$0xff]
    %v1024 = vld [vmem:[#allocation9 + $0x10] sm:$0xff]
    %v1025 = vld [vmem:[#allocation9 + $0x18] sm:$0xff]
    %v1026 = vld [vmem:[#allocation9 + $0x20] sm:$0xff]
    %v1027 = vld [vmem:[#allocation9 + $0x28] sm:$0xff]
    %v1028 = vld [vmem:[#allocation9 + $0x30] sm:$0xff]
    %v1029 = vld [vmem:[#allocation9 + $0x38] sm:$0xff]
    %v1030 = vld [vmem:[#allocation9 + $0x40] sm:$0xff]
    %v1031 = vld [vmem:[#allocation9 + $0x48] sm:$0xff]
    %v1032 = vld [vmem:[#allocation9 + $0x50] sm:$0xff]
    %v1033 = vld [vmem:[#allocation9 + $0x58] sm:$0xff]
    %v1034 = vld [vmem:[#allocation9 + $0x60] sm:$0xff]
    %v1035 = vld [vmem:[#allocation9 + $0x68] sm:$0xff]
    %v1036 = vld [vmem:[#allocation9 + $0x70] sm:$0xff]
    %v1037 = vld [vmem:[#allocation9 + $0x78] sm:$0xff]
    %v1038 = vld [vmem:[#allocation9 + $0x80] sm:$0xff]
    %v1039 = vld [vmem:[#allocation9 + $0x88] sm:$0xff]
    %v1040 = vld [vmem:[#allocation11] sm:$0x3]
    %v1042 = vperm.slane %v1040, 0
    %v1043 = vperm.slane %v1040, 1
    %vm1046 = vcmask 588800
    %v1048 = vsel %vm1046, %v1006, 0
    %v1051 = vsel %vm1046, %v1007, 0
    %v1054 = vsel %vm1046, %v1008, 0
    %v1057 = vsel %vm1046, %v1009, 0
    %v1060 = vsel %vm1046, %v1010, 0
    %v1063 = vsel %vm1046, %v1011, 0
    %v1066 = vsel %vm1046, %v1012, 0
    %v1069 = vsel %vm1046, %v1013, 0
    %v1072 = vsel %vm1046, %v1014, 0
    %v1075 = vsel %vm1046, %v1015, 0
    %v1078 = vsel %vm1046, %v1016, 0
    %v1081 = vsel %vm1046, %v1017, 0
    %v1084 = vsel %vm1046, %v1018, 0
    %v1087 = vsel %vm1046, %v1019, 0
    %v1090 = vsel %vm1046, %v1020, 0
    %v1093 = vsel %vm1046, %v1021, 0
    %1095 = vmatpush.msra.mxu0 0.0
    %1096 = vmatpush.msra.mxu0 0.0
    %1097 = vmatpush.msra.mxu0 0.0
    %1098 = vmatpush.msra.mxu0 0.0
    %1099 = vmatpush.msra.mxu0 0.0
    %1100 = vmatpush.msra.mxu0 0.0
    %1101 = vmatpush.msra.mxu0 0.0
    %1102 = vmatpush.msra.mxu0 %v1038
    %1103 = vmatpush.msra.mxu0 %v1036
    %1104 = vmatpush.msra.mxu0 %v1034
    %1105 = vmatpush.msra.mxu0 %v1032
    %1106 = vmatpush.msra.mxu0 %v1030
    %1107 = vmatpush.msra.mxu0 %v1028
    %1108 = vmatpush.msra.mxu0 %v1026
    %1109 = vmatpush.msra.mxu0 %v1024
    %1110 = vmatpush.msra.mxu0 %v1022
    %1111 = vmatmul.f32.gmra.mxu0 %v1048
    %v1112 = vpop.f32.mrf.mxu0
    %v1113 = vadd.f32 %v1042, %v1112
    %1114 = vmatmul.f32.gmra.mxu0 %v1051
    %v1115 = vpop.f32.mrf.mxu0
    %v1116 = vadd.f32 %v1042, %v1115
    %1117 = vmatmul.f32.gmra.mxu0 %v1054
    %v1118 = vpop.f32.mrf.mxu0
    %v1119 = vadd.f32 %v1042, %v1118
    %1120 = vmatmul.f32.gmra.mxu0 %v1057
    %v1121 = vpop.f32.mrf.mxu0
    %v1122 = vadd.f32 %v1042, %v1121
    %1123 = vmatmul.f32.gmra.mxu0 %v1060
    %v1124 = vpop.f32.mrf.mxu0
    %v1125 = vadd.f32 %v1042, %v1124
    %1126 = vmatmul.f32.gmra.mxu0 %v1063
    %v1127 = vpop.f32.mrf.mxu0
    %v1128 = vadd.f32 %v1042, %v1127
    %1129 = vmatmul.f32.gmra.mxu0 %v1066
    %v1130 = vpop.f32.mrf.mxu0
    %v1131 = vadd.f32 %v1042, %v1130
    %1132 = vmatmul.f32.gmra.mxu0 %v1069
    %v1133 = vpop.f32.mrf.mxu0
    %v1134 = vadd.f32 %v1042, %v1133
    %1135 = vmatmul.f32.gmra.mxu0 %v1072
    %v1136 = vpop.f32.mrf.mxu0
    %v1137 = vadd.f32 %v1042, %v1136
    %1138 = vmatmul.f32.gmra.mxu0 %v1075
    %v1139 = vpop.f32.mrf.mxu0
    %v1140 = vadd.f32 %v1042, %v1139
    %1141 = vmatmul.f32.gmra.mxu0 %v1078
    %v1142 = vpop.f32.mrf.mxu0
    %v1143 = vadd.f32 %v1042, %v1142
    %1144 = vmatmul.f32.gmra.mxu0 %v1081
    %v1145 = vpop.f32.mrf.mxu0
    %v1146 = vadd.f32 %v1042, %v1145
    %1147 = vmatmul.f32.gmra.mxu0 %v1084
    %v1148 = vpop.f32.mrf.mxu0
    %v1149 = vadd.f32 %v1042, %v1148
    %1150 = vmatmul.f32.gmra.mxu0 %v1087
    %v1151 = vpop.f32.mrf.mxu0
    %v1152 = vadd.f32 %v1042, %v1151
    %1153 = vmatmul.f32.gmra.mxu0 %v1090
    %v1154 = vpop.f32.mrf.mxu0
    %v1155 = vadd.f32 %v1042, %v1154
    %1156 = vmatmul.f32.gmra.mxu0 %v1093
    %v1157 = vpop.f32.mrf.mxu0
    %v1158 = vadd.f32 %v1042, %v1157
    %1159 = vdwg.mxu0
    %1160 = vmatpush.msra.mxu0 0.0
    %1161 = vmatpush.msra.mxu0 0.0
    %1162 = vmatpush.msra.mxu0 0.0
    %1163 = vmatpush.msra.mxu0 0.0
    %1164 = vmatpush.msra.mxu0 0.0
    %1165 = vmatpush.msra.mxu0 0.0
    %1166 = vmatpush.msra.mxu0 0.0
    %1167 = vmatpush.msra.mxu0 %v1039
    %1168 = vmatpush.msra.mxu0 %v1037
    %1169 = vmatpush.msra.mxu0 %v1035
    %1170 = vmatpush.msra.mxu0 %v1033
    %1171 = vmatpush.msra.mxu0 %v1031
    %1172 = vmatpush.msra.mxu0 %v1029
    %1173 = vmatpush.msra.mxu0 %v1027
    %1174 = vmatpush.msra.mxu0 %v1025
    %1175 = vmatpush.msra.mxu0 %v1023
    %1176 = vmatmul.f32.gmra.mxu0 %v1048
    %v1177 = vpop.f32.mrf.mxu0
    %v1178 = vadd.f32 %v1043, %v1177
    %1179 = vmatmul.f32.gmra.mxu0 %v1051
    %v1180 = vpop.f32.mrf.mxu0
    %v1181 = vadd.f32 %v1043, %v1180
    %1182 = vmatmul.f32.gmra.mxu0 %v1054
    %v1183 = vpop.f32.mrf.mxu0
    %v1184 = vadd.f32 %v1043, %v1183
    %1185 = vmatmul.f32.gmra.mxu0 %v1057
    %v1186 = vpop.f32.mrf.mxu0
    %v1187 = vadd.f32 %v1043, %v1186
    %1188 = vmatmul.f32.gmra.mxu0 %v1060
    %v1189 = vpop.f32.mrf.mxu0
    %v1190 = vadd.f32 %v1043, %v1189
    %1191 = vmatmul.f32.gmra.mxu0 %v1063
    %v1192 = vpop.f32.mrf.mxu0
    %v1193 = vadd.f32 %v1043, %v1192
    %1194 = vmatmul.f32.gmra.mxu0 %v1066
    %v1195 = vpop.f32.mrf.mxu0
    %v1196 = vadd.f32 %v1043, %v1195
    %1197 = vmatmul.f32.gmra.mxu0 %v1069
    %v1198 = vpop.f32.mrf.mxu0
    %v1199 = vadd.f32 %v1043, %v1198
    %1200 = vmatmul.f32.gmra.mxu0 %v1072
    %v1201 = vpop.f32.mrf.mxu0
    %v1202 = vadd.f32 %v1043, %v1201
    %1203 = vmatmul.f32.gmra.mxu0 %v1075
    %v1204 = vpop.f32.mrf.mxu0
    %v1205 = vadd.f32 %v1043, %v1204
    %1206 = vmatmul.f32.gmra.mxu0 %v1078
    %v1207 = vpop.f32.mrf.mxu0
    %v1208 = vadd.f32 %v1043, %v1207
    %1209 = vmatmul.f32.gmra.mxu0 %v1081
    %v1210 = vpop.f32.mrf.mxu0
    %v1211 = vadd.f32 %v1043, %v1210
    %1212 = vmatmul.f32.gmra.mxu0 %v1084
    %v1213 = vpop.f32.mrf.mxu0
    %v1214 = vadd.f32 %v1043, %v1213
    %1215 = vmatmul.f32.gmra.mxu0 %v1087
    %v1216 = vpop.f32.mrf.mxu0
    %v1217 = vadd.f32 %v1043, %v1216
    %1218 = vmatmul.f32.gmra.mxu0 %v1090
    %v1219 = vpop.f32.mrf.mxu0
    %v1220 = vadd.f32 %v1043, %v1219
    %1221 = vmatmul.f32.gmra.mxu0 %v1093
    %v1222 = vpop.f32.mrf.mxu0
    %v1223 = vadd.f32 %v1043, %v1222
    %1224 = vdwg.mxu0
    %v1225 = vmax.f32 %v1113, 0.0
    %v1226 = vmax.f32 %v1178, 0.0
    %v1227 = vmax.f32 %v1116, 0.0
    %v1228 = vmax.f32 %v1181, 0.0
    %v1229 = vmax.f32 %v1119, 0.0
    %v1230 = vmax.f32 %v1184, 0.0
    %v1231 = vmax.f32 %v1122, 0.0
    %v1232 = vmax.f32 %v1187, 0.0
    %v1233 = vmax.f32 %v1125, 0.0
    %v1234 = vmax.f32 %v1190, 0.0
    %v1235 = vmax.f32 %v1128, 0.0
    %v1236 = vmax.f32 %v1193, 0.0
    %v1237 = vmax.f32 %v1131, 0.0
    %v1238 = vmax.f32 %v1196, 0.0
    %v1239 = vmax.f32 %v1134, 0.0
    %v1240 = vmax.f32 %v1199, 0.0
    %v1241 = vmax.f32 %v1137, 0.0
    %v1242 = vmax.f32 %v1202, 0.0
    %v1243 = vmax.f32 %v1140, 0.0
    %v1244 = vmax.f32 %v1205, 0.0
    %v1245 = vmax.f32 %v1143, 0.0
    %v1246 = vmax.f32 %v1208, 0.0
    %v1247 = vmax.f32 %v1146, 0.0
    %v1248 = vmax.f32 %v1211, 0.0
    %v1249 = vmax.f32 %v1149, 0.0
    %v1250 = vmax.f32 %v1214, 0.0
    %v1251 = vmax.f32 %v1152, 0.0
    %v1252 = vmax.f32 %v1217, 0.0
    %v1253 = vmax.f32 %v1155, 0.0
    %v1254 = vmax.f32 %v1220, 0.0
    %v1255 = vmax.f32 %v1158, 0.0
    %v1256 = vmax.f32 %v1223, 0.0
    %1257 = vst [vmem:[#allocation3] sm:$0xff] 0.0
    %1258 = vst [vmem:[#allocation3 + $0x8] sm:$0xff] 0.0
    %1259 = vst [vmem:[#allocation3 + $0x10] sm:$0x3] 0.0
    %1260 = vst [vmem:[#allocation3 + $0x18] sm:$0x3] 0.0
    %s1261 = scalar_lea.vmem [#allocation3], 288
    %1262 = vst [vmem:[%s1261] sm:$0xff] 0.0
    %1263 = vst [vmem:[%s1261 + $0x8] sm:$0xff] 0.0
    %1264 = vst [vmem:[%s1261 + $0x10] sm:$0x3] 0.0
    %1265 = vst [vmem:[%s1261 + $0x18] sm:$0x3] 0.0
    %s1266 = scalar_lea.vmem [#allocation3], 32
    %v1267 = vlaneseq
    %vm1268 = vcmp.ge.s32.totalorder %v1267, 0
    %vm1269 = vcmp.lt.s32.totalorder %v1267, 256
    %vm1270 = vmand %vm1268, %vm1269
    %1271 = vst.msk [vmem:[%s1266] ss:$8 sm:$0x3] %vm1270, 0.0
    %1272 = vst.msk [vmem:[%s1266] ss:$8 sm:$0x0] %vm1270, 0.0
    %s1273 = scalar_lea.vmem %s1266, 32 [#allocation3]
    %1274 = vst.msk [vmem:[%s1273] ss:$8 sm:$0x3] %vm1270, 0.0
    %1275 = vst.msk [vmem:[%s1273] ss:$8 sm:$0x0] %vm1270, 0.0
    %s1276 = scalar_lea.vmem %s1266, 64 [#allocation3]
    %1277 = vst.msk [vmem:[%s1276] ss:$8 sm:$0x3] %vm1270, 0.0
    %1278 = vst.msk [vmem:[%s1276] ss:$8 sm:$0x0] %vm1270, 0.0
    %s1279 = scalar_lea.vmem %s1266, 96 [#allocation3]
    %1280 = vst.msk [vmem:[%s1279] ss:$8 sm:$0x3] %vm1270, 0.0
    %1281 = vst.msk [vmem:[%s1279] ss:$8 sm:$0x0] %vm1270, 0.0
    %s1282 = scalar_lea.vmem %s1266, 128 [#allocation3]
    %1283 = vst.msk [vmem:[%s1282] ss:$8 sm:$0x3] %vm1270, 0.0
    %1284 = vst.msk [vmem:[%s1282] ss:$8 sm:$0x0] %vm1270, 0.0
    %s1285 = scalar_lea.vmem %s1266, 160 [#allocation3]
    %1286 = vst.msk [vmem:[%s1285] ss:$8 sm:$0x3] %vm1270, 0.0
    %1287 = vst.msk [vmem:[%s1285] ss:$8 sm:$0x0] %vm1270, 0.0
    %s1288 = scalar_lea.vmem %s1266, 192 [#allocation3]
    %1289 = vst.msk [vmem:[%s1288] ss:$8 sm:$0x3] %vm1270, 0.0
    %1290 = vst.msk [vmem:[%s1288] ss:$8 sm:$0x0] %vm1270, 0.0
    %s1291 = scalar_lea.vmem %s1266, 224 [#allocation3]
    %1292 = vst.msk [vmem:[%s1291] ss:$8 sm:$0x3] %vm1270, 0.0
    %1293 = vst.msk [vmem:[%s1291] ss:$8 sm:$0x0] %vm1270, 0.0
    %s1294 = scalar_lea.vmem %s1266, 17 [#allocation3]
    %1295 = vst.msk [vmem:[%s1294] ss:$8 sm:$0x3] %vm1270, 0.0
    %1296 = vst.msk [vmem:[%s1294] ss:$8 sm:$0x0] %vm1270, 0.0
    %s1297 = scalar_lea.vmem %s1266, 49 [#allocation3]
    %1298 = vst.msk [vmem:[%s1297] ss:$8 sm:$0x3] %vm1270, 0.0
    %1299 = vst.msk [vmem:[%s1297] ss:$8 sm:$0x0] %vm1270, 0.0
    %s1300 = scalar_lea.vmem %s1266, 81 [#allocation3]
    %1301 = vst.msk [vmem:[%s1300] ss:$8 sm:$0x3] %vm1270, 0.0
    %1302 = vst.msk [vmem:[%s1300] ss:$8 sm:$0x0] %vm1270, 0.0
    %s1303 = scalar_lea.vmem %s1266, 113 [#allocation3]
    %1304 = vst.msk [vmem:[%s1303] ss:$8 sm:$0x3] %vm1270, 0.0
    %1305 = vst.msk [vmem:[%s1303] ss:$8 sm:$0x0] %vm1270, 0.0
    %s1306 = scalar_lea.vmem %s1266, 145 [#allocation3]
    %1307 = vst.msk [vmem:[%s1306] ss:$8 sm:$0x3] %vm1270, 0.0
    %1308 = vst.msk [vmem:[%s1306] ss:$8 sm:$0x0] %vm1270, 0.0
    %s1309 = scalar_lea.vmem %s1266, 177 [#allocation3]
    %1310 = vst.msk [vmem:[%s1309] ss:$8 sm:$0x3] %vm1270, 0.0
    %1311 = vst.msk [vmem:[%s1309] ss:$8 sm:$0x0] %vm1270, 0.0
    %s1312 = scalar_lea.vmem %s1266, 209 [#allocation3]
    %1313 = vst.msk [vmem:[%s1312] ss:$8 sm:$0x3] %vm1270, 0.0
    %1314 = vst.msk [vmem:[%s1312] ss:$8 sm:$0x0] %vm1270, 0.0
    %s1315 = scalar_lea.vmem %s1266, 241 [#allocation3]
    %1316 = vst.msk [vmem:[%s1315] ss:$8 sm:$0x3] %vm1270, 0.0
    %1317 = vst.msk [vmem:[%s1315] ss:$8 sm:$0x0] %vm1270, 0.0
    %v1334 = vrot.slane %v1225, 7
    %v1335 = vrot.slane %v1226, 7
    %v1336 = vrot.slane %v1227, 7
    %v1337 = vrot.slane %v1228, 7
    %v1338 = vrot.slane %v1229, 7
    %v1339 = vrot.slane %v1230, 7
    %v1340 = vrot.slane %v1231, 7
    %v1341 = vrot.slane %v1232, 7
    %v1342 = vrot.slane %v1233, 7
    %v1343 = vrot.slane %v1234, 7
    %v1344 = vrot.slane %v1235, 7
    %v1345 = vrot.slane %v1236, 7
    %v1346 = vrot.slane %v1237, 7
    %v1347 = vrot.slane %v1238, 7
    %v1348 = vrot.slane %v1239, 7
    %v1349 = vrot.slane %v1240, 7
    %1366 = vst [vmem:[%s1266] sm:$0xfe] %v1334
    %1367 = vst [vmem:[%s1266 + $0x8] sm:$0xfe] %v1335
    %1368 = vst [vmem:[%s1266 + $0x10] sm:$0x1] %v1334
    %1369 = vst [vmem:[%s1266 + $0x18] sm:$0x1] %v1335
    %1370 = vst [vmem:[%s1266 + $0x20] sm:$0xfe] %v1336
    %1371 = vst [vmem:[%s1266 + $0x28] sm:$0xfe] %v1337
    %1372 = vst [vmem:[%s1266 + $0x30] sm:$0x1] %v1336
    %1373 = vst [vmem:[%s1266 + $0x38] sm:$0x1] %v1337
    %1374 = vst [vmem:[%s1266 + $0x40] sm:$0xfe] %v1338
    %1375 = vst [vmem:[%s1266 + $0x48] sm:$0xfe] %v1339
    %1376 = vst [vmem:[%s1266 + $0x50] sm:$0x1] %v1338
    %1377 = vst [vmem:[%s1266 + $0x58] sm:$0x1] %v1339
    %1378 = vst [vmem:[%s1266 + $0x60] sm:$0xfe] %v1340
    %1379 = vst [vmem:[%s1266 + $0x68] sm:$0xfe] %v1341
    %1380 = vst [vmem:[%s1266 + $0x70] sm:$0x1] %v1340
    %1381 = vst [vmem:[%s1266 + $0x78] sm:$0x1] %v1341
    %1382 = vst [vmem:[%s1266 + $0x80] sm:$0xfe] %v1342
    %1383 = vst [vmem:[%s1266 + $0x88] sm:$0xfe] %v1343
    %1384 = vst [vmem:[%s1266 + $0x90] sm:$0x1] %v1342
    %1385 = vst [vmem:[%s1266 + $0x98] sm:$0x1] %v1343
    %1386 = vst [vmem:[%s1266 + $0xa0] sm:$0xfe] %v1344
    %1387 = vst [vmem:[%s1266 + $0xa8] sm:$0xfe] %v1345
    %1388 = vst [vmem:[%s1266 + $0xb0] sm:$0x1] %v1344
    %1389 = vst [vmem:[%s1266 + $0xb8] sm:$0x1] %v1345
    %1390 = vst [vmem:[%s1266 + $0xc0] sm:$0xfe] %v1346
    %1391 = vst [vmem:[%s1266 + $0xc8] sm:$0xfe] %v1347
    %1392 = vst [vmem:[%s1266 + $0xd0] sm:$0x1] %v1346
    %1393 = vst [vmem:[%s1266 + $0xd8] sm:$0x1] %v1347
    %1394 = vst [vmem:[%s1266 + $0xe0] sm:$0xfe] %v1348
    %1395 = vst [vmem:[%s1266 + $0xe8] sm:$0xfe] %v1349
    %1396 = vst [vmem:[%s1266 + $0xf0] sm:$0x1] %v1348
    %1397 = vst [vmem:[%s1266 + $0xf8] sm:$0x1] %v1349
    %s1398 = scalar_lea.vmem [#allocation3], 320
    %1399 = vst [vmem:[%s1398] sm:$0xff] 0.0
    %1400 = vst [vmem:[%s1398 + $0x8] sm:$0xff] 0.0
    %1401 = vst [vmem:[%s1398 + $0x10] sm:$0x3] 0.0
    %1402 = vst [vmem:[%s1398 + $0x18] sm:$0x3] 0.0
    %s1403 = scalar_lea.vmem [#allocation3], 608
    %1404 = vst [vmem:[%s1403] sm:$0xff] 0.0
    %1405 = vst [vmem:[%s1403 + $0x8] sm:$0xff] 0.0
    %1406 = vst [vmem:[%s1403 + $0x10] sm:$0x3] 0.0
    %1407 = vst [vmem:[%s1403 + $0x18] sm:$0x3] 0.0
    %s1408 = scalar_lea.vmem [#allocation3], 352
    %1409 = vst.msk [vmem:[%s1408] ss:$8 sm:$0x3] %vm1270, 0.0
    %1410 = vst.msk [vmem:[%s1408] ss:$8 sm:$0x0] %vm1270, 0.0
    %s1411 = scalar_lea.vmem %s1408, 32 [#allocation3]
    %1412 = vst.msk [vmem:[%s1411] ss:$8 sm:$0x3] %vm1270, 0.0
    %1413 = vst.msk [vmem:[%s1411] ss:$8 sm:$0x0] %vm1270, 0.0
    %s1414 = scalar_lea.vmem %s1408, 64 [#allocation3]
    %1415 = vst.msk [vmem:[%s1414] ss:$8 sm:$0x3] %vm1270, 0.0
    %1416 = vst.msk [vmem:[%s1414] ss:$8 sm:$0x0] %vm1270, 0.0
    %s1417 = scalar_lea.vmem %s1408, 96 [#allocation3]
    %1418 = vst.msk [vmem:[%s1417] ss:$8 sm:$0x3] %vm1270, 0.0
    %1419 = vst.msk [vmem:[%s1417] ss:$8 sm:$0x0] %vm1270, 0.0
    %s1420 = scalar_lea.vmem %s1408, 128 [#allocation3]
    %1421 = vst.msk [vmem:[%s1420] ss:$8 sm:$0x3] %vm1270, 0.0
    %1422 = vst.msk [vmem:[%s1420] ss:$8 sm:$0x0] %vm1270, 0.0
    %s1423 = scalar_lea.vmem %s1408, 160 [#allocation3]
    %1424 = vst.msk [vmem:[%s1423] ss:$8 sm:$0x3] %vm1270, 0.0
    %1425 = vst.msk [vmem:[%s1423] ss:$8 sm:$0x0] %vm1270, 0.0
    %s1426 = scalar_lea.vmem %s1408, 192 [#allocation3]
    %1427 = vst.msk [vmem:[%s1426] ss:$8 sm:$0x3] %vm1270, 0.0
    %1428 = vst.msk [vmem:[%s1426] ss:$8 sm:$0x0] %vm1270, 0.0
    %s1429 = scalar_lea.vmem %s1408, 224 [#allocation3]
    %1430 = vst.msk [vmem:[%s1429] ss:$8 sm:$0x3] %vm1270, 0.0
    %1431 = vst.msk [vmem:[%s1429] ss:$8 sm:$0x0] %vm1270, 0.0
    %s1432 = scalar_lea.vmem %s1408, 17 [#allocation3]
    %1433 = vst.msk [vmem:[%s1432] ss:$8 sm:$0x3] %vm1270, 0.0
    %1434 = vst.msk [vmem:[%s1432] ss:$8 sm:$0x0] %vm1270, 0.0
    %s1435 = scalar_lea.vmem %s1408, 49 [#allocation3]
    %1436 = vst.msk [vmem:[%s1435] ss:$8 sm:$0x3] %vm1270, 0.0
    %1437 = vst.msk [vmem:[%s1435] ss:$8 sm:$0x0] %vm1270, 0.0
    %s1438 = scalar_lea.vmem %s1408, 81 [#allocation3]
    %1439 = vst.msk [vmem:[%s1438] ss:$8 sm:$0x3] %vm1270, 0.0
    %1440 = vst.msk [vmem:[%s1438] ss:$8 sm:$0x0] %vm1270, 0.0
    %s1441 = scalar_lea.vmem %s1408, 113 [#allocation3]
    %1442 = vst.msk [vmem:[%s1441] ss:$8 sm:$0x3] %vm1270, 0.0
    %1443 = vst.msk [vmem:[%s1441] ss:$8 sm:$0x0] %vm1270, 0.0
    %s1444 = scalar_lea.vmem %s1408, 145 [#allocation3]
    %1445 = vst.msk [vmem:[%s1444] ss:$8 sm:$0x3] %vm1270, 0.0
    %1446 = vst.msk [vmem:[%s1444] ss:$8 sm:$0x0] %vm1270, 0.0
    %s1447 = scalar_lea.vmem %s1408, 177 [#allocation3]
    %1448 = vst.msk [vmem:[%s1447] ss:$8 sm:$0x3] %vm1270, 0.0
    %1449 = vst.msk [vmem:[%s1447] ss:$8 sm:$0x0] %vm1270, 0.0
    %s1450 = scalar_lea.vmem %s1408, 209 [#allocation3]
    %1451 = vst.msk [vmem:[%s1450] ss:$8 sm:$0x3] %vm1270, 0.0
    %1452 = vst.msk [vmem:[%s1450] ss:$8 sm:$0x0] %vm1270, 0.0
    %s1453 = scalar_lea.vmem %s1408, 241 [#allocation3]
    %1454 = vst.msk [vmem:[%s1453] ss:$8 sm:$0x3] %vm1270, 0.0
    %1455 = vst.msk [vmem:[%s1453] ss:$8 sm:$0x0] %vm1270, 0.0
    %v1472 = vrot.slane %v1241, 7
    %v1473 = vrot.slane %v1242, 7
    %v1474 = vrot.slane %v1243, 7
    %v1475 = vrot.slane %v1244, 7
    %v1476 = vrot.slane %v1245, 7
    %v1477 = vrot.slane %v1246, 7
    %v1478 = vrot.slane %v1247, 7
    %v1479 = vrot.slane %v1248, 7
    %v1480 = vrot.slane %v1249, 7
    %v1481 = vrot.slane %v1250, 7
    %v1482 = vrot.slane %v1251, 7
    %v1483 = vrot.slane %v1252, 7
    %v1484 = vrot.slane %v1253, 7
    %v1485 = vrot.slane %v1254, 7
    %v1486 = vrot.slane %v1255, 7
    %v1487 = vrot.slane %v1256, 7
    %1504 = vst [vmem:[%s1408] sm:$0xfe] %v1472
    %1505 = vst [vmem:[%s1408 + $0x8] sm:$0xfe] %v1473
    %1506 = vst [vmem:[%s1408 + $0x10] sm:$0x1] %v1472
    %1507 = vst [vmem:[%s1408 + $0x18] sm:$0x1] %v1473
    %1508 = vst [vmem:[%s1408 + $0x20] sm:$0xfe] %v1474
    %1509 = vst [vmem:[%s1408 + $0x28] sm:$0xfe] %v1475
    %1510 = vst [vmem:[%s1408 + $0x30] sm:$0x1] %v1474
    %1511 = vst [vmem:[%s1408 + $0x38] sm:$0x1] %v1475
    %1512 = vst [vmem:[%s1408 + $0x40] sm:$0xfe] %v1476
    %1513 = vst [vmem:[%s1408 + $0x48] sm:$0xfe] %v1477
    %1514 = vst [vmem:[%s1408 + $0x50] sm:$0x1] %v1476
    %1515 = vst [vmem:[%s1408 + $0x58] sm:$0x1] %v1477
    %1516 = vst [vmem:[%s1408 + $0x60] sm:$0xfe] %v1478
    %1517 = vst [vmem:[%s1408 + $0x68] sm:$0xfe] %v1479
    %1518 = vst [vmem:[%s1408 + $0x70] sm:$0x1] %v1478
    %1519 = vst [vmem:[%s1408 + $0x78] sm:$0x1] %v1479
    %1520 = vst [vmem:[%s1408 + $0x80] sm:$0xfe] %v1480
    %1521 = vst [vmem:[%s1408 + $0x88] sm:$0xfe] %v1481
    %1522 = vst [vmem:[%s1408 + $0x90] sm:$0x1] %v1480
    %1523 = vst [vmem:[%s1408 + $0x98] sm:$0x1] %v1481
    %1524 = vst [vmem:[%s1408 + $0xa0] sm:$0xfe] %v1482
    %1525 = vst [vmem:[%s1408 + $0xa8] sm:$0xfe] %v1483
    %1526 = vst [vmem:[%s1408 + $0xb0] sm:$0x1] %v1482
    %1527 = vst [vmem:[%s1408 + $0xb8] sm:$0x1] %v1483
    %1528 = vst [vmem:[%s1408 + $0xc0] sm:$0xfe] %v1484
    %1529 = vst [vmem:[%s1408 + $0xc8] sm:$0xfe] %v1485
    %1530 = vst [vmem:[%s1408 + $0xd0] sm:$0x1] %v1484
    %1531 = vst [vmem:[%s1408 + $0xd8] sm:$0x1] %v1485
    %1532 = vst [vmem:[%s1408 + $0xe0] sm:$0xfe] %v1486
    %1533 = vst [vmem:[%s1408 + $0xe8] sm:$0xfe] %v1487
    %1534 = vst [vmem:[%s1408 + $0xf0] sm:$0x1] %v1486
    %1535 = vst [vmem:[%s1408 + $0xf8] sm:$0x1] %v1487
    %v1536 = vld [vmem:[#allocation3] sm:$0xff]
    %v1537 = vld [vmem:[#allocation3 + $0x8] sm:$0xff]
    %v1538 = vld [vmem:[#allocation3 + $0x20] sm:$0xff]
    %v1539 = vld [vmem:[#allocation3 + $0x28] sm:$0xff]
    %v1540 = vld [vmem:[#allocation3 + $0x40] sm:$0xff]
    %v1541 = vld [vmem:[#allocation3 + $0x48] sm:$0xff]
    %v1542 = vld [vmem:[#allocation3 + $0x60] sm:$0xff]
    %v1543 = vld [vmem:[#allocation3 + $0x68] sm:$0xff]
    %v1544 = vld [vmem:[#allocation3 + $0x80] sm:$0xff]
    %v1545 = vld [vmem:[#allocation3 + $0x88] sm:$0xff]
    %v1546 = vld [vmem:[#allocation3 + $0xa0] sm:$0xff]
    %v1547 = vld [vmem:[#allocation3 + $0xa8] sm:$0xff]
    %v1548 = vld [vmem:[#allocation3 + $0xc0] sm:$0xff]
    %v1549 = vld [vmem:[#allocation3 + $0xc8] sm:$0xff]
    %v1550 = vld [vmem:[#allocation3 + $0xe0] sm:$0xff]
    %v1551 = vld [vmem:[#allocation3 + $0xe8] sm:$0xff]
    %1552 = vst [vmem:[#allocation5] sm:$0xff] %v1536
    %1553 = vst [vmem:[#allocation5 + $0x8] sm:$0xff] %v1537
    %1554 = vst [vmem:[#allocation5 + $0x90] sm:$0xff] %v1538
    %1555 = vst [vmem:[#allocation5 + $0x98] sm:$0xff] %v1539
    %1556 = vst [vmem:[#allocation5 + $0x120] sm:$0xff] %v1540
    %1557 = vst [vmem:[#allocation5 + $0x128] sm:$0xff] %v1541
    %1558 = vst [vmem:[#allocation5 + $0x1b0] sm:$0xff] %v1542
    %1559 = vst [vmem:[#allocation5 + $0x1b8] sm:$0xff] %v1543
    %1560 = vst [vmem:[#allocation5 + $0x240] sm:$0xff] %v1544
    %1561 = vst [vmem:[#allocation5 + $0x248] sm:$0xff] %v1545
    %1562 = vst [vmem:[#allocation5 + $0x2d0] sm:$0xff] %v1546
    %1563 = vst [vmem:[#allocation5 + $0x2d8] sm:$0xff] %v1547
    %1564 = vst [vmem:[#allocation5 + $0x360] sm:$0xff] %v1548
    %1565 = vst [vmem:[#allocation5 + $0x368] sm:$0xff] %v1549
    %1566 = vst [vmem:[#allocation5 + $0x3f0] sm:$0xff] %v1550
    %1567 = vst [vmem:[#allocation5 + $0x3f8] sm:$0xff] %v1551
    %v1568 = vld [vmem:[#allocation3] sm:$0xfe]
    %v1569 = vld [vmem:[#allocation3 + $0x8] sm:$0xfe]
    %v1570 = vld [vmem:[#allocation3 + $0x10] sm:$0x1]
    %v1571 = vld [vmem:[#allocation3 + $0x18] sm:$0x1]
    %v1572 = vld [vmem:[#allocation3 + $0x20] sm:$0xfe]
    %v1573 = vld [vmem:[#allocation3 + $0x28] sm:$0xfe]
    %v1574 = vld [vmem:[#allocation3 + $0x30] sm:$0x1]
    %v1575 = vld [vmem:[#allocation3 + $0x38] sm:$0x1]
    %v1576 = vld [vmem:[#allocation3 + $0x40] sm:$0xfe]
    %v1577 = vld [vmem:[#allocation3 + $0x48] sm:$0xfe]
    %v1578 = vld [vmem:[#allocation3 + $0x50] sm:$0x1]
    %v1579 = vld [vmem:[#allocation3 + $0x58] sm:$0x1]
    %v1580 = vld [vmem:[#allocation3 + $0x60] sm:$0xfe]
    %v1581 = vld [vmem:[#allocation3 + $0x68] sm:$0xfe]
    %v1582 = vld [vmem:[#allocation3 + $0x70] sm:$0x1]
    %v1583 = vld [vmem:[#allocation3 + $0x78] sm:$0x1]
    %v1584 = vld [vmem:[#allocation3 + $0x80] sm:$0xfe]
    %v1585 = vld [vmem:[#allocation3 + $0x88] sm:$0xfe]
    %v1586 = vld [vmem:[#allocation3 + $0x90] sm:$0x1]
    %v1587 = vld [vmem:[#allocation3 + $0x98] sm:$0x1]
    %v1588 = vld [vmem:[#allocation3 + $0xa0] sm:$0xfe]
    %v1589 = vld [vmem:[#allocation3 + $0xa8] sm:$0xfe]
    %v1590 = vld [vmem:[#allocation3 + $0xb0] sm:$0x1]
    %v1591 = vld [vmem:[#allocation3 + $0xb8] sm:$0x1]
    %v1592 = vld [vmem:[#allocation3 + $0xc0] sm:$0xfe]
    %v1593 = vld [vmem:[#allocation3 + $0xc8] sm:$0xfe]
    %v1594 = vld [vmem:[#allocation3 + $0xd0] sm:$0x1]
    %v1595 = vld [vmem:[#allocation3 + $0xd8] sm:$0x1]
    %v1596 = vld [vmem:[#allocation3 + $0xe0] sm:$0xfe]
    %v1597 = vld [vmem:[#allocation3 + $0xe8] sm:$0xfe]
    %v1598 = vld [vmem:[#allocation3 + $0xf0] sm:$0x1]
    %v1599 = vld [vmem:[#allocation3 + $0xf8] sm:$0x1]
    %vm1632 = vcmask 1046528
    %v1633 = vrot.slane %v1568, 1
    %v1634 = vrot.slane %v1570, 1
    %v1635 = vsel %vm1632, %v1633, %v1634
    %v1636 = vrot.slane %v1569, 1
    %v1637 = vrot.slane %v1571, 1
    %v1638 = vsel %vm1632, %v1636, %v1637
    %v1639 = vrot.slane %v1572, 1
    %v1640 = vrot.slane %v1574, 1
    %v1641 = vsel %vm1632, %v1639, %v1640
    %v1642 = vrot.slane %v1573, 1
    %v1643 = vrot.slane %v1575, 1
    %v1644 = vsel %vm1632, %v1642, %v1643
    %v1645 = vrot.slane %v1576, 1
    %v1646 = vrot.slane %v1578, 1
    %v1647 = vsel %vm1632, %v1645, %v1646
    %v1648 = vrot.slane %v1577, 1
    %v1649 = vrot.slane %v1579, 1
    %v1650 = vsel %vm1632, %v1648, %v1649
    %v1651 = vrot.slane %v1580, 1
    %v1652 = vrot.slane %v1582, 1
    %v1653 = vsel %vm1632, %v1651, %v1652
    %v1654 = vrot.slane %v1581, 1
    %v1655 = vrot.slane %v1583, 1
    %v1656 = vsel %vm1632, %v1654, %v1655
    %v1657 = vrot.slane %v1584, 1
    %v1658 = vrot.slane %v1586, 1
    %v1659 = vsel %vm1632, %v1657, %v1658
    %v1660 = vrot.slane %v1585, 1
    %v1661 = vrot.slane %v1587, 1
    %v1662 = vsel %vm1632, %v1660, %v1661
    %v1663 = vrot.slane %v1588, 1
    %v1664 = vrot.slane %v1590, 1
    %v1665 = vsel %vm1632, %v1663, %v1664
    %v1666 = vrot.slane %v1589, 1
    %v1667 = vrot.slane %v1591, 1
    %v1668 = vsel %vm1632, %v1666, %v1667
    %v1669 = vrot.slane %v1592, 1
    %v1670 = vrot.slane %v1594, 1
    %v1671 = vsel %vm1632, %v1669, %v1670
    %v1672 = vrot.slane %v1593, 1
    %v1673 = vrot.slane %v1595, 1
    %v1674 = vsel %vm1632, %v1672, %v1673
    %v1675 = vrot.slane %v1596, 1
    %v1676 = vrot.slane %v1598, 1
    %v1677 = vsel %vm1632, %v1675, %v1676
    %v1678 = vrot.slane %v1597, 1
    %v1679 = vrot.slane %v1599, 1
    %v1680 = vsel %vm1632, %v1678, %v1679
    %1697 = vst [vmem:[#allocation5 + $0x10] sm:$0xff] %v1635
    %1698 = vst [vmem:[#allocation5 + $0x18] sm:$0xff] %v1638
    %1699 = vst [vmem:[#allocation5 + $0xa0] sm:$0xff] %v1641
    %1700 = vst [vmem:[#allocation5 + $0xa8] sm:$0xff] %v1644
    %1701 = vst [vmem:[#allocation5 + $0x130] sm:$0xff] %v1647
    %1702 = vst [vmem:[#allocation5 + $0x138] sm:$0xff] %v1650
    %1703 = vst [vmem:[#allocation5 + $0x1c0] sm:$0xff] %v1653
    %1704 = vst [vmem:[#allocation5 + $0x1c8] sm:$0xff] %v1656
    %1705 = vst [vmem:[#allocation5 + $0x250] sm:$0xff] %v1659
    %1706 = vst [vmem:[#allocation5 + $0x258] sm:$0xff] %v1662
    %1707 = vst [vmem:[#allocation5 + $0x2e0] sm:$0xff] %v1665
    %1708 = vst [vmem:[#allocation5 + $0x2e8] sm:$0xff] %v1668
    %1709 = vst [vmem:[#allocation5 + $0x370] sm:$0xff] %v1671
    %1710 = vst [vmem:[#allocation5 + $0x378] sm:$0xff] %v1674
    %1711 = vst [vmem:[#allocation5 + $0x400] sm:$0xff] %v1677
    %1712 = vst [vmem:[#allocation5 + $0x408] sm:$0xff] %v1680
    %v1713 = vld [vmem:[#allocation3] sm:$0xfc]
    %v1714 = vld [vmem:[#allocation3 + $0x8] sm:$0xfc]
    %v1715 = vld [vmem:[#allocation3 + $0x10] sm:$0x3]
    %v1716 = vld [vmem:[#allocation3 + $0x18] sm:$0x3]
    %v1717 = vld [vmem:[#allocation3 + $0x20] sm:$0xfc]
    %v1718 = vld [vmem:[#allocation3 + $0x28] sm:$0xfc]
    %v1719 = vld [vmem:[#allocation3 + $0x30] sm:$0x3]
    %v1720 = vld [vmem:[#allocation3 + $0x38] sm:$0x3]
    %v1721 = vld [vmem:[#allocation3 + $0x40] sm:$0xfc]
    %v1722 = vld [vmem:[#allocation3 + $0x48] sm:$0xfc]
    %v1723 = vld [vmem:[#allocation3 + $0x50] sm:$0x3]
    %v1724 = vld [vmem:[#allocation3 + $0x58] sm:$0x3]
    %v1725 = vld [vmem:[#allocation3 + $0x60] sm:$0xfc]
    %v1726 = vld [vmem:[#allocation3 + $0x68] sm:$0xfc]
    %v1727 = vld [vmem:[#allocation3 + $0x70] sm:$0x3]
    %v1728 = vld [vmem:[#allocation3 + $0x78] sm:$0x3]
    %v1729 = vld [vmem:[#allocation3 + $0x80] sm:$0xfc]
    %v1730 = vld [vmem:[#allocation3 + $0x88] sm:$0xfc]
    %v1731 = vld [vmem:[#allocation3 + $0x90] sm:$0x3]
    %v1732 = vld [vmem:[#allocation3 + $0x98] sm:$0x3]
    %v1733 = vld [vmem:[#allocation3 + $0xa0] sm:$0xfc]
    %v1734 = vld [vmem:[#allocation3 + $0xa8] sm:$0xfc]
    %v1735 = vld [vmem:[#allocation3 + $0xb0] sm:$0x3]
    %v1736 = vld [vmem:[#allocation3 + $0xb8] sm:$0x3]
    %v1737 = vld [vmem:[#allocation3 + $0xc0] sm:$0xfc]
    %v1738 = vld [vmem:[#allocation3 + $0xc8] sm:$0xfc]
    %v1739 = vld [vmem:[#allocation3 + $0xd0] sm:$0x3]
    %v1740 = vld [vmem:[#allocation3 + $0xd8] sm:$0x3]
    %v1741 = vld [vmem:[#allocation3 + $0xe0] sm:$0xfc]
    %v1742 = vld [vmem:[#allocation3 + $0xe8] sm:$0xfc]
    %v1743 = vld [vmem:[#allocation3 + $0xf0] sm:$0x3]
    %v1744 = vld [vmem:[#allocation3 + $0xf8] sm:$0x3]
    %vm1777 = vcmask 1045504
    %v1778 = vrot.slane %v1713, 2
    %v1779 = vrot.slane %v1715, 2
    %v1780 = vsel %vm1777, %v1778, %v1779
    %v1781 = vrot.slane %v1714, 2
    %v1782 = vrot.slane %v1716, 2
    %v1783 = vsel %vm1777, %v1781, %v1782
    %v1784 = vrot.slane %v1717, 2
    %v1785 = vrot.slane %v1719, 2
    %v1786 = vsel %vm1777, %v1784, %v1785
    %v1787 = vrot.slane %v1718, 2
    %v1788 = vrot.slane %v1720, 2
    %v1789 = vsel %vm1777, %v1787, %v1788
    %v1790 = vrot.slane %v1721, 2
    %v1791 = vrot.slane %v1723, 2
    %v1792 = vsel %vm1777, %v1790, %v1791
    %v1793 = vrot.slane %v1722, 2
    %v1794 = vrot.slane %v1724, 2
    %v1795 = vsel %vm1777, %v1793, %v1794
    %v1796 = vrot.slane %v1725, 2
    %v1797 = vrot.slane %v1727, 2
    %v1798 = vsel %vm1777, %v1796, %v1797
    %v1799 = vrot.slane %v1726, 2
    %v1800 = vrot.slane %v1728, 2
    %v1801 = vsel %vm1777, %v1799, %v1800
    %v1802 = vrot.slane %v1729, 2
    %v1803 = vrot.slane %v1731, 2
    %v1804 = vsel %vm1777, %v1802, %v1803
    %v1805 = vrot.slane %v1730, 2
    %v1806 = vrot.slane %v1732, 2
    %v1807 = vsel %vm1777, %v1805, %v1806
    %v1808 = vrot.slane %v1733, 2
    %v1809 = vrot.slane %v1735, 2
    %v1810 = vsel %vm1777, %v1808, %v1809
    %v1811 = vrot.slane %v1734, 2
    %v1812 = vrot.slane %v1736, 2
    %v1813 = vsel %vm1777, %v1811, %v1812
    %v1814 = vrot.slane %v1737, 2
    %v1815 = vrot.slane %v1739, 2
    %v1816 = vsel %vm1777, %v1814, %v1815
    %v1817 = vrot.slane %v1738, 2
    %v1818 = vrot.slane %v1740, 2
    %v1819 = vsel %vm1777, %v1817, %v1818
    %v1820 = vrot.slane %v1741, 2
    %v1821 = vrot.slane %v1743, 2
    %v1822 = vsel %vm1777, %v1820, %v1821
    %v1823 = vrot.slane %v1742, 2
    %v1824 = vrot.slane %v1744, 2
    %v1825 = vsel %vm1777, %v1823, %v1824
    %1842 = vst [vmem:[#allocation5 + $0x20] sm:$0xff] %v1780
    %1843 = vst [vmem:[#allocation5 + $0x28] sm:$0xff] %v1783
    %1844 = vst [vmem:[#allocation5 + $0xb0] sm:$0xff] %v1786
    %1845 = vst [vmem:[#allocation5 + $0xb8] sm:$0xff] %v1789
    %1846 = vst [vmem:[#allocation5 + $0x140] sm:$0xff] %v1792
    %1847 = vst [vmem:[#allocation5 + $0x148] sm:$0xff] %v1795
    %1848 = vst [vmem:[#allocation5 + $0x1d0] sm:$0xff] %v1798
    %1849 = vst [vmem:[#allocation5 + $0x1d8] sm:$0xff] %v1801
    %1850 = vst [vmem:[#allocation5 + $0x260] sm:$0xff] %v1804
    %1851 = vst [vmem:[#allocation5 + $0x268] sm:$0xff] %v1807
    %1852 = vst [vmem:[#allocation5 + $0x2f0] sm:$0xff] %v1810
    %1853 = vst [vmem:[#allocation5 + $0x2f8] sm:$0xff] %v1813
    %1854 = vst [vmem:[#allocation5 + $0x380] sm:$0xff] %v1816
    %1855 = vst [vmem:[#allocation5 + $0x388] sm:$0xff] %v1819
    %1856 = vst [vmem:[#allocation5 + $0x410] sm:$0xff] %v1822
    %1857 = vst [vmem:[#allocation5 + $0x418] sm:$0xff] %v1825
    %v1858 = vld [vmem:[%s1266] sm:$0xff]
    %v1859 = vld [vmem:[%s1266 + $0x8] sm:$0xff]
    %v1860 = vld [vmem:[%s1266 + $0x20] sm:$0xff]
    %v1861 = vld [vmem:[%s1266 + $0x28] sm:$0xff]
    %v1862 = vld [vmem:[%s1266 + $0x40] sm:$0xff]
    %v1863 = vld [vmem:[%s1266 + $0x48] sm:$0xff]
    %v1864 = vld [vmem:[%s1266 + $0x60] sm:$0xff]
    %v1865 = vld [vmem:[%s1266 + $0x68] sm:$0xff]
    %v1866 = vld [vmem:[%s1266 + $0x80] sm:$0xff]
    %v1867 = vld [vmem:[%s1266 + $0x88] sm:$0xff]
    %v1868 = vld [vmem:[%s1266 + $0xa0] sm:$0xff]
    %v1869 = vld [vmem:[%s1266 + $0xa8] sm:$0xff]
    %v1870 = vld [vmem:[%s1266 + $0xc0] sm:$0xff]
    %v1871 = vld [vmem:[%s1266 + $0xc8] sm:$0xff]
    %v1872 = vld [vmem:[%s1266 + $0xe0] sm:$0xff]
    %v1873 = vld [vmem:[%s1266 + $0xe8] sm:$0xff]
    %1874 = vst [vmem:[#allocation5 + $0x30] sm:$0xff] %v1858
    %1875 = vst [vmem:[#allocation5 + $0x38] sm:$0xff] %v1859
    %1876 = vst [vmem:[#allocation5 + $0xc0] sm:$0xff] %v1860
    %1877 = vst [vmem:[#allocation5 + $0xc8] sm:$0xff] %v1861
    %1878 = vst [vmem:[#allocation5 + $0x150] sm:$0xff] %v1862
    %1879 = vst [vmem:[#allocation5 + $0x158] sm:$0xff] %v1863
    %1880 = vst [vmem:[#allocation5 + $0x1e0] sm:$0xff] %v1864
    %1881 = vst [vmem:[#allocation5 + $0x1e8] sm:$0xff] %v1865
    %1882 = vst [vmem:[#allocation5 + $0x270] sm:$0xff] %v1866
    %1883 = vst [vmem:[#allocation5 + $0x278] sm:$0xff] %v1867
    %1884 = vst [vmem:[#allocation5 + $0x300] sm:$0xff] %v1868
    %1885 = vst [vmem:[#allocation5 + $0x308] sm:$0xff] %v1869
    %1886 = vst [vmem:[#allocation5 + $0x390] sm:$0xff] %v1870
    %1887 = vst [vmem:[#allocation5 + $0x398] sm:$0xff] %v1871
    %1888 = vst [vmem:[#allocation5 + $0x420] sm:$0xff] %v1872
    %1889 = vst [vmem:[#allocation5 + $0x428] sm:$0xff] %v1873
    %v1890 = vld [vmem:[%s1266] sm:$0xfe]
    %v1891 = vld [vmem:[%s1266 + $0x8] sm:$0xfe]
    %v1892 = vld [vmem:[%s1266 + $0x10] sm:$0x1]
    %v1893 = vld [vmem:[%s1266 + $0x18] sm:$0x1]
    %v1894 = vld [vmem:[%s1266 + $0x20] sm:$0xfe]
    %v1895 = vld [vmem:[%s1266 + $0x28] sm:$0xfe]
    %v1896 = vld [vmem:[%s1266 + $0x30] sm:$0x1]
    %v1897 = vld [vmem:[%s1266 + $0x38] sm:$0x1]
    %v1898 = vld [vmem:[%s1266 + $0x40] sm:$0xfe]
    %v1899 = vld [vmem:[%s1266 + $0x48] sm:$0xfe]
    %v1900 = vld [vmem:[%s1266 + $0x50] sm:$0x1]
    %v1901 = vld [vmem:[%s1266 + $0x58] sm:$0x1]
    %v1902 = vld [vmem:[%s1266 + $0x60] sm:$0xfe]
    %v1903 = vld [vmem:[%s1266 + $0x68] sm:$0xfe]
    %v1904 = vld [vmem:[%s1266 + $0x70] sm:$0x1]
    %v1905 = vld [vmem:[%s1266 + $0x78] sm:$0x1]
    %v1906 = vld [vmem:[%s1266 + $0x80] sm:$0xfe]
    %v1907 = vld [vmem:[%s1266 + $0x88] sm:$0xfe]
    %v1908 = vld [vmem:[%s1266 + $0x90] sm:$0x1]
    %v1909 = vld [vmem:[%s1266 + $0x98] sm:$0x1]
    %v1910 = vld [vmem:[%s1266 + $0xa0] sm:$0xfe]
    %v1911 = vld [vmem:[%s1266 + $0xa8] sm:$0xfe]
    %v1912 = vld [vmem:[%s1266 + $0xb0] sm:$0x1]
    %v1913 = vld [vmem:[%s1266 + $0xb8] sm:$0x1]
    %v1914 = vld [vmem:[%s1266 + $0xc0] sm:$0xfe]
    %v1915 = vld [vmem:[%s1266 + $0xc8] sm:$0xfe]
    %v1916 = vld [vmem:[%s1266 + $0xd0] sm:$0x1]
    %v1917 = vld [vmem:[%s1266 + $0xd8] sm:$0x1]
    %v1918 = vld [vmem:[%s1266 + $0xe0] sm:$0xfe]
    %v1919 = vld [vmem:[%s1266 + $0xe8] sm:$0xfe]
    %v1920 = vld [vmem:[%s1266 + $0xf0] sm:$0x1]
    %v1921 = vld [vmem:[%s1266 + $0xf8] sm:$0x1]
    %v1954 = vrot.slane %v1890, 1
    %v1955 = vrot.slane %v1892, 1
    %v1956 = vsel %vm1632, %v1954, %v1955
    %v1957 = vrot.slane %v1891, 1
    %v1958 = vrot.slane %v1893, 1
    %v1959 = vsel %vm1632, %v1957, %v1958
    %v1960 = vrot.slane %v1894, 1
    %v1961 = vrot.slane %v1896, 1
    %v1962 = vsel %vm1632, %v1960, %v1961
    %v1963 = vrot.slane %v1895, 1
    %v1964 = vrot.slane %v1897, 1
    %v1965 = vsel %vm1632, %v1963, %v1964
    %v1966 = vrot.slane %v1898, 1
    %v1967 = vrot.slane %v1900, 1
    %v1968 = vsel %vm1632, %v1966, %v1967
    %v1969 = vrot.slane %v1899, 1
    %v1970 = vrot.slane %v1901, 1
    %v1971 = vsel %vm1632, %v1969, %v1970
    %v1972 = vrot.slane %v1902, 1
    %v1973 = vrot.slane %v1904, 1
    %v1974 = vsel %vm1632, %v1972, %v1973
    %v1975 = vrot.slane %v1903, 1
    %v1976 = vrot.slane %v1905, 1
    %v1977 = vsel %vm1632, %v1975, %v1976
    %v1978 = vrot.slane %v1906, 1
    %v1979 = vrot.slane %v1908, 1
    %v1980 = vsel %vm1632, %v1978, %v1979
    %v1981 = vrot.slane %v1907, 1
    %v1982 = vrot.slane %v1909, 1
    %v1983 = vsel %vm1632, %v1981, %v1982
    %v1984 = vrot.slane %v1910, 1
    %v1985 = vrot.slane %v1912, 1
    %v1986 = vsel %vm1632, %v1984, %v1985
    %v1987 = vrot.slane %v1911, 1
    %v1988 = vrot.slane %v1913, 1
    %v1989 = vsel %vm1632, %v1987, %v1988
    %v1990 = vrot.slane %v1914, 1
    %v1991 = vrot.slane %v1916, 1
    %v1992 = vsel %vm1632, %v1990, %v1991
    %v1993 = vrot.slane %v1915, 1
    %v1994 = vrot.slane %v1917, 1
    %v1995 = vsel %vm1632, %v1993, %v1994
    %v1996 = vrot.slane %v1918, 1
    %v1997 = vrot.slane %v1920, 1
    %v1998 = vsel %vm1632, %v1996, %v1997
    %v1999 = vrot.slane %v1919, 1
    %v2000 = vrot.slane %v1921, 1
    %v2001 = vsel %vm1632, %v1999, %v2000
    %2018 = vst [vmem:[#allocation5 + $0x40] sm:$0xff] %v1956
    %2019 = vst [vmem:[#allocation5 + $0x48] sm:$0xff] %v1959
    %2020 = vst [vmem:[#allocation5 + $0xd0] sm:$0xff] %v1962
    %2021 = vst [vmem:[#allocation5 + $0xd8] sm:$0xff] %v1965
    %2022 = vst [vmem:[#allocation5 + $0x160] sm:$0xff] %v1968
    %2023 = vst [vmem:[#allocation5 + $0x168] sm:$0xff] %v1971
    %2024 = vst [vmem:[#allocation5 + $0x1f0] sm:$0xff] %v1974
    %2025 = vst [vmem:[#allocation5 + $0x1f8] sm:$0xff] %v1977
    %2026 = vst [vmem:[#allocation5 + $0x280] sm:$0xff] %v1980
    %2027 = vst [vmem:[#allocation5 + $0x288] sm:$0xff] %v1983
    %2028 = vst [vmem:[#allocation5 + $0x310] sm:$0xff] %v1986
    %2029 = vst [vmem:[#allocation5 + $0x318] sm:$0xff] %v1989
    %2030 = vst [vmem:[#allocation5 + $0x3a0] sm:$0xff] %v1992
    %2031 = vst [vmem:[#allocation5 + $0x3a8] sm:$0xff] %v1995
    %2032 = vst [vmem:[#allocation5 + $0x430] sm:$0xff] %v1998
    %2033 = vst [vmem:[#allocation5 + $0x438] sm:$0xff] %v2001
    %v2034 = vld [vmem:[%s1266] sm:$0xfc]
    %v2035 = vld [vmem:[%s1266 + $0x8] sm:$0xfc]
    %v2036 = vld [vmem:[%s1266 + $0x10] sm:$0x3]
    %v2037 = vld [vmem:[%s1266 + $0x18] sm:$0x3]
    %v2038 = vld [vmem:[%s1266 + $0x20] sm:$0xfc]
    %v2039 = vld [vmem:[%s1266 + $0x28] sm:$0xfc]
    %v2040 = vld [vmem:[%s1266 + $0x30] sm:$0x3]
    %v2041 = vld [vmem:[%s1266 + $0x38] sm:$0x3]
    %v2042 = vld [vmem:[%s1266 + $0x40] sm:$0xfc]
    %v2043 = vld [vmem:[%s1266 + $0x48] sm:$0xfc]
    %v2044 = vld [vmem:[%s1266 + $0x50] sm:$0x3]
    %v2045 = vld [vmem:[%s1266 + $0x58] sm:$0x3]
    %v2046 = vld [vmem:[%s1266 + $0x60] sm:$0xfc]
    %v2047 = vld [vmem:[%s1266 + $0x68] sm:$0xfc]
    %v2048 = vld [vmem:[%s1266 + $0x70] sm:$0x3]
    %v2049 = vld [vmem:[%s1266 + $0x78] sm:$0x3]
    %v2050 = vld [vmem:[%s1266 + $0x80] sm:$0xfc]
    %v2051 = vld [vmem:[%s1266 + $0x88] sm:$0xfc]
    %v2052 = vld [vmem:[%s1266 + $0x90] sm:$0x3]
    %v2053 = vld [vmem:[%s1266 + $0x98] sm:$0x3]
    %v2054 = vld [vmem:[%s1266 + $0xa0] sm:$0xfc]
    %v2055 = vld [vmem:[%s1266 + $0xa8] sm:$0xfc]
    %v2056 = vld [vmem:[%s1266 + $0xb0] sm:$0x3]
    %v2057 = vld [vmem:[%s1266 + $0xb8] sm:$0x3]
    %v2058 = vld [vmem:[%s1266 + $0xc0] sm:$0xfc]
    %v2059 = vld [vmem:[%s1266 + $0xc8] sm:$0xfc]
    %v2060 = vld [vmem:[%s1266 + $0xd0] sm:$0x3]
    %v2061 = vld [vmem:[%s1266 + $0xd8] sm:$0x3]
    %v2062 = vld [vmem:[%s1266 + $0xe0] sm:$0xfc]
    %v2063 = vld [vmem:[%s1266 + $0xe8] sm:$0xfc]
    %v2064 = vld [vmem:[%s1266 + $0xf0] sm:$0x3]
    %v2065 = vld [vmem:[%s1266 + $0xf8] sm:$0x3]
    %v2098 = vrot.slane %v2034, 2
    %v2099 = vrot.slane %v2036, 2
    %v2100 = vsel %vm1777, %v2098, %v2099
    %v2101 = vrot.slane %v2035, 2
    %v2102 = vrot.slane %v2037, 2
    %v2103 = vsel %vm1777, %v2101, %v2102
    %v2104 = vrot.slane %v2038, 2
    %v2105 = vrot.slane %v2040, 2
    %v2106 = vsel %vm1777, %v2104, %v2105
    %v2107 = vrot.slane %v2039, 2
    %v2108 = vrot.slane %v2041, 2
    %v2109 = vsel %vm1777, %v2107, %v2108
    %v2110 = vrot.slane %v2042, 2
    %v2111 = vrot.slane %v2044, 2
    %v2112 = vsel %vm1777, %v2110, %v2111
    %v2113 = vrot.slane %v2043, 2
    %v2114 = vrot.slane %v2045, 2
    %v2115 = vsel %vm1777, %v2113, %v2114
    %v2116 = vrot.slane %v2046, 2
    %v2117 = vrot.slane %v2048, 2
    %v2118 = vsel %vm1777, %v2116, %v2117
    %v2119 = vrot.slane %v2047, 2
    %v2120 = vrot.slane %v2049, 2
    %v2121 = vsel %vm1777, %v2119, %v2120
    %v2122 = vrot.slane %v2050, 2
    %v2123 = vrot.slane %v2052, 2
    %v2124 = vsel %vm1777, %v2122, %v2123
    %v2125 = vrot.slane %v2051, 2
    %v2126 = vrot.slane %v2053, 2
    %v2127 = vsel %vm1777, %v2125, %v2126
    %v2128 = vrot.slane %v2054, 2
    %v2129 = vrot.slane %v2056, 2
    %v2130 = vsel %vm1777, %v2128, %v2129
    %v2131 = vrot.slane %v2055, 2
    %v2132 = vrot.slane %v2057, 2
    %v2133 = vsel %vm1777, %v2131, %v2132
    %v2134 = vrot.slane %v2058, 2
    %v2135 = vrot.slane %v2060, 2
    %v2136 = vsel %vm1777, %v2134, %v2135
    %v2137 = vrot.slane %v2059, 2
    %v2138 = vrot.slane %v2061, 2
    %v2139 = vsel %vm1777, %v2137, %v2138
    %v2140 = vrot.slane %v2062, 2
    %v2141 = vrot.slane %v2064, 2
    %v2142 = vsel %vm1777, %v2140, %v2141
    %v2143 = vrot.slane %v2063, 2
    %v2144 = vrot.slane %v2065, 2
    %v2145 = vsel %vm1777, %v2143, %v2144
    %2162 = vst [vmem:[#allocation5 + $0x50] sm:$0xff] %v2100
    %2163 = vst [vmem:[#allocation5 + $0x58] sm:$0xff] %v2103
    %2164 = vst [vmem:[#allocation5 + $0xe0] sm:$0xff] %v2106
    %2165 = vst [vmem:[#allocation5 + $0xe8] sm:$0xff] %v2109
    %2166 = vst [vmem:[#allocation5 + $0x170] sm:$0xff] %v2112
    %2167 = vst [vmem:[#allocation5 + $0x178] sm:$0xff] %v2115
    %2168 = vst [vmem:[#allocation5 + $0x200] sm:$0xff] %v2118
    %2169 = vst [vmem:[#allocation5 + $0x208] sm:$0xff] %v2121
    %2170 = vst [vmem:[#allocation5 + $0x290] sm:$0xff] %v2124
    %2171 = vst [vmem:[#allocation5 + $0x298] sm:$0xff] %v2127
    %2172 = vst [vmem:[#allocation5 + $0x320] sm:$0xff] %v2130
    %2173 = vst [vmem:[#allocation5 + $0x328] sm:$0xff] %v2133
    %2174 = vst [vmem:[#allocation5 + $0x3b0] sm:$0xff] %v2136
    %2175 = vst [vmem:[#allocation5 + $0x3b8] sm:$0xff] %v2139
    %2176 = vst [vmem:[#allocation5 + $0x440] sm:$0xff] %v2142
    %2177 = vst [vmem:[#allocation5 + $0x448] sm:$0xff] %v2145
    %s2178 = scalar_lea.vmem [#allocation3], 64
    %v2179 = vld [vmem:[%s2178] sm:$0xff]
    %v2180 = vld [vmem:[%s2178 + $0x8] sm:$0xff]
    %v2181 = vld [vmem:[%s2178 + $0x20] sm:$0xff]
    %v2182 = vld [vmem:[%s2178 + $0x28] sm:$0xff]
    %v2183 = vld [vmem:[%s2178 + $0x40] sm:$0xff]
    %v2184 = vld [vmem:[%s2178 + $0x48] sm:$0xff]
    %v2185 = vld [vmem:[%s2178 + $0x60] sm:$0xff]
    %v2186 = vld [vmem:[%s2178 + $0x68] sm:$0xff]
    %v2187 = vld [vmem:[%s2178 + $0x80] sm:$0xff]
    %v2188 = vld [vmem:[%s2178 + $0x88] sm:$0xff]
    %v2189 = vld [vmem:[%s2178 + $0xa0] sm:$0xff]
    %v2190 = vld [vmem:[%s2178 + $0xa8] sm:$0xff]
    %v2191 = vld [vmem:[%s2178 + $0xc0] sm:$0xff]
    %v2192 = vld [vmem:[%s2178 + $0xc8] sm:$0xff]
    %v2193 = vld [vmem:[%s2178 + $0xe0] sm:$0xff]
    %v2194 = vld [vmem:[%s2178 + $0xe8] sm:$0xff]
    %2195 = vst [vmem:[#allocation5 + $0x60] sm:$0xff] %v2179
    %2196 = vst [vmem:[#allocation5 + $0x68] sm:$0xff] %v2180
    %2197 = vst [vmem:[#allocation5 + $0xf0] sm:$0xff] %v2181
    %2198 = vst [vmem:[#allocation5 + $0xf8] sm:$0xff] %v2182
    %2199 = vst [vmem:[#allocation5 + $0x180] sm:$0xff] %v2183
    %2200 = vst [vmem:[#allocation5 + $0x188] sm:$0xff] %v2184
    %2201 = vst [vmem:[#allocation5 + $0x210] sm:$0xff] %v2185
    %2202 = vst [vmem:[#allocation5 + $0x218] sm:$0xff] %v2186
    %2203 = vst [vmem:[#allocation5 + $0x2a0] sm:$0xff] %v2187
    %2204 = vst [vmem:[#allocation5 + $0x2a8] sm:$0xff] %v2188
    %2205 = vst [vmem:[#allocation5 + $0x330] sm:$0xff] %v2189
    %2206 = vst [vmem:[#allocation5 + $0x338] sm:$0xff] %v2190
    %2207 = vst [vmem:[#allocation5 + $0x3c0] sm:$0xff] %v2191
    %2208 = vst [vmem:[#allocation5 + $0x3c8] sm:$0xff] %v2192
    %2209 = vst [vmem:[#allocation5 + $0x450] sm:$0xff] %v2193
    %2210 = vst [vmem:[#allocation5 + $0x458] sm:$0xff] %v2194
    %v2211 = vld [vmem:[%s2178] sm:$0xfe]
    %v2212 = vld [vmem:[%s2178 + $0x8] sm:$0xfe]
    %v2213 = vld [vmem:[%s2178 + $0x10] sm:$0x1]
    %v2214 = vld [vmem:[%s2178 + $0x18] sm:$0x1]
    %v2215 = vld [vmem:[%s2178 + $0x20] sm:$0xfe]
    %v2216 = vld [vmem:[%s2178 + $0x28] sm:$0xfe]
    %v2217 = vld [vmem:[%s2178 + $0x30] sm:$0x1]
    %v2218 = vld [vmem:[%s2178 + $0x38] sm:$0x1]
    %v2219 = vld [vmem:[%s2178 + $0x40] sm:$0xfe]
    %v2220 = vld [vmem:[%s2178 + $0x48] sm:$0xfe]
    %v2221 = vld [vmem:[%s2178 + $0x50] sm:$0x1]
    %v2222 = vld [vmem:[%s2178 + $0x58] sm:$0x1]
    %v2223 = vld [vmem:[%s2178 + $0x60] sm:$0xfe]
    %v2224 = vld [vmem:[%s2178 + $0x68] sm:$0xfe]
    %v2225 = vld [vmem:[%s2178 + $0x70] sm:$0x1]
    %v2226 = vld [vmem:[%s2178 + $0x78] sm:$0x1]
    %v2227 = vld [vmem:[%s2178 + $0x80] sm:$0xfe]
    %v2228 = vld [vmem:[%s2178 + $0x88] sm:$0xfe]
    %v2229 = vld [vmem:[%s2178 + $0x90] sm:$0x1]
    %v2230 = vld [vmem:[%s2178 + $0x98] sm:$0x1]
    %v2231 = vld [vmem:[%s2178 + $0xa0] sm:$0xfe]
    %v2232 = vld [vmem:[%s2178 + $0xa8] sm:$0xfe]
    %v2233 = vld [vmem:[%s2178 + $0xb0] sm:$0x1]
    %v2234 = vld [vmem:[%s2178 + $0xb8] sm:$0x1]
    %v2235 = vld [vmem:[%s2178 + $0xc0] sm:$0xfe]
    %v2236 = vld [vmem:[%s2178 + $0xc8] sm:$0xfe]
    %v2237 = vld [vmem:[%s2178 + $0xd0] sm:$0x1]
    %v2238 = vld [vmem:[%s2178 + $0xd8] sm:$0x1]
    %v2239 = vld [vmem:[%s2178 + $0xe0] sm:$0xfe]
    %v2240 = vld [vmem:[%s2178 + $0xe8] sm:$0xfe]
    %v2241 = vld [vmem:[%s2178 + $0xf0] sm:$0x1]
    %v2242 = vld [vmem:[%s2178 + $0xf8] sm:$0x1]
    %v2275 = vrot.slane %v2211, 1
    %v2276 = vrot.slane %v2213, 1
    %v2277 = vsel %vm1632, %v2275, %v2276
    %v2278 = vrot.slane %v2212, 1
    %v2279 = vrot.slane %v2214, 1
    %v2280 = vsel %vm1632, %v2278, %v2279
    %v2281 = vrot.slane %v2215, 1
    %v2282 = vrot.slane %v2217, 1
    %v2283 = vsel %vm1632, %v2281, %v2282
    %v2284 = vrot.slane %v2216, 1
    %v2285 = vrot.slane %v2218, 1
    %v2286 = vsel %vm1632, %v2284, %v2285
    %v2287 = vrot.slane %v2219, 1
    %v2288 = vrot.slane %v2221, 1
    %v2289 = vsel %vm1632, %v2287, %v2288
    %v2290 = vrot.slane %v2220, 1
    %v2291 = vrot.slane %v2222, 1
    %v2292 = vsel %vm1632, %v2290, %v2291
    %v2293 = vrot.slane %v2223, 1
    %v2294 = vrot.slane %v2225, 1
    %v2295 = vsel %vm1632, %v2293, %v2294
    %v2296 = vrot.slane %v2224, 1
    %v2297 = vrot.slane %v2226, 1
    %v2298 = vsel %vm1632, %v2296, %v2297
    %v2299 = vrot.slane %v2227, 1
    %v2300 = vrot.slane %v2229, 1
    %v2301 = vsel %vm1632, %v2299, %v2300
    %v2302 = vrot.slane %v2228, 1
    %v2303 = vrot.slane %v2230, 1
    %v2304 = vsel %vm1632, %v2302, %v2303
    %v2305 = vrot.slane %v2231, 1
    %v2306 = vrot.slane %v2233, 1
    %v2307 = vsel %vm1632, %v2305, %v2306
    %v2308 = vrot.slane %v2232, 1
    %v2309 = vrot.slane %v2234, 1
    %v2310 = vsel %vm1632, %v2308, %v2309
    %v2311 = vrot.slane %v2235, 1
    %v2312 = vrot.slane %v2237, 1
    %v2313 = vsel %vm1632, %v2311, %v2312
    %v2314 = vrot.slane %v2236, 1
    %v2315 = vrot.slane %v2238, 1
    %v2316 = vsel %vm1632, %v2314, %v2315
    %v2317 = vrot.slane %v2239, 1
    %v2318 = vrot.slane %v2241, 1
    %v2319 = vsel %vm1632, %v2317, %v2318
    %v2320 = vrot.slane %v2240, 1
    %v2321 = vrot.slane %v2242, 1
    %v2322 = vsel %vm1632, %v2320, %v2321
    %2339 = vst [vmem:[#allocation5 + $0x70] sm:$0xff] %v2277
    %2340 = vst [vmem:[#allocation5 + $0x78] sm:$0xff] %v2280
    %2341 = vst [vmem:[#allocation5 + $0x100] sm:$0xff] %v2283
    %2342 = vst [vmem:[#allocation5 + $0x108] sm:$0xff] %v2286
    %2343 = vst [vmem:[#allocation5 + $0x190] sm:$0xff] %v2289
    %2344 = vst [vmem:[#allocation5 + $0x198] sm:$0xff] %v2292
    %2345 = vst [vmem:[#allocation5 + $0x220] sm:$0xff] %v2295
    %2346 = vst [vmem:[#allocation5 + $0x228] sm:$0xff] %v2298
    %2347 = vst [vmem:[#allocation5 + $0x2b0] sm:$0xff] %v2301
    %2348 = vst [vmem:[#allocation5 + $0x2b8] sm:$0xff] %v2304
    %2349 = vst [vmem:[#allocation5 + $0x340] sm:$0xff] %v2307
    %2350 = vst [vmem:[#allocation5 + $0x348] sm:$0xff] %v2310
    %2351 = vst [vmem:[#allocation5 + $0x3d0] sm:$0xff] %v2313
    %2352 = vst [vmem:[#allocation5 + $0x3d8] sm:$0xff] %v2316
    %2353 = vst [vmem:[#allocation5 + $0x460] sm:$0xff] %v2319
    %2354 = vst [vmem:[#allocation5 + $0x468] sm:$0xff] %v2322
    %v2355 = vld [vmem:[%s2178] sm:$0xfc]
    %v2356 = vld [vmem:[%s2178 + $0x8] sm:$0xfc]
    %v2357 = vld [vmem:[%s2178 + $0x10] sm:$0x3]
    %v2358 = vld [vmem:[%s2178 + $0x18] sm:$0x3]
    %v2359 = vld [vmem:[%s2178 + $0x20] sm:$0xfc]
    %v2360 = vld [vmem:[%s2178 + $0x28] sm:$0xfc]
    %v2361 = vld [vmem:[%s2178 + $0x30] sm:$0x3]
    %v2362 = vld [vmem:[%s2178 + $0x38] sm:$0x3]
    %v2363 = vld [vmem:[%s2178 + $0x40] sm:$0xfc]
    %v2364 = vld [vmem:[%s2178 + $0x48] sm:$0xfc]
    %v2365 = vld [vmem:[%s2178 + $0x50] sm:$0x3]
    %v2366 = vld [vmem:[%s2178 + $0x58] sm:$0x3]
    %v2367 = vld [vmem:[%s2178 + $0x60] sm:$0xfc]
    %v2368 = vld [vmem:[%s2178 + $0x68] sm:$0xfc]
    %v2369 = vld [vmem:[%s2178 + $0x70] sm:$0x3]
    %v2370 = vld [vmem:[%s2178 + $0x78] sm:$0x3]
    %v2371 = vld [vmem:[%s2178 + $0x80] sm:$0xfc]
    %v2372 = vld [vmem:[%s2178 + $0x88] sm:$0xfc]
    %v2373 = vld [vmem:[%s2178 + $0x90] sm:$0x3]
    %v2374 = vld [vmem:[%s2178 + $0x98] sm:$0x3]
    %v2375 = vld [vmem:[%s2178 + $0xa0] sm:$0xfc]
    %v2376 = vld [vmem:[%s2178 + $0xa8] sm:$0xfc]
    %v2377 = vld [vmem:[%s2178 + $0xb0] sm:$0x3]
    %v2378 = vld [vmem:[%s2178 + $0xb8] sm:$0x3]
    %v2379 = vld [vmem:[%s2178 + $0xc0] sm:$0xfc]
    %v2380 = vld [vmem:[%s2178 + $0xc8] sm:$0xfc]
    %v2381 = vld [vmem:[%s2178 + $0xd0] sm:$0x3]
    %v2382 = vld [vmem:[%s2178 + $0xd8] sm:$0x3]
    %v2383 = vld [vmem:[%s2178 + $0xe0] sm:$0xfc]
    %v2384 = vld [vmem:[%s2178 + $0xe8] sm:$0xfc]
    %v2385 = vld [vmem:[%s2178 + $0xf0] sm:$0x3]
    %v2386 = vld [vmem:[%s2178 + $0xf8] sm:$0x3]
    %v2419 = vrot.slane %v2355, 2
    %v2420 = vrot.slane %v2357, 2
    %v2421 = vsel %vm1777, %v2419, %v2420
    %v2422 = vrot.slane %v2356, 2
    %v2423 = vrot.slane %v2358, 2
    %v2424 = vsel %vm1777, %v2422, %v2423
    %v2425 = vrot.slane %v2359, 2
    %v2426 = vrot.slane %v2361, 2
    %v2427 = vsel %vm1777, %v2425, %v2426
    %v2428 = vrot.slane %v2360, 2
    %v2429 = vrot.slane %v2362, 2
    %v2430 = vsel %vm1777, %v2428, %v2429
    %v2431 = vrot.slane %v2363, 2
    %v2432 = vrot.slane %v2365, 2
    %v2433 = vsel %vm1777, %v2431, %v2432
    %v2434 = vrot.slane %v2364, 2
    %v2435 = vrot.slane %v2366, 2
    %v2436 = vsel %vm1777, %v2434, %v2435
    %v2437 = vrot.slane %v2367, 2
    %v2438 = vrot.slane %v2369, 2
    %v2439 = vsel %vm1777, %v2437, %v2438
    %v2440 = vrot.slane %v2368, 2
    %v2441 = vrot.slane %v2370, 2
    %v2442 = vsel %vm1777, %v2440, %v2441
    %v2443 = vrot.slane %v2371, 2
    %v2444 = vrot.slane %v2373, 2
    %v2445 = vsel %vm1777, %v2443, %v2444
    %v2446 = vrot.slane %v2372, 2
    %v2447 = vrot.slane %v2374, 2
    %v2448 = vsel %vm1777, %v2446, %v2447
    %v2449 = vrot.slane %v2375, 2
    %v2450 = vrot.slane %v2377, 2
    %v2451 = vsel %vm1777, %v2449, %v2450
    %v2452 = vrot.slane %v2376, 2
    %v2453 = vrot.slane %v2378, 2
    %v2454 = vsel %vm1777, %v2452, %v2453
    %v2455 = vrot.slane %v2379, 2
    %v2456 = vrot.slane %v2381, 2
    %v2457 = vsel %vm1777, %v2455, %v2456
    %v2458 = vrot.slane %v2380, 2
    %v2459 = vrot.slane %v2382, 2
    %v2460 = vsel %vm1777, %v2458, %v2459
    %v2461 = vrot.slane %v2383, 2
    %v2462 = vrot.slane %v2385, 2
    %v2463 = vsel %vm1777, %v2461, %v2462
    %v2464 = vrot.slane %v2384, 2
    %v2465 = vrot.slane %v2386, 2
    %v2466 = vsel %vm1777, %v2464, %v2465
    %2483 = vst [vmem:[#allocation5 + $0x80] sm:$0xff] %v2421
    %2484 = vst [vmem:[#allocation5 + $0x88] sm:$0xff] %v2424
    %2485 = vst [vmem:[#allocation5 + $0x110] sm:$0xff] %v2427
    %2486 = vst [vmem:[#allocation5 + $0x118] sm:$0xff] %v2430
    %2487 = vst [vmem:[#allocation5 + $0x1a0] sm:$0xff] %v2433
    %2488 = vst [vmem:[#allocation5 + $0x1a8] sm:$0xff] %v2436
    %2489 = vst [vmem:[#allocation5 + $0x230] sm:$0xff] %v2439
    %2490 = vst [vmem:[#allocation5 + $0x238] sm:$0xff] %v2442
    %2491 = vst [vmem:[#allocation5 + $0x2c0] sm:$0xff] %v2445
    %2492 = vst [vmem:[#allocation5 + $0x2c8] sm:$0xff] %v2448
    %2493 = vst [vmem:[#allocation5 + $0x350] sm:$0xff] %v2451
    %2494 = vst [vmem:[#allocation5 + $0x358] sm:$0xff] %v2454
    %2495 = vst [vmem:[#allocation5 + $0x3e0] sm:$0xff] %v2457
    %2496 = vst [vmem:[#allocation5 + $0x3e8] sm:$0xff] %v2460
    %2497 = vst [vmem:[#allocation5 + $0x470] sm:$0xff] %v2463
    %2498 = vst [vmem:[#allocation5 + $0x478] sm:$0xff] %v2466
    %v2499 = vld [vmem:[%s1398] sm:$0xff]
    %v2500 = vld [vmem:[%s1398 + $0x8] sm:$0xff]
    %v2501 = vld [vmem:[%s1398 + $0x20] sm:$0xff]
    %v2502 = vld [vmem:[%s1398 + $0x28] sm:$0xff]
    %v2503 = vld [vmem:[%s1398 + $0x40] sm:$0xff]
    %v2504 = vld [vmem:[%s1398 + $0x48] sm:$0xff]
    %v2505 = vld [vmem:[%s1398 + $0x60] sm:$0xff]
    %v2506 = vld [vmem:[%s1398 + $0x68] sm:$0xff]
    %v2507 = vld [vmem:[%s1398 + $0x80] sm:$0xff]
    %v2508 = vld [vmem:[%s1398 + $0x88] sm:$0xff]
    %v2509 = vld [vmem:[%s1398 + $0xa0] sm:$0xff]
    %v2510 = vld [vmem:[%s1398 + $0xa8] sm:$0xff]
    %v2511 = vld [vmem:[%s1398 + $0xc0] sm:$0xff]
    %v2512 = vld [vmem:[%s1398 + $0xc8] sm:$0xff]
    %v2513 = vld [vmem:[%s1398 + $0xe0] sm:$0xff]
    %v2514 = vld [vmem:[%s1398 + $0xe8] sm:$0xff]
    %2515 = vst [vmem:[#allocation5 + $0x480] sm:$0xff] %v2499
    %2516 = vst [vmem:[#allocation5 + $0x488] sm:$0xff] %v2500
    %2517 = vst [vmem:[#allocation5 + $0x510] sm:$0xff] %v2501
    %2518 = vst [vmem:[#allocation5 + $0x518] sm:$0xff] %v2502
    %2519 = vst [vmem:[#allocation5 + $0x5a0] sm:$0xff] %v2503
    %2520 = vst [vmem:[#allocation5 + $0x5a8] sm:$0xff] %v2504
    %2521 = vst [vmem:[#allocation5 + $0x630] sm:$0xff] %v2505
    %2522 = vst [vmem:[#allocation5 + $0x638] sm:$0xff] %v2506
    %2523 = vst [vmem:[#allocation5 + $0x6c0] sm:$0xff] %v2507
    %2524 = vst [vmem:[#allocation5 + $0x6c8] sm:$0xff] %v2508
    %2525 = vst [vmem:[#allocation5 + $0x750] sm:$0xff] %v2509
    %2526 = vst [vmem:[#allocation5 + $0x758] sm:$0xff] %v2510
    %2527 = vst [vmem:[#allocation5 + $0x7e0] sm:$0xff] %v2511
    %2528 = vst [vmem:[#allocation5 + $0x7e8] sm:$0xff] %v2512
    %2529 = vst [vmem:[#allocation5 + $0x870] sm:$0xff] %v2513
    %2530 = vst [vmem:[#allocation5 + $0x878] sm:$0xff] %v2514
    %v2531 = vld [vmem:[%s1398] sm:$0xfe]
    %v2532 = vld [vmem:[%s1398 + $0x8] sm:$0xfe]
    %v2533 = vld [vmem:[%s1398 + $0x10] sm:$0x1]
    %v2534 = vld [vmem:[%s1398 + $0x18] sm:$0x1]
    %v2535 = vld [vmem:[%s1398 + $0x20] sm:$0xfe]
    %v2536 = vld [vmem:[%s1398 + $0x28] sm:$0xfe]
    %v2537 = vld [vmem:[%s1398 + $0x30] sm:$0x1]
    %v2538 = vld [vmem:[%s1398 + $0x38] sm:$0x1]
    %v2539 = vld [vmem:[%s1398 + $0x40] sm:$0xfe]
    %v2540 = vld [vmem:[%s1398 + $0x48] sm:$0xfe]
    %v2541 = vld [vmem:[%s1398 + $0x50] sm:$0x1]
    %v2542 = vld [vmem:[%s1398 + $0x58] sm:$0x1]
    %v2543 = vld [vmem:[%s1398 + $0x60] sm:$0xfe]
    %v2544 = vld [vmem:[%s1398 + $0x68] sm:$0xfe]
    %v2545 = vld [vmem:[%s1398 + $0x70] sm:$0x1]
    %v2546 = vld [vmem:[%s1398 + $0x78] sm:$0x1]
    %v2547 = vld [vmem:[%s1398 + $0x80] sm:$0xfe]
    %v2548 = vld [vmem:[%s1398 + $0x88] sm:$0xfe]
    %v2549 = vld [vmem:[%s1398 + $0x90] sm:$0x1]
    %v2550 = vld [vmem:[%s1398 + $0x98] sm:$0x1]
    %v2551 = vld [vmem:[%s1398 + $0xa0] sm:$0xfe]
    %v2552 = vld [vmem:[%s1398 + $0xa8] sm:$0xfe]
    %v2553 = vld [vmem:[%s1398 + $0xb0] sm:$0x1]
    %v2554 = vld [vmem:[%s1398 + $0xb8] sm:$0x1]
    %v2555 = vld [vmem:[%s1398 + $0xc0] sm:$0xfe]
    %v2556 = vld [vmem:[%s1398 + $0xc8] sm:$0xfe]
    %v2557 = vld [vmem:[%s1398 + $0xd0] sm:$0x1]
    %v2558 = vld [vmem:[%s1398 + $0xd8] sm:$0x1]
    %v2559 = vld [vmem:[%s1398 + $0xe0] sm:$0xfe]
    %v2560 = vld [vmem:[%s1398 + $0xe8] sm:$0xfe]
    %v2561 = vld [vmem:[%s1398 + $0xf0] sm:$0x1]
    %v2562 = vld [vmem:[%s1398 + $0xf8] sm:$0x1]
    %v2595 = vrot.slane %v2531, 1
    %v2596 = vrot.slane %v2533, 1
    %v2597 = vsel %vm1632, %v2595, %v2596
    %v2598 = vrot.slane %v2532, 1
    %v2599 = vrot.slane %v2534, 1
    %v2600 = vsel %vm1632, %v2598, %v2599
    %v2601 = vrot.slane %v2535, 1
    %v2602 = vrot.slane %v2537, 1
    %v2603 = vsel %vm1632, %v2601, %v2602
    %v2604 = vrot.slane %v2536, 1
    %v2605 = vrot.slane %v2538, 1
    %v2606 = vsel %vm1632, %v2604, %v2605
    %v2607 = vrot.slane %v2539, 1
    %v2608 = vrot.slane %v2541, 1
    %v2609 = vsel %vm1632, %v2607, %v2608
    %v2610 = vrot.slane %v2540, 1
    %v2611 = vrot.slane %v2542, 1
    %v2612 = vsel %vm1632, %v2610, %v2611
    %v2613 = vrot.slane %v2543, 1
    %v2614 = vrot.slane %v2545, 1
    %v2615 = vsel %vm1632, %v2613, %v2614
    %v2616 = vrot.slane %v2544, 1
    %v2617 = vrot.slane %v2546, 1
    %v2618 = vsel %vm1632, %v2616, %v2617
    %v2619 = vrot.slane %v2547, 1
    %v2620 = vrot.slane %v2549, 1
    %v2621 = vsel %vm1632, %v2619, %v2620
    %v2622 = vrot.slane %v2548, 1
    %v2623 = vrot.slane %v2550, 1
    %v2624 = vsel %vm1632, %v2622, %v2623
    %v2625 = vrot.slane %v2551, 1
    %v2626 = vrot.slane %v2553, 1
    %v2627 = vsel %vm1632, %v2625, %v2626
    %v2628 = vrot.slane %v2552, 1
    %v2629 = vrot.slane %v2554, 1
    %v2630 = vsel %vm1632, %v2628, %v2629
    %v2631 = vrot.slane %v2555, 1
    %v2632 = vrot.slane %v2557, 1
    %v2633 = vsel %vm1632, %v2631, %v2632
    %v2634 = vrot.slane %v2556, 1
    %v2635 = vrot.slane %v2558, 1
    %v2636 = vsel %vm1632, %v2634, %v2635
    %v2637 = vrot.slane %v2559, 1
    %v2638 = vrot.slane %v2561, 1
    %v2639 = vsel %vm1632, %v2637, %v2638
    %v2640 = vrot.slane %v2560, 1
    %v2641 = vrot.slane %v2562, 1
    %v2642 = vsel %vm1632, %v2640, %v2641
    %2659 = vst [vmem:[#allocation5 + $0x490] sm:$0xff] %v2597
    %2660 = vst [vmem:[#allocation5 + $0x498] sm:$0xff] %v2600
    %2661 = vst [vmem:[#allocation5 + $0x520] sm:$0xff] %v2603
    %2662 = vst [vmem:[#allocation5 + $0x528] sm:$0xff] %v2606
    %2663 = vst [vmem:[#allocation5 + $0x5b0] sm:$0xff] %v2609
    %2664 = vst [vmem:[#allocation5 + $0x5b8] sm:$0xff] %v2612
    %2665 = vst [vmem:[#allocation5 + $0x640] sm:$0xff] %v2615
    %2666 = vst [vmem:[#allocation5 + $0x648] sm:$0xff] %v2618
    %2667 = vst [vmem:[#allocation5 + $0x6d0] sm:$0xff] %v2621
    %2668 = vst [vmem:[#allocation5 + $0x6d8] sm:$0xff] %v2624
    %2669 = vst [vmem:[#allocation5 + $0x760] sm:$0xff] %v2627
    %2670 = vst [vmem:[#allocation5 + $0x768] sm:$0xff] %v2630
    %2671 = vst [vmem:[#allocation5 + $0x7f0] sm:$0xff] %v2633
    %2672 = vst [vmem:[#allocation5 + $0x7f8] sm:$0xff] %v2636
    %2673 = vst [vmem:[#allocation5 + $0x880] sm:$0xff] %v2639
    %2674 = vst [vmem:[#allocation5 + $0x888] sm:$0xff] %v2642
    %v2675 = vld [vmem:[%s1398] sm:$0xfc]
    %v2676 = vld [vmem:[%s1398 + $0x8] sm:$0xfc]
    %v2677 = vld [vmem:[%s1398 + $0x10] sm:$0x3]
    %v2678 = vld [vmem:[%s1398 + $0x18] sm:$0x3]
    %v2679 = vld [vmem:[%s1398 + $0x20] sm:$0xfc]
    %v2680 = vld [vmem:[%s1398 + $0x28] sm:$0xfc]
    %v2681 = vld [vmem:[%s1398 + $0x30] sm:$0x3]
    %v2682 = vld [vmem:[%s1398 + $0x38] sm:$0x3]
    %v2683 = vld [vmem:[%s1398 + $0x40] sm:$0xfc]
    %v2684 = vld [vmem:[%s1398 + $0x48] sm:$0xfc]
    %v2685 = vld [vmem:[%s1398 + $0x50] sm:$0x3]
    %v2686 = vld [vmem:[%s1398 + $0x58] sm:$0x3]
    %v2687 = vld [vmem:[%s1398 + $0x60] sm:$0xfc]
    %v2688 = vld [vmem:[%s1398 + $0x68] sm:$0xfc]
    %v2689 = vld [vmem:[%s1398 + $0x70] sm:$0x3]
    %v2690 = vld [vmem:[%s1398 + $0x78] sm:$0x3]
    %v2691 = vld [vmem:[%s1398 + $0x80] sm:$0xfc]
    %v2692 = vld [vmem:[%s1398 + $0x88] sm:$0xfc]
    %v2693 = vld [vmem:[%s1398 + $0x90] sm:$0x3]
    %v2694 = vld [vmem:[%s1398 + $0x98] sm:$0x3]
    %v2695 = vld [vmem:[%s1398 + $0xa0] sm:$0xfc]
    %v2696 = vld [vmem:[%s1398 + $0xa8] sm:$0xfc]
    %v2697 = vld [vmem:[%s1398 + $0xb0] sm:$0x3]
    %v2698 = vld [vmem:[%s1398 + $0xb8] sm:$0x3]
    %v2699 = vld [vmem:[%s1398 + $0xc0] sm:$0xfc]
    %v2700 = vld [vmem:[%s1398 + $0xc8] sm:$0xfc]
    %v2701 = vld [vmem:[%s1398 + $0xd0] sm:$0x3]
    %v2702 = vld [vmem:[%s1398 + $0xd8] sm:$0x3]
    %v2703 = vld [vmem:[%s1398 + $0xe0] sm:$0xfc]
    %v2704 = vld [vmem:[%s1398 + $0xe8] sm:$0xfc]
    %v2705 = vld [vmem:[%s1398 + $0xf0] sm:$0x3]
    %v2706 = vld [vmem:[%s1398 + $0xf8] sm:$0x3]
    %v2739 = vrot.slane %v2675, 2
    %v2740 = vrot.slane %v2677, 2
    %v2741 = vsel %vm1777, %v2739, %v2740
    %v2742 = vrot.slane %v2676, 2
    %v2743 = vrot.slane %v2678, 2
    %v2744 = vsel %vm1777, %v2742, %v2743
    %v2745 = vrot.slane %v2679, 2
    %v2746 = vrot.slane %v2681, 2
    %v2747 = vsel %vm1777, %v2745, %v2746
    %v2748 = vrot.slane %v2680, 2
    %v2749 = vrot.slane %v2682, 2
    %v2750 = vsel %vm1777, %v2748, %v2749
    %v2751 = vrot.slane %v2683, 2
    %v2752 = vrot.slane %v2685, 2
    %v2753 = vsel %vm1777, %v2751, %v2752
    %v2754 = vrot.slane %v2684, 2
    %v2755 = vrot.slane %v2686, 2
    %v2756 = vsel %vm1777, %v2754, %v2755
    %v2757 = vrot.slane %v2687, 2
    %v2758 = vrot.slane %v2689, 2
    %v2759 = vsel %vm1777, %v2757, %v2758
    %v2760 = vrot.slane %v2688, 2
    %v2761 = vrot.slane %v2690, 2
    %v2762 = vsel %vm1777, %v2760, %v2761
    %v2763 = vrot.slane %v2691, 2
    %v2764 = vrot.slane %v2693, 2
    %v2765 = vsel %vm1777, %v2763, %v2764
    %v2766 = vrot.slane %v2692, 2
    %v2767 = vrot.slane %v2694, 2
    %v2768 = vsel %vm1777, %v2766, %v2767
    %v2769 = vrot.slane %v2695, 2
    %v2770 = vrot.slane %v2697, 2
    %v2771 = vsel %vm1777, %v2769, %v2770
    %v2772 = vrot.slane %v2696, 2
    %v2773 = vrot.slane %v2698, 2
    %v2774 = vsel %vm1777, %v2772, %v2773
    %v2775 = vrot.slane %v2699, 2
    %v2776 = vrot.slane %v2701, 2
    %v2777 = vsel %vm1777, %v2775, %v2776
    %v2778 = vrot.slane %v2700, 2
    %v2779 = vrot.slane %v2702, 2
    %v2780 = vsel %vm1777, %v2778, %v2779
    %v2781 = vrot.slane %v2703, 2
    %v2782 = vrot.slane %v2705, 2
    %v2783 = vsel %vm1777, %v2781, %v2782
    %v2784 = vrot.slane %v2704, 2
    %v2785 = vrot.slane %v2706, 2
    %v2786 = vsel %vm1777, %v2784, %v2785
    %2803 = vst [vmem:[#allocation5 + $0x4a0] sm:$0xff] %v2741
    %2804 = vst [vmem:[#allocation5 + $0x4a8] sm:$0xff] %v2744
    %2805 = vst [vmem:[#allocation5 + $0x530] sm:$0xff] %v2747
    %2806 = vst [vmem:[#allocation5 + $0x538] sm:$0xff] %v2750
    %2807 = vst [vmem:[#allocation5 + $0x5c0] sm:$0xff] %v2753
    %2808 = vst [vmem:[#allocation5 + $0x5c8] sm:$0xff] %v2756
    %2809 = vst [vmem:[#allocation5 + $0x650] sm:$0xff] %v2759
    %2810 = vst [vmem:[#allocation5 + $0x658] sm:$0xff] %v2762
    %2811 = vst [vmem:[#allocation5 + $0x6e0] sm:$0xff] %v2765
    %2812 = vst [vmem:[#allocation5 + $0x6e8] sm:$0xff] %v2768
    %2813 = vst [vmem:[#allocation5 + $0x770] sm:$0xff] %v2771
    %2814 = vst [vmem:[#allocation5 + $0x778] sm:$0xff] %v2774
    %2815 = vst [vmem:[#allocation5 + $0x800] sm:$0xff] %v2777
    %2816 = vst [vmem:[#allocation5 + $0x808] sm:$0xff] %v2780
    %2817 = vst [vmem:[#allocation5 + $0x890] sm:$0xff] %v2783
    %2818 = vst [vmem:[#allocation5 + $0x898] sm:$0xff] %v2786
    %v2819 = vld [vmem:[%s1408] sm:$0xff]
    %v2820 = vld [vmem:[%s1408 + $0x8] sm:$0xff]
    %v2821 = vld [vmem:[%s1408 + $0x20] sm:$0xff]
    %v2822 = vld [vmem:[%s1408 + $0x28] sm:$0xff]
    %v2823 = vld [vmem:[%s1408 + $0x40] sm:$0xff]
    %v2824 = vld [vmem:[%s1408 + $0x48] sm:$0xff]
    %v2825 = vld [vmem:[%s1408 + $0x60] sm:$0xff]
    %v2826 = vld [vmem:[%s1408 + $0x68] sm:$0xff]
    %v2827 = vld [vmem:[%s1408 + $0x80] sm:$0xff]
    %v2828 = vld [vmem:[%s1408 + $0x88] sm:$0xff]
    %v2829 = vld [vmem:[%s1408 + $0xa0] sm:$0xff]
    %v2830 = vld [vmem:[%s1408 + $0xa8] sm:$0xff]
    %v2831 = vld [vmem:[%s1408 + $0xc0] sm:$0xff]
    %v2832 = vld [vmem:[%s1408 + $0xc8] sm:$0xff]
    %v2833 = vld [vmem:[%s1408 + $0xe0] sm:$0xff]
    %v2834 = vld [vmem:[%s1408 + $0xe8] sm:$0xff]
    %2835 = vst [vmem:[#allocation5 + $0x4b0] sm:$0xff] %v2819
    %2836 = vst [vmem:[#allocation5 + $0x4b8] sm:$0xff] %v2820
    %2837 = vst [vmem:[#allocation5 + $0x540] sm:$0xff] %v2821
    %2838 = vst [vmem:[#allocation5 + $0x548] sm:$0xff] %v2822
    %2839 = vst [vmem:[#allocation5 + $0x5d0] sm:$0xff] %v2823
    %2840 = vst [vmem:[#allocation5 + $0x5d8] sm:$0xff] %v2824
    %2841 = vst [vmem:[#allocation5 + $0x660] sm:$0xff] %v2825
    %2842 = vst [vmem:[#allocation5 + $0x668] sm:$0xff] %v2826
    %2843 = vst [vmem:[#allocation5 + $0x6f0] sm:$0xff] %v2827
    %2844 = vst [vmem:[#allocation5 + $0x6f8] sm:$0xff] %v2828
    %2845 = vst [vmem:[#allocation5 + $0x780] sm:$0xff] %v2829
    %2846 = vst [vmem:[#allocation5 + $0x788] sm:$0xff] %v2830
    %2847 = vst [vmem:[#allocation5 + $0x810] sm:$0xff] %v2831
    %2848 = vst [vmem:[#allocation5 + $0x818] sm:$0xff] %v2832
    %2849 = vst [vmem:[#allocation5 + $0x8a0] sm:$0xff] %v2833
    %2850 = vst [vmem:[#allocation5 + $0x8a8] sm:$0xff] %v2834
    %v2851 = vld [vmem:[%s1408] sm:$0xfe]
    %v2852 = vld [vmem:[%s1408 + $0x8] sm:$0xfe]
    %v2853 = vld [vmem:[%s1408 + $0x10] sm:$0x1]
    %v2854 = vld [vmem:[%s1408 + $0x18] sm:$0x1]
    %v2855 = vld [vmem:[%s1408 + $0x20] sm:$0xfe]
    %v2856 = vld [vmem:[%s1408 + $0x28] sm:$0xfe]
    %v2857 = vld [vmem:[%s1408 + $0x30] sm:$0x1]
    %v2858 = vld [vmem:[%s1408 + $0x38] sm:$0x1]
    %v2859 = vld [vmem:[%s1408 + $0x40] sm:$0xfe]
    %v2860 = vld [vmem:[%s1408 + $0x48] sm:$0xfe]
    %v2861 = vld [vmem:[%s1408 + $0x50] sm:$0x1]
    %v2862 = vld [vmem:[%s1408 + $0x58] sm:$0x1]
    %v2863 = vld [vmem:[%s1408 + $0x60] sm:$0xfe]
    %v2864 = vld [vmem:[%s1408 + $0x68] sm:$0xfe]
    %v2865 = vld [vmem:[%s1408 + $0x70] sm:$0x1]
    %v2866 = vld [vmem:[%s1408 + $0x78] sm:$0x1]
    %v2867 = vld [vmem:[%s1408 + $0x80] sm:$0xfe]
    %v2868 = vld [vmem:[%s1408 + $0x88] sm:$0xfe]
    %v2869 = vld [vmem:[%s1408 + $0x90] sm:$0x1]
    %v2870 = vld [vmem:[%s1408 + $0x98] sm:$0x1]
    %v2871 = vld [vmem:[%s1408 + $0xa0] sm:$0xfe]
    %v2872 = vld [vmem:[%s1408 + $0xa8] sm:$0xfe]
    %v2873 = vld [vmem:[%s1408 + $0xb0] sm:$0x1]
    %v2874 = vld [vmem:[%s1408 + $0xb8] sm:$0x1]
    %v2875 = vld [vmem:[%s1408 + $0xc0] sm:$0xfe]
    %v2876 = vld [vmem:[%s1408 + $0xc8] sm:$0xfe]
    %v2877 = vld [vmem:[%s1408 + $0xd0] sm:$0x1]
    %v2878 = vld [vmem:[%s1408 + $0xd8] sm:$0x1]
    %v2879 = vld [vmem:[%s1408 + $0xe0] sm:$0xfe]
    %v2880 = vld [vmem:[%s1408 + $0xe8] sm:$0xfe]
    %v2881 = vld [vmem:[%s1408 + $0xf0] sm:$0x1]
    %v2882 = vld [vmem:[%s1408 + $0xf8] sm:$0x1]
    %v2915 = vrot.slane %v2851, 1
    %v2916 = vrot.slane %v2853, 1
    %v2917 = vsel %vm1632, %v2915, %v2916
    %v2918 = vrot.slane %v2852, 1
    %v2919 = vrot.slane %v2854, 1
    %v2920 = vsel %vm1632, %v2918, %v2919
    %v2921 = vrot.slane %v2855, 1
    %v2922 = vrot.slane %v2857, 1
    %v2923 = vsel %vm1632, %v2921, %v2922
    %v2924 = vrot.slane %v2856, 1
    %v2925 = vrot.slane %v2858, 1
    %v2926 = vsel %vm1632, %v2924, %v2925
    %v2927 = vrot.slane %v2859, 1
    %v2928 = vrot.slane %v2861, 1
    %v2929 = vsel %vm1632, %v2927, %v2928
    %v2930 = vrot.slane %v2860, 1
    %v2931 = vrot.slane %v2862, 1
    %v2932 = vsel %vm1632, %v2930, %v2931
    %v2933 = vrot.slane %v2863, 1
    %v2934 = vrot.slane %v2865, 1
    %v2935 = vsel %vm1632, %v2933, %v2934
    %v2936 = vrot.slane %v2864, 1
    %v2937 = vrot.slane %v2866, 1
    %v2938 = vsel %vm1632, %v2936, %v2937
    %v2939 = vrot.slane %v2867, 1
    %v2940 = vrot.slane %v2869, 1
    %v2941 = vsel %vm1632, %v2939, %v2940
    %v2942 = vrot.slane %v2868, 1
    %v2943 = vrot.slane %v2870, 1
    %v2944 = vsel %vm1632, %v2942, %v2943
    %v2945 = vrot.slane %v2871, 1
    %v2946 = vrot.slane %v2873, 1
    %v2947 = vsel %vm1632, %v2945, %v2946
    %v2948 = vrot.slane %v2872, 1
    %v2949 = vrot.slane %v2874, 1
    %v2950 = vsel %vm1632, %v2948, %v2949
    %v2951 = vrot.slane %v2875, 1
    %v2952 = vrot.slane %v2877, 1
    %v2953 = vsel %vm1632, %v2951, %v2952
    %v2954 = vrot.slane %v2876, 1
    %v2955 = vrot.slane %v2878, 1
    %v2956 = vsel %vm1632, %v2954, %v2955
    %v2957 = vrot.slane %v2879, 1
    %v2958 = vrot.slane %v2881, 1
    %v2959 = vsel %vm1632, %v2957, %v2958
    %v2960 = vrot.slane %v2880, 1
    %v2961 = vrot.slane %v2882, 1
    %v2962 = vsel %vm1632, %v2960, %v2961
    %2979 = vst [vmem:[#allocation5 + $0x4c0] sm:$0xff] %v2917
    %2980 = vst [vmem:[#allocation5 + $0x4c8] sm:$0xff] %v2920
    %2981 = vst [vmem:[#allocation5 + $0x550] sm:$0xff] %v2923
    %2982 = vst [vmem:[#allocation5 + $0x558] sm:$0xff] %v2926
    %2983 = vst [vmem:[#allocation5 + $0x5e0] sm:$0xff] %v2929
    %2984 = vst [vmem:[#allocation5 + $0x5e8] sm:$0xff] %v2932
    %2985 = vst [vmem:[#allocation5 + $0x670] sm:$0xff] %v2935
    %2986 = vst [vmem:[#allocation5 + $0x678] sm:$0xff] %v2938
    %2987 = vst [vmem:[#allocation5 + $0x700] sm:$0xff] %v2941
    %2988 = vst [vmem:[#allocation5 + $0x708] sm:$0xff] %v2944
    %2989 = vst [vmem:[#allocation5 + $0x790] sm:$0xff] %v2947
    %2990 = vst [vmem:[#allocation5 + $0x798] sm:$0xff] %v2950
    %2991 = vst [vmem:[#allocation5 + $0x820] sm:$0xff] %v2953
    %2992 = vst [vmem:[#allocation5 + $0x828] sm:$0xff] %v2956
    %2993 = vst [vmem:[#allocation5 + $0x8b0] sm:$0xff] %v2959
    %2994 = vst [vmem:[#allocation5 + $0x8b8] sm:$0xff] %v2962
    %v2995 = vld [vmem:[%s1408] sm:$0xfc]
    %v2996 = vld [vmem:[%s1408 + $0x8] sm:$0xfc]
    %v2997 = vld [vmem:[%s1408 + $0x10] sm:$0x3]
    %v2998 = vld [vmem:[%s1408 + $0x18] sm:$0x3]
    %v2999 = vld [vmem:[%s1408 + $0x20] sm:$0xfc]
    %v3000 = vld [vmem:[%s1408 + $0x28] sm:$0xfc]
    %v3001 = vld [vmem:[%s1408 + $0x30] sm:$0x3]
    %v3002 = vld [vmem:[%s1408 + $0x38] sm:$0x3]
    %v3003 = vld [vmem:[%s1408 + $0x40] sm:$0xfc]
    %v3004 = vld [vmem:[%s1408 + $0x48] sm:$0xfc]
    %v3005 = vld [vmem:[%s1408 + $0x50] sm:$0x3]
    %v3006 = vld [vmem:[%s1408 + $0x58] sm:$0x3]
    %v3007 = vld [vmem:[%s1408 + $0x60] sm:$0xfc]
    %v3008 = vld [vmem:[%s1408 + $0x68] sm:$0xfc]
    %v3009 = vld [vmem:[%s1408 + $0x70] sm:$0x3]
    %v3010 = vld [vmem:[%s1408 + $0x78] sm:$0x3]
    %v3011 = vld [vmem:[%s1408 + $0x80] sm:$0xfc]
    %v3012 = vld [vmem:[%s1408 + $0x88] sm:$0xfc]
    %v3013 = vld [vmem:[%s1408 + $0x90] sm:$0x3]
    %v3014 = vld [vmem:[%s1408 + $0x98] sm:$0x3]
    %v3015 = vld [vmem:[%s1408 + $0xa0] sm:$0xfc]
    %v3016 = vld [vmem:[%s1408 + $0xa8] sm:$0xfc]
    %v3017 = vld [vmem:[%s1408 + $0xb0] sm:$0x3]
    %v3018 = vld [vmem:[%s1408 + $0xb8] sm:$0x3]
    %v3019 = vld [vmem:[%s1408 + $0xc0] sm:$0xfc]
    %v3020 = vld [vmem:[%s1408 + $0xc8] sm:$0xfc]
    %v3021 = vld [vmem:[%s1408 + $0xd0] sm:$0x3]
    %v3022 = vld [vmem:[%s1408 + $0xd8] sm:$0x3]
    %v3023 = vld [vmem:[%s1408 + $0xe0] sm:$0xfc]
    %v3024 = vld [vmem:[%s1408 + $0xe8] sm:$0xfc]
    %v3025 = vld [vmem:[%s1408 + $0xf0] sm:$0x3]
    %v3026 = vld [vmem:[%s1408 + $0xf8] sm:$0x3]
    %v3059 = vrot.slane %v2995, 2
    %v3060 = vrot.slane %v2997, 2
    %v3061 = vsel %vm1777, %v3059, %v3060
    %v3062 = vrot.slane %v2996, 2
    %v3063 = vrot.slane %v2998, 2
    %v3064 = vsel %vm1777, %v3062, %v3063
    %v3065 = vrot.slane %v2999, 2
    %v3066 = vrot.slane %v3001, 2
    %v3067 = vsel %vm1777, %v3065, %v3066
    %v3068 = vrot.slane %v3000, 2
    %v3069 = vrot.slane %v3002, 2
    %v3070 = vsel %vm1777, %v3068, %v3069
    %v3071 = vrot.slane %v3003, 2
    %v3072 = vrot.slane %v3005, 2
    %v3073 = vsel %vm1777, %v3071, %v3072
    %v3074 = vrot.slane %v3004, 2
    %v3075 = vrot.slane %v3006, 2
    %v3076 = vsel %vm1777, %v3074, %v3075
    %v3077 = vrot.slane %v3007, 2
    %v3078 = vrot.slane %v3009, 2
    %v3079 = vsel %vm1777, %v3077, %v3078
    %v3080 = vrot.slane %v3008, 2
    %v3081 = vrot.slane %v3010, 2
    %v3082 = vsel %vm1777, %v3080, %v3081
    %v3083 = vrot.slane %v3011, 2
    %v3084 = vrot.slane %v3013, 2
    %v3085 = vsel %vm1777, %v3083, %v3084
    %v3086 = vrot.slane %v3012, 2
    %v3087 = vrot.slane %v3014, 2
    %v3088 = vsel %vm1777, %v3086, %v3087
    %v3089 = vrot.slane %v3015, 2
    %v3090 = vrot.slane %v3017, 2
    %v3091 = vsel %vm1777, %v3089, %v3090
    %v3092 = vrot.slane %v3016, 2
    %v3093 = vrot.slane %v3018, 2
    %v3094 = vsel %vm1777, %v3092, %v3093
    %v3095 = vrot.slane %v3019, 2
    %v3096 = vrot.slane %v3021, 2
    %v3097 = vsel %vm1777, %v3095, %v3096
    %v3098 = vrot.slane %v3020, 2
    %v3099 = vrot.slane %v3022, 2
    %v3100 = vsel %vm1777, %v3098, %v3099
    %v3101 = vrot.slane %v3023, 2
    %v3102 = vrot.slane %v3025, 2
    %v3103 = vsel %vm1777, %v3101, %v3102
    %v3104 = vrot.slane %v3024, 2
    %v3105 = vrot.slane %v3026, 2
    %v3106 = vsel %vm1777, %v3104, %v3105
    %3123 = vst [vmem:[#allocation5 + $0x4d0] sm:$0xff] %v3061
    %3124 = vst [vmem:[#allocation5 + $0x4d8] sm:$0xff] %v3064
    %3125 = vst [vmem:[#allocation5 + $0x560] sm:$0xff] %v3067
    %3126 = vst [vmem:[#allocation5 + $0x568] sm:$0xff] %v3070
    %3127 = vst [vmem:[#allocation5 + $0x5f0] sm:$0xff] %v3073
    %3128 = vst [vmem:[#allocation5 + $0x5f8] sm:$0xff] %v3076
    %3129 = vst [vmem:[#allocation5 + $0x680] sm:$0xff] %v3079
    %3130 = vst [vmem:[#allocation5 + $0x688] sm:$0xff] %v3082
    %3131 = vst [vmem:[#allocation5 + $0x710] sm:$0xff] %v3085
    %3132 = vst [vmem:[#allocation5 + $0x718] sm:$0xff] %v3088
    %3133 = vst [vmem:[#allocation5 + $0x7a0] sm:$0xff] %v3091
    %3134 = vst [vmem:[#allocation5 + $0x7a8] sm:$0xff] %v3094
    %3135 = vst [vmem:[#allocation5 + $0x830] sm:$0xff] %v3097
    %3136 = vst [vmem:[#allocation5 + $0x838] sm:$0xff] %v3100
    %3137 = vst [vmem:[#allocation5 + $0x8c0] sm:$0xff] %v3103
    %3138 = vst [vmem:[#allocation5 + $0x8c8] sm:$0xff] %v3106
    %s3139 = scalar_lea.vmem [#allocation3], 384
    %v3140 = vld [vmem:[%s3139] sm:$0xff]
    %v3141 = vld [vmem:[%s3139 + $0x8] sm:$0xff]
    %v3142 = vld [vmem:[%s3139 + $0x20] sm:$0xff]
    %v3143 = vld [vmem:[%s3139 + $0x28] sm:$0xff]
    %v3144 = vld [vmem:[%s3139 + $0x40] sm:$0xff]
    %v3145 = vld [vmem:[%s3139 + $0x48] sm:$0xff]
    %v3146 = vld [vmem:[%s3139 + $0x60] sm:$0xff]
    %v3147 = vld [vmem:[%s3139 + $0x68] sm:$0xff]
    %v3148 = vld [vmem:[%s3139 + $0x80] sm:$0xff]
    %v3149 = vld [vmem:[%s3139 + $0x88] sm:$0xff]
    %v3150 = vld [vmem:[%s3139 + $0xa0] sm:$0xff]
    %v3151 = vld [vmem:[%s3139 + $0xa8] sm:$0xff]
    %v3152 = vld [vmem:[%s3139 + $0xc0] sm:$0xff]
    %v3153 = vld [vmem:[%s3139 + $0xc8] sm:$0xff]
    %v3154 = vld [vmem:[%s3139 + $0xe0] sm:$0xff]
    %v3155 = vld [vmem:[%s3139 + $0xe8] sm:$0xff]
    %3156 = vst [vmem:[#allocation5 + $0x4e0] sm:$0xff] %v3140
    %3157 = vst [vmem:[#allocation5 + $0x4e8] sm:$0xff] %v3141
    %3158 = vst [vmem:[#allocation5 + $0x570] sm:$0xff] %v3142
    %3159 = vst [vmem:[#allocation5 + $0x578] sm:$0xff] %v3143
    %3160 = vst [vmem:[#allocation5 + $0x600] sm:$0xff] %v3144
    %3161 = vst [vmem:[#allocation5 + $0x608] sm:$0xff] %v3145
    %3162 = vst [vmem:[#allocation5 + $0x690] sm:$0xff] %v3146
    %3163 = vst [vmem:[#allocation5 + $0x698] sm:$0xff] %v3147
    %3164 = vst [vmem:[#allocation5 + $0x720] sm:$0xff] %v3148
    %3165 = vst [vmem:[#allocation5 + $0x728] sm:$0xff] %v3149
    %3166 = vst [vmem:[#allocation5 + $0x7b0] sm:$0xff] %v3150
    %3167 = vst [vmem:[#allocation5 + $0x7b8] sm:$0xff] %v3151
    %3168 = vst [vmem:[#allocation5 + $0x840] sm:$0xff] %v3152
    %3169 = vst [vmem:[#allocation5 + $0x848] sm:$0xff] %v3153
    %3170 = vst [vmem:[#allocation5 + $0x8d0] sm:$0xff] %v3154
    %3171 = vst [vmem:[#allocation5 + $0x8d8] sm:$0xff] %v3155
    %v3172 = vld [vmem:[%s3139] sm:$0xfe]
    %v3173 = vld [vmem:[%s3139 + $0x8] sm:$0xfe]
    %v3174 = vld [vmem:[%s3139 + $0x10] sm:$0x1]
    %v3175 = vld [vmem:[%s3139 + $0x18] sm:$0x1]
    %v3176 = vld [vmem:[%s3139 + $0x20] sm:$0xfe]
    %v3177 = vld [vmem:[%s3139 + $0x28] sm:$0xfe]
    %v3178 = vld [vmem:[%s3139 + $0x30] sm:$0x1]
    %v3179 = vld [vmem:[%s3139 + $0x38] sm:$0x1]
    %v3180 = vld [vmem:[%s3139 + $0x40] sm:$0xfe]
    %v3181 = vld [vmem:[%s3139 + $0x48] sm:$0xfe]
    %v3182 = vld [vmem:[%s3139 + $0x50] sm:$0x1]
    %v3183 = vld [vmem:[%s3139 + $0x58] sm:$0x1]
    %v3184 = vld [vmem:[%s3139 + $0x60] sm:$0xfe]
    %v3185 = vld [vmem:[%s3139 + $0x68] sm:$0xfe]
    %v3186 = vld [vmem:[%s3139 + $0x70] sm:$0x1]
    %v3187 = vld [vmem:[%s3139 + $0x78] sm:$0x1]
    %v3188 = vld [vmem:[%s3139 + $0x80] sm:$0xfe]
    %v3189 = vld [vmem:[%s3139 + $0x88] sm:$0xfe]
    %v3190 = vld [vmem:[%s3139 + $0x90] sm:$0x1]
    %v3191 = vld [vmem:[%s3139 + $0x98] sm:$0x1]
    %v3192 = vld [vmem:[%s3139 + $0xa0] sm:$0xfe]
    %v3193 = vld [vmem:[%s3139 + $0xa8] sm:$0xfe]
    %v3194 = vld [vmem:[%s3139 + $0xb0] sm:$0x1]
    %v3195 = vld [vmem:[%s3139 + $0xb8] sm:$0x1]
    %v3196 = vld [vmem:[%s3139 + $0xc0] sm:$0xfe]
    %v3197 = vld [vmem:[%s3139 + $0xc8] sm:$0xfe]
    %v3198 = vld [vmem:[%s3139 + $0xd0] sm:$0x1]
    %v3199 = vld [vmem:[%s3139 + $0xd8] sm:$0x1]
    %v3200 = vld [vmem:[%s3139 + $0xe0] sm:$0xfe]
    %v3201 = vld [vmem:[%s3139 + $0xe8] sm:$0xfe]
    %v3202 = vld [vmem:[%s3139 + $0xf0] sm:$0x1]
    %v3203 = vld [vmem:[%s3139 + $0xf8] sm:$0x1]
    %v3236 = vrot.slane %v3172, 1
    %v3237 = vrot.slane %v3174, 1
    %v3238 = vsel %vm1632, %v3236, %v3237
    %v3239 = vrot.slane %v3173, 1
    %v3240 = vrot.slane %v3175, 1
    %v3241 = vsel %vm1632, %v3239, %v3240
    %v3242 = vrot.slane %v3176, 1
    %v3243 = vrot.slane %v3178, 1
    %v3244 = vsel %vm1632, %v3242, %v3243
    %v3245 = vrot.slane %v3177, 1
    %v3246 = vrot.slane %v3179, 1
    %v3247 = vsel %vm1632, %v3245, %v3246
    %v3248 = vrot.slane %v3180, 1
    %v3249 = vrot.slane %v3182, 1
    %v3250 = vsel %vm1632, %v3248, %v3249
    %v3251 = vrot.slane %v3181, 1
    %v3252 = vrot.slane %v3183, 1
    %v3253 = vsel %vm1632, %v3251, %v3252
    %v3254 = vrot.slane %v3184, 1
    %v3255 = vrot.slane %v3186, 1
    %v3256 = vsel %vm1632, %v3254, %v3255
    %v3257 = vrot.slane %v3185, 1
    %v3258 = vrot.slane %v3187, 1
    %v3259 = vsel %vm1632, %v3257, %v3258
    %v3260 = vrot.slane %v3188, 1
    %v3261 = vrot.slane %v3190, 1
    %v3262 = vsel %vm1632, %v3260, %v3261
    %v3263 = vrot.slane %v3189, 1
    %v3264 = vrot.slane %v3191, 1
    %v3265 = vsel %vm1632, %v3263, %v3264
    %v3266 = vrot.slane %v3192, 1
    %v3267 = vrot.slane %v3194, 1
    %v3268 = vsel %vm1632, %v3266, %v3267
    %v3269 = vrot.slane %v3193, 1
    %v3270 = vrot.slane %v3195, 1
    %v3271 = vsel %vm1632, %v3269, %v3270
    %v3272 = vrot.slane %v3196, 1
    %v3273 = vrot.slane %v3198, 1
    %v3274 = vsel %vm1632, %v3272, %v3273
    %v3275 = vrot.slane %v3197, 1
    %v3276 = vrot.slane %v3199, 1
    %v3277 = vsel %vm1632, %v3275, %v3276
    %v3278 = vrot.slane %v3200, 1
    %v3279 = vrot.slane %v3202, 1
    %v3280 = vsel %vm1632, %v3278, %v3279
    %v3281 = vrot.slane %v3201, 1
    %v3282 = vrot.slane %v3203, 1
    %v3283 = vsel %vm1632, %v3281, %v3282
    %3300 = vst [vmem:[#allocation5 + $0x4f0] sm:$0xff] %v3238
    %3301 = vst [vmem:[#allocation5 + $0x4f8] sm:$0xff] %v3241
    %3302 = vst [vmem:[#allocation5 + $0x580] sm:$0xff] %v3244
    %3303 = vst [vmem:[#allocation5 + $0x588] sm:$0xff] %v3247
    %3304 = vst [vmem:[#allocation5 + $0x610] sm:$0xff] %v3250
    %3305 = vst [vmem:[#allocation5 + $0x618] sm:$0xff] %v3253
    %3306 = vst [vmem:[#allocation5 + $0x6a0] sm:$0xff] %v3256
    %3307 = vst [vmem:[#allocation5 + $0x6a8] sm:$0xff] %v3259
    %3308 = vst [vmem:[#allocation5 + $0x730] sm:$0xff] %v3262
    %3309 = vst [vmem:[#allocation5 + $0x738] sm:$0xff] %v3265
    %3310 = vst [vmem:[#allocation5 + $0x7c0] sm:$0xff] %v3268
    %3311 = vst [vmem:[#allocation5 + $0x7c8] sm:$0xff] %v3271
    %3312 = vst [vmem:[#allocation5 + $0x850] sm:$0xff] %v3274
    %3313 = vst [vmem:[#allocation5 + $0x858] sm:$0xff] %v3277
    %3314 = vst [vmem:[#allocation5 + $0x8e0] sm:$0xff] %v3280
    %3315 = vst [vmem:[#allocation5 + $0x8e8] sm:$0xff] %v3283
    %v3316 = vld [vmem:[%s3139] sm:$0xfc]
    %v3317 = vld [vmem:[%s3139 + $0x8] sm:$0xfc]
    %v3318 = vld [vmem:[%s3139 + $0x10] sm:$0x3]
    %v3319 = vld [vmem:[%s3139 + $0x18] sm:$0x3]
    %v3320 = vld [vmem:[%s3139 + $0x20] sm:$0xfc]
    %v3321 = vld [vmem:[%s3139 + $0x28] sm:$0xfc]
    %v3322 = vld [vmem:[%s3139 + $0x30] sm:$0x3]
    %v3323 = vld [vmem:[%s3139 + $0x38] sm:$0x3]
    %v3324 = vld [vmem:[%s3139 + $0x40] sm:$0xfc]
    %v3325 = vld [vmem:[%s3139 + $0x48] sm:$0xfc]
    %v3326 = vld [vmem:[%s3139 + $0x50] sm:$0x3]
    %v3327 = vld [vmem:[%s3139 + $0x58] sm:$0x3]
    %v3328 = vld [vmem:[%s3139 + $0x60] sm:$0xfc]
    %v3329 = vld [vmem:[%s3139 + $0x68] sm:$0xfc]
    %v3330 = vld [vmem:[%s3139 + $0x70] sm:$0x3]
    %v3331 = vld [vmem:[%s3139 + $0x78] sm:$0x3]
    %v3332 = vld [vmem:[%s3139 + $0x80] sm:$0xfc]
    %v3333 = vld [vmem:[%s3139 + $0x88] sm:$0xfc]
    %v3334 = vld [vmem:[%s3139 + $0x90] sm:$0x3]
    %v3335 = vld [vmem:[%s3139 + $0x98] sm:$0x3]
    %v3336 = vld [vmem:[%s3139 + $0xa0] sm:$0xfc]
    %v3337 = vld [vmem:[%s3139 + $0xa8] sm:$0xfc]
    %v3338 = vld [vmem:[%s3139 + $0xb0] sm:$0x3]
    %v3339 = vld [vmem:[%s3139 + $0xb8] sm:$0x3]
    %v3340 = vld [vmem:[%s3139 + $0xc0] sm:$0xfc]
    %v3341 = vld [vmem:[%s3139 + $0xc8] sm:$0xfc]
    %v3342 = vld [vmem:[%s3139 + $0xd0] sm:$0x3]
    %v3343 = vld [vmem:[%s3139 + $0xd8] sm:$0x3]
    %v3344 = vld [vmem:[%s3139 + $0xe0] sm:$0xfc]
    %v3345 = vld [vmem:[%s3139 + $0xe8] sm:$0xfc]
    %v3346 = vld [vmem:[%s3139 + $0xf0] sm:$0x3]
    %v3347 = vld [vmem:[%s3139 + $0xf8] sm:$0x3]
    %v3380 = vrot.slane %v3316, 2
    %v3381 = vrot.slane %v3318, 2
    %v3382 = vsel %vm1777, %v3380, %v3381
    %v3383 = vrot.slane %v3317, 2
    %v3384 = vrot.slane %v3319, 2
    %v3385 = vsel %vm1777, %v3383, %v3384
    %v3386 = vrot.slane %v3320, 2
    %v3387 = vrot.slane %v3322, 2
    %v3388 = vsel %vm1777, %v3386, %v3387
    %v3389 = vrot.slane %v3321, 2
    %v3390 = vrot.slane %v3323, 2
    %v3391 = vsel %vm1777, %v3389, %v3390
    %v3392 = vrot.slane %v3324, 2
    %v3393 = vrot.slane %v3326, 2
    %v3394 = vsel %vm1777, %v3392, %v3393
    %v3395 = vrot.slane %v3325, 2
    %v3396 = vrot.slane %v3327, 2
    %v3397 = vsel %vm1777, %v3395, %v3396
    %v3398 = vrot.slane %v3328, 2
    %v3399 = vrot.slane %v3330, 2
    %v3400 = vsel %vm1777, %v3398, %v3399
    %v3401 = vrot.slane %v3329, 2
    %v3402 = vrot.slane %v3331, 2
    %v3403 = vsel %vm1777, %v3401, %v3402
    %v3404 = vrot.slane %v3332, 2
    %v3405 = vrot.slane %v3334, 2
    %v3406 = vsel %vm1777, %v3404, %v3405
    %v3407 = vrot.slane %v3333, 2
    %v3408 = vrot.slane %v3335, 2
    %v3409 = vsel %vm1777, %v3407, %v3408
    %v3410 = vrot.slane %v3336, 2
    %v3411 = vrot.slane %v3338, 2
    %v3412 = vsel %vm1777, %v3410, %v3411
    %v3413 = vrot.slane %v3337, 2
    %v3414 = vrot.slane %v3339, 2
    %v3415 = vsel %vm1777, %v3413, %v3414
    %v3416 = vrot.slane %v3340, 2
    %v3417 = vrot.slane %v3342, 2
    %v3418 = vsel %vm1777, %v3416, %v3417
    %v3419 = vrot.slane %v3341, 2
    %v3420 = vrot.slane %v3343, 2
    %v3421 = vsel %vm1777, %v3419, %v3420
    %v3422 = vrot.slane %v3344, 2
    %v3423 = vrot.slane %v3346, 2
    %v3424 = vsel %vm1777, %v3422, %v3423
    %v3425 = vrot.slane %v3345, 2
    %v3426 = vrot.slane %v3347, 2
    %v3427 = vsel %vm1777, %v3425, %v3426
    %3444 = vst [vmem:[#allocation5 + $0x500] sm:$0xff] %v3382
    %3445 = vst [vmem:[#allocation5 + $0x508] sm:$0xff] %v3385
    %3446 = vst [vmem:[#allocation5 + $0x590] sm:$0xff] %v3388
    %3447 = vst [vmem:[#allocation5 + $0x598] sm:$0xff] %v3391
    %3448 = vst [vmem:[#allocation5 + $0x620] sm:$0xff] %v3394
    %3449 = vst [vmem:[#allocation5 + $0x628] sm:$0xff] %v3397
    %3450 = vst [vmem:[#allocation5 + $0x6b0] sm:$0xff] %v3400
    %3451 = vst [vmem:[#allocation5 + $0x6b8] sm:$0xff] %v3403
    %3452 = vst [vmem:[#allocation5 + $0x740] sm:$0xff] %v3406
    %3453 = vst [vmem:[#allocation5 + $0x748] sm:$0xff] %v3409
    %3454 = vst [vmem:[#allocation5 + $0x7d0] sm:$0xff] %v3412
    %3455 = vst [vmem:[#allocation5 + $0x7d8] sm:$0xff] %v3415
    %3456 = vst [vmem:[#allocation5 + $0x860] sm:$0xff] %v3418
    %3457 = vst [vmem:[#allocation5 + $0x868] sm:$0xff] %v3421
    %3458 = vst [vmem:[#allocation5 + $0x8f0] sm:$0xff] %v3424
    %3459 = vst [vmem:[#allocation5 + $0x8f8] sm:$0xff] %v3427
    %v3460 = vld [vmem:[#allocation5] sm:$0xff]
    %v3461 = vld [vmem:[#allocation5 + $0x8] sm:$0xff]
    %v3462 = vld [vmem:[#allocation5 + $0x10] sm:$0xff]
    %v3463 = vld [vmem:[#allocation5 + $0x18] sm:$0xff]
    %v3464 = vld [vmem:[#allocation5 + $0x20] sm:$0xff]
    %v3465 = vld [vmem:[#allocation5 + $0x28] sm:$0xff]
    %v3466 = vld [vmem:[#allocation5 + $0x30] sm:$0xff]
    %v3467 = vld [vmem:[#allocation5 + $0x38] sm:$0xff]
    %v3468 = vld [vmem:[#allocation5 + $0x40] sm:$0xff]
    %v3469 = vld [vmem:[#allocation5 + $0x48] sm:$0xff]
    %v3470 = vld [vmem:[#allocation5 + $0x50] sm:$0xff]
    %v3471 = vld [vmem:[#allocation5 + $0x58] sm:$0xff]
    %v3472 = vld [vmem:[#allocation5 + $0x60] sm:$0xff]
    %v3473 = vld [vmem:[#allocation5 + $0x68] sm:$0xff]
    %v3474 = vld [vmem:[#allocation5 + $0x70] sm:$0xff]
    %v3475 = vld [vmem:[#allocation5 + $0x78] sm:$0xff]
    %v3476 = vld [vmem:[#allocation5 + $0x80] sm:$0xff]
    %v3477 = vld [vmem:[#allocation5 + $0x88] sm:$0xff]
    %v3478 = vld [vmem:[#allocation5 + $0x90] sm:$0xff]
    %v3479 = vld [vmem:[#allocation5 + $0x98] sm:$0xff]
    %v3480 = vld [vmem:[#allocation5 + $0xa0] sm:$0xff]
    %v3481 = vld [vmem:[#allocation5 + $0xa8] sm:$0xff]
    %v3482 = vld [vmem:[#allocation5 + $0xb0] sm:$0xff]
    %v3483 = vld [vmem:[#allocation5 + $0xb8] sm:$0xff]
    %v3484 = vld [vmem:[#allocation5 + $0xc0] sm:$0xff]
    %v3485 = vld [vmem:[#allocation5 + $0xc8] sm:$0xff]
    %v3486 = vld [vmem:[#allocation5 + $0xd0] sm:$0xff]
    %v3487 = vld [vmem:[#allocation5 + $0xd8] sm:$0xff]
    %v3488 = vld [vmem:[#allocation5 + $0xe0] sm:$0xff]
    %v3489 = vld [vmem:[#allocation5 + $0xe8] sm:$0xff]
    %v3490 = vld [vmem:[#allocation5 + $0xf0] sm:$0xff]
    %v3491 = vld [vmem:[#allocation5 + $0xf8] sm:$0xff]
    %v3492 = vld [vmem:[#allocation5 + $0x100] sm:$0xff]
    %v3493 = vld [vmem:[#allocation5 + $0x108] sm:$0xff]
    %v3494 = vld [vmem:[#allocation5 + $0x110] sm:$0xff]
    %v3495 = vld [vmem:[#allocation5 + $0x118] sm:$0xff]
    %v3496 = vld [vmem:[#allocation5 + $0x120] sm:$0xff]
    %v3497 = vld [vmem:[#allocation5 + $0x128] sm:$0xff]
    %v3498 = vld [vmem:[#allocation5 + $0x130] sm:$0xff]
    %v3499 = vld [vmem:[#allocation5 + $0x138] sm:$0xff]
    %v3500 = vld [vmem:[#allocation5 + $0x140] sm:$0xff]
    %v3501 = vld [vmem:[#allocation5 + $0x148] sm:$0xff]
    %v3502 = vld [vmem:[#allocation5 + $0x150] sm:$0xff]
    %v3503 = vld [vmem:[#allocation5 + $0x158] sm:$0xff]
    %v3504 = vld [vmem:[#allocation5 + $0x160] sm:$0xff]
    %v3505 = vld [vmem:[#allocation5 + $0x168] sm:$0xff]
    %v3506 = vld [vmem:[#allocation5 + $0x170] sm:$0xff]
    %v3507 = vld [vmem:[#allocation5 + $0x178] sm:$0xff]
    %v3508 = vld [vmem:[#allocation5 + $0x180] sm:$0xff]
    %v3509 = vld [vmem:[#allocation5 + $0x188] sm:$0xff]
    %v3510 = vld [vmem:[#allocation5 + $0x190] sm:$0xff]
    %v3511 = vld [vmem:[#allocation5 + $0x198] sm:$0xff]
    %v3512 = vld [vmem:[#allocation5 + $0x1a0] sm:$0xff]
    %v3513 = vld [vmem:[#allocation5 + $0x1a8] sm:$0xff]
    %v3514 = vld [vmem:[#allocation5 + $0x1b0] sm:$0xff]
    %v3515 = vld [vmem:[#allocation5 + $0x1b8] sm:$0xff]
    %v3516 = vld [vmem:[#allocation5 + $0x1c0] sm:$0xff]
    %v3517 = vld [vmem:[#allocation5 + $0x1c8] sm:$0xff]
    %v3518 = vld [vmem:[#allocation5 + $0x1d0] sm:$0xff]
    %v3519 = vld [vmem:[#allocation5 + $0x1d8] sm:$0xff]
    %v3520 = vld [vmem:[#allocation5 + $0x1e0] sm:$0xff]
    %v3521 = vld [vmem:[#allocation5 + $0x1e8] sm:$0xff]
    %v3522 = vld [vmem:[#allocation5 + $0x1f0] sm:$0xff]
    %v3523 = vld [vmem:[#allocation5 + $0x1f8] sm:$0xff]
    %v3524 = vld [vmem:[#allocation5 + $0x200] sm:$0xff]
    %v3525 = vld [vmem:[#allocation5 + $0x208] sm:$0xff]
    %v3526 = vld [vmem:[#allocation5 + $0x210] sm:$0xff]
    %v3527 = vld [vmem:[#allocation5 + $0x218] sm:$0xff]
    %v3528 = vld [vmem:[#allocation5 + $0x220] sm:$0xff]
    %v3529 = vld [vmem:[#allocation5 + $0x228] sm:$0xff]
    %v3530 = vld [vmem:[#allocation5 + $0x230] sm:$0xff]
    %v3531 = vld [vmem:[#allocation5 + $0x238] sm:$0xff]
    %v3532 = vld [vmem:[#allocation5 + $0x240] sm:$0xff]
    %v3533 = vld [vmem:[#allocation5 + $0x248] sm:$0xff]
    %v3534 = vld [vmem:[#allocation5 + $0x250] sm:$0xff]
    %v3535 = vld [vmem:[#allocation5 + $0x258] sm:$0xff]
    %v3536 = vld [vmem:[#allocation5 + $0x260] sm:$0xff]
    %v3537 = vld [vmem:[#allocation5 + $0x268] sm:$0xff]
    %v3538 = vld [vmem:[#allocation5 + $0x270] sm:$0xff]
    %v3539 = vld [vmem:[#allocation5 + $0x278] sm:$0xff]
    %v3540 = vld [vmem:[#allocation5 + $0x280] sm:$0xff]
    %v3541 = vld [vmem:[#allocation5 + $0x288] sm:$0xff]
    %v3542 = vld [vmem:[#allocation5 + $0x290] sm:$0xff]
    %v3543 = vld [vmem:[#allocation5 + $0x298] sm:$0xff]
    %v3544 = vld [vmem:[#allocation5 + $0x2a0] sm:$0xff]
    %v3545 = vld [vmem:[#allocation5 + $0x2a8] sm:$0xff]
    %v3546 = vld [vmem:[#allocation5 + $0x2b0] sm:$0xff]
    %v3547 = vld [vmem:[#allocation5 + $0x2b8] sm:$0xff]
    %v3548 = vld [vmem:[#allocation5 + $0x2c0] sm:$0xff]
    %v3549 = vld [vmem:[#allocation5 + $0x2c8] sm:$0xff]
    %v3550 = vld [vmem:[#allocation5 + $0x2d0] sm:$0xff]
    %v3551 = vld [vmem:[#allocation5 + $0x2d8] sm:$0xff]
    %v3552 = vld [vmem:[#allocation5 + $0x2e0] sm:$0xff]
    %v3553 = vld [vmem:[#allocation5 + $0x2e8] sm:$0xff]
    %v3554 = vld [vmem:[#allocation5 + $0x2f0] sm:$0xff]
    %v3555 = vld [vmem:[#allocation5 + $0x2f8] sm:$0xff]
    %v3556 = vld [vmem:[#allocation5 + $0x300] sm:$0xff]
    %v3557 = vld [vmem:[#allocation5 + $0x308] sm:$0xff]
    %v3558 = vld [vmem:[#allocation5 + $0x310] sm:$0xff]
    %v3559 = vld [vmem:[#allocation5 + $0x318] sm:$0xff]
    %v3560 = vld [vmem:[#allocation5 + $0x320] sm:$0xff]
    %v3561 = vld [vmem:[#allocation5 + $0x328] sm:$0xff]
    %v3562 = vld [vmem:[#allocation5 + $0x330] sm:$0xff]
    %v3563 = vld [vmem:[#allocation5 + $0x338] sm:$0xff]
    %v3564 = vld [vmem:[#allocation5 + $0x340] sm:$0xff]
    %v3565 = vld [vmem:[#allocation5 + $0x348] sm:$0xff]
    %v3566 = vld [vmem:[#allocation5 + $0x350] sm:$0xff]
    %v3567 = vld [vmem:[#allocation5 + $0x358] sm:$0xff]
    %v3568 = vld [vmem:[#allocation5 + $0x360] sm:$0xff]
    %v3569 = vld [vmem:[#allocation5 + $0x368] sm:$0xff]
    %v3570 = vld [vmem:[#allocation5 + $0x370] sm:$0xff]
    %v3571 = vld [vmem:[#allocation5 + $0x378] sm:$0xff]
    %v3572 = vld [vmem:[#allocation5 + $0x380] sm:$0xff]
    %v3573 = vld [vmem:[#allocation5 + $0x388] sm:$0xff]
    %v3574 = vld [vmem:[#allocation5 + $0x390] sm:$0xff]
    %v3575 = vld [vmem:[#allocation5 + $0x398] sm:$0xff]
    %v3576 = vld [vmem:[#allocation5 + $0x3a0] sm:$0xff]
    %v3577 = vld [vmem:[#allocation5 + $0x3a8] sm:$0xff]
    %v3578 = vld [vmem:[#allocation5 + $0x3b0] sm:$0xff]
    %v3579 = vld [vmem:[#allocation5 + $0x3b8] sm:$0xff]
    %v3580 = vld [vmem:[#allocation5 + $0x3c0] sm:$0xff]
    %v3581 = vld [vmem:[#allocation5 + $0x3c8] sm:$0xff]
    %v3582 = vld [vmem:[#allocation5 + $0x3d0] sm:$0xff]
    %v3583 = vld [vmem:[#allocation5 + $0x3d8] sm:$0xff]
    %v3584 = vld [vmem:[#allocation5 + $0x3e0] sm:$0xff]
    %v3585 = vld [vmem:[#allocation5 + $0x3e8] sm:$0xff]
    %v3586 = vld [vmem:[#allocation5 + $0x3f0] sm:$0xff]
    %v3587 = vld [vmem:[#allocation5 + $0x3f8] sm:$0xff]
    %v3588 = vld [vmem:[#allocation5 + $0x400] sm:$0xff]
    %v3589 = vld [vmem:[#allocation5 + $0x408] sm:$0xff]
    %v3590 = vld [vmem:[#allocation5 + $0x410] sm:$0xff]
    %v3591 = vld [vmem:[#allocation5 + $0x418] sm:$0xff]
    %v3592 = vld [vmem:[#allocation5 + $0x420] sm:$0xff]
    %v3593 = vld [vmem:[#allocation5 + $0x428] sm:$0xff]
    %v3594 = vld [vmem:[#allocation5 + $0x430] sm:$0xff]
    %v3595 = vld [vmem:[#allocation5 + $0x438] sm:$0xff]
    %v3596 = vld [vmem:[#allocation5 + $0x440] sm:$0xff]
    %v3597 = vld [vmem:[#allocation5 + $0x448] sm:$0xff]
    %v3598 = vld [vmem:[#allocation5 + $0x450] sm:$0xff]
    %v3599 = vld [vmem:[#allocation5 + $0x458] sm:$0xff]
    %v3600 = vld [vmem:[#allocation5 + $0x460] sm:$0xff]
    %v3601 = vld [vmem:[#allocation5 + $0x468] sm:$0xff]
    %v3602 = vld [vmem:[#allocation5 + $0x470] sm:$0xff]
    %v3603 = vld [vmem:[#allocation5 + $0x478] sm:$0xff]
    %v3604 = vld [vmem:[#allocation5 + $0x480] sm:$0xff]
    %v3605 = vld [vmem:[#allocation5 + $0x488] sm:$0xff]
    %v3606 = vld [vmem:[#allocation5 + $0x490] sm:$0xff]
    %v3607 = vld [vmem:[#allocation5 + $0x498] sm:$0xff]
    %v3608 = vld [vmem:[#allocation5 + $0x4a0] sm:$0xff]
    %v3609 = vld [vmem:[#allocation5 + $0x4a8] sm:$0xff]
    %v3610 = vld [vmem:[#allocation5 + $0x4b0] sm:$0xff]
    %v3611 = vld [vmem:[#allocation5 + $0x4b8] sm:$0xff]
    %v3612 = vld [vmem:[#allocation5 + $0x4c0] sm:$0xff]
    %v3613 = vld [vmem:[#allocation5 + $0x4c8] sm:$0xff]
    %v3614 = vld [vmem:[#allocation5 + $0x4d0] sm:$0xff]
    %v3615 = vld [vmem:[#allocation5 + $0x4d8] sm:$0xff]
    %v3616 = vld [vmem:[#allocation5 + $0x4e0] sm:$0xff]
    %v3617 = vld [vmem:[#allocation5 + $0x4e8] sm:$0xff]
    %v3618 = vld [vmem:[#allocation5 + $0x4f0] sm:$0xff]
    %v3619 = vld [vmem:[#allocation5 + $0x4f8] sm:$0xff]
    %v3620 = vld [vmem:[#allocation5 + $0x500] sm:$0xff]
    %v3621 = vld [vmem:[#allocation5 + $0x508] sm:$0xff]
    %v3622 = vld [vmem:[#allocation5 + $0x510] sm:$0xff]
    %v3623 = vld [vmem:[#allocation5 + $0x518] sm:$0xff]
    %v3624 = vld [vmem:[#allocation5 + $0x520] sm:$0xff]
    %v3625 = vld [vmem:[#allocation5 + $0x528] sm:$0xff]
    %v3626 = vld [vmem:[#allocation5 + $0x530] sm:$0xff]
    %v3627 = vld [vmem:[#allocation5 + $0x538] sm:$0xff]
    %v3628 = vld [vmem:[#allocation5 + $0x540] sm:$0xff]
    %v3629 = vld [vmem:[#allocation5 + $0x548] sm:$0xff]
    %v3630 = vld [vmem:[#allocation5 + $0x550] sm:$0xff]
    %v3631 = vld [vmem:[#allocation5 + $0x558] sm:$0xff]
    %v3632 = vld [vmem:[#allocation5 + $0x560] sm:$0xff]
    %v3633 = vld [vmem:[#allocation5 + $0x568] sm:$0xff]
    %v3634 = vld [vmem:[#allocation5 + $0x570] sm:$0xff]
    %v3635 = vld [vmem:[#allocation5 + $0x578] sm:$0xff]
    %v3636 = vld [vmem:[#allocation5 + $0x580] sm:$0xff]
    %v3637 = vld [vmem:[#allocation5 + $0x588] sm:$0xff]
    %v3638 = vld [vmem:[#allocation5 + $0x590] sm:$0xff]
    %v3639 = vld [vmem:[#allocation5 + $0x598] sm:$0xff]
    %v3640 = vld [vmem:[#allocation5 + $0x5a0] sm:$0xff]
    %v3641 = vld [vmem:[#allocation5 + $0x5a8] sm:$0xff]
    %v3642 = vld [vmem:[#allocation5 + $0x5b0] sm:$0xff]
    %v3643 = vld [vmem:[#allocation5 + $0x5b8] sm:$0xff]
    %v3644 = vld [vmem:[#allocation5 + $0x5c0] sm:$0xff]
    %v3645 = vld [vmem:[#allocation5 + $0x5c8] sm:$0xff]
    %v3646 = vld [vmem:[#allocation5 + $0x5d0] sm:$0xff]
    %v3647 = vld [vmem:[#allocation5 + $0x5d8] sm:$0xff]
    %v3648 = vld [vmem:[#allocation5 + $0x5e0] sm:$0xff]
    %v3649 = vld [vmem:[#allocation5 + $0x5e8] sm:$0xff]
    %v3650 = vld [vmem:[#allocation5 + $0x5f0] sm:$0xff]
    %v3651 = vld [vmem:[#allocation5 + $0x5f8] sm:$0xff]
    %v3652 = vld [vmem:[#allocation5 + $0x600] sm:$0xff]
    %v3653 = vld [vmem:[#allocation5 + $0x608] sm:$0xff]
    %v3654 = vld [vmem:[#allocation5 + $0x610] sm:$0xff]
    %v3655 = vld [vmem:[#allocation5 + $0x618] sm:$0xff]
    %v3656 = vld [vmem:[#allocation5 + $0x620] sm:$0xff]
    %v3657 = vld [vmem:[#allocation5 + $0x628] sm:$0xff]
    %v3658 = vld [vmem:[#allocation5 + $0x630] sm:$0xff]
    %v3659 = vld [vmem:[#allocation5 + $0x638] sm:$0xff]
    %v3660 = vld [vmem:[#allocation5 + $0x640] sm:$0xff]
    %v3661 = vld [vmem:[#allocation5 + $0x648] sm:$0xff]
    %v3662 = vld [vmem:[#allocation5 + $0x650] sm:$0xff]
    %v3663 = vld [vmem:[#allocation5 + $0x658] sm:$0xff]
    %v3664 = vld [vmem:[#allocation5 + $0x660] sm:$0xff]
    %v3665 = vld [vmem:[#allocation5 + $0x668] sm:$0xff]
    %v3666 = vld [vmem:[#allocation5 + $0x670] sm:$0xff]
    %v3667 = vld [vmem:[#allocation5 + $0x678] sm:$0xff]
    %v3668 = vld [vmem:[#allocation5 + $0x680] sm:$0xff]
    %v3669 = vld [vmem:[#allocation5 + $0x688] sm:$0xff]
    %v3670 = vld [vmem:[#allocation5 + $0x690] sm:$0xff]
    %v3671 = vld [vmem:[#allocation5 + $0x698] sm:$0xff]
    %v3672 = vld [vmem:[#allocation5 + $0x6a0] sm:$0xff]
    %v3673 = vld [vmem:[#allocation5 + $0x6a8] sm:$0xff]
    %v3674 = vld [vmem:[#allocation5 + $0x6b0] sm:$0xff]
    %v3675 = vld [vmem:[#allocation5 + $0x6b8] sm:$0xff]
    %v3676 = vld [vmem:[#allocation5 + $0x6c0] sm:$0xff]
    %v3677 = vld [vmem:[#allocation5 + $0x6c8] sm:$0xff]
    %v3678 = vld [vmem:[#allocation5 + $0x6d0] sm:$0xff]
    %v3679 = vld [vmem:[#allocation5 + $0x6d8] sm:$0xff]
    %v3680 = vld [vmem:[#allocation5 + $0x6e0] sm:$0xff]
    %v3681 = vld [vmem:[#allocation5 + $0x6e8] sm:$0xff]
    %v3682 = vld [vmem:[#allocation5 + $0x6f0] sm:$0xff]
    %v3683 = vld [vmem:[#allocation5 + $0x6f8] sm:$0xff]
    %v3684 = vld [vmem:[#allocation5 + $0x700] sm:$0xff]
    %v3685 = vld [vmem:[#allocation5 + $0x708] sm:$0xff]
    %v3686 = vld [vmem:[#allocation5 + $0x710] sm:$0xff]
    %v3687 = vld [vmem:[#allocation5 + $0x718] sm:$0xff]
    %v3688 = vld [vmem:[#allocation5 + $0x720] sm:$0xff]
    %v3689 = vld [vmem:[#allocation5 + $0x728] sm:$0xff]
    %v3690 = vld [vmem:[#allocation5 + $0x730] sm:$0xff]
    %v3691 = vld [vmem:[#allocation5 + $0x738] sm:$0xff]
    %v3692 = vld [vmem:[#allocation5 + $0x740] sm:$0xff]
    %v3693 = vld [vmem:[#allocation5 + $0x748] sm:$0xff]
    %v3694 = vld [vmem:[#allocation5 + $0x750] sm:$0xff]
    %v3695 = vld [vmem:[#allocation5 + $0x758] sm:$0xff]
    %v3696 = vld [vmem:[#allocation5 + $0x760] sm:$0xff]
    %v3697 = vld [vmem:[#allocation5 + $0x768] sm:$0xff]
    %v3698 = vld [vmem:[#allocation5 + $0x770] sm:$0xff]
    %v3699 = vld [vmem:[#allocation5 + $0x778] sm:$0xff]
    %v3700 = vld [vmem:[#allocation5 + $0x780] sm:$0xff]
    %v3701 = vld [vmem:[#allocation5 + $0x788] sm:$0xff]
    %v3702 = vld [vmem:[#allocation5 + $0x790] sm:$0xff]
    %v3703 = vld [vmem:[#allocation5 + $0x798] sm:$0xff]
    %v3704 = vld [vmem:[#allocation5 + $0x7a0] sm:$0xff]
    %v3705 = vld [vmem:[#allocation5 + $0x7a8] sm:$0xff]
    %v3706 = vld [vmem:[#allocation5 + $0x7b0] sm:$0xff]
    %v3707 = vld [vmem:[#allocation5 + $0x7b8] sm:$0xff]
    %v3708 = vld [vmem:[#allocation5 + $0x7c0] sm:$0xff]
    %v3709 = vld [vmem:[#allocation5 + $0x7c8] sm:$0xff]
    %v3710 = vld [vmem:[#allocation5 + $0x7d0] sm:$0xff]
    %v3711 = vld [vmem:[#allocation5 + $0x7d8] sm:$0xff]
    %v3712 = vld [vmem:[#allocation5 + $0x7e0] sm:$0xff]
    %v3713 = vld [vmem:[#allocation5 + $0x7e8] sm:$0xff]
    %v3714 = vld [vmem:[#allocation5 + $0x7f0] sm:$0xff]
    %v3715 = vld [vmem:[#allocation5 + $0x7f8] sm:$0xff]
    %v3716 = vld [vmem:[#allocation5 + $0x800] sm:$0xff]
    %v3717 = vld [vmem:[#allocation5 + $0x808] sm:$0xff]
    %v3718 = vld [vmem:[#allocation5 + $0x810] sm:$0xff]
    %v3719 = vld [vmem:[#allocation5 + $0x818] sm:$0xff]
    %v3720 = vld [vmem:[#allocation5 + $0x820] sm:$0xff]
    %v3721 = vld [vmem:[#allocation5 + $0x828] sm:$0xff]
    %v3722 = vld [vmem:[#allocation5 + $0x830] sm:$0xff]
    %v3723 = vld [vmem:[#allocation5 + $0x838] sm:$0xff]
    %v3724 = vld [vmem:[#allocation5 + $0x840] sm:$0xff]
    %v3725 = vld [vmem:[#allocation5 + $0x848] sm:$0xff]
    %v3726 = vld [vmem:[#allocation5 + $0x850] sm:$0xff]
    %v3727 = vld [vmem:[#allocation5 + $0x858] sm:$0xff]
    %v3728 = vld [vmem:[#allocation5 + $0x860] sm:$0xff]
    %v3729 = vld [vmem:[#allocation5 + $0x868] sm:$0xff]
    %v3730 = vld [vmem:[#allocation5 + $0x870] sm:$0xff]
    %v3731 = vld [vmem:[#allocation5 + $0x878] sm:$0xff]
    %v3732 = vld [vmem:[#allocation5 + $0x880] sm:$0xff]
    %v3733 = vld [vmem:[#allocation5 + $0x888] sm:$0xff]
    %v3734 = vld [vmem:[#allocation5 + $0x890] sm:$0xff]
    %v3735 = vld [vmem:[#allocation5 + $0x898] sm:$0xff]
    %v3736 = vld [vmem:[#allocation5 + $0x8a0] sm:$0xff]
    %v3737 = vld [vmem:[#allocation5 + $0x8a8] sm:$0xff]
    %v3738 = vld [vmem:[#allocation5 + $0x8b0] sm:$0xff]
    %v3739 = vld [vmem:[#allocation5 + $0x8b8] sm:$0xff]
    %v3740 = vld [vmem:[#allocation5 + $0x8c0] sm:$0xff]
    %v3741 = vld [vmem:[#allocation5 + $0x8c8] sm:$0xff]
    %v3742 = vld [vmem:[#allocation5 + $0x8d0] sm:$0xff]
    %v3743 = vld [vmem:[#allocation5 + $0x8d8] sm:$0xff]
    %v3744 = vld [vmem:[#allocation5 + $0x8e0] sm:$0xff]
    %v3745 = vld [vmem:[#allocation5 + $0x8e8] sm:$0xff]
    %v3746 = vld [vmem:[#allocation5 + $0x8f0] sm:$0xff]
    %v3747 = vld [vmem:[#allocation5 + $0x8f8] sm:$0xff]
    %v3748 = vld [vmem:[#allocation12] sm:$0xff]
    %v3749 = vld [vmem:[#allocation12 + $0x8] sm:$0xff]
    %v3750 = vld [vmem:[#allocation12 + $0x10] sm:$0xff]
    %v3751 = vld [vmem:[#allocation12 + $0x18] sm:$0xff]
    %v3752 = vld [vmem:[#allocation12 + $0x20] sm:$0xff]
    %v3753 = vld [vmem:[#allocation12 + $0x28] sm:$0xff]
    %v3754 = vld [vmem:[#allocation12 + $0x30] sm:$0xff]
    %v3755 = vld [vmem:[#allocation12 + $0x38] sm:$0xff]
    %v3756 = vld [vmem:[#allocation12 + $0x40] sm:$0xff]
    %v3757 = vld [vmem:[#allocation12 + $0x48] sm:$0xff]
    %v3758 = vld [vmem:[#allocation12 + $0x50] sm:$0xff]
    %v3759 = vld [vmem:[#allocation12 + $0x58] sm:$0xff]
    %v3760 = vld [vmem:[#allocation12 + $0x60] sm:$0xff]
    %v3761 = vld [vmem:[#allocation12 + $0x68] sm:$0xff]
    %v3762 = vld [vmem:[#allocation12 + $0x70] sm:$0xff]
    %v3763 = vld [vmem:[#allocation12 + $0x78] sm:$0xff]
    %v3764 = vld [vmem:[#allocation12 + $0x80] sm:$0xff]
    %v3765 = vld [vmem:[#allocation12 + $0x88] sm:$0xff]
    %v3766 = vld [vmem:[#allocation12 + $0x90] sm:$0xff]
    %v3767 = vld [vmem:[#allocation12 + $0x98] sm:$0xff]
    %v3768 = vld [vmem:[#allocation12 + $0xa0] sm:$0xff]
    %v3769 = vld [vmem:[#allocation12 + $0xa8] sm:$0xff]
    %v3770 = vld [vmem:[#allocation12 + $0xb0] sm:$0xff]
    %v3771 = vld [vmem:[#allocation12 + $0xb8] sm:$0xff]
    %v3772 = vld [vmem:[#allocation12 + $0xc0] sm:$0xff]
    %v3773 = vld [vmem:[#allocation12 + $0xc8] sm:$0xff]
    %v3774 = vld [vmem:[#allocation12 + $0xd0] sm:$0xff]
    %v3775 = vld [vmem:[#allocation12 + $0xd8] sm:$0xff]
    %v3776 = vld [vmem:[#allocation12 + $0xe0] sm:$0xff]
    %v3777 = vld [vmem:[#allocation12 + $0xe8] sm:$0xff]
    %v3778 = vld [vmem:[#allocation12 + $0xf0] sm:$0xff]
    %v3779 = vld [vmem:[#allocation12 + $0xf8] sm:$0xff]
    %v3780 = vld [vmem:[#allocation12 + $0x100] sm:$0xff]
    %v3781 = vld [vmem:[#allocation12 + $0x108] sm:$0xff]
    %v3782 = vld [vmem:[#allocation12 + $0x110] sm:$0xff]
    %v3783 = vld [vmem:[#allocation12 + $0x118] sm:$0xff]
    %v3784 = vld [vmem:[#allocation12 + $0x120] sm:$0xff]
    %v3785 = vld [vmem:[#allocation12 + $0x128] sm:$0xff]
    %v3786 = vld [vmem:[#allocation12 + $0x130] sm:$0xff]
    %v3787 = vld [vmem:[#allocation12 + $0x138] sm:$0xff]
    %v3788 = vld [vmem:[#allocation12 + $0x140] sm:$0xff]
    %v3789 = vld [vmem:[#allocation12 + $0x148] sm:$0xff]
    %v3790 = vld [vmem:[#allocation12 + $0x150] sm:$0xff]
    %v3791 = vld [vmem:[#allocation12 + $0x158] sm:$0xff]
    %v3792 = vld [vmem:[#allocation12 + $0x160] sm:$0xff]
    %v3793 = vld [vmem:[#allocation12 + $0x168] sm:$0xff]
    %v3794 = vld [vmem:[#allocation12 + $0x170] sm:$0xff]
    %v3795 = vld [vmem:[#allocation12 + $0x178] sm:$0xff]
    %v3796 = vld [vmem:[#allocation12 + $0x180] sm:$0xff]
    %v3797 = vld [vmem:[#allocation12 + $0x188] sm:$0xff]
    %v3798 = vld [vmem:[#allocation12 + $0x190] sm:$0xff]
    %v3799 = vld [vmem:[#allocation12 + $0x198] sm:$0xff]
    %v3800 = vld [vmem:[#allocation12 + $0x1a0] sm:$0xff]
    %v3801 = vld [vmem:[#allocation12 + $0x1a8] sm:$0xff]
    %v3802 = vld [vmem:[#allocation12 + $0x1b0] sm:$0xff]
    %v3803 = vld [vmem:[#allocation12 + $0x1b8] sm:$0xff]
    %v3804 = vld [vmem:[#allocation12 + $0x1c0] sm:$0xff]
    %v3805 = vld [vmem:[#allocation12 + $0x1c8] sm:$0xff]
    %v3806 = vld [vmem:[#allocation12 + $0x1d0] sm:$0xff]
    %v3807 = vld [vmem:[#allocation12 + $0x1d8] sm:$0xff]
    %v3808 = vld [vmem:[#allocation12 + $0x1e0] sm:$0xff]
    %v3809 = vld [vmem:[#allocation12 + $0x1e8] sm:$0xff]
    %v3810 = vld [vmem:[#allocation12 + $0x1f0] sm:$0xff]
    %v3811 = vld [vmem:[#allocation12 + $0x1f8] sm:$0xff]
    %v3812 = vld [vmem:[#allocation12 + $0x200] sm:$0xff]
    %v3813 = vld [vmem:[#allocation12 + $0x208] sm:$0xff]
    %v3814 = vld [vmem:[#allocation12 + $0x210] sm:$0xff]
    %v3815 = vld [vmem:[#allocation12 + $0x218] sm:$0xff]
    %v3816 = vld [vmem:[#allocation12 + $0x220] sm:$0xff]
    %v3817 = vld [vmem:[#allocation12 + $0x228] sm:$0xff]
    %v3818 = vld [vmem:[#allocation12 + $0x230] sm:$0xff]
    %v3819 = vld [vmem:[#allocation12 + $0x238] sm:$0xff]
    %v3820 = vld [vmem:[#allocation12 + $0x240] sm:$0xff]
    %v3821 = vld [vmem:[#allocation12 + $0x248] sm:$0xff]
    %v3822 = vld [vmem:[#allocation12 + $0x250] sm:$0xff]
    %v3823 = vld [vmem:[#allocation12 + $0x258] sm:$0xff]
    %v3824 = vld [vmem:[#allocation12 + $0x260] sm:$0xff]
    %v3825 = vld [vmem:[#allocation12 + $0x268] sm:$0xff]
    %v3826 = vld [vmem:[#allocation12 + $0x270] sm:$0xff]
    %v3827 = vld [vmem:[#allocation12 + $0x278] sm:$0xff]
    %v3828 = vld [vmem:[#allocation12 + $0x280] sm:$0xff]
    %v3829 = vld [vmem:[#allocation12 + $0x288] sm:$0xff]
    %v3830 = vld [vmem:[#allocation12 + $0x290] sm:$0xff]
    %v3831 = vld [vmem:[#allocation12 + $0x298] sm:$0xff]
    %v3832 = vld [vmem:[#allocation12 + $0x2a0] sm:$0xff]
    %v3833 = vld [vmem:[#allocation12 + $0x2a8] sm:$0xff]
    %v3834 = vld [vmem:[#allocation12 + $0x2b0] sm:$0xff]
    %v3835 = vld [vmem:[#allocation12 + $0x2b8] sm:$0xff]
    %v3836 = vld [vmem:[#allocation12 + $0x2c0] sm:$0xff]
    %v3837 = vld [vmem:[#allocation12 + $0x2c8] sm:$0xff]
    %v3838 = vld [vmem:[#allocation12 + $0x2d0] sm:$0xff]
    %v3839 = vld [vmem:[#allocation12 + $0x2d8] sm:$0xff]
    %v3840 = vld [vmem:[#allocation12 + $0x2e0] sm:$0xff]
    %v3841 = vld [vmem:[#allocation12 + $0x2e8] sm:$0xff]
    %v3842 = vld [vmem:[#allocation12 + $0x2f0] sm:$0xff]
    %v3843 = vld [vmem:[#allocation12 + $0x2f8] sm:$0xff]
    %v3844 = vld [vmem:[#allocation12 + $0x300] sm:$0xff]
    %v3845 = vld [vmem:[#allocation12 + $0x308] sm:$0xff]
    %v3846 = vld [vmem:[#allocation12 + $0x310] sm:$0xff]
    %v3847 = vld [vmem:[#allocation12 + $0x318] sm:$0xff]
    %v3848 = vld [vmem:[#allocation12 + $0x320] sm:$0xff]
    %v3849 = vld [vmem:[#allocation12 + $0x328] sm:$0xff]
    %v3850 = vld [vmem:[#allocation12 + $0x330] sm:$0xff]
    %v3851 = vld [vmem:[#allocation12 + $0x338] sm:$0xff]
    %v3852 = vld [vmem:[#allocation12 + $0x340] sm:$0xff]
    %v3853 = vld [vmem:[#allocation12 + $0x348] sm:$0xff]
    %v3854 = vld [vmem:[#allocation12 + $0x350] sm:$0xff]
    %v3855 = vld [vmem:[#allocation12 + $0x358] sm:$0xff]
    %v3856 = vld [vmem:[#allocation12 + $0x360] sm:$0xff]
    %v3857 = vld [vmem:[#allocation12 + $0x368] sm:$0xff]
    %v3858 = vld [vmem:[#allocation12 + $0x370] sm:$0xff]
    %v3859 = vld [vmem:[#allocation12 + $0x378] sm:$0xff]
    %v3860 = vld [vmem:[#allocation12 + $0x380] sm:$0xff]
    %v3861 = vld [vmem:[#allocation12 + $0x388] sm:$0xff]
    %v3862 = vld [vmem:[#allocation12 + $0x390] sm:$0xff]
    %v3863 = vld [vmem:[#allocation12 + $0x398] sm:$0xff]
    %v3864 = vld [vmem:[#allocation12 + $0x3a0] sm:$0xff]
    %v3865 = vld [vmem:[#allocation12 + $0x3a8] sm:$0xff]
    %v3866 = vld [vmem:[#allocation12 + $0x3b0] sm:$0xff]
    %v3867 = vld [vmem:[#allocation12 + $0x3b8] sm:$0xff]
    %v3868 = vld [vmem:[#allocation12 + $0x3c0] sm:$0xff]
    %v3869 = vld [vmem:[#allocation12 + $0x3c8] sm:$0xff]
    %v3870 = vld [vmem:[#allocation12 + $0x3d0] sm:$0xff]
    %v3871 = vld [vmem:[#allocation12 + $0x3d8] sm:$0xff]
    %v3872 = vld [vmem:[#allocation12 + $0x3e0] sm:$0xff]
    %v3873 = vld [vmem:[#allocation12 + $0x3e8] sm:$0xff]
    %v3874 = vld [vmem:[#allocation12 + $0x3f0] sm:$0xff]
    %v3875 = vld [vmem:[#allocation12 + $0x3f8] sm:$0xff]
    %v3876 = vld [vmem:[#allocation12 + $0x400] sm:$0xff]
    %v3877 = vld [vmem:[#allocation12 + $0x408] sm:$0xff]
    %v3878 = vld [vmem:[#allocation12 + $0x410] sm:$0xff]
    %v3879 = vld [vmem:[#allocation12 + $0x418] sm:$0xff]
    %v3880 = vld [vmem:[#allocation12 + $0x420] sm:$0xff]
    %v3881 = vld [vmem:[#allocation12 + $0x428] sm:$0xff]
    %v3882 = vld [vmem:[#allocation12 + $0x430] sm:$0xff]
    %v3883 = vld [vmem:[#allocation12 + $0x438] sm:$0xff]
    %v3884 = vld [vmem:[#allocation12 + $0x440] sm:$0xff]
    %v3885 = vld [vmem:[#allocation12 + $0x448] sm:$0xff]
    %v3886 = vld [vmem:[#allocation12 + $0x450] sm:$0xff]
    %v3887 = vld [vmem:[#allocation12 + $0x458] sm:$0xff]
    %v3888 = vld [vmem:[#allocation12 + $0x460] sm:$0xff]
    %v3889 = vld [vmem:[#allocation12 + $0x468] sm:$0xff]
    %v3890 = vld [vmem:[#allocation12 + $0x470] sm:$0xff]
    %v3891 = vld [vmem:[#allocation12 + $0x478] sm:$0xff]
    %v3892 = vld [vmem:[#allocation12 + $0x480] sm:$0xff]
    %v3893 = vld [vmem:[#allocation12 + $0x488] sm:$0xff]
    %v3894 = vld [vmem:[#allocation12 + $0x490] sm:$0xff]
    %v3895 = vld [vmem:[#allocation12 + $0x498] sm:$0xff]
    %v3896 = vld [vmem:[#allocation12 + $0x4a0] sm:$0xff]
    %v3897 = vld [vmem:[#allocation12 + $0x4a8] sm:$0xff]
    %v3898 = vld [vmem:[#allocation12 + $0x4b0] sm:$0xff]
    %v3899 = vld [vmem:[#allocation12 + $0x4b8] sm:$0xff]
    %v3900 = vld [vmem:[#allocation12 + $0x4c0] sm:$0xff]
    %v3901 = vld [vmem:[#allocation12 + $0x4c8] sm:$0xff]
    %v3902 = vld [vmem:[#allocation12 + $0x4d0] sm:$0xff]
    %v3903 = vld [vmem:[#allocation12 + $0x4d8] sm:$0xff]
    %v3904 = vld [vmem:[#allocation12 + $0x4e0] sm:$0xff]
    %v3905 = vld [vmem:[#allocation12 + $0x4e8] sm:$0xff]
    %v3906 = vld [vmem:[#allocation12 + $0x4f0] sm:$0xff]
    %v3907 = vld [vmem:[#allocation12 + $0x4f8] sm:$0xff]
    %v3908 = vld [vmem:[#allocation12 + $0x500] sm:$0xff]
    %v3909 = vld [vmem:[#allocation12 + $0x508] sm:$0xff]
    %v3910 = vld [vmem:[#allocation12 + $0x510] sm:$0xff]
    %v3911 = vld [vmem:[#allocation12 + $0x518] sm:$0xff]
    %v3912 = vld [vmem:[#allocation12 + $0x520] sm:$0xff]
    %v3913 = vld [vmem:[#allocation12 + $0x528] sm:$0xff]
    %v3914 = vld [vmem:[#allocation12 + $0x530] sm:$0xff]
    %v3915 = vld [vmem:[#allocation12 + $0x538] sm:$0xff]
    %v3916 = vld [vmem:[#allocation12 + $0x540] sm:$0xff]
    %v3917 = vld [vmem:[#allocation12 + $0x548] sm:$0xff]
    %v3918 = vld [vmem:[#allocation12 + $0x550] sm:$0xff]
    %v3919 = vld [vmem:[#allocation12 + $0x558] sm:$0xff]
    %v3920 = vld [vmem:[#allocation12 + $0x560] sm:$0xff]
    %v3921 = vld [vmem:[#allocation12 + $0x568] sm:$0xff]
    %v3922 = vld [vmem:[#allocation12 + $0x570] sm:$0xff]
    %v3923 = vld [vmem:[#allocation12 + $0x578] sm:$0xff]
    %v3924 = vld [vmem:[#allocation12 + $0x580] sm:$0xff]
    %v3925 = vld [vmem:[#allocation12 + $0x588] sm:$0xff]
    %v3926 = vld [vmem:[#allocation12 + $0x590] sm:$0xff]
    %v3927 = vld [vmem:[#allocation12 + $0x598] sm:$0xff]
    %v3928 = vld [vmem:[#allocation12 + $0x5a0] sm:$0xff]
    %v3929 = vld [vmem:[#allocation12 + $0x5a8] sm:$0xff]
    %v3930 = vld [vmem:[#allocation12 + $0x5b0] sm:$0xff]
    %v3931 = vld [vmem:[#allocation12 + $0x5b8] sm:$0xff]
    %v3932 = vld [vmem:[#allocation12 + $0x5c0] sm:$0xff]
    %v3933 = vld [vmem:[#allocation12 + $0x5c8] sm:$0xff]
    %v3934 = vld [vmem:[#allocation12 + $0x5d0] sm:$0xff]
    %v3935 = vld [vmem:[#allocation12 + $0x5d8] sm:$0xff]
    %v3936 = vld [vmem:[#allocation12 + $0x5e0] sm:$0xff]
    %v3937 = vld [vmem:[#allocation12 + $0x5e8] sm:$0xff]
    %v3938 = vld [vmem:[#allocation12 + $0x5f0] sm:$0xff]
    %v3939 = vld [vmem:[#allocation12 + $0x5f8] sm:$0xff]
    %v3940 = vld [vmem:[#allocation12 + $0x600] sm:$0xff]
    %v3941 = vld [vmem:[#allocation12 + $0x608] sm:$0xff]
    %v3942 = vld [vmem:[#allocation12 + $0x610] sm:$0xff]
    %v3943 = vld [vmem:[#allocation12 + $0x618] sm:$0xff]
    %v3944 = vld [vmem:[#allocation12 + $0x620] sm:$0xff]
    %v3945 = vld [vmem:[#allocation12 + $0x628] sm:$0xff]
    %v3946 = vld [vmem:[#allocation12 + $0x630] sm:$0xff]
    %v3947 = vld [vmem:[#allocation12 + $0x638] sm:$0xff]
    %v3948 = vld [vmem:[#allocation12 + $0x640] sm:$0xff]
    %v3949 = vld [vmem:[#allocation12 + $0x648] sm:$0xff]
    %v3950 = vld [vmem:[#allocation12 + $0x650] sm:$0xff]
    %v3951 = vld [vmem:[#allocation12 + $0x658] sm:$0xff]
    %v3952 = vld [vmem:[#allocation12 + $0x660] sm:$0xff]
    %v3953 = vld [vmem:[#allocation12 + $0x668] sm:$0xff]
    %v3954 = vld [vmem:[#allocation12 + $0x670] sm:$0xff]
    %v3955 = vld [vmem:[#allocation12 + $0x678] sm:$0xff]
    %v3956 = vld [vmem:[#allocation12 + $0x680] sm:$0xff]
    %v3957 = vld [vmem:[#allocation12 + $0x688] sm:$0xff]
    %v3958 = vld [vmem:[#allocation12 + $0x690] sm:$0xff]
    %v3959 = vld [vmem:[#allocation12 + $0x698] sm:$0xff]
    %v3960 = vld [vmem:[#allocation12 + $0x6a0] sm:$0xff]
    %v3961 = vld [vmem:[#allocation12 + $0x6a8] sm:$0xff]
    %v3962 = vld [vmem:[#allocation12 + $0x6b0] sm:$0xff]
    %v3963 = vld [vmem:[#allocation12 + $0x6b8] sm:$0xff]
    %v3964 = vld [vmem:[#allocation12 + $0x6c0] sm:$0xff]
    %v3965 = vld [vmem:[#allocation12 + $0x6c8] sm:$0xff]
    %v3966 = vld [vmem:[#allocation12 + $0x6d0] sm:$0xff]
    %v3967 = vld [vmem:[#allocation12 + $0x6d8] sm:$0xff]
    %v3968 = vld [vmem:[#allocation12 + $0x6e0] sm:$0xff]
    %v3969 = vld [vmem:[#allocation12 + $0x6e8] sm:$0xff]
    %v3970 = vld [vmem:[#allocation12 + $0x6f0] sm:$0xff]
    %v3971 = vld [vmem:[#allocation12 + $0x6f8] sm:$0xff]
    %v3972 = vld [vmem:[#allocation12 + $0x700] sm:$0xff]
    %v3973 = vld [vmem:[#allocation12 + $0x708] sm:$0xff]
    %v3974 = vld [vmem:[#allocation12 + $0x710] sm:$0xff]
    %v3975 = vld [vmem:[#allocation12 + $0x718] sm:$0xff]
    %v3976 = vld [vmem:[#allocation12 + $0x720] sm:$0xff]
    %v3977 = vld [vmem:[#allocation12 + $0x728] sm:$0xff]
    %v3978 = vld [vmem:[#allocation12 + $0x730] sm:$0xff]
    %v3979 = vld [vmem:[#allocation12 + $0x738] sm:$0xff]
    %v3980 = vld [vmem:[#allocation12 + $0x740] sm:$0xff]
    %v3981 = vld [vmem:[#allocation12 + $0x748] sm:$0xff]
    %v3982 = vld [vmem:[#allocation12 + $0x750] sm:$0xff]
    %v3983 = vld [vmem:[#allocation12 + $0x758] sm:$0xff]
    %v3984 = vld [vmem:[#allocation12 + $0x760] sm:$0xff]
    %v3985 = vld [vmem:[#allocation12 + $0x768] sm:$0xff]
    %v3986 = vld [vmem:[#allocation12 + $0x770] sm:$0xff]
    %v3987 = vld [vmem:[#allocation12 + $0x778] sm:$0xff]
    %v3988 = vld [vmem:[#allocation12 + $0x780] sm:$0xff]
    %v3989 = vld [vmem:[#allocation12 + $0x788] sm:$0xff]
    %v3990 = vld [vmem:[#allocation12 + $0x790] sm:$0xff]
    %v3991 = vld [vmem:[#allocation12 + $0x798] sm:$0xff]
    %v3992 = vld [vmem:[#allocation12 + $0x7a0] sm:$0xff]
    %v3993 = vld [vmem:[#allocation12 + $0x7a8] sm:$0xff]
    %v3994 = vld [vmem:[#allocation12 + $0x7b0] sm:$0xff]
    %v3995 = vld [vmem:[#allocation12 + $0x7b8] sm:$0xff]
    %v3996 = vld [vmem:[#allocation12 + $0x7c0] sm:$0xff]
    %v3997 = vld [vmem:[#allocation12 + $0x7c8] sm:$0xff]
    %v3998 = vld [vmem:[#allocation12 + $0x7d0] sm:$0xff]
    %v3999 = vld [vmem:[#allocation12 + $0x7d8] sm:$0xff]
    %v4000 = vld [vmem:[#allocation12 + $0x7e0] sm:$0xff]
    %v4001 = vld [vmem:[#allocation12 + $0x7e8] sm:$0xff]
    %v4002 = vld [vmem:[#allocation12 + $0x7f0] sm:$0xff]
    %v4003 = vld [vmem:[#allocation12 + $0x7f8] sm:$0xff]
    %v4004 = vld [vmem:[#allocation12 + $0x800] sm:$0xff]
    %v4005 = vld [vmem:[#allocation12 + $0x808] sm:$0xff]
    %v4006 = vld [vmem:[#allocation12 + $0x810] sm:$0xff]
    %v4007 = vld [vmem:[#allocation12 + $0x818] sm:$0xff]
    %v4008 = vld [vmem:[#allocation12 + $0x820] sm:$0xff]
    %v4009 = vld [vmem:[#allocation12 + $0x828] sm:$0xff]
    %v4010 = vld [vmem:[#allocation12 + $0x830] sm:$0xff]
    %v4011 = vld [vmem:[#allocation12 + $0x838] sm:$0xff]
    %v4012 = vld [vmem:[#allocation12 + $0x840] sm:$0xff]
    %v4013 = vld [vmem:[#allocation12 + $0x848] sm:$0xff]
    %v4014 = vld [vmem:[#allocation12 + $0x850] sm:$0xff]
    %v4015 = vld [vmem:[#allocation12 + $0x858] sm:$0xff]
    %v4016 = vld [vmem:[#allocation12 + $0x860] sm:$0xff]
    %v4017 = vld [vmem:[#allocation12 + $0x868] sm:$0xff]
    %v4018 = vld [vmem:[#allocation12 + $0x870] sm:$0xff]
    %v4019 = vld [vmem:[#allocation12 + $0x878] sm:$0xff]
    %v4020 = vld [vmem:[#allocation12 + $0x880] sm:$0xff]
    %v4021 = vld [vmem:[#allocation12 + $0x888] sm:$0xff]
    %v4022 = vld [vmem:[#allocation12 + $0x890] sm:$0xff]
    %v4023 = vld [vmem:[#allocation12 + $0x898] sm:$0xff]
    %v4024 = vld [vmem:[#allocation12 + $0x8a0] sm:$0xff]
    %v4025 = vld [vmem:[#allocation12 + $0x8a8] sm:$0xff]
    %v4026 = vld [vmem:[#allocation12 + $0x8b0] sm:$0xff]
    %v4027 = vld [vmem:[#allocation12 + $0x8b8] sm:$0xff]
    %v4028 = vld [vmem:[#allocation12 + $0x8c0] sm:$0xff]
    %v4029 = vld [vmem:[#allocation12 + $0x8c8] sm:$0xff]
    %v4030 = vld [vmem:[#allocation12 + $0x8d0] sm:$0xff]
    %v4031 = vld [vmem:[#allocation12 + $0x8d8] sm:$0xff]
    %v4032 = vld [vmem:[#allocation12 + $0x8e0] sm:$0xff]
    %v4033 = vld [vmem:[#allocation12 + $0x8e8] sm:$0xff]
    %v4034 = vld [vmem:[#allocation12 + $0x8f0] sm:$0xff]
    %v4035 = vld [vmem:[#allocation12 + $0x8f8] sm:$0xff]
    %v4036 = vld [vmem:[#allocation12 + $0x900] sm:$0xff]
    %v4037 = vld [vmem:[#allocation12 + $0x908] sm:$0xff]
    %v4038 = vld [vmem:[#allocation12 + $0x910] sm:$0xff]
    %v4039 = vld [vmem:[#allocation12 + $0x918] sm:$0xff]
    %v4040 = vld [vmem:[#allocation12 + $0x920] sm:$0xff]
    %v4041 = vld [vmem:[#allocation12 + $0x928] sm:$0xff]
    %v4042 = vld [vmem:[#allocation12 + $0x930] sm:$0xff]
    %v4043 = vld [vmem:[#allocation12 + $0x938] sm:$0xff]
    %v4044 = vld [vmem:[#allocation12 + $0x940] sm:$0xff]
    %v4045 = vld [vmem:[#allocation12 + $0x948] sm:$0xff]
    %v4046 = vld [vmem:[#allocation12 + $0x950] sm:$0xff]
    %v4047 = vld [vmem:[#allocation12 + $0x958] sm:$0xff]
    %v4048 = vld [vmem:[#allocation12 + $0x960] sm:$0xff]
    %v4049 = vld [vmem:[#allocation12 + $0x968] sm:$0xff]
    %v4050 = vld [vmem:[#allocation12 + $0x970] sm:$0xff]
    %v4051 = vld [vmem:[#allocation12 + $0x978] sm:$0xff]
    %v4052 = vld [vmem:[#allocation12 + $0x980] sm:$0xff]
    %v4053 = vld [vmem:[#allocation12 + $0x988] sm:$0xff]
    %v4054 = vld [vmem:[#allocation12 + $0x990] sm:$0xff]
    %v4055 = vld [vmem:[#allocation12 + $0x998] sm:$0xff]
    %v4056 = vld [vmem:[#allocation12 + $0x9a0] sm:$0xff]
    %v4057 = vld [vmem:[#allocation12 + $0x9a8] sm:$0xff]
    %v4058 = vld [vmem:[#allocation12 + $0x9b0] sm:$0xff]
    %v4059 = vld [vmem:[#allocation12 + $0x9b8] sm:$0xff]
    %v4060 = vld [vmem:[#allocation12 + $0x9c0] sm:$0xff]
    %v4061 = vld [vmem:[#allocation12 + $0x9c8] sm:$0xff]
    %v4062 = vld [vmem:[#allocation12 + $0x9d0] sm:$0xff]
    %v4063 = vld [vmem:[#allocation12 + $0x9d8] sm:$0xff]
    %v4064 = vld [vmem:[#allocation12 + $0x9e0] sm:$0xff]
    %v4065 = vld [vmem:[#allocation12 + $0x9e8] sm:$0xff]
    %v4066 = vld [vmem:[#allocation12 + $0x9f0] sm:$0xff]
    %v4067 = vld [vmem:[#allocation12 + $0x9f8] sm:$0xff]
    %v4068 = vld [vmem:[#allocation12 + $0xa00] sm:$0xff]
    %v4069 = vld [vmem:[#allocation12 + $0xa08] sm:$0xff]
    %v4070 = vld [vmem:[#allocation12 + $0xa10] sm:$0xff]
    %v4071 = vld [vmem:[#allocation12 + $0xa18] sm:$0xff]
    %v4072 = vld [vmem:[#allocation12 + $0xa20] sm:$0xff]
    %v4073 = vld [vmem:[#allocation12 + $0xa28] sm:$0xff]
    %v4074 = vld [vmem:[#allocation12 + $0xa30] sm:$0xff]
    %v4075 = vld [vmem:[#allocation12 + $0xa38] sm:$0xff]
    %v4076 = vld [vmem:[#allocation12 + $0xa40] sm:$0xff]
    %v4077 = vld [vmem:[#allocation12 + $0xa48] sm:$0xff]
    %v4078 = vld [vmem:[#allocation12 + $0xa50] sm:$0xff]
    %v4079 = vld [vmem:[#allocation12 + $0xa58] sm:$0xff]
    %v4080 = vld [vmem:[#allocation12 + $0xa60] sm:$0xff]
    %v4081 = vld [vmem:[#allocation12 + $0xa68] sm:$0xff]
    %v4082 = vld [vmem:[#allocation12 + $0xa70] sm:$0xff]
    %v4083 = vld [vmem:[#allocation12 + $0xa78] sm:$0xff]
    %v4084 = vld [vmem:[#allocation12 + $0xa80] sm:$0xff]
    %v4085 = vld [vmem:[#allocation12 + $0xa88] sm:$0xff]
    %v4086 = vld [vmem:[#allocation12 + $0xa90] sm:$0xff]
    %v4087 = vld [vmem:[#allocation12 + $0xa98] sm:$0xff]
    %v4088 = vld [vmem:[#allocation12 + $0xaa0] sm:$0xff]
    %v4089 = vld [vmem:[#allocation12 + $0xaa8] sm:$0xff]
    %v4090 = vld [vmem:[#allocation12 + $0xab0] sm:$0xff]
    %v4091 = vld [vmem:[#allocation12 + $0xab8] sm:$0xff]
    %v4092 = vld [vmem:[#allocation12 + $0xac0] sm:$0xff]
    %v4093 = vld [vmem:[#allocation12 + $0xac8] sm:$0xff]
    %v4094 = vld [vmem:[#allocation12 + $0xad0] sm:$0xff]
    %v4095 = vld [vmem:[#allocation12 + $0xad8] sm:$0xff]
    %v4096 = vld [vmem:[#allocation12 + $0xae0] sm:$0xff]
    %v4097 = vld [vmem:[#allocation12 + $0xae8] sm:$0xff]
    %v4098 = vld [vmem:[#allocation12 + $0xaf0] sm:$0xff]
    %v4099 = vld [vmem:[#allocation12 + $0xaf8] sm:$0xff]
    %v4100 = vld [vmem:[#allocation12 + $0xb00] sm:$0xff]
    %v4101 = vld [vmem:[#allocation12 + $0xb08] sm:$0xff]
    %v4102 = vld [vmem:[#allocation12 + $0xb10] sm:$0xff]
    %v4103 = vld [vmem:[#allocation12 + $0xb18] sm:$0xff]
    %v4104 = vld [vmem:[#allocation12 + $0xb20] sm:$0xff]
    %v4105 = vld [vmem:[#allocation12 + $0xb28] sm:$0xff]
    %v4106 = vld [vmem:[#allocation12 + $0xb30] sm:$0xff]
    %v4107 = vld [vmem:[#allocation12 + $0xb38] sm:$0xff]
    %v4108 = vld [vmem:[#allocation12 + $0xb40] sm:$0xff]
    %v4109 = vld [vmem:[#allocation12 + $0xb48] sm:$0xff]
    %v4110 = vld [vmem:[#allocation12 + $0xb50] sm:$0xff]
    %v4111 = vld [vmem:[#allocation12 + $0xb58] sm:$0xff]
    %v4112 = vld [vmem:[#allocation12 + $0xb60] sm:$0xff]
    %v4113 = vld [vmem:[#allocation12 + $0xb68] sm:$0xff]
    %v4114 = vld [vmem:[#allocation12 + $0xb70] sm:$0xff]
    %v4115 = vld [vmem:[#allocation12 + $0xb78] sm:$0xff]
    %v4116 = vld [vmem:[#allocation12 + $0xb80] sm:$0xff]
    %v4117 = vld [vmem:[#allocation12 + $0xb88] sm:$0xff]
    %v4118 = vld [vmem:[#allocation12 + $0xb90] sm:$0xff]
    %v4119 = vld [vmem:[#allocation12 + $0xb98] sm:$0xff]
    %v4120 = vld [vmem:[#allocation12 + $0xba0] sm:$0xff]
    %v4121 = vld [vmem:[#allocation12 + $0xba8] sm:$0xff]
    %v4122 = vld [vmem:[#allocation12 + $0xbb0] sm:$0xff]
    %v4123 = vld [vmem:[#allocation12 + $0xbb8] sm:$0xff]
    %v4124 = vld [vmem:[#allocation12 + $0xbc0] sm:$0xff]
    %v4125 = vld [vmem:[#allocation12 + $0xbc8] sm:$0xff]
    %v4126 = vld [vmem:[#allocation12 + $0xbd0] sm:$0xff]
    %v4127 = vld [vmem:[#allocation12 + $0xbd8] sm:$0xff]
    %v4128 = vld [vmem:[#allocation12 + $0xbe0] sm:$0xff]
    %v4129 = vld [vmem:[#allocation12 + $0xbe8] sm:$0xff]
    %v4130 = vld [vmem:[#allocation12 + $0xbf0] sm:$0xff]
    %v4131 = vld [vmem:[#allocation12 + $0xbf8] sm:$0xff]
    %v4132 = vld [vmem:[#allocation12 + $0xc00] sm:$0xff]
    %v4133 = vld [vmem:[#allocation12 + $0xc08] sm:$0xff]
    %v4134 = vld [vmem:[#allocation12 + $0xc10] sm:$0xff]
    %v4135 = vld [vmem:[#allocation12 + $0xc18] sm:$0xff]
    %v4136 = vld [vmem:[#allocation12 + $0xc20] sm:$0xff]
    %v4137 = vld [vmem:[#allocation12 + $0xc28] sm:$0xff]
    %v4138 = vld [vmem:[#allocation12 + $0xc30] sm:$0xff]
    %v4139 = vld [vmem:[#allocation12 + $0xc38] sm:$0xff]
    %v4140 = vld [vmem:[#allocation12 + $0xc40] sm:$0xff]
    %v4141 = vld [vmem:[#allocation12 + $0xc48] sm:$0xff]
    %v4142 = vld [vmem:[#allocation12 + $0xc50] sm:$0xff]
    %v4143 = vld [vmem:[#allocation12 + $0xc58] sm:$0xff]
    %v4144 = vld [vmem:[#allocation12 + $0xc60] sm:$0xff]
    %v4145 = vld [vmem:[#allocation12 + $0xc68] sm:$0xff]
    %v4146 = vld [vmem:[#allocation12 + $0xc70] sm:$0xff]
    %v4147 = vld [vmem:[#allocation12 + $0xc78] sm:$0xff]
    %v4148 = vld [vmem:[#allocation12 + $0xc80] sm:$0xff]
    %v4149 = vld [vmem:[#allocation12 + $0xc88] sm:$0xff]
    %v4150 = vld [vmem:[#allocation12 + $0xc90] sm:$0xff]
    %v4151 = vld [vmem:[#allocation12 + $0xc98] sm:$0xff]
    %v4152 = vld [vmem:[#allocation12 + $0xca0] sm:$0xff]
    %v4153 = vld [vmem:[#allocation12 + $0xca8] sm:$0xff]
    %v4154 = vld [vmem:[#allocation12 + $0xcb0] sm:$0xff]
    %v4155 = vld [vmem:[#allocation12 + $0xcb8] sm:$0xff]
    %v4156 = vld [vmem:[#allocation12 + $0xcc0] sm:$0xff]
    %v4157 = vld [vmem:[#allocation12 + $0xcc8] sm:$0xff]
    %v4158 = vld [vmem:[#allocation12 + $0xcd0] sm:$0xff]
    %v4159 = vld [vmem:[#allocation12 + $0xcd8] sm:$0xff]
    %v4160 = vld [vmem:[#allocation12 + $0xce0] sm:$0xff]
    %v4161 = vld [vmem:[#allocation12 + $0xce8] sm:$0xff]
    %v4162 = vld [vmem:[#allocation12 + $0xcf0] sm:$0xff]
    %v4163 = vld [vmem:[#allocation12 + $0xcf8] sm:$0xff]
    %v4164 = vld [vmem:[#allocation12 + $0xd00] sm:$0xff]
    %v4165 = vld [vmem:[#allocation12 + $0xd08] sm:$0xff]
    %v4166 = vld [vmem:[#allocation12 + $0xd10] sm:$0xff]
    %v4167 = vld [vmem:[#allocation12 + $0xd18] sm:$0xff]
    %v4168 = vld [vmem:[#allocation12 + $0xd20] sm:$0xff]
    %v4169 = vld [vmem:[#allocation12 + $0xd28] sm:$0xff]
    %v4170 = vld [vmem:[#allocation12 + $0xd30] sm:$0xff]
    %v4171 = vld [vmem:[#allocation12 + $0xd38] sm:$0xff]
    %v4172 = vld [vmem:[#allocation12 + $0xd40] sm:$0xff]
    %v4173 = vld [vmem:[#allocation12 + $0xd48] sm:$0xff]
    %v4174 = vld [vmem:[#allocation12 + $0xd50] sm:$0xff]
    %v4175 = vld [vmem:[#allocation12 + $0xd58] sm:$0xff]
    %v4176 = vld [vmem:[#allocation12 + $0xd60] sm:$0xff]
    %v4177 = vld [vmem:[#allocation12 + $0xd68] sm:$0xff]
    %v4178 = vld [vmem:[#allocation12 + $0xd70] sm:$0xff]
    %v4179 = vld [vmem:[#allocation12 + $0xd78] sm:$0xff]
    %v4180 = vld [vmem:[#allocation12 + $0xd80] sm:$0xff]
    %v4181 = vld [vmem:[#allocation12 + $0xd88] sm:$0xff]
    %v4182 = vld [vmem:[#allocation12 + $0xd90] sm:$0xff]
    %v4183 = vld [vmem:[#allocation12 + $0xd98] sm:$0xff]
    %v4184 = vld [vmem:[#allocation12 + $0xda0] sm:$0xff]
    %v4185 = vld [vmem:[#allocation12 + $0xda8] sm:$0xff]
    %v4186 = vld [vmem:[#allocation12 + $0xdb0] sm:$0xff]
    %v4187 = vld [vmem:[#allocation12 + $0xdb8] sm:$0xff]
    %v4188 = vld [vmem:[#allocation12 + $0xdc0] sm:$0xff]
    %v4189 = vld [vmem:[#allocation12 + $0xdc8] sm:$0xff]
    %v4190 = vld [vmem:[#allocation12 + $0xdd0] sm:$0xff]
    %v4191 = vld [vmem:[#allocation12 + $0xdd8] sm:$0xff]
    %v4192 = vld [vmem:[#allocation12 + $0xde0] sm:$0xff]
    %v4193 = vld [vmem:[#allocation12 + $0xde8] sm:$0xff]
    %v4194 = vld [vmem:[#allocation12 + $0xdf0] sm:$0xff]
    %v4195 = vld [vmem:[#allocation12 + $0xdf8] sm:$0xff]
    %v4196 = vld [vmem:[#allocation12 + $0xe00] sm:$0xff]
    %v4197 = vld [vmem:[#allocation12 + $0xe08] sm:$0xff]
    %v4198 = vld [vmem:[#allocation12 + $0xe10] sm:$0xff]
    %v4199 = vld [vmem:[#allocation12 + $0xe18] sm:$0xff]
    %v4200 = vld [vmem:[#allocation12 + $0xe20] sm:$0xff]
    %v4201 = vld [vmem:[#allocation12 + $0xe28] sm:$0xff]
    %v4202 = vld [vmem:[#allocation12 + $0xe30] sm:$0xff]
    %v4203 = vld [vmem:[#allocation12 + $0xe38] sm:$0xff]
    %v4204 = vld [vmem:[#allocation12 + $0xe40] sm:$0xff]
    %v4205 = vld [vmem:[#allocation12 + $0xe48] sm:$0xff]
    %v4206 = vld [vmem:[#allocation12 + $0xe50] sm:$0xff]
    %v4207 = vld [vmem:[#allocation12 + $0xe58] sm:$0xff]
    %v4208 = vld [vmem:[#allocation12 + $0xe60] sm:$0xff]
    %v4209 = vld [vmem:[#allocation12 + $0xe68] sm:$0xff]
    %v4210 = vld [vmem:[#allocation12 + $0xe70] sm:$0xff]
    %v4211 = vld [vmem:[#allocation12 + $0xe78] sm:$0xff]
    %v4212 = vld [vmem:[#allocation12 + $0xe80] sm:$0xff]
    %v4213 = vld [vmem:[#allocation12 + $0xe88] sm:$0xff]
    %v4214 = vld [vmem:[#allocation12 + $0xe90] sm:$0xff]
    %v4215 = vld [vmem:[#allocation12 + $0xe98] sm:$0xff]
    %v4216 = vld [vmem:[#allocation12 + $0xea0] sm:$0xff]
    %v4217 = vld [vmem:[#allocation12 + $0xea8] sm:$0xff]
    %v4218 = vld [vmem:[#allocation12 + $0xeb0] sm:$0xff]
    %v4219 = vld [vmem:[#allocation12 + $0xeb8] sm:$0xff]
    %v4220 = vld [vmem:[#allocation12 + $0xec0] sm:$0xff]
    %v4221 = vld [vmem:[#allocation12 + $0xec8] sm:$0xff]
    %v4222 = vld [vmem:[#allocation12 + $0xed0] sm:$0xff]
    %v4223 = vld [vmem:[#allocation12 + $0xed8] sm:$0xff]
    %v4224 = vld [vmem:[#allocation12 + $0xee0] sm:$0xff]
    %v4225 = vld [vmem:[#allocation12 + $0xee8] sm:$0xff]
    %v4226 = vld [vmem:[#allocation12 + $0xef0] sm:$0xff]
    %v4227 = vld [vmem:[#allocation12 + $0xef8] sm:$0xff]
    %v4228 = vld [vmem:[#allocation12 + $0xf00] sm:$0xff]
    %v4229 = vld [vmem:[#allocation12 + $0xf08] sm:$0xff]
    %v4230 = vld [vmem:[#allocation12 + $0xf10] sm:$0xff]
    %v4231 = vld [vmem:[#allocation12 + $0xf18] sm:$0xff]
    %v4232 = vld [vmem:[#allocation12 + $0xf20] sm:$0xff]
    %v4233 = vld [vmem:[#allocation12 + $0xf28] sm:$0xff]
    %v4234 = vld [vmem:[#allocation12 + $0xf30] sm:$0xff]
    %v4235 = vld [vmem:[#allocation12 + $0xf38] sm:$0xff]
    %v4236 = vld [vmem:[#allocation12 + $0xf40] sm:$0xff]
    %v4237 = vld [vmem:[#allocation12 + $0xf48] sm:$0xff]
    %v4238 = vld [vmem:[#allocation12 + $0xf50] sm:$0xff]
    %v4239 = vld [vmem:[#allocation12 + $0xf58] sm:$0xff]
    %v4240 = vld [vmem:[#allocation12 + $0xf60] sm:$0xff]
    %v4241 = vld [vmem:[#allocation12 + $0xf68] sm:$0xff]
    %v4242 = vld [vmem:[#allocation12 + $0xf70] sm:$0xff]
    %v4243 = vld [vmem:[#allocation12 + $0xf78] sm:$0xff]
    %v4244 = vld [vmem:[#allocation12 + $0xf80] sm:$0xff]
    %v4245 = vld [vmem:[#allocation12 + $0xf88] sm:$0xff]
    %v4246 = vld [vmem:[#allocation12 + $0xf90] sm:$0xff]
    %v4247 = vld [vmem:[#allocation12 + $0xf98] sm:$0xff]
    %v4248 = vld [vmem:[#allocation12 + $0xfa0] sm:$0xff]
    %v4249 = vld [vmem:[#allocation12 + $0xfa8] sm:$0xff]
    %v4250 = vld [vmem:[#allocation12 + $0xfb0] sm:$0xff]
    %v4251 = vld [vmem:[#allocation12 + $0xfb8] sm:$0xff]
    %v4252 = vld [vmem:[#allocation12 + $0xfc0] sm:$0xff]
    %v4253 = vld [vmem:[#allocation12 + $0xfc8] sm:$0xff]
    %v4254 = vld [vmem:[#allocation12 + $0xfd0] sm:$0xff]
    %v4255 = vld [vmem:[#allocation12 + $0xfd8] sm:$0xff]
    %v4256 = vld [vmem:[#allocation12 + $0xfe0] sm:$0xff]
    %v4257 = vld [vmem:[#allocation12 + $0xfe8] sm:$0xff]
    %v4258 = vld [vmem:[#allocation12 + $0xff0] sm:$0xff]
    %v4259 = vld [vmem:[#allocation12 + $0xff8] sm:$0xff]
    %v4260 = vld [vmem:[#allocation12 + $0x1000] sm:$0xff]
    %v4261 = vld [vmem:[#allocation12 + $0x1008] sm:$0xff]
    %v4262 = vld [vmem:[#allocation12 + $0x1010] sm:$0xff]
    %v4263 = vld [vmem:[#allocation12 + $0x1018] sm:$0xff]
    %v4264 = vld [vmem:[#allocation12 + $0x1020] sm:$0xff]
    %v4265 = vld [vmem:[#allocation12 + $0x1028] sm:$0xff]
    %v4266 = vld [vmem:[#allocation12 + $0x1030] sm:$0xff]
    %v4267 = vld [vmem:[#allocation12 + $0x1038] sm:$0xff]
    %v4268 = vld [vmem:[#allocation12 + $0x1040] sm:$0xff]
    %v4269 = vld [vmem:[#allocation12 + $0x1048] sm:$0xff]
    %v4270 = vld [vmem:[#allocation12 + $0x1050] sm:$0xff]
    %v4271 = vld [vmem:[#allocation12 + $0x1058] sm:$0xff]
    %v4272 = vld [vmem:[#allocation12 + $0x1060] sm:$0xff]
    %v4273 = vld [vmem:[#allocation12 + $0x1068] sm:$0xff]
    %v4274 = vld [vmem:[#allocation12 + $0x1070] sm:$0xff]
    %v4275 = vld [vmem:[#allocation12 + $0x1078] sm:$0xff]
    %v4276 = vld [vmem:[#allocation12 + $0x1080] sm:$0xff]
    %v4277 = vld [vmem:[#allocation12 + $0x1088] sm:$0xff]
    %v4278 = vld [vmem:[#allocation12 + $0x1090] sm:$0xff]
    %v4279 = vld [vmem:[#allocation12 + $0x1098] sm:$0xff]
    %v4280 = vld [vmem:[#allocation12 + $0x10a0] sm:$0xff]
    %v4281 = vld [vmem:[#allocation12 + $0x10a8] sm:$0xff]
    %v4282 = vld [vmem:[#allocation12 + $0x10b0] sm:$0xff]
    %v4283 = vld [vmem:[#allocation12 + $0x10b8] sm:$0xff]
    %v4284 = vld [vmem:[#allocation12 + $0x10c0] sm:$0xff]
    %v4285 = vld [vmem:[#allocation12 + $0x10c8] sm:$0xff]
    %v4286 = vld [vmem:[#allocation12 + $0x10d0] sm:$0xff]
    %v4287 = vld [vmem:[#allocation12 + $0x10d8] sm:$0xff]
    %v4288 = vld [vmem:[#allocation12 + $0x10e0] sm:$0xff]
    %v4289 = vld [vmem:[#allocation12 + $0x10e8] sm:$0xff]
    %v4290 = vld [vmem:[#allocation12 + $0x10f0] sm:$0xff]
    %v4291 = vld [vmem:[#allocation12 + $0x10f8] sm:$0xff]
    %v4292 = vld [vmem:[#allocation12 + $0x1100] sm:$0xff]
    %v4293 = vld [vmem:[#allocation12 + $0x1108] sm:$0xff]
    %v4294 = vld [vmem:[#allocation12 + $0x1110] sm:$0xff]
    %v4295 = vld [vmem:[#allocation12 + $0x1118] sm:$0xff]
    %v4296 = vld [vmem:[#allocation12 + $0x1120] sm:$0xff]
    %v4297 = vld [vmem:[#allocation12 + $0x1128] sm:$0xff]
    %v4298 = vld [vmem:[#allocation12 + $0x1130] sm:$0xff]
    %v4299 = vld [vmem:[#allocation12 + $0x1138] sm:$0xff]
    %v4300 = vld [vmem:[#allocation12 + $0x1140] sm:$0xff]
    %v4301 = vld [vmem:[#allocation12 + $0x1148] sm:$0xff]
    %v4302 = vld [vmem:[#allocation12 + $0x1150] sm:$0xff]
    %v4303 = vld [vmem:[#allocation12 + $0x1158] sm:$0xff]
    %v4304 = vld [vmem:[#allocation12 + $0x1160] sm:$0xff]
    %v4305 = vld [vmem:[#allocation12 + $0x1168] sm:$0xff]
    %v4306 = vld [vmem:[#allocation12 + $0x1170] sm:$0xff]
    %v4307 = vld [vmem:[#allocation12 + $0x1178] sm:$0xff]
    %v4308 = vld [vmem:[#allocation12 + $0x1180] sm:$0xff]
    %v4309 = vld [vmem:[#allocation12 + $0x1188] sm:$0xff]
    %v4310 = vld [vmem:[#allocation12 + $0x1190] sm:$0xff]
    %v4311 = vld [vmem:[#allocation12 + $0x1198] sm:$0xff]
    %v4312 = vld [vmem:[#allocation12 + $0x11a0] sm:$0xff]
    %v4313 = vld [vmem:[#allocation12 + $0x11a8] sm:$0xff]
    %v4314 = vld [vmem:[#allocation12 + $0x11b0] sm:$0xff]
    %v4315 = vld [vmem:[#allocation12 + $0x11b8] sm:$0xff]
    %v4316 = vld [vmem:[#allocation12 + $0x11c0] sm:$0xff]
    %v4317 = vld [vmem:[#allocation12 + $0x11c8] sm:$0xff]
    %v4318 = vld [vmem:[#allocation12 + $0x11d0] sm:$0xff]
    %v4319 = vld [vmem:[#allocation12 + $0x11d8] sm:$0xff]
    %v4320 = vld [vmem:[#allocation12 + $0x11e0] sm:$0xff]
    %v4321 = vld [vmem:[#allocation12 + $0x11e8] sm:$0xff]
    %v4322 = vld [vmem:[#allocation12 + $0x11f0] sm:$0xff]
    %v4323 = vld [vmem:[#allocation12 + $0x11f8] sm:$0xff]
    %v4324 = vld [vmem:[#allocation14] sm:$0x3]
    %v4326 = vperm.slane %v4324, 0
    %v4327 = vperm.slane %v4324, 1
    %4330 = vmatpush.msra.mxu0 %v3778
    %4331 = vmatpush.msra.mxu0 %v3776
    %4332 = vmatpush.msra.mxu0 %v3774
    %4333 = vmatpush.msra.mxu0 %v3772
    %4334 = vmatpush.msra.mxu0 %v3770
    %4335 = vmatpush.msra.mxu0 %v3768
    %4336 = vmatpush.msra.mxu0 %v3766
    %4337 = vmatpush.msra.mxu0 %v3764
    %4338 = vmatpush.msra.mxu0 %v3762
    %4339 = vmatpush.msra.mxu0 %v3760
    %4340 = vmatpush.msra.mxu0 %v3758
    %4341 = vmatpush.msra.mxu0 %v3756
    %4342 = vmatpush.msra.mxu0 %v3754
    %4343 = vmatpush.msra.mxu0 %v3752
    %4344 = vmatpush.msra.mxu0 %v3750
    %4345 = vmatpush.msra.mxu0 %v3748
    %4346 = vmatmul.f32.gmra.mxu0 %v3460
    %v4347 = vpop.f32.mrf.mxu0
    %v4348 = vadd.f32 %v4326, %v4347
    %4349 = vmatmul.f32.gmra.mxu0 %v3478
    %v4350 = vpop.f32.mrf.mxu0
    %v4351 = vadd.f32 %v4326, %v4350
    %4352 = vmatmul.f32.gmra.mxu0 %v3496
    %v4353 = vpop.f32.mrf.mxu0
    %v4354 = vadd.f32 %v4326, %v4353
    %4355 = vmatmul.f32.gmra.mxu0 %v3514
    %v4356 = vpop.f32.mrf.mxu0
    %v4357 = vadd.f32 %v4326, %v4356
    %4358 = vmatmul.f32.gmra.mxu0 %v3532
    %v4359 = vpop.f32.mrf.mxu0
    %v4360 = vadd.f32 %v4326, %v4359
    %4361 = vmatmul.f32.gmra.mxu0 %v3550
    %v4362 = vpop.f32.mrf.mxu0
    %v4363 = vadd.f32 %v4326, %v4362
    %4364 = vmatmul.f32.gmra.mxu0 %v3568
    %v4365 = vpop.f32.mrf.mxu0
    %v4366 = vadd.f32 %v4326, %v4365
    %4367 = vmatmul.f32.gmra.mxu0 %v3586
    %v4368 = vpop.f32.mrf.mxu0
    %v4369 = vadd.f32 %v4326, %v4368
    %4370 = vmatmul.f32.gmra.mxu0 %v3604
    %v4371 = vpop.f32.mrf.mxu0
    %v4372 = vadd.f32 %v4326, %v4371
    %4373 = vmatmul.f32.gmra.mxu0 %v3622
    %v4374 = vpop.f32.mrf.mxu0
    %v4375 = vadd.f32 %v4326, %v4374
    %4376 = vmatmul.f32.gmra.mxu0 %v3640
    %v4377 = vpop.f32.mrf.mxu0
    %v4378 = vadd.f32 %v4326, %v4377
    %4379 = vmatmul.f32.gmra.mxu0 %v3658
    %v4380 = vpop.f32.mrf.mxu0
    %v4381 = vadd.f32 %v4326, %v4380
    %4382 = vmatmul.f32.gmra.mxu0 %v3676
    %v4383 = vpop.f32.mrf.mxu0
    %v4384 = vadd.f32 %v4326, %v4383
    %4385 = vmatmul.f32.gmra.mxu0 %v3694
    %v4386 = vpop.f32.mrf.mxu0
    %v4387 = vadd.f32 %v4326, %v4386
    %4388 = vmatmul.f32.gmra.mxu0 %v3712
    %v4389 = vpop.f32.mrf.mxu0
    %v4390 = vadd.f32 %v4326, %v4389
    %4391 = vmatmul.f32.gmra.mxu0 %v3730
    %v4392 = vpop.f32.mrf.mxu0
    %v4393 = vadd.f32 %v4326, %v4392
    %4394 = vdwg.mxu0
    %4395 = vmatpush.msra.mxu0 %v3810
    %4396 = vmatpush.msra.mxu0 %v3808
    %4397 = vmatpush.msra.mxu0 %v3806
    %4398 = vmatpush.msra.mxu0 %v3804
    %4399 = vmatpush.msra.mxu0 %v3802
    %4400 = vmatpush.msra.mxu0 %v3800
    %4401 = vmatpush.msra.mxu0 %v3798
    %4402 = vmatpush.msra.mxu0 %v3796
    %4403 = vmatpush.msra.mxu0 %v3794
    %4404 = vmatpush.msra.mxu0 %v3792
    %4405 = vmatpush.msra.mxu0 %v3790
    %4406 = vmatpush.msra.mxu0 %v3788
    %4407 = vmatpush.msra.mxu0 %v3786
    %4408 = vmatpush.msra.mxu0 %v3784
    %4409 = vmatpush.msra.mxu0 %v3782
    %4410 = vmatpush.msra.mxu0 %v3780
    %4411 = vmatmul.f32.gmra.mxu0 %v3461
    %v4412 = vpop.f32.mrf.mxu0
    %v4413 = vadd.f32 %v4348, %v4412
    %4414 = vmatmul.f32.gmra.mxu0 %v3479
    %v4415 = vpop.f32.mrf.mxu0
    %v4416 = vadd.f32 %v4351, %v4415
    %4417 = vmatmul.f32.gmra.mxu0 %v3497
    %v4418 = vpop.f32.mrf.mxu0
    %v4419 = vadd.f32 %v4354, %v4418
    %4420 = vmatmul.f32.gmra.mxu0 %v3515
    %v4421 = vpop.f32.mrf.mxu0
    %v4422 = vadd.f32 %v4357, %v4421
    %4423 = vmatmul.f32.gmra.mxu0 %v3533
    %v4424 = vpop.f32.mrf.mxu0
    %v4425 = vadd.f32 %v4360, %v4424
    %4426 = vmatmul.f32.gmra.mxu0 %v3551
    %v4427 = vpop.f32.mrf.mxu0
    %v4428 = vadd.f32 %v4363, %v4427
    %4429 = vmatmul.f32.gmra.mxu0 %v3569
    %v4430 = vpop.f32.mrf.mxu0
    %v4431 = vadd.f32 %v4366, %v4430
    %4432 = vmatmul.f32.gmra.mxu0 %v3587
    %v4433 = vpop.f32.mrf.mxu0
    %v4434 = vadd.f32 %v4369, %v4433
    %4435 = vmatmul.f32.gmra.mxu0 %v3605
    %v4436 = vpop.f32.mrf.mxu0
    %v4437 = vadd.f32 %v4372, %v4436
    %4438 = vmatmul.f32.gmra.mxu0 %v3623
    %v4439 = vpop.f32.mrf.mxu0
    %v4440 = vadd.f32 %v4375, %v4439
    %4441 = vmatmul.f32.gmra.mxu0 %v3641
    %v4442 = vpop.f32.mrf.mxu0
    %v4443 = vadd.f32 %v4378, %v4442
    %4444 = vmatmul.f32.gmra.mxu0 %v3659
    %v4445 = vpop.f32.mrf.mxu0
    %v4446 = vadd.f32 %v4381, %v4445
    %4447 = vmatmul.f32.gmra.mxu0 %v3677
    %v4448 = vpop.f32.mrf.mxu0
    %v4449 = vadd.f32 %v4384, %v4448
    %4450 = vmatmul.f32.gmra.mxu0 %v3695
    %v4451 = vpop.f32.mrf.mxu0
    %v4452 = vadd.f32 %v4387, %v4451
    %4453 = vmatmul.f32.gmra.mxu0 %v3713
    %v4454 = vpop.f32.mrf.mxu0
    %v4455 = vadd.f32 %v4390, %v4454
    %4456 = vmatmul.f32.gmra.mxu0 %v3731
    %v4457 = vpop.f32.mrf.mxu0
    %v4458 = vadd.f32 %v4393, %v4457
    %4459 = vdwg.mxu0
    %4460 = vmatpush.msra.mxu0 %v3842
    %4461 = vmatpush.msra.mxu0 %v3840
    %4462 = vmatpush.msra.mxu0 %v3838
    %4463 = vmatpush.msra.mxu0 %v3836
    %4464 = vmatpush.msra.mxu0 %v3834
    %4465 = vmatpush.msra.mxu0 %v3832
    %4466 = vmatpush.msra.mxu0 %v3830
    %4467 = vmatpush.msra.mxu0 %v3828
    %4468 = vmatpush.msra.mxu0 %v3826
    %4469 = vmatpush.msra.mxu0 %v3824
    %4470 = vmatpush.msra.mxu0 %v3822
    %4471 = vmatpush.msra.mxu0 %v3820
    %4472 = vmatpush.msra.mxu0 %v3818
    %4473 = vmatpush.msra.mxu0 %v3816
    %4474 = vmatpush.msra.mxu0 %v3814
    %4475 = vmatpush.msra.mxu0 %v3812
    %4476 = vmatmul.f32.gmra.mxu0 %v3462
    %v4477 = vpop.f32.mrf.mxu0
    %v4478 = vadd.f32 %v4413, %v4477
    %4479 = vmatmul.f32.gmra.mxu0 %v3480
    %v4480 = vpop.f32.mrf.mxu0
    %v4481 = vadd.f32 %v4416, %v4480
    %4482 = vmatmul.f32.gmra.mxu0 %v3498
    %v4483 = vpop.f32.mrf.mxu0
    %v4484 = vadd.f32 %v4419, %v4483
    %4485 = vmatmul.f32.gmra.mxu0 %v3516
    %v4486 = vpop.f32.mrf.mxu0
    %v4487 = vadd.f32 %v4422, %v4486
    %4488 = vmatmul.f32.gmra.mxu0 %v3534
    %v4489 = vpop.f32.mrf.mxu0
    %v4490 = vadd.f32 %v4425, %v4489
    %4491 = vmatmul.f32.gmra.mxu0 %v3552
    %v4492 = vpop.f32.mrf.mxu0
    %v4493 = vadd.f32 %v4428, %v4492
    %4494 = vmatmul.f32.gmra.mxu0 %v3570
    %v4495 = vpop.f32.mrf.mxu0
    %v4496 = vadd.f32 %v4431, %v4495
    %4497 = vmatmul.f32.gmra.mxu0 %v3588
    %v4498 = vpop.f32.mrf.mxu0
    %v4499 = vadd.f32 %v4434, %v4498
    %4500 = vmatmul.f32.gmra.mxu0 %v3606
    %v4501 = vpop.f32.mrf.mxu0
    %v4502 = vadd.f32 %v4437, %v4501
    %4503 = vmatmul.f32.gmra.mxu0 %v3624
    %v4504 = vpop.f32.mrf.mxu0
    %v4505 = vadd.f32 %v4440, %v4504
    %4506 = vmatmul.f32.gmra.mxu0 %v3642
    %v4507 = vpop.f32.mrf.mxu0
    %v4508 = vadd.f32 %v4443, %v4507
    %4509 = vmatmul.f32.gmra.mxu0 %v3660
    %v4510 = vpop.f32.mrf.mxu0
    %v4511 = vadd.f32 %v4446, %v4510
    %4512 = vmatmul.f32.gmra.mxu0 %v3678
    %v4513 = vpop.f32.mrf.mxu0
    %v4514 = vadd.f32 %v4449, %v4513
    %4515 = vmatmul.f32.gmra.mxu0 %v3696
    %v4516 = vpop.f32.mrf.mxu0
    %v4517 = vadd.f32 %v4452, %v4516
    %4518 = vmatmul.f32.gmra.mxu0 %v3714
    %v4519 = vpop.f32.mrf.mxu0
    %v4520 = vadd.f32 %v4455, %v4519
    %4521 = vmatmul.f32.gmra.mxu0 %v3732
    %v4522 = vpop.f32.mrf.mxu0
    %v4523 = vadd.f32 %v4458, %v4522
    %4524 = vdwg.mxu0
    %4525 = vmatpush.msra.mxu0 %v3874
    %4526 = vmatpush.msra.mxu0 %v3872
    %4527 = vmatpush.msra.mxu0 %v3870
    %4528 = vmatpush.msra.mxu0 %v3868
    %4529 = vmatpush.msra.mxu0 %v3866
    %4530 = vmatpush.msra.mxu0 %v3864
    %4531 = vmatpush.msra.mxu0 %v3862
    %4532 = vmatpush.msra.mxu0 %v3860
    %4533 = vmatpush.msra.mxu0 %v3858
    %4534 = vmatpush.msra.mxu0 %v3856
    %4535 = vmatpush.msra.mxu0 %v3854
    %4536 = vmatpush.msra.mxu0 %v3852
    %4537 = vmatpush.msra.mxu0 %v3850
    %4538 = vmatpush.msra.mxu0 %v3848
    %4539 = vmatpush.msra.mxu0 %v3846
    %4540 = vmatpush.msra.mxu0 %v3844
    %4541 = vmatmul.f32.gmra.mxu0 %v3463
    %v4542 = vpop.f32.mrf.mxu0
    %v4543 = vadd.f32 %v4478, %v4542
    %4544 = vmatmul.f32.gmra.mxu0 %v3481
    %v4545 = vpop.f32.mrf.mxu0
    %v4546 = vadd.f32 %v4481, %v4545
    %4547 = vmatmul.f32.gmra.mxu0 %v3499
    %v4548 = vpop.f32.mrf.mxu0
    %v4549 = vadd.f32 %v4484, %v4548
    %4550 = vmatmul.f32.gmra.mxu0 %v3517
    %v4551 = vpop.f32.mrf.mxu0
    %v4552 = vadd.f32 %v4487, %v4551
    %4553 = vmatmul.f32.gmra.mxu0 %v3535
    %v4554 = vpop.f32.mrf.mxu0
    %v4555 = vadd.f32 %v4490, %v4554
    %4556 = vmatmul.f32.gmra.mxu0 %v3553
    %v4557 = vpop.f32.mrf.mxu0
    %v4558 = vadd.f32 %v4493, %v4557
    %4559 = vmatmul.f32.gmra.mxu0 %v3571
    %v4560 = vpop.f32.mrf.mxu0
    %v4561 = vadd.f32 %v4496, %v4560
    %4562 = vmatmul.f32.gmra.mxu0 %v3589
    %v4563 = vpop.f32.mrf.mxu0
    %v4564 = vadd.f32 %v4499, %v4563
    %4565 = vmatmul.f32.gmra.mxu0 %v3607
    %v4566 = vpop.f32.mrf.mxu0
    %v4567 = vadd.f32 %v4502, %v4566
    %4568 = vmatmul.f32.gmra.mxu0 %v3625
    %v4569 = vpop.f32.mrf.mxu0
    %v4570 = vadd.f32 %v4505, %v4569
    %4571 = vmatmul.f32.gmra.mxu0 %v3643
    %v4572 = vpop.f32.mrf.mxu0
    %v4573 = vadd.f32 %v4508, %v4572
    %4574 = vmatmul.f32.gmra.mxu0 %v3661
    %v4575 = vpop.f32.mrf.mxu0
    %v4576 = vadd.f32 %v4511, %v4575
    %4577 = vmatmul.f32.gmra.mxu0 %v3679
    %v4578 = vpop.f32.mrf.mxu0
    %v4579 = vadd.f32 %v4514, %v4578
    %4580 = vmatmul.f32.gmra.mxu0 %v3697
    %v4581 = vpop.f32.mrf.mxu0
    %v4582 = vadd.f32 %v4517, %v4581
    %4583 = vmatmul.f32.gmra.mxu0 %v3715
    %v4584 = vpop.f32.mrf.mxu0
    %v4585 = vadd.f32 %v4520, %v4584
    %4586 = vmatmul.f32.gmra.mxu0 %v3733
    %v4587 = vpop.f32.mrf.mxu0
    %v4588 = vadd.f32 %v4523, %v4587
    %4589 = vdwg.mxu0
    %4590 = vmatpush.msra.mxu0 %v3906
    %4591 = vmatpush.msra.mxu0 %v3904
    %4592 = vmatpush.msra.mxu0 %v3902
    %4593 = vmatpush.msra.mxu0 %v3900
    %4594 = vmatpush.msra.mxu0 %v3898
    %4595 = vmatpush.msra.mxu0 %v3896
    %4596 = vmatpush.msra.mxu0 %v3894
    %4597 = vmatpush.msra.mxu0 %v3892
    %4598 = vmatpush.msra.mxu0 %v3890
    %4599 = vmatpush.msra.mxu0 %v3888
    %4600 = vmatpush.msra.mxu0 %v3886
    %4601 = vmatpush.msra.mxu0 %v3884
    %4602 = vmatpush.msra.mxu0 %v3882
    %4603 = vmatpush.msra.mxu0 %v3880
    %4604 = vmatpush.msra.mxu0 %v3878
    %4605 = vmatpush.msra.mxu0 %v3876
    %4606 = vmatmul.f32.gmra.mxu0 %v3464
    %v4607 = vpop.f32.mrf.mxu0
    %v4608 = vadd.f32 %v4543, %v4607
    %4609 = vmatmul.f32.gmra.mxu0 %v3482
    %v4610 = vpop.f32.mrf.mxu0
    %v4611 = vadd.f32 %v4546, %v4610
    %4612 = vmatmul.f32.gmra.mxu0 %v3500
    %v4613 = vpop.f32.mrf.mxu0
    %v4614 = vadd.f32 %v4549, %v4613
    %4615 = vmatmul.f32.gmra.mxu0 %v3518
    %v4616 = vpop.f32.mrf.mxu0
    %v4617 = vadd.f32 %v4552, %v4616
    %4618 = vmatmul.f32.gmra.mxu0 %v3536
    %v4619 = vpop.f32.mrf.mxu0
    %v4620 = vadd.f32 %v4555, %v4619
    %4621 = vmatmul.f32.gmra.mxu0 %v3554
    %v4622 = vpop.f32.mrf.mxu0
    %v4623 = vadd.f32 %v4558, %v4622
    %4624 = vmatmul.f32.gmra.mxu0 %v3572
    %v4625 = vpop.f32.mrf.mxu0
    %v4626 = vadd.f32 %v4561, %v4625
    %4627 = vmatmul.f32.gmra.mxu0 %v3590
    %v4628 = vpop.f32.mrf.mxu0
    %v4629 = vadd.f32 %v4564, %v4628
    %4630 = vmatmul.f32.gmra.mxu0 %v3608
    %v4631 = vpop.f32.mrf.mxu0
    %v4632 = vadd.f32 %v4567, %v4631
    %4633 = vmatmul.f32.gmra.mxu0 %v3626
    %v4634 = vpop.f32.mrf.mxu0
    %v4635 = vadd.f32 %v4570, %v4634
    %4636 = vmatmul.f32.gmra.mxu0 %v3644
    %v4637 = vpop.f32.mrf.mxu0
    %v4638 = vadd.f32 %v4573, %v4637
    %4639 = vmatmul.f32.gmra.mxu0 %v3662
    %v4640 = vpop.f32.mrf.mxu0
    %v4641 = vadd.f32 %v4576, %v4640
    %4642 = vmatmul.f32.gmra.mxu0 %v3680
    %v4643 = vpop.f32.mrf.mxu0
    %v4644 = vadd.f32 %v4579, %v4643
    %4645 = vmatmul.f32.gmra.mxu0 %v3698
    %v4646 = vpop.f32.mrf.mxu0
    %v4647 = vadd.f32 %v4582, %v4646
    %4648 = vmatmul.f32.gmra.mxu0 %v3716
    %v4649 = vpop.f32.mrf.mxu0
    %v4650 = vadd.f32 %v4585, %v4649
    %4651 = vmatmul.f32.gmra.mxu0 %v3734
    %v4652 = vpop.f32.mrf.mxu0
    %v4653 = vadd.f32 %v4588, %v4652
    %4654 = vdwg.mxu0
    %4655 = vmatpush.msra.mxu0 %v3938
    %4656 = vmatpush.msra.mxu0 %v3936
    %4657 = vmatpush.msra.mxu0 %v3934
    %4658 = vmatpush.msra.mxu0 %v3932
    %4659 = vmatpush.msra.mxu0 %v3930
    %4660 = vmatpush.msra.mxu0 %v3928
    %4661 = vmatpush.msra.mxu0 %v3926
    %4662 = vmatpush.msra.mxu0 %v3924
    %4663 = vmatpush.msra.mxu0 %v3922
    %4664 = vmatpush.msra.mxu0 %v3920
    %4665 = vmatpush.msra.mxu0 %v3918
    %4666 = vmatpush.msra.mxu0 %v3916
    %4667 = vmatpush.msra.mxu0 %v3914
    %4668 = vmatpush.msra.mxu0 %v3912
    %4669 = vmatpush.msra.mxu0 %v3910
    %4670 = vmatpush.msra.mxu0 %v3908
    %4671 = vmatmul.f32.gmra.mxu0 %v3465
    %v4672 = vpop.f32.mrf.mxu0
    %v4673 = vadd.f32 %v4608, %v4672
    %4674 = vmatmul.f32.gmra.mxu0 %v3483
    %v4675 = vpop.f32.mrf.mxu0
    %v4676 = vadd.f32 %v4611, %v4675
    %4677 = vmatmul.f32.gmra.mxu0 %v3501
    %v4678 = vpop.f32.mrf.mxu0
    %v4679 = vadd.f32 %v4614, %v4678
    %4680 = vmatmul.f32.gmra.mxu0 %v3519
    %v4681 = vpop.f32.mrf.mxu0
    %v4682 = vadd.f32 %v4617, %v4681
    %4683 = vmatmul.f32.gmra.mxu0 %v3537
    %v4684 = vpop.f32.mrf.mxu0
    %v4685 = vadd.f32 %v4620, %v4684
    %4686 = vmatmul.f32.gmra.mxu0 %v3555
    %v4687 = vpop.f32.mrf.mxu0
    %v4688 = vadd.f32 %v4623, %v4687
    %4689 = vmatmul.f32.gmra.mxu0 %v3573
    %v4690 = vpop.f32.mrf.mxu0
    %v4691 = vadd.f32 %v4626, %v4690
    %4692 = vmatmul.f32.gmra.mxu0 %v3591
    %v4693 = vpop.f32.mrf.mxu0
    %v4694 = vadd.f32 %v4629, %v4693
    %4695 = vmatmul.f32.gmra.mxu0 %v3609
    %v4696 = vpop.f32.mrf.mxu0
    %v4697 = vadd.f32 %v4632, %v4696
    %4698 = vmatmul.f32.gmra.mxu0 %v3627
    %v4699 = vpop.f32.mrf.mxu0
    %v4700 = vadd.f32 %v4635, %v4699
    %4701 = vmatmul.f32.gmra.mxu0 %v3645
    %v4702 = vpop.f32.mrf.mxu0
    %v4703 = vadd.f32 %v4638, %v4702
    %4704 = vmatmul.f32.gmra.mxu0 %v3663
    %v4705 = vpop.f32.mrf.mxu0
    %v4706 = vadd.f32 %v4641, %v4705
    %4707 = vmatmul.f32.gmra.mxu0 %v3681
    %v4708 = vpop.f32.mrf.mxu0
    %v4709 = vadd.f32 %v4644, %v4708
    %4710 = vmatmul.f32.gmra.mxu0 %v3699
    %v4711 = vpop.f32.mrf.mxu0
    %v4712 = vadd.f32 %v4647, %v4711
    %4713 = vmatmul.f32.gmra.mxu0 %v3717
    %v4714 = vpop.f32.mrf.mxu0
    %v4715 = vadd.f32 %v4650, %v4714
    %4716 = vmatmul.f32.gmra.mxu0 %v3735
    %v4717 = vpop.f32.mrf.mxu0
    %v4718 = vadd.f32 %v4653, %v4717
    %4719 = vdwg.mxu0
    %4720 = vmatpush.msra.mxu0 %v3970
    %4721 = vmatpush.msra.mxu0 %v3968
    %4722 = vmatpush.msra.mxu0 %v3966
    %4723 = vmatpush.msra.mxu0 %v3964
    %4724 = vmatpush.msra.mxu0 %v3962
    %4725 = vmatpush.msra.mxu0 %v3960
    %4726 = vmatpush.msra.mxu0 %v3958
    %4727 = vmatpush.msra.mxu0 %v3956
    %4728 = vmatpush.msra.mxu0 %v3954
    %4729 = vmatpush.msra.mxu0 %v3952
    %4730 = vmatpush.msra.mxu0 %v3950
    %4731 = vmatpush.msra.mxu0 %v3948
    %4732 = vmatpush.msra.mxu0 %v3946
    %4733 = vmatpush.msra.mxu0 %v3944
    %4734 = vmatpush.msra.mxu0 %v3942
    %4735 = vmatpush.msra.mxu0 %v3940
    %4736 = vmatmul.f32.gmra.mxu0 %v3466
    %v4737 = vpop.f32.mrf.mxu0
    %v4738 = vadd.f32 %v4673, %v4737
    %4739 = vmatmul.f32.gmra.mxu0 %v3484
    %v4740 = vpop.f32.mrf.mxu0
    %v4741 = vadd.f32 %v4676, %v4740
    %4742 = vmatmul.f32.gmra.mxu0 %v3502
    %v4743 = vpop.f32.mrf.mxu0
    %v4744 = vadd.f32 %v4679, %v4743
    %4745 = vmatmul.f32.gmra.mxu0 %v3520
    %v4746 = vpop.f32.mrf.mxu0
    %v4747 = vadd.f32 %v4682, %v4746
    %4748 = vmatmul.f32.gmra.mxu0 %v3538
    %v4749 = vpop.f32.mrf.mxu0
    %v4750 = vadd.f32 %v4685, %v4749
    %4751 = vmatmul.f32.gmra.mxu0 %v3556
    %v4752 = vpop.f32.mrf.mxu0
    %v4753 = vadd.f32 %v4688, %v4752
    %4754 = vmatmul.f32.gmra.mxu0 %v3574
    %v4755 = vpop.f32.mrf.mxu0
    %v4756 = vadd.f32 %v4691, %v4755
    %4757 = vmatmul.f32.gmra.mxu0 %v3592
    %v4758 = vpop.f32.mrf.mxu0
    %v4759 = vadd.f32 %v4694, %v4758
    %4760 = vmatmul.f32.gmra.mxu0 %v3610
    %v4761 = vpop.f32.mrf.mxu0
    %v4762 = vadd.f32 %v4697, %v4761
    %4763 = vmatmul.f32.gmra.mxu0 %v3628
    %v4764 = vpop.f32.mrf.mxu0
    %v4765 = vadd.f32 %v4700, %v4764
    %4766 = vmatmul.f32.gmra.mxu0 %v3646
    %v4767 = vpop.f32.mrf.mxu0
    %v4768 = vadd.f32 %v4703, %v4767
    %4769 = vmatmul.f32.gmra.mxu0 %v3664
    %v4770 = vpop.f32.mrf.mxu0
    %v4771 = vadd.f32 %v4706, %v4770
    %4772 = vmatmul.f32.gmra.mxu0 %v3682
    %v4773 = vpop.f32.mrf.mxu0
    %v4774 = vadd.f32 %v4709, %v4773
    %4775 = vmatmul.f32.gmra.mxu0 %v3700
    %v4776 = vpop.f32.mrf.mxu0
    %v4777 = vadd.f32 %v4712, %v4776
    %4778 = vmatmul.f32.gmra.mxu0 %v3718
    %v4779 = vpop.f32.mrf.mxu0
    %v4780 = vadd.f32 %v4715, %v4779
    %4781 = vmatmul.f32.gmra.mxu0 %v3736
    %v4782 = vpop.f32.mrf.mxu0
    %v4783 = vadd.f32 %v4718, %v4782
    %4784 = vdwg.mxu0
    %4785 = vmatpush.msra.mxu0 %v4002
    %4786 = vmatpush.msra.mxu0 %v4000
    %4787 = vmatpush.msra.mxu0 %v3998
    %4788 = vmatpush.msra.mxu0 %v3996
    %4789 = vmatpush.msra.mxu0 %v3994
    %4790 = vmatpush.msra.mxu0 %v3992
    %4791 = vmatpush.msra.mxu0 %v3990
    %4792 = vmatpush.msra.mxu0 %v3988
    %4793 = vmatpush.msra.mxu0 %v3986
    %4794 = vmatpush.msra.mxu0 %v3984
    %4795 = vmatpush.msra.mxu0 %v3982
    %4796 = vmatpush.msra.mxu0 %v3980
    %4797 = vmatpush.msra.mxu0 %v3978
    %4798 = vmatpush.msra.mxu0 %v3976
    %4799 = vmatpush.msra.mxu0 %v3974
    %4800 = vmatpush.msra.mxu0 %v3972
    %4801 = vmatmul.f32.gmra.mxu0 %v3467
    %v4802 = vpop.f32.mrf.mxu0
    %v4803 = vadd.f32 %v4738, %v4802
    %4804 = vmatmul.f32.gmra.mxu0 %v3485
    %v4805 = vpop.f32.mrf.mxu0
    %v4806 = vadd.f32 %v4741, %v4805
    %4807 = vmatmul.f32.gmra.mxu0 %v3503
    %v4808 = vpop.f32.mrf.mxu0
    %v4809 = vadd.f32 %v4744, %v4808
    %4810 = vmatmul.f32.gmra.mxu0 %v3521
    %v4811 = vpop.f32.mrf.mxu0
    %v4812 = vadd.f32 %v4747, %v4811
    %4813 = vmatmul.f32.gmra.mxu0 %v3539
    %v4814 = vpop.f32.mrf.mxu0
    %v4815 = vadd.f32 %v4750, %v4814
    %4816 = vmatmul.f32.gmra.mxu0 %v3557
    %v4817 = vpop.f32.mrf.mxu0
    %v4818 = vadd.f32 %v4753, %v4817
    %4819 = vmatmul.f32.gmra.mxu0 %v3575
    %v4820 = vpop.f32.mrf.mxu0
    %v4821 = vadd.f32 %v4756, %v4820
    %4822 = vmatmul.f32.gmra.mxu0 %v3593
    %v4823 = vpop.f32.mrf.mxu0
    %v4824 = vadd.f32 %v4759, %v4823
    %4825 = vmatmul.f32.gmra.mxu0 %v3611
    %v4826 = vpop.f32.mrf.mxu0
    %v4827 = vadd.f32 %v4762, %v4826
    %4828 = vmatmul.f32.gmra.mxu0 %v3629
    %v4829 = vpop.f32.mrf.mxu0
    %v4830 = vadd.f32 %v4765, %v4829
    %4831 = vmatmul.f32.gmra.mxu0 %v3647
    %v4832 = vpop.f32.mrf.mxu0
    %v4833 = vadd.f32 %v4768, %v4832
    %4834 = vmatmul.f32.gmra.mxu0 %v3665
    %v4835 = vpop.f32.mrf.mxu0
    %v4836 = vadd.f32 %v4771, %v4835
    %4837 = vmatmul.f32.gmra.mxu0 %v3683
    %v4838 = vpop.f32.mrf.mxu0
    %v4839 = vadd.f32 %v4774, %v4838
    %4840 = vmatmul.f32.gmra.mxu0 %v3701
    %v4841 = vpop.f32.mrf.mxu0
    %v4842 = vadd.f32 %v4777, %v4841
    %4843 = vmatmul.f32.gmra.mxu0 %v3719
    %v4844 = vpop.f32.mrf.mxu0
    %v4845 = vadd.f32 %v4780, %v4844
    %4846 = vmatmul.f32.gmra.mxu0 %v3737
    %v4847 = vpop.f32.mrf.mxu0
    %v4848 = vadd.f32 %v4783, %v4847
    %4849 = vdwg.mxu0
    %4850 = vmatpush.msra.mxu0 %v4034
    %4851 = vmatpush.msra.mxu0 %v4032
    %4852 = vmatpush.msra.mxu0 %v4030
    %4853 = vmatpush.msra.mxu0 %v4028
    %4854 = vmatpush.msra.mxu0 %v4026
    %4855 = vmatpush.msra.mxu0 %v4024
    %4856 = vmatpush.msra.mxu0 %v4022
    %4857 = vmatpush.msra.mxu0 %v4020
    %4858 = vmatpush.msra.mxu0 %v4018
    %4859 = vmatpush.msra.mxu0 %v4016
    %4860 = vmatpush.msra.mxu0 %v4014
    %4861 = vmatpush.msra.mxu0 %v4012
    %4862 = vmatpush.msra.mxu0 %v4010
    %4863 = vmatpush.msra.mxu0 %v4008
    %4864 = vmatpush.msra.mxu0 %v4006
    %4865 = vmatpush.msra.mxu0 %v4004
    %4866 = vmatmul.f32.gmra.mxu0 %v3468
    %v4867 = vpop.f32.mrf.mxu0
    %v4868 = vadd.f32 %v4803, %v4867
    %4869 = vmatmul.f32.gmra.mxu0 %v3486
    %v4870 = vpop.f32.mrf.mxu0
    %v4871 = vadd.f32 %v4806, %v4870
    %4872 = vmatmul.f32.gmra.mxu0 %v3504
    %v4873 = vpop.f32.mrf.mxu0
    %v4874 = vadd.f32 %v4809, %v4873
    %4875 = vmatmul.f32.gmra.mxu0 %v3522
    %v4876 = vpop.f32.mrf.mxu0
    %v4877 = vadd.f32 %v4812, %v4876
    %4878 = vmatmul.f32.gmra.mxu0 %v3540
    %v4879 = vpop.f32.mrf.mxu0
    %v4880 = vadd.f32 %v4815, %v4879
    %4881 = vmatmul.f32.gmra.mxu0 %v3558
    %v4882 = vpop.f32.mrf.mxu0
    %v4883 = vadd.f32 %v4818, %v4882
    %4884 = vmatmul.f32.gmra.mxu0 %v3576
    %v4885 = vpop.f32.mrf.mxu0
    %v4886 = vadd.f32 %v4821, %v4885
    %4887 = vmatmul.f32.gmra.mxu0 %v3594
    %v4888 = vpop.f32.mrf.mxu0
    %v4889 = vadd.f32 %v4824, %v4888
    %4890 = vmatmul.f32.gmra.mxu0 %v3612
    %v4891 = vpop.f32.mrf.mxu0
    %v4892 = vadd.f32 %v4827, %v4891
    %4893 = vmatmul.f32.gmra.mxu0 %v3630
    %v4894 = vpop.f32.mrf.mxu0
    %v4895 = vadd.f32 %v4830, %v4894
    %4896 = vmatmul.f32.gmra.mxu0 %v3648
    %v4897 = vpop.f32.mrf.mxu0
    %v4898 = vadd.f32 %v4833, %v4897
    %4899 = vmatmul.f32.gmra.mxu0 %v3666
    %v4900 = vpop.f32.mrf.mxu0
    %v4901 = vadd.f32 %v4836, %v4900
    %4902 = vmatmul.f32.gmra.mxu0 %v3684
    %v4903 = vpop.f32.mrf.mxu0
    %v4904 = vadd.f32 %v4839, %v4903
    %4905 = vmatmul.f32.gmra.mxu0 %v3702
    %v4906 = vpop.f32.mrf.mxu0
    %v4907 = vadd.f32 %v4842, %v4906
    %4908 = vmatmul.f32.gmra.mxu0 %v3720
    %v4909 = vpop.f32.mrf.mxu0
    %v4910 = vadd.f32 %v4845, %v4909
    %4911 = vmatmul.f32.gmra.mxu0 %v3738
    %v4912 = vpop.f32.mrf.mxu0
    %v4913 = vadd.f32 %v4848, %v4912
    %4914 = vdwg.mxu0
    %4915 = vmatpush.msra.mxu0 %v4066
    %4916 = vmatpush.msra.mxu0 %v4064
    %4917 = vmatpush.msra.mxu0 %v4062
    %4918 = vmatpush.msra.mxu0 %v4060
    %4919 = vmatpush.msra.mxu0 %v4058
    %4920 = vmatpush.msra.mxu0 %v4056
    %4921 = vmatpush.msra.mxu0 %v4054
    %4922 = vmatpush.msra.mxu0 %v4052
    %4923 = vmatpush.msra.mxu0 %v4050
    %4924 = vmatpush.msra.mxu0 %v4048
    %4925 = vmatpush.msra.mxu0 %v4046
    %4926 = vmatpush.msra.mxu0 %v4044
    %4927 = vmatpush.msra.mxu0 %v4042
    %4928 = vmatpush.msra.mxu0 %v4040
    %4929 = vmatpush.msra.mxu0 %v4038
    %4930 = vmatpush.msra.mxu0 %v4036
    %4931 = vmatmul.f32.gmra.mxu0 %v3469
    %v4932 = vpop.f32.mrf.mxu0
    %v4933 = vadd.f32 %v4868, %v4932
    %4934 = vmatmul.f32.gmra.mxu0 %v3487
    %v4935 = vpop.f32.mrf.mxu0
    %v4936 = vadd.f32 %v4871, %v4935
    %4937 = vmatmul.f32.gmra.mxu0 %v3505
    %v4938 = vpop.f32.mrf.mxu0
    %v4939 = vadd.f32 %v4874, %v4938
    %4940 = vmatmul.f32.gmra.mxu0 %v3523
    %v4941 = vpop.f32.mrf.mxu0
    %v4942 = vadd.f32 %v4877, %v4941
    %4943 = vmatmul.f32.gmra.mxu0 %v3541
    %v4944 = vpop.f32.mrf.mxu0
    %v4945 = vadd.f32 %v4880, %v4944
    %4946 = vmatmul.f32.gmra.mxu0 %v3559
    %v4947 = vpop.f32.mrf.mxu0
    %v4948 = vadd.f32 %v4883, %v4947
    %4949 = vmatmul.f32.gmra.mxu0 %v3577
    %v4950 = vpop.f32.mrf.mxu0
    %v4951 = vadd.f32 %v4886, %v4950
    %4952 = vmatmul.f32.gmra.mxu0 %v3595
    %v4953 = vpop.f32.mrf.mxu0
    %v4954 = vadd.f32 %v4889, %v4953
    %4955 = vmatmul.f32.gmra.mxu0 %v3613
    %v4956 = vpop.f32.mrf.mxu0
    %v4957 = vadd.f32 %v4892, %v4956
    %4958 = vmatmul.f32.gmra.mxu0 %v3631
    %v4959 = vpop.f32.mrf.mxu0
    %v4960 = vadd.f32 %v4895, %v4959
    %4961 = vmatmul.f32.gmra.mxu0 %v3649
    %v4962 = vpop.f32.mrf.mxu0
    %v4963 = vadd.f32 %v4898, %v4962
    %4964 = vmatmul.f32.gmra.mxu0 %v3667
    %v4965 = vpop.f32.mrf.mxu0
    %v4966 = vadd.f32 %v4901, %v4965
    %4967 = vmatmul.f32.gmra.mxu0 %v3685
    %v4968 = vpop.f32.mrf.mxu0
    %v4969 = vadd.f32 %v4904, %v4968
    %4970 = vmatmul.f32.gmra.mxu0 %v3703
    %v4971 = vpop.f32.mrf.mxu0
    %v4972 = vadd.f32 %v4907, %v4971
    %4973 = vmatmul.f32.gmra.mxu0 %v3721
    %v4974 = vpop.f32.mrf.mxu0
    %v4975 = vadd.f32 %v4910, %v4974
    %4976 = vmatmul.f32.gmra.mxu0 %v3739
    %v4977 = vpop.f32.mrf.mxu0
    %v4978 = vadd.f32 %v4913, %v4977
    %4979 = vdwg.mxu0
    %4980 = vmatpush.msra.mxu0 %v4098
    %4981 = vmatpush.msra.mxu0 %v4096
    %4982 = vmatpush.msra.mxu0 %v4094
    %4983 = vmatpush.msra.mxu0 %v4092
    %4984 = vmatpush.msra.mxu0 %v4090
    %4985 = vmatpush.msra.mxu0 %v4088
    %4986 = vmatpush.msra.mxu0 %v4086
    %4987 = vmatpush.msra.mxu0 %v4084
    %4988 = vmatpush.msra.mxu0 %v4082
    %4989 = vmatpush.msra.mxu0 %v4080
    %4990 = vmatpush.msra.mxu0 %v4078
    %4991 = vmatpush.msra.mxu0 %v4076
    %4992 = vmatpush.msra.mxu0 %v4074
    %4993 = vmatpush.msra.mxu0 %v4072
    %4994 = vmatpush.msra.mxu0 %v4070
    %4995 = vmatpush.msra.mxu0 %v4068
    %4996 = vmatmul.f32.gmra.mxu0 %v3470
    %v4997 = vpop.f32.mrf.mxu0
    %v4998 = vadd.f32 %v4933, %v4997
    %4999 = vmatmul.f32.gmra.mxu0 %v3488
    %v5000 = vpop.f32.mrf.mxu0
    %v5001 = vadd.f32 %v4936, %v5000
    %5002 = vmatmul.f32.gmra.mxu0 %v3506
    %v5003 = vpop.f32.mrf.mxu0
    %v5004 = vadd.f32 %v4939, %v5003
    %5005 = vmatmul.f32.gmra.mxu0 %v3524
    %v5006 = vpop.f32.mrf.mxu0
    %v5007 = vadd.f32 %v4942, %v5006
    %5008 = vmatmul.f32.gmra.mxu0 %v3542
    %v5009 = vpop.f32.mrf.mxu0
    %v5010 = vadd.f32 %v4945, %v5009
    %5011 = vmatmul.f32.gmra.mxu0 %v3560
    %v5012 = vpop.f32.mrf.mxu0
    %v5013 = vadd.f32 %v4948, %v5012
    %5014 = vmatmul.f32.gmra.mxu0 %v3578
    %v5015 = vpop.f32.mrf.mxu0
    %v5016 = vadd.f32 %v4951, %v5015
    %5017 = vmatmul.f32.gmra.mxu0 %v3596
    %v5018 = vpop.f32.mrf.mxu0
    %v5019 = vadd.f32 %v4954, %v5018
    %5020 = vmatmul.f32.gmra.mxu0 %v3614
    %v5021 = vpop.f32.mrf.mxu0
    %v5022 = vadd.f32 %v4957, %v5021
    %5023 = vmatmul.f32.gmra.mxu0 %v3632
    %v5024 = vpop.f32.mrf.mxu0
    %v5025 = vadd.f32 %v4960, %v5024
    %5026 = vmatmul.f32.gmra.mxu0 %v3650
    %v5027 = vpop.f32.mrf.mxu0
    %v5028 = vadd.f32 %v4963, %v5027
    %5029 = vmatmul.f32.gmra.mxu0 %v3668
    %v5030 = vpop.f32.mrf.mxu0
    %v5031 = vadd.f32 %v4966, %v5030
    %5032 = vmatmul.f32.gmra.mxu0 %v3686
    %v5033 = vpop.f32.mrf.mxu0
    %v5034 = vadd.f32 %v4969, %v5033
    %5035 = vmatmul.f32.gmra.mxu0 %v3704
    %v5036 = vpop.f32.mrf.mxu0
    %v5037 = vadd.f32 %v4972, %v5036
    %5038 = vmatmul.f32.gmra.mxu0 %v3722
    %v5039 = vpop.f32.mrf.mxu0
    %v5040 = vadd.f32 %v4975, %v5039
    %5041 = vmatmul.f32.gmra.mxu0 %v3740
    %v5042 = vpop.f32.mrf.mxu0
    %v5043 = vadd.f32 %v4978, %v5042
    %5044 = vdwg.mxu0
    %5045 = vmatpush.msra.mxu0 %v4130
    %5046 = vmatpush.msra.mxu0 %v4128
    %5047 = vmatpush.msra.mxu0 %v4126
    %5048 = vmatpush.msra.mxu0 %v4124
    %5049 = vmatpush.msra.mxu0 %v4122
    %5050 = vmatpush.msra.mxu0 %v4120
    %5051 = vmatpush.msra.mxu0 %v4118
    %5052 = vmatpush.msra.mxu0 %v4116
    %5053 = vmatpush.msra.mxu0 %v4114
    %5054 = vmatpush.msra.mxu0 %v4112
    %5055 = vmatpush.msra.mxu0 %v4110
    %5056 = vmatpush.msra.mxu0 %v4108
    %5057 = vmatpush.msra.mxu0 %v4106
    %5058 = vmatpush.msra.mxu0 %v4104
    %5059 = vmatpush.msra.mxu0 %v4102
    %5060 = vmatpush.msra.mxu0 %v4100
    %5061 = vmatmul.f32.gmra.mxu0 %v3471
    %v5062 = vpop.f32.mrf.mxu0
    %v5063 = vadd.f32 %v4998, %v5062
    %5064 = vmatmul.f32.gmra.mxu0 %v3489
    %v5065 = vpop.f32.mrf.mxu0
    %v5066 = vadd.f32 %v5001, %v5065
    %5067 = vmatmul.f32.gmra.mxu0 %v3507
    %v5068 = vpop.f32.mrf.mxu0
    %v5069 = vadd.f32 %v5004, %v5068
    %5070 = vmatmul.f32.gmra.mxu0 %v3525
    %v5071 = vpop.f32.mrf.mxu0
    %v5072 = vadd.f32 %v5007, %v5071
    %5073 = vmatmul.f32.gmra.mxu0 %v3543
    %v5074 = vpop.f32.mrf.mxu0
    %v5075 = vadd.f32 %v5010, %v5074
    %5076 = vmatmul.f32.gmra.mxu0 %v3561
    %v5077 = vpop.f32.mrf.mxu0
    %v5078 = vadd.f32 %v5013, %v5077
    %5079 = vmatmul.f32.gmra.mxu0 %v3579
    %v5080 = vpop.f32.mrf.mxu0
    %v5081 = vadd.f32 %v5016, %v5080
    %5082 = vmatmul.f32.gmra.mxu0 %v3597
    %v5083 = vpop.f32.mrf.mxu0
    %v5084 = vadd.f32 %v5019, %v5083
    %5085 = vmatmul.f32.gmra.mxu0 %v3615
    %v5086 = vpop.f32.mrf.mxu0
    %v5087 = vadd.f32 %v5022, %v5086
    %5088 = vmatmul.f32.gmra.mxu0 %v3633
    %v5089 = vpop.f32.mrf.mxu0
    %v5090 = vadd.f32 %v5025, %v5089
    %5091 = vmatmul.f32.gmra.mxu0 %v3651
    %v5092 = vpop.f32.mrf.mxu0
    %v5093 = vadd.f32 %v5028, %v5092
    %5094 = vmatmul.f32.gmra.mxu0 %v3669
    %v5095 = vpop.f32.mrf.mxu0
    %v5096 = vadd.f32 %v5031, %v5095
    %5097 = vmatmul.f32.gmra.mxu0 %v3687
    %v5098 = vpop.f32.mrf.mxu0
    %v5099 = vadd.f32 %v5034, %v5098
    %5100 = vmatmul.f32.gmra.mxu0 %v3705
    %v5101 = vpop.f32.mrf.mxu0
    %v5102 = vadd.f32 %v5037, %v5101
    %5103 = vmatmul.f32.gmra.mxu0 %v3723
    %v5104 = vpop.f32.mrf.mxu0
    %v5105 = vadd.f32 %v5040, %v5104
    %5106 = vmatmul.f32.gmra.mxu0 %v3741
    %v5107 = vpop.f32.mrf.mxu0
    %v5108 = vadd.f32 %v5043, %v5107
    %5109 = vdwg.mxu0
    %5110 = vmatpush.msra.mxu0 %v4162
    %5111 = vmatpush.msra.mxu0 %v4160
    %5112 = vmatpush.msra.mxu0 %v4158
    %5113 = vmatpush.msra.mxu0 %v4156
    %5114 = vmatpush.msra.mxu0 %v4154
    %5115 = vmatpush.msra.mxu0 %v4152
    %5116 = vmatpush.msra.mxu0 %v4150
    %5117 = vmatpush.msra.mxu0 %v4148
    %5118 = vmatpush.msra.mxu0 %v4146
    %5119 = vmatpush.msra.mxu0 %v4144
    %5120 = vmatpush.msra.mxu0 %v4142
    %5121 = vmatpush.msra.mxu0 %v4140
    %5122 = vmatpush.msra.mxu0 %v4138
    %5123 = vmatpush.msra.mxu0 %v4136
    %5124 = vmatpush.msra.mxu0 %v4134
    %5125 = vmatpush.msra.mxu0 %v4132
    %5126 = vmatmul.f32.gmra.mxu0 %v3472
    %v5127 = vpop.f32.mrf.mxu0
    %v5128 = vadd.f32 %v5063, %v5127
    %5129 = vmatmul.f32.gmra.mxu0 %v3490
    %v5130 = vpop.f32.mrf.mxu0
    %v5131 = vadd.f32 %v5066, %v5130
    %5132 = vmatmul.f32.gmra.mxu0 %v3508
    %v5133 = vpop.f32.mrf.mxu0
    %v5134 = vadd.f32 %v5069, %v5133
    %5135 = vmatmul.f32.gmra.mxu0 %v3526
    %v5136 = vpop.f32.mrf.mxu0
    %v5137 = vadd.f32 %v5072, %v5136
    %5138 = vmatmul.f32.gmra.mxu0 %v3544
    %v5139 = vpop.f32.mrf.mxu0
    %v5140 = vadd.f32 %v5075, %v5139
    %5141 = vmatmul.f32.gmra.mxu0 %v3562
    %v5142 = vpop.f32.mrf.mxu0
    %v5143 = vadd.f32 %v5078, %v5142
    %5144 = vmatmul.f32.gmra.mxu0 %v3580
    %v5145 = vpop.f32.mrf.mxu0
    %v5146 = vadd.f32 %v5081, %v5145
    %5147 = vmatmul.f32.gmra.mxu0 %v3598
    %v5148 = vpop.f32.mrf.mxu0
    %v5149 = vadd.f32 %v5084, %v5148
    %5150 = vmatmul.f32.gmra.mxu0 %v3616
    %v5151 = vpop.f32.mrf.mxu0
    %v5152 = vadd.f32 %v5087, %v5151
    %5153 = vmatmul.f32.gmra.mxu0 %v3634
    %v5154 = vpop.f32.mrf.mxu0
    %v5155 = vadd.f32 %v5090, %v5154
    %5156 = vmatmul.f32.gmra.mxu0 %v3652
    %v5157 = vpop.f32.mrf.mxu0
    %v5158 = vadd.f32 %v5093, %v5157
    %5159 = vmatmul.f32.gmra.mxu0 %v3670
    %v5160 = vpop.f32.mrf.mxu0
    %v5161 = vadd.f32 %v5096, %v5160
    %5162 = vmatmul.f32.gmra.mxu0 %v3688
    %v5163 = vpop.f32.mrf.mxu0
    %v5164 = vadd.f32 %v5099, %v5163
    %5165 = vmatmul.f32.gmra.mxu0 %v3706
    %v5166 = vpop.f32.mrf.mxu0
    %v5167 = vadd.f32 %v5102, %v5166
    %5168 = vmatmul.f32.gmra.mxu0 %v3724
    %v5169 = vpop.f32.mrf.mxu0
    %v5170 = vadd.f32 %v5105, %v5169
    %5171 = vmatmul.f32.gmra.mxu0 %v3742
    %v5172 = vpop.f32.mrf.mxu0
    %v5173 = vadd.f32 %v5108, %v5172
    %5174 = vdwg.mxu0
    %5175 = vmatpush.msra.mxu0 %v4194
    %5176 = vmatpush.msra.mxu0 %v4192
    %5177 = vmatpush.msra.mxu0 %v4190
    %5178 = vmatpush.msra.mxu0 %v4188
    %5179 = vmatpush.msra.mxu0 %v4186
    %5180 = vmatpush.msra.mxu0 %v4184
    %5181 = vmatpush.msra.mxu0 %v4182
    %5182 = vmatpush.msra.mxu0 %v4180
    %5183 = vmatpush.msra.mxu0 %v4178
    %5184 = vmatpush.msra.mxu0 %v4176
    %5185 = vmatpush.msra.mxu0 %v4174
    %5186 = vmatpush.msra.mxu0 %v4172
    %5187 = vmatpush.msra.mxu0 %v4170
    %5188 = vmatpush.msra.mxu0 %v4168
    %5189 = vmatpush.msra.mxu0 %v4166
    %5190 = vmatpush.msra.mxu0 %v4164
    %5191 = vmatmul.f32.gmra.mxu0 %v3473
    %v5192 = vpop.f32.mrf.mxu0
    %v5193 = vadd.f32 %v5128, %v5192
    %5194 = vmatmul.f32.gmra.mxu0 %v3491
    %v5195 = vpop.f32.mrf.mxu0
    %v5196 = vadd.f32 %v5131, %v5195
    %5197 = vmatmul.f32.gmra.mxu0 %v3509
    %v5198 = vpop.f32.mrf.mxu0
    %v5199 = vadd.f32 %v5134, %v5198
    %5200 = vmatmul.f32.gmra.mxu0 %v3527
    %v5201 = vpop.f32.mrf.mxu0
    %v5202 = vadd.f32 %v5137, %v5201
    %5203 = vmatmul.f32.gmra.mxu0 %v3545
    %v5204 = vpop.f32.mrf.mxu0
    %v5205 = vadd.f32 %v5140, %v5204
    %5206 = vmatmul.f32.gmra.mxu0 %v3563
    %v5207 = vpop.f32.mrf.mxu0
    %v5208 = vadd.f32 %v5143, %v5207
    %5209 = vmatmul.f32.gmra.mxu0 %v3581
    %v5210 = vpop.f32.mrf.mxu0
    %v5211 = vadd.f32 %v5146, %v5210
    %5212 = vmatmul.f32.gmra.mxu0 %v3599
    %v5213 = vpop.f32.mrf.mxu0
    %v5214 = vadd.f32 %v5149, %v5213
    %5215 = vmatmul.f32.gmra.mxu0 %v3617
    %v5216 = vpop.f32.mrf.mxu0
    %v5217 = vadd.f32 %v5152, %v5216
    %5218 = vmatmul.f32.gmra.mxu0 %v3635
    %v5219 = vpop.f32.mrf.mxu0
    %v5220 = vadd.f32 %v5155, %v5219
    %5221 = vmatmul.f32.gmra.mxu0 %v3653
    %v5222 = vpop.f32.mrf.mxu0
    %v5223 = vadd.f32 %v5158, %v5222
    %5224 = vmatmul.f32.gmra.mxu0 %v3671
    %v5225 = vpop.f32.mrf.mxu0
    %v5226 = vadd.f32 %v5161, %v5225
    %5227 = vmatmul.f32.gmra.mxu0 %v3689
    %v5228 = vpop.f32.mrf.mxu0
    %v5229 = vadd.f32 %v5164, %v5228
    %5230 = vmatmul.f32.gmra.mxu0 %v3707
    %v5231 = vpop.f32.mrf.mxu0
    %v5232 = vadd.f32 %v5167, %v5231
    %5233 = vmatmul.f32.gmra.mxu0 %v3725
    %v5234 = vpop.f32.mrf.mxu0
    %v5235 = vadd.f32 %v5170, %v5234
    %5236 = vmatmul.f32.gmra.mxu0 %v3743
    %v5237 = vpop.f32.mrf.mxu0
    %v5238 = vadd.f32 %v5173, %v5237
    %5239 = vdwg.mxu0
    %5240 = vmatpush.msra.mxu0 %v4226
    %5241 = vmatpush.msra.mxu0 %v4224
    %5242 = vmatpush.msra.mxu0 %v4222
    %5243 = vmatpush.msra.mxu0 %v4220
    %5244 = vmatpush.msra.mxu0 %v4218
    %5245 = vmatpush.msra.mxu0 %v4216
    %5246 = vmatpush.msra.mxu0 %v4214
    %5247 = vmatpush.msra.mxu0 %v4212
    %5248 = vmatpush.msra.mxu0 %v4210
    %5249 = vmatpush.msra.mxu0 %v4208
    %5250 = vmatpush.msra.mxu0 %v4206
    %5251 = vmatpush.msra.mxu0 %v4204
    %5252 = vmatpush.msra.mxu0 %v4202
    %5253 = vmatpush.msra.mxu0 %v4200
    %5254 = vmatpush.msra.mxu0 %v4198
    %5255 = vmatpush.msra.mxu0 %v4196
    %5256 = vmatmul.f32.gmra.mxu0 %v3474
    %v5257 = vpop.f32.mrf.mxu0
    %v5258 = vadd.f32 %v5193, %v5257
    %5259 = vmatmul.f32.gmra.mxu0 %v3492
    %v5260 = vpop.f32.mrf.mxu0
    %v5261 = vadd.f32 %v5196, %v5260
    %5262 = vmatmul.f32.gmra.mxu0 %v3510
    %v5263 = vpop.f32.mrf.mxu0
    %v5264 = vadd.f32 %v5199, %v5263
    %5265 = vmatmul.f32.gmra.mxu0 %v3528
    %v5266 = vpop.f32.mrf.mxu0
    %v5267 = vadd.f32 %v5202, %v5266
    %5268 = vmatmul.f32.gmra.mxu0 %v3546
    %v5269 = vpop.f32.mrf.mxu0
    %v5270 = vadd.f32 %v5205, %v5269
    %5271 = vmatmul.f32.gmra.mxu0 %v3564
    %v5272 = vpop.f32.mrf.mxu0
    %v5273 = vadd.f32 %v5208, %v5272
    %5274 = vmatmul.f32.gmra.mxu0 %v3582
    %v5275 = vpop.f32.mrf.mxu0
    %v5276 = vadd.f32 %v5211, %v5275
    %5277 = vmatmul.f32.gmra.mxu0 %v3600
    %v5278 = vpop.f32.mrf.mxu0
    %v5279 = vadd.f32 %v5214, %v5278
    %5280 = vmatmul.f32.gmra.mxu0 %v3618
    %v5281 = vpop.f32.mrf.mxu0
    %v5282 = vadd.f32 %v5217, %v5281
    %5283 = vmatmul.f32.gmra.mxu0 %v3636
    %v5284 = vpop.f32.mrf.mxu0
    %v5285 = vadd.f32 %v5220, %v5284
    %5286 = vmatmul.f32.gmra.mxu0 %v3654
    %v5287 = vpop.f32.mrf.mxu0
    %v5288 = vadd.f32 %v5223, %v5287
    %5289 = vmatmul.f32.gmra.mxu0 %v3672
    %v5290 = vpop.f32.mrf.mxu0
    %v5291 = vadd.f32 %v5226, %v5290
    %5292 = vmatmul.f32.gmra.mxu0 %v3690
    %v5293 = vpop.f32.mrf.mxu0
    %v5294 = vadd.f32 %v5229, %v5293
    %5295 = vmatmul.f32.gmra.mxu0 %v3708
    %v5296 = vpop.f32.mrf.mxu0
    %v5297 = vadd.f32 %v5232, %v5296
    %5298 = vmatmul.f32.gmra.mxu0 %v3726
    %v5299 = vpop.f32.mrf.mxu0
    %v5300 = vadd.f32 %v5235, %v5299
    %5301 = vmatmul.f32.gmra.mxu0 %v3744
    %v5302 = vpop.f32.mrf.mxu0
    %v5303 = vadd.f32 %v5238, %v5302
    %5304 = vdwg.mxu0
    %5305 = vmatpush.msra.mxu0 %v4258
    %5306 = vmatpush.msra.mxu0 %v4256
    %5307 = vmatpush.msra.mxu0 %v4254
    %5308 = vmatpush.msra.mxu0 %v4252
    %5309 = vmatpush.msra.mxu0 %v4250
    %5310 = vmatpush.msra.mxu0 %v4248
    %5311 = vmatpush.msra.mxu0 %v4246
    %5312 = vmatpush.msra.mxu0 %v4244
    %5313 = vmatpush.msra.mxu0 %v4242
    %5314 = vmatpush.msra.mxu0 %v4240
    %5315 = vmatpush.msra.mxu0 %v4238
    %5316 = vmatpush.msra.mxu0 %v4236
    %5317 = vmatpush.msra.mxu0 %v4234
    %5318 = vmatpush.msra.mxu0 %v4232
    %5319 = vmatpush.msra.mxu0 %v4230
    %5320 = vmatpush.msra.mxu0 %v4228
    %5321 = vmatmul.f32.gmra.mxu0 %v3475
    %v5322 = vpop.f32.mrf.mxu0
    %v5323 = vadd.f32 %v5258, %v5322
    %5324 = vmatmul.f32.gmra.mxu0 %v3493
    %v5325 = vpop.f32.mrf.mxu0
    %v5326 = vadd.f32 %v5261, %v5325
    %5327 = vmatmul.f32.gmra.mxu0 %v3511
    %v5328 = vpop.f32.mrf.mxu0
    %v5329 = vadd.f32 %v5264, %v5328
    %5330 = vmatmul.f32.gmra.mxu0 %v3529
    %v5331 = vpop.f32.mrf.mxu0
    %v5332 = vadd.f32 %v5267, %v5331
    %5333 = vmatmul.f32.gmra.mxu0 %v3547
    %v5334 = vpop.f32.mrf.mxu0
    %v5335 = vadd.f32 %v5270, %v5334
    %5336 = vmatmul.f32.gmra.mxu0 %v3565
    %v5337 = vpop.f32.mrf.mxu0
    %v5338 = vadd.f32 %v5273, %v5337
    %5339 = vmatmul.f32.gmra.mxu0 %v3583
    %v5340 = vpop.f32.mrf.mxu0
    %v5341 = vadd.f32 %v5276, %v5340
    %5342 = vmatmul.f32.gmra.mxu0 %v3601
    %v5343 = vpop.f32.mrf.mxu0
    %v5344 = vadd.f32 %v5279, %v5343
    %5345 = vmatmul.f32.gmra.mxu0 %v3619
    %v5346 = vpop.f32.mrf.mxu0
    %v5347 = vadd.f32 %v5282, %v5346
    %5348 = vmatmul.f32.gmra.mxu0 %v3637
    %v5349 = vpop.f32.mrf.mxu0
    %v5350 = vadd.f32 %v5285, %v5349
    %5351 = vmatmul.f32.gmra.mxu0 %v3655
    %v5352 = vpop.f32.mrf.mxu0
    %v5353 = vadd.f32 %v5288, %v5352
    %5354 = vmatmul.f32.gmra.mxu0 %v3673
    %v5355 = vpop.f32.mrf.mxu0
    %v5356 = vadd.f32 %v5291, %v5355
    %5357 = vmatmul.f32.gmra.mxu0 %v3691
    %v5358 = vpop.f32.mrf.mxu0
    %v5359 = vadd.f32 %v5294, %v5358
    %5360 = vmatmul.f32.gmra.mxu0 %v3709
    %v5361 = vpop.f32.mrf.mxu0
    %v5362 = vadd.f32 %v5297, %v5361
    %5363 = vmatmul.f32.gmra.mxu0 %v3727
    %v5364 = vpop.f32.mrf.mxu0
    %v5365 = vadd.f32 %v5300, %v5364
    %5366 = vmatmul.f32.gmra.mxu0 %v3745
    %v5367 = vpop.f32.mrf.mxu0
    %v5368 = vadd.f32 %v5303, %v5367
    %5369 = vdwg.mxu0
    %5370 = vmatpush.msra.mxu0 %v4290
    %5371 = vmatpush.msra.mxu0 %v4288
    %5372 = vmatpush.msra.mxu0 %v4286
    %5373 = vmatpush.msra.mxu0 %v4284
    %5374 = vmatpush.msra.mxu0 %v4282
    %5375 = vmatpush.msra.mxu0 %v4280
    %5376 = vmatpush.msra.mxu0 %v4278
    %5377 = vmatpush.msra.mxu0 %v4276
    %5378 = vmatpush.msra.mxu0 %v4274
    %5379 = vmatpush.msra.mxu0 %v4272
    %5380 = vmatpush.msra.mxu0 %v4270
    %5381 = vmatpush.msra.mxu0 %v4268
    %5382 = vmatpush.msra.mxu0 %v4266
    %5383 = vmatpush.msra.mxu0 %v4264
    %5384 = vmatpush.msra.mxu0 %v4262
    %5385 = vmatpush.msra.mxu0 %v4260
    %5386 = vmatmul.f32.gmra.mxu0 %v3476
    %v5387 = vpop.f32.mrf.mxu0
    %v5388 = vadd.f32 %v5323, %v5387
    %5389 = vmatmul.f32.gmra.mxu0 %v3494
    %v5390 = vpop.f32.mrf.mxu0
    %v5391 = vadd.f32 %v5326, %v5390
    %5392 = vmatmul.f32.gmra.mxu0 %v3512
    %v5393 = vpop.f32.mrf.mxu0
    %v5394 = vadd.f32 %v5329, %v5393
    %5395 = vmatmul.f32.gmra.mxu0 %v3530
    %v5396 = vpop.f32.mrf.mxu0
    %v5397 = vadd.f32 %v5332, %v5396
    %5398 = vmatmul.f32.gmra.mxu0 %v3548
    %v5399 = vpop.f32.mrf.mxu0
    %v5400 = vadd.f32 %v5335, %v5399
    %5401 = vmatmul.f32.gmra.mxu0 %v3566
    %v5402 = vpop.f32.mrf.mxu0
    %v5403 = vadd.f32 %v5338, %v5402
    %5404 = vmatmul.f32.gmra.mxu0 %v3584
    %v5405 = vpop.f32.mrf.mxu0
    %v5406 = vadd.f32 %v5341, %v5405
    %5407 = vmatmul.f32.gmra.mxu0 %v3602
    %v5408 = vpop.f32.mrf.mxu0
    %v5409 = vadd.f32 %v5344, %v5408
    %5410 = vmatmul.f32.gmra.mxu0 %v3620
    %v5411 = vpop.f32.mrf.mxu0
    %v5412 = vadd.f32 %v5347, %v5411
    %5413 = vmatmul.f32.gmra.mxu0 %v3638
    %v5414 = vpop.f32.mrf.mxu0
    %v5415 = vadd.f32 %v5350, %v5414
    %5416 = vmatmul.f32.gmra.mxu0 %v3656
    %v5417 = vpop.f32.mrf.mxu0
    %v5418 = vadd.f32 %v5353, %v5417
    %5419 = vmatmul.f32.gmra.mxu0 %v3674
    %v5420 = vpop.f32.mrf.mxu0
    %v5421 = vadd.f32 %v5356, %v5420
    %5422 = vmatmul.f32.gmra.mxu0 %v3692
    %v5423 = vpop.f32.mrf.mxu0
    %v5424 = vadd.f32 %v5359, %v5423
    %5425 = vmatmul.f32.gmra.mxu0 %v3710
    %v5426 = vpop.f32.mrf.mxu0
    %v5427 = vadd.f32 %v5362, %v5426
    %5428 = vmatmul.f32.gmra.mxu0 %v3728
    %v5429 = vpop.f32.mrf.mxu0
    %v5430 = vadd.f32 %v5365, %v5429
    %5431 = vmatmul.f32.gmra.mxu0 %v3746
    %v5432 = vpop.f32.mrf.mxu0
    %v5433 = vadd.f32 %v5368, %v5432
    %5434 = vdwg.mxu0
    %5435 = vmatpush.msra.mxu0 %v4322
    %5436 = vmatpush.msra.mxu0 %v4320
    %5437 = vmatpush.msra.mxu0 %v4318
    %5438 = vmatpush.msra.mxu0 %v4316
    %5439 = vmatpush.msra.mxu0 %v4314
    %5440 = vmatpush.msra.mxu0 %v4312
    %5441 = vmatpush.msra.mxu0 %v4310
    %5442 = vmatpush.msra.mxu0 %v4308
    %5443 = vmatpush.msra.mxu0 %v4306
    %5444 = vmatpush.msra.mxu0 %v4304
    %5445 = vmatpush.msra.mxu0 %v4302
    %5446 = vmatpush.msra.mxu0 %v4300
    %5447 = vmatpush.msra.mxu0 %v4298
    %5448 = vmatpush.msra.mxu0 %v4296
    %5449 = vmatpush.msra.mxu0 %v4294
    %5450 = vmatpush.msra.mxu0 %v4292
    %5451 = vmatmul.f32.gmra.mxu0 %v3477
    %v5452 = vpop.f32.mrf.mxu0
    %v5453 = vadd.f32 %v5388, %v5452
    %5454 = vmatmul.f32.gmra.mxu0 %v3495
    %v5455 = vpop.f32.mrf.mxu0
    %v5456 = vadd.f32 %v5391, %v5455
    %5457 = vmatmul.f32.gmra.mxu0 %v3513
    %v5458 = vpop.f32.mrf.mxu0
    %v5459 = vadd.f32 %v5394, %v5458
    %5460 = vmatmul.f32.gmra.mxu0 %v3531
    %v5461 = vpop.f32.mrf.mxu0
    %v5462 = vadd.f32 %v5397, %v5461
    %5463 = vmatmul.f32.gmra.mxu0 %v3549
    %v5464 = vpop.f32.mrf.mxu0
    %v5465 = vadd.f32 %v5400, %v5464
    %5466 = vmatmul.f32.gmra.mxu0 %v3567
    %v5467 = vpop.f32.mrf.mxu0
    %v5468 = vadd.f32 %v5403, %v5467
    %5469 = vmatmul.f32.gmra.mxu0 %v3585
    %v5470 = vpop.f32.mrf.mxu0
    %v5471 = vadd.f32 %v5406, %v5470
    %5472 = vmatmul.f32.gmra.mxu0 %v3603
    %v5473 = vpop.f32.mrf.mxu0
    %v5474 = vadd.f32 %v5409, %v5473
    %5475 = vmatmul.f32.gmra.mxu0 %v3621
    %v5476 = vpop.f32.mrf.mxu0
    %v5477 = vadd.f32 %v5412, %v5476
    %5478 = vmatmul.f32.gmra.mxu0 %v3639
    %v5479 = vpop.f32.mrf.mxu0
    %v5480 = vadd.f32 %v5415, %v5479
    %5481 = vmatmul.f32.gmra.mxu0 %v3657
    %v5482 = vpop.f32.mrf.mxu0
    %v5483 = vadd.f32 %v5418, %v5482
    %5484 = vmatmul.f32.gmra.mxu0 %v3675
    %v5485 = vpop.f32.mrf.mxu0
    %v5486 = vadd.f32 %v5421, %v5485
    %5487 = vmatmul.f32.gmra.mxu0 %v3693
    %v5488 = vpop.f32.mrf.mxu0
    %v5489 = vadd.f32 %v5424, %v5488
    %5490 = vmatmul.f32.gmra.mxu0 %v3711
    %v5491 = vpop.f32.mrf.mxu0
    %v5492 = vadd.f32 %v5427, %v5491
    %5493 = vmatmul.f32.gmra.mxu0 %v3729
    %v5494 = vpop.f32.mrf.mxu0
    %v5495 = vadd.f32 %v5430, %v5494
    %5496 = vmatmul.f32.gmra.mxu0 %v3747
    %v5497 = vpop.f32.mrf.mxu0
    %v5498 = vadd.f32 %v5433, %v5497
    %5499 = vdwg.mxu0
    %5500 = vmatpush.msra.mxu0 %v3779
    %5501 = vmatpush.msra.mxu0 %v3777
    %5502 = vmatpush.msra.mxu0 %v3775
    %5503 = vmatpush.msra.mxu0 %v3773
    %5504 = vmatpush.msra.mxu0 %v3771
    %5505 = vmatpush.msra.mxu0 %v3769
    %5506 = vmatpush.msra.mxu0 %v3767
    %5507 = vmatpush.msra.mxu0 %v3765
    %5508 = vmatpush.msra.mxu0 %v3763
    %5509 = vmatpush.msra.mxu0 %v3761
    %5510 = vmatpush.msra.mxu0 %v3759
    %5511 = vmatpush.msra.mxu0 %v3757
    %5512 = vmatpush.msra.mxu0 %v3755
    %5513 = vmatpush.msra.mxu0 %v3753
    %5514 = vmatpush.msra.mxu0 %v3751
    %5515 = vmatpush.msra.mxu0 %v3749
    %5516 = vmatmul.f32.gmra.mxu0 %v3460
    %v5517 = vpop.f32.mrf.mxu0
    %v5518 = vadd.f32 %v4327, %v5517
    %5519 = vmatmul.f32.gmra.mxu0 %v3478
    %v5520 = vpop.f32.mrf.mxu0
    %v5521 = vadd.f32 %v4327, %v5520
    %5522 = vmatmul.f32.gmra.mxu0 %v3496
    %v5523 = vpop.f32.mrf.mxu0
    %v5524 = vadd.f32 %v4327, %v5523
    %5525 = vmatmul.f32.gmra.mxu0 %v3514
    %v5526 = vpop.f32.mrf.mxu0
    %v5527 = vadd.f32 %v4327, %v5526
    %5528 = vmatmul.f32.gmra.mxu0 %v3532
    %v5529 = vpop.f32.mrf.mxu0
    %v5530 = vadd.f32 %v4327, %v5529
    %5531 = vmatmul.f32.gmra.mxu0 %v3550
    %v5532 = vpop.f32.mrf.mxu0
    %v5533 = vadd.f32 %v4327, %v5532
    %5534 = vmatmul.f32.gmra.mxu0 %v3568
    %v5535 = vpop.f32.mrf.mxu0
    %v5536 = vadd.f32 %v4327, %v5535
    %5537 = vmatmul.f32.gmra.mxu0 %v3586
    %v5538 = vpop.f32.mrf.mxu0
    %v5539 = vadd.f32 %v4327, %v5538
    %5540 = vmatmul.f32.gmra.mxu0 %v3604
    %v5541 = vpop.f32.mrf.mxu0
    %v5542 = vadd.f32 %v4327, %v5541
    %5543 = vmatmul.f32.gmra.mxu0 %v3622
    %v5544 = vpop.f32.mrf.mxu0
    %v5545 = vadd.f32 %v4327, %v5544
    %5546 = vmatmul.f32.gmra.mxu0 %v3640
    %v5547 = vpop.f32.mrf.mxu0
    %v5548 = vadd.f32 %v4327, %v5547
    %5549 = vmatmul.f32.gmra.mxu0 %v3658
    %v5550 = vpop.f32.mrf.mxu0
    %v5551 = vadd.f32 %v4327, %v5550
    %5552 = vmatmul.f32.gmra.mxu0 %v3676
    %v5553 = vpop.f32.mrf.mxu0
    %v5554 = vadd.f32 %v4327, %v5553
    %5555 = vmatmul.f32.gmra.mxu0 %v3694
    %v5556 = vpop.f32.mrf.mxu0
    %v5557 = vadd.f32 %v4327, %v5556
    %5558 = vmatmul.f32.gmra.mxu0 %v3712
    %v5559 = vpop.f32.mrf.mxu0
    %v5560 = vadd.f32 %v4327, %v5559
    %5561 = vmatmul.f32.gmra.mxu0 %v3730
    %v5562 = vpop.f32.mrf.mxu0
    %v5563 = vadd.f32 %v4327, %v5562
    %5564 = vdwg.mxu0
    %5565 = vmatpush.msra.mxu0 %v3811
    %5566 = vmatpush.msra.mxu0 %v3809
    %5567 = vmatpush.msra.mxu0 %v3807
    %5568 = vmatpush.msra.mxu0 %v3805
    %5569 = vmatpush.msra.mxu0 %v3803
    %5570 = vmatpush.msra.mxu0 %v3801
    %5571 = vmatpush.msra.mxu0 %v3799
    %5572 = vmatpush.msra.mxu0 %v3797
    %5573 = vmatpush.msra.mxu0 %v3795
    %5574 = vmatpush.msra.mxu0 %v3793
    %5575 = vmatpush.msra.mxu0 %v3791
    %5576 = vmatpush.msra.mxu0 %v3789
    %5577 = vmatpush.msra.mxu0 %v3787
    %5578 = vmatpush.msra.mxu0 %v3785
    %5579 = vmatpush.msra.mxu0 %v3783
    %5580 = vmatpush.msra.mxu0 %v3781
    %5581 = vmatmul.f32.gmra.mxu0 %v3461
    %v5582 = vpop.f32.mrf.mxu0
    %v5583 = vadd.f32 %v5518, %v5582
    %5584 = vmatmul.f32.gmra.mxu0 %v3479
    %v5585 = vpop.f32.mrf.mxu0
    %v5586 = vadd.f32 %v5521, %v5585
    %5587 = vmatmul.f32.gmra.mxu0 %v3497
    %v5588 = vpop.f32.mrf.mxu0
    %v5589 = vadd.f32 %v5524, %v5588
    %5590 = vmatmul.f32.gmra.mxu0 %v3515
    %v5591 = vpop.f32.mrf.mxu0
    %v5592 = vadd.f32 %v5527, %v5591
    %5593 = vmatmul.f32.gmra.mxu0 %v3533
    %v5594 = vpop.f32.mrf.mxu0
    %v5595 = vadd.f32 %v5530, %v5594
    %5596 = vmatmul.f32.gmra.mxu0 %v3551
    %v5597 = vpop.f32.mrf.mxu0
    %v5598 = vadd.f32 %v5533, %v5597
    %5599 = vmatmul.f32.gmra.mxu0 %v3569
    %v5600 = vpop.f32.mrf.mxu0
    %v5601 = vadd.f32 %v5536, %v5600
    %5602 = vmatmul.f32.gmra.mxu0 %v3587
    %v5603 = vpop.f32.mrf.mxu0
    %v5604 = vadd.f32 %v5539, %v5603
    %5605 = vmatmul.f32.gmra.mxu0 %v3605
    %v5606 = vpop.f32.mrf.mxu0
    %v5607 = vadd.f32 %v5542, %v5606
    %5608 = vmatmul.f32.gmra.mxu0 %v3623
    %v5609 = vpop.f32.mrf.mxu0
    %v5610 = vadd.f32 %v5545, %v5609
    %5611 = vmatmul.f32.gmra.mxu0 %v3641
    %v5612 = vpop.f32.mrf.mxu0
    %v5613 = vadd.f32 %v5548, %v5612
    %5614 = vmatmul.f32.gmra.mxu0 %v3659
    %v5615 = vpop.f32.mrf.mxu0
    %v5616 = vadd.f32 %v5551, %v5615
    %5617 = vmatmul.f32.gmra.mxu0 %v3677
    %v5618 = vpop.f32.mrf.mxu0
    %v5619 = vadd.f32 %v5554, %v5618
    %5620 = vmatmul.f32.gmra.mxu0 %v3695
    %v5621 = vpop.f32.mrf.mxu0
    %v5622 = vadd.f32 %v5557, %v5621
    %5623 = vmatmul.f32.gmra.mxu0 %v3713
    %v5624 = vpop.f32.mrf.mxu0
    %v5625 = vadd.f32 %v5560, %v5624
    %5626 = vmatmul.f32.gmra.mxu0 %v3731
    %v5627 = vpop.f32.mrf.mxu0
    %v5628 = vadd.f32 %v5563, %v5627
    %5629 = vdwg.mxu0
    %5630 = vmatpush.msra.mxu0 %v3843
    %5631 = vmatpush.msra.mxu0 %v3841
    %5632 = vmatpush.msra.mxu0 %v3839
    %5633 = vmatpush.msra.mxu0 %v3837
    %5634 = vmatpush.msra.mxu0 %v3835
    %5635 = vmatpush.msra.mxu0 %v3833
    %5636 = vmatpush.msra.mxu0 %v3831
    %5637 = vmatpush.msra.mxu0 %v3829
    %5638 = vmatpush.msra.mxu0 %v3827
    %5639 = vmatpush.msra.mxu0 %v3825
    %5640 = vmatpush.msra.mxu0 %v3823
    %5641 = vmatpush.msra.mxu0 %v3821
    %5642 = vmatpush.msra.mxu0 %v3819
    %5643 = vmatpush.msra.mxu0 %v3817
    %5644 = vmatpush.msra.mxu0 %v3815
    %5645 = vmatpush.msra.mxu0 %v3813
    %5646 = vmatmul.f32.gmra.mxu0 %v3462
    %v5647 = vpop.f32.mrf.mxu0
    %v5648 = vadd.f32 %v5583, %v5647
    %5649 = vmatmul.f32.gmra.mxu0 %v3480
    %v5650 = vpop.f32.mrf.mxu0
    %v5651 = vadd.f32 %v5586, %v5650
    %5652 = vmatmul.f32.gmra.mxu0 %v3498
    %v5653 = vpop.f32.mrf.mxu0
    %v5654 = vadd.f32 %v5589, %v5653
    %5655 = vmatmul.f32.gmra.mxu0 %v3516
    %v5656 = vpop.f32.mrf.mxu0
    %v5657 = vadd.f32 %v5592, %v5656
    %5658 = vmatmul.f32.gmra.mxu0 %v3534
    %v5659 = vpop.f32.mrf.mxu0
    %v5660 = vadd.f32 %v5595, %v5659
    %5661 = vmatmul.f32.gmra.mxu0 %v3552
    %v5662 = vpop.f32.mrf.mxu0
    %v5663 = vadd.f32 %v5598, %v5662
    %5664 = vmatmul.f32.gmra.mxu0 %v3570
    %v5665 = vpop.f32.mrf.mxu0
    %v5666 = vadd.f32 %v5601, %v5665
    %5667 = vmatmul.f32.gmra.mxu0 %v3588
    %v5668 = vpop.f32.mrf.mxu0
    %v5669 = vadd.f32 %v5604, %v5668
    %5670 = vmatmul.f32.gmra.mxu0 %v3606
    %v5671 = vpop.f32.mrf.mxu0
    %v5672 = vadd.f32 %v5607, %v5671
    %5673 = vmatmul.f32.gmra.mxu0 %v3624
    %v5674 = vpop.f32.mrf.mxu0
    %v5675 = vadd.f32 %v5610, %v5674
    %5676 = vmatmul.f32.gmra.mxu0 %v3642
    %v5677 = vpop.f32.mrf.mxu0
    %v5678 = vadd.f32 %v5613, %v5677
    %5679 = vmatmul.f32.gmra.mxu0 %v3660
    %v5680 = vpop.f32.mrf.mxu0
    %v5681 = vadd.f32 %v5616, %v5680
    %5682 = vmatmul.f32.gmra.mxu0 %v3678
    %v5683 = vpop.f32.mrf.mxu0
    %v5684 = vadd.f32 %v5619, %v5683
    %5685 = vmatmul.f32.gmra.mxu0 %v3696
    %v5686 = vpop.f32.mrf.mxu0
    %v5687 = vadd.f32 %v5622, %v5686
    %5688 = vmatmul.f32.gmra.mxu0 %v3714
    %v5689 = vpop.f32.mrf.mxu0
    %v5690 = vadd.f32 %v5625, %v5689
    %5691 = vmatmul.f32.gmra.mxu0 %v3732
    %v5692 = vpop.f32.mrf.mxu0
    %v5693 = vadd.f32 %v5628, %v5692
    %5694 = vdwg.mxu0
    %5695 = vmatpush.msra.mxu0 %v3875
    %5696 = vmatpush.msra.mxu0 %v3873
    %5697 = vmatpush.msra.mxu0 %v3871
    %5698 = vmatpush.msra.mxu0 %v3869
    %5699 = vmatpush.msra.mxu0 %v3867
    %5700 = vmatpush.msra.mxu0 %v3865
    %5701 = vmatpush.msra.mxu0 %v3863
    %5702 = vmatpush.msra.mxu0 %v3861
    %5703 = vmatpush.msra.mxu0 %v3859
    %5704 = vmatpush.msra.mxu0 %v3857
    %5705 = vmatpush.msra.mxu0 %v3855
    %5706 = vmatpush.msra.mxu0 %v3853
    %5707 = vmatpush.msra.mxu0 %v3851
    %5708 = vmatpush.msra.mxu0 %v3849
    %5709 = vmatpush.msra.mxu0 %v3847
    %5710 = vmatpush.msra.mxu0 %v3845
    %5711 = vmatmul.f32.gmra.mxu0 %v3463
    %v5712 = vpop.f32.mrf.mxu0
    %v5713 = vadd.f32 %v5648, %v5712
    %5714 = vmatmul.f32.gmra.mxu0 %v3481
    %v5715 = vpop.f32.mrf.mxu0
    %v5716 = vadd.f32 %v5651, %v5715
    %5717 = vmatmul.f32.gmra.mxu0 %v3499
    %v5718 = vpop.f32.mrf.mxu0
    %v5719 = vadd.f32 %v5654, %v5718
    %5720 = vmatmul.f32.gmra.mxu0 %v3517
    %v5721 = vpop.f32.mrf.mxu0
    %v5722 = vadd.f32 %v5657, %v5721
    %5723 = vmatmul.f32.gmra.mxu0 %v3535
    %v5724 = vpop.f32.mrf.mxu0
    %v5725 = vadd.f32 %v5660, %v5724
    %5726 = vmatmul.f32.gmra.mxu0 %v3553
    %v5727 = vpop.f32.mrf.mxu0
    %v5728 = vadd.f32 %v5663, %v5727
    %5729 = vmatmul.f32.gmra.mxu0 %v3571
    %v5730 = vpop.f32.mrf.mxu0
    %v5731 = vadd.f32 %v5666, %v5730
    %5732 = vmatmul.f32.gmra.mxu0 %v3589
    %v5733 = vpop.f32.mrf.mxu0
    %v5734 = vadd.f32 %v5669, %v5733
    %5735 = vmatmul.f32.gmra.mxu0 %v3607
    %v5736 = vpop.f32.mrf.mxu0
    %v5737 = vadd.f32 %v5672, %v5736
    %5738 = vmatmul.f32.gmra.mxu0 %v3625
    %v5739 = vpop.f32.mrf.mxu0
    %v5740 = vadd.f32 %v5675, %v5739
    %5741 = vmatmul.f32.gmra.mxu0 %v3643
    %v5742 = vpop.f32.mrf.mxu0
    %v5743 = vadd.f32 %v5678, %v5742
    %5744 = vmatmul.f32.gmra.mxu0 %v3661
    %v5745 = vpop.f32.mrf.mxu0
    %v5746 = vadd.f32 %v5681, %v5745
    %5747 = vmatmul.f32.gmra.mxu0 %v3679
    %v5748 = vpop.f32.mrf.mxu0
    %v5749 = vadd.f32 %v5684, %v5748
    %5750 = vmatmul.f32.gmra.mxu0 %v3697
    %v5751 = vpop.f32.mrf.mxu0
    %v5752 = vadd.f32 %v5687, %v5751
    %5753 = vmatmul.f32.gmra.mxu0 %v3715
    %v5754 = vpop.f32.mrf.mxu0
    %v5755 = vadd.f32 %v5690, %v5754
    %5756 = vmatmul.f32.gmra.mxu0 %v3733
    %v5757 = vpop.f32.mrf.mxu0
    %v5758 = vadd.f32 %v5693, %v5757
    %5759 = vdwg.mxu0
    %5760 = vmatpush.msra.mxu0 %v3907
    %5761 = vmatpush.msra.mxu0 %v3905
    %5762 = vmatpush.msra.mxu0 %v3903
    %5763 = vmatpush.msra.mxu0 %v3901
    %5764 = vmatpush.msra.mxu0 %v3899
    %5765 = vmatpush.msra.mxu0 %v3897
    %5766 = vmatpush.msra.mxu0 %v3895
    %5767 = vmatpush.msra.mxu0 %v3893
    %5768 = vmatpush.msra.mxu0 %v3891
    %5769 = vmatpush.msra.mxu0 %v3889
    %5770 = vmatpush.msra.mxu0 %v3887
    %5771 = vmatpush.msra.mxu0 %v3885
    %5772 = vmatpush.msra.mxu0 %v3883
    %5773 = vmatpush.msra.mxu0 %v3881
    %5774 = vmatpush.msra.mxu0 %v3879
    %5775 = vmatpush.msra.mxu0 %v3877
    %5776 = vmatmul.f32.gmra.mxu0 %v3464
    %v5777 = vpop.f32.mrf.mxu0
    %v5778 = vadd.f32 %v5713, %v5777
    %5779 = vmatmul.f32.gmra.mxu0 %v3482
    %v5780 = vpop.f32.mrf.mxu0
    %v5781 = vadd.f32 %v5716, %v5780
    %5782 = vmatmul.f32.gmra.mxu0 %v3500
    %v5783 = vpop.f32.mrf.mxu0
    %v5784 = vadd.f32 %v5719, %v5783
    %5785 = vmatmul.f32.gmra.mxu0 %v3518
    %v5786 = vpop.f32.mrf.mxu0
    %v5787 = vadd.f32 %v5722, %v5786
    %5788 = vmatmul.f32.gmra.mxu0 %v3536
    %v5789 = vpop.f32.mrf.mxu0
    %v5790 = vadd.f32 %v5725, %v5789
    %5791 = vmatmul.f32.gmra.mxu0 %v3554
    %v5792 = vpop.f32.mrf.mxu0
    %v5793 = vadd.f32 %v5728, %v5792
    %5794 = vmatmul.f32.gmra.mxu0 %v3572
    %v5795 = vpop.f32.mrf.mxu0
    %v5796 = vadd.f32 %v5731, %v5795
    %5797 = vmatmul.f32.gmra.mxu0 %v3590
    %v5798 = vpop.f32.mrf.mxu0
    %v5799 = vadd.f32 %v5734, %v5798
    %5800 = vmatmul.f32.gmra.mxu0 %v3608
    %v5801 = vpop.f32.mrf.mxu0
    %v5802 = vadd.f32 %v5737, %v5801
    %5803 = vmatmul.f32.gmra.mxu0 %v3626
    %v5804 = vpop.f32.mrf.mxu0
    %v5805 = vadd.f32 %v5740, %v5804
    %5806 = vmatmul.f32.gmra.mxu0 %v3644
    %v5807 = vpop.f32.mrf.mxu0
    %v5808 = vadd.f32 %v5743, %v5807
    %5809 = vmatmul.f32.gmra.mxu0 %v3662
    %v5810 = vpop.f32.mrf.mxu0
    %v5811 = vadd.f32 %v5746, %v5810
    %5812 = vmatmul.f32.gmra.mxu0 %v3680
    %v5813 = vpop.f32.mrf.mxu0
    %v5814 = vadd.f32 %v5749, %v5813
    %5815 = vmatmul.f32.gmra.mxu0 %v3698
    %v5816 = vpop.f32.mrf.mxu0
    %v5817 = vadd.f32 %v5752, %v5816
    %5818 = vmatmul.f32.gmra.mxu0 %v3716
    %v5819 = vpop.f32.mrf.mxu0
    %v5820 = vadd.f32 %v5755, %v5819
    %5821 = vmatmul.f32.gmra.mxu0 %v3734
    %v5822 = vpop.f32.mrf.mxu0
    %v5823 = vadd.f32 %v5758, %v5822
    %5824 = vdwg.mxu0
    %5825 = vmatpush.msra.mxu0 %v3939
    %5826 = vmatpush.msra.mxu0 %v3937
    %5827 = vmatpush.msra.mxu0 %v3935
    %5828 = vmatpush.msra.mxu0 %v3933
    %5829 = vmatpush.msra.mxu0 %v3931
    %5830 = vmatpush.msra.mxu0 %v3929
    %5831 = vmatpush.msra.mxu0 %v3927
    %5832 = vmatpush.msra.mxu0 %v3925
    %5833 = vmatpush.msra.mxu0 %v3923
    %5834 = vmatpush.msra.mxu0 %v3921
    %5835 = vmatpush.msra.mxu0 %v3919
    %5836 = vmatpush.msra.mxu0 %v3917
    %5837 = vmatpush.msra.mxu0 %v3915
    %5838 = vmatpush.msra.mxu0 %v3913
    %5839 = vmatpush.msra.mxu0 %v3911
    %5840 = vmatpush.msra.mxu0 %v3909
    %5841 = vmatmul.f32.gmra.mxu0 %v3465
    %v5842 = vpop.f32.mrf.mxu0
    %v5843 = vadd.f32 %v5778, %v5842
    %5844 = vmatmul.f32.gmra.mxu0 %v3483
    %v5845 = vpop.f32.mrf.mxu0
    %v5846 = vadd.f32 %v5781, %v5845
    %5847 = vmatmul.f32.gmra.mxu0 %v3501
    %v5848 = vpop.f32.mrf.mxu0
    %v5849 = vadd.f32 %v5784, %v5848
    %5850 = vmatmul.f32.gmra.mxu0 %v3519
    %v5851 = vpop.f32.mrf.mxu0
    %v5852 = vadd.f32 %v5787, %v5851
    %5853 = vmatmul.f32.gmra.mxu0 %v3537
    %v5854 = vpop.f32.mrf.mxu0
    %v5855 = vadd.f32 %v5790, %v5854
    %5856 = vmatmul.f32.gmra.mxu0 %v3555
    %v5857 = vpop.f32.mrf.mxu0
    %v5858 = vadd.f32 %v5793, %v5857
    %5859 = vmatmul.f32.gmra.mxu0 %v3573
    %v5860 = vpop.f32.mrf.mxu0
    %v5861 = vadd.f32 %v5796, %v5860
    %5862 = vmatmul.f32.gmra.mxu0 %v3591
    %v5863 = vpop.f32.mrf.mxu0
    %v5864 = vadd.f32 %v5799, %v5863
    %5865 = vmatmul.f32.gmra.mxu0 %v3609
    %v5866 = vpop.f32.mrf.mxu0
    %v5867 = vadd.f32 %v5802, %v5866
    %5868 = vmatmul.f32.gmra.mxu0 %v3627
    %v5869 = vpop.f32.mrf.mxu0
    %v5870 = vadd.f32 %v5805, %v5869
    %5871 = vmatmul.f32.gmra.mxu0 %v3645
    %v5872 = vpop.f32.mrf.mxu0
    %v5873 = vadd.f32 %v5808, %v5872
    %5874 = vmatmul.f32.gmra.mxu0 %v3663
    %v5875 = vpop.f32.mrf.mxu0
    %v5876 = vadd.f32 %v5811, %v5875
    %5877 = vmatmul.f32.gmra.mxu0 %v3681
    %v5878 = vpop.f32.mrf.mxu0
    %v5879 = vadd.f32 %v5814, %v5878
    %5880 = vmatmul.f32.gmra.mxu0 %v3699
    %v5881 = vpop.f32.mrf.mxu0
    %v5882 = vadd.f32 %v5817, %v5881
    %5883 = vmatmul.f32.gmra.mxu0 %v3717
    %v5884 = vpop.f32.mrf.mxu0
    %v5885 = vadd.f32 %v5820, %v5884
    %5886 = vmatmul.f32.gmra.mxu0 %v3735
    %v5887 = vpop.f32.mrf.mxu0
    %v5888 = vadd.f32 %v5823, %v5887
    %5889 = vdwg.mxu0
    %5890 = vmatpush.msra.mxu0 %v3971
    %5891 = vmatpush.msra.mxu0 %v3969
    %5892 = vmatpush.msra.mxu0 %v3967
    %5893 = vmatpush.msra.mxu0 %v3965
    %5894 = vmatpush.msra.mxu0 %v3963
    %5895 = vmatpush.msra.mxu0 %v3961
    %5896 = vmatpush.msra.mxu0 %v3959
    %5897 = vmatpush.msra.mxu0 %v3957
    %5898 = vmatpush.msra.mxu0 %v3955
    %5899 = vmatpush.msra.mxu0 %v3953
    %5900 = vmatpush.msra.mxu0 %v3951
    %5901 = vmatpush.msra.mxu0 %v3949
    %5902 = vmatpush.msra.mxu0 %v3947
    %5903 = vmatpush.msra.mxu0 %v3945
    %5904 = vmatpush.msra.mxu0 %v3943
    %5905 = vmatpush.msra.mxu0 %v3941
    %5906 = vmatmul.f32.gmra.mxu0 %v3466
    %v5907 = vpop.f32.mrf.mxu0
    %v5908 = vadd.f32 %v5843, %v5907
    %5909 = vmatmul.f32.gmra.mxu0 %v3484
    %v5910 = vpop.f32.mrf.mxu0
    %v5911 = vadd.f32 %v5846, %v5910
    %5912 = vmatmul.f32.gmra.mxu0 %v3502
    %v5913 = vpop.f32.mrf.mxu0
    %v5914 = vadd.f32 %v5849, %v5913
    %5915 = vmatmul.f32.gmra.mxu0 %v3520
    %v5916 = vpop.f32.mrf.mxu0
    %v5917 = vadd.f32 %v5852, %v5916
    %5918 = vmatmul.f32.gmra.mxu0 %v3538
    %v5919 = vpop.f32.mrf.mxu0
    %v5920 = vadd.f32 %v5855, %v5919
    %5921 = vmatmul.f32.gmra.mxu0 %v3556
    %v5922 = vpop.f32.mrf.mxu0
    %v5923 = vadd.f32 %v5858, %v5922
    %5924 = vmatmul.f32.gmra.mxu0 %v3574
    %v5925 = vpop.f32.mrf.mxu0
    %v5926 = vadd.f32 %v5861, %v5925
    %5927 = vmatmul.f32.gmra.mxu0 %v3592
    %v5928 = vpop.f32.mrf.mxu0
    %v5929 = vadd.f32 %v5864, %v5928
    %5930 = vmatmul.f32.gmra.mxu0 %v3610
    %v5931 = vpop.f32.mrf.mxu0
    %v5932 = vadd.f32 %v5867, %v5931
    %5933 = vmatmul.f32.gmra.mxu0 %v3628
    %v5934 = vpop.f32.mrf.mxu0
    %v5935 = vadd.f32 %v5870, %v5934
    %5936 = vmatmul.f32.gmra.mxu0 %v3646
    %v5937 = vpop.f32.mrf.mxu0
    %v5938 = vadd.f32 %v5873, %v5937
    %5939 = vmatmul.f32.gmra.mxu0 %v3664
    %v5940 = vpop.f32.mrf.mxu0
    %v5941 = vadd.f32 %v5876, %v5940
    %5942 = vmatmul.f32.gmra.mxu0 %v3682
    %v5943 = vpop.f32.mrf.mxu0
    %v5944 = vadd.f32 %v5879, %v5943
    %5945 = vmatmul.f32.gmra.mxu0 %v3700
    %v5946 = vpop.f32.mrf.mxu0
    %v5947 = vadd.f32 %v5882, %v5946
    %5948 = vmatmul.f32.gmra.mxu0 %v3718
    %v5949 = vpop.f32.mrf.mxu0
    %v5950 = vadd.f32 %v5885, %v5949
    %5951 = vmatmul.f32.gmra.mxu0 %v3736
    %v5952 = vpop.f32.mrf.mxu0
    %v5953 = vadd.f32 %v5888, %v5952
    %5954 = vdwg.mxu0
    %5955 = vmatpush.msra.mxu0 %v4003
    %5956 = vmatpush.msra.mxu0 %v4001
    %5957 = vmatpush.msra.mxu0 %v3999
    %5958 = vmatpush.msra.mxu0 %v3997
    %5959 = vmatpush.msra.mxu0 %v3995
    %5960 = vmatpush.msra.mxu0 %v3993
    %5961 = vmatpush.msra.mxu0 %v3991
    %5962 = vmatpush.msra.mxu0 %v3989
    %5963 = vmatpush.msra.mxu0 %v3987
    %5964 = vmatpush.msra.mxu0 %v3985
    %5965 = vmatpush.msra.mxu0 %v3983
    %5966 = vmatpush.msra.mxu0 %v3981
    %5967 = vmatpush.msra.mxu0 %v3979
    %5968 = vmatpush.msra.mxu0 %v3977
    %5969 = vmatpush.msra.mxu0 %v3975
    %5970 = vmatpush.msra.mxu0 %v3973
    %5971 = vmatmul.f32.gmra.mxu0 %v3467
    %v5972 = vpop.f32.mrf.mxu0
    %v5973 = vadd.f32 %v5908, %v5972
    %5974 = vmatmul.f32.gmra.mxu0 %v3485
    %v5975 = vpop.f32.mrf.mxu0
    %v5976 = vadd.f32 %v5911, %v5975
    %5977 = vmatmul.f32.gmra.mxu0 %v3503
    %v5978 = vpop.f32.mrf.mxu0
    %v5979 = vadd.f32 %v5914, %v5978
    %5980 = vmatmul.f32.gmra.mxu0 %v3521
    %v5981 = vpop.f32.mrf.mxu0
    %v5982 = vadd.f32 %v5917, %v5981
    %5983 = vmatmul.f32.gmra.mxu0 %v3539
    %v5984 = vpop.f32.mrf.mxu0
    %v5985 = vadd.f32 %v5920, %v5984
    %5986 = vmatmul.f32.gmra.mxu0 %v3557
    %v5987 = vpop.f32.mrf.mxu0
    %v5988 = vadd.f32 %v5923, %v5987
    %5989 = vmatmul.f32.gmra.mxu0 %v3575
    %v5990 = vpop.f32.mrf.mxu0
    %v5991 = vadd.f32 %v5926, %v5990
    %5992 = vmatmul.f32.gmra.mxu0 %v3593
    %v5993 = vpop.f32.mrf.mxu0
    %v5994 = vadd.f32 %v5929, %v5993
    %5995 = vmatmul.f32.gmra.mxu0 %v3611
    %v5996 = vpop.f32.mrf.mxu0
    %v5997 = vadd.f32 %v5932, %v5996
    %5998 = vmatmul.f32.gmra.mxu0 %v3629
    %v5999 = vpop.f32.mrf.mxu0
    %v6000 = vadd.f32 %v5935, %v5999
    %6001 = vmatmul.f32.gmra.mxu0 %v3647
    %v6002 = vpop.f32.mrf.mxu0
    %v6003 = vadd.f32 %v5938, %v6002
    %6004 = vmatmul.f32.gmra.mxu0 %v3665
    %v6005 = vpop.f32.mrf.mxu0
    %v6006 = vadd.f32 %v5941, %v6005
    %6007 = vmatmul.f32.gmra.mxu0 %v3683
    %v6008 = vpop.f32.mrf.mxu0
    %v6009 = vadd.f32 %v5944, %v6008
    %6010 = vmatmul.f32.gmra.mxu0 %v3701
    %v6011 = vpop.f32.mrf.mxu0
    %v6012 = vadd.f32 %v5947, %v6011
    %6013 = vmatmul.f32.gmra.mxu0 %v3719
    %v6014 = vpop.f32.mrf.mxu0
    %v6015 = vadd.f32 %v5950, %v6014
    %6016 = vmatmul.f32.gmra.mxu0 %v3737
    %v6017 = vpop.f32.mrf.mxu0
    %v6018 = vadd.f32 %v5953, %v6017
    %6019 = vdwg.mxu0
    %6020 = vmatpush.msra.mxu0 %v4035
    %6021 = vmatpush.msra.mxu0 %v4033
    %6022 = vmatpush.msra.mxu0 %v4031
    %6023 = vmatpush.msra.mxu0 %v4029
    %6024 = vmatpush.msra.mxu0 %v4027
    %6025 = vmatpush.msra.mxu0 %v4025
    %6026 = vmatpush.msra.mxu0 %v4023
    %6027 = vmatpush.msra.mxu0 %v4021
    %6028 = vmatpush.msra.mxu0 %v4019
    %6029 = vmatpush.msra.mxu0 %v4017
    %6030 = vmatpush.msra.mxu0 %v4015
    %6031 = vmatpush.msra.mxu0 %v4013
    %6032 = vmatpush.msra.mxu0 %v4011
    %6033 = vmatpush.msra.mxu0 %v4009
    %6034 = vmatpush.msra.mxu0 %v4007
    %6035 = vmatpush.msra.mxu0 %v4005
    %6036 = vmatmul.f32.gmra.mxu0 %v3468
    %v6037 = vpop.f32.mrf.mxu0
    %v6038 = vadd.f32 %v5973, %v6037
    %6039 = vmatmul.f32.gmra.mxu0 %v3486
    %v6040 = vpop.f32.mrf.mxu0
    %v6041 = vadd.f32 %v5976, %v6040
    %6042 = vmatmul.f32.gmra.mxu0 %v3504
    %v6043 = vpop.f32.mrf.mxu0
    %v6044 = vadd.f32 %v5979, %v6043
    %6045 = vmatmul.f32.gmra.mxu0 %v3522
    %v6046 = vpop.f32.mrf.mxu0
    %v6047 = vadd.f32 %v5982, %v6046
    %6048 = vmatmul.f32.gmra.mxu0 %v3540
    %v6049 = vpop.f32.mrf.mxu0
    %v6050 = vadd.f32 %v5985, %v6049
    %6051 = vmatmul.f32.gmra.mxu0 %v3558
    %v6052 = vpop.f32.mrf.mxu0
    %v6053 = vadd.f32 %v5988, %v6052
    %6054 = vmatmul.f32.gmra.mxu0 %v3576
    %v6055 = vpop.f32.mrf.mxu0
    %v6056 = vadd.f32 %v5991, %v6055
    %6057 = vmatmul.f32.gmra.mxu0 %v3594
    %v6058 = vpop.f32.mrf.mxu0
    %v6059 = vadd.f32 %v5994, %v6058
    %6060 = vmatmul.f32.gmra.mxu0 %v3612
    %v6061 = vpop.f32.mrf.mxu0
    %v6062 = vadd.f32 %v5997, %v6061
    %6063 = vmatmul.f32.gmra.mxu0 %v3630
    %v6064 = vpop.f32.mrf.mxu0
    %v6065 = vadd.f32 %v6000, %v6064
    %6066 = vmatmul.f32.gmra.mxu0 %v3648
    %v6067 = vpop.f32.mrf.mxu0
    %v6068 = vadd.f32 %v6003, %v6067
    %6069 = vmatmul.f32.gmra.mxu0 %v3666
    %v6070 = vpop.f32.mrf.mxu0
    %v6071 = vadd.f32 %v6006, %v6070
    %6072 = vmatmul.f32.gmra.mxu0 %v3684
    %v6073 = vpop.f32.mrf.mxu0
    %v6074 = vadd.f32 %v6009, %v6073
    %6075 = vmatmul.f32.gmra.mxu0 %v3702
    %v6076 = vpop.f32.mrf.mxu0
    %v6077 = vadd.f32 %v6012, %v6076
    %6078 = vmatmul.f32.gmra.mxu0 %v3720
    %v6079 = vpop.f32.mrf.mxu0
    %v6080 = vadd.f32 %v6015, %v6079
    %6081 = vmatmul.f32.gmra.mxu0 %v3738
    %v6082 = vpop.f32.mrf.mxu0
    %v6083 = vadd.f32 %v6018, %v6082
    %6084 = vdwg.mxu0
    %6085 = vmatpush.msra.mxu0 %v4067
    %6086 = vmatpush.msra.mxu0 %v4065
    %6087 = vmatpush.msra.mxu0 %v4063
    %6088 = vmatpush.msra.mxu0 %v4061
    %6089 = vmatpush.msra.mxu0 %v4059
    %6090 = vmatpush.msra.mxu0 %v4057
    %6091 = vmatpush.msra.mxu0 %v4055
    %6092 = vmatpush.msra.mxu0 %v4053
    %6093 = vmatpush.msra.mxu0 %v4051
    %6094 = vmatpush.msra.mxu0 %v4049
    %6095 = vmatpush.msra.mxu0 %v4047
    %6096 = vmatpush.msra.mxu0 %v4045
    %6097 = vmatpush.msra.mxu0 %v4043
    %6098 = vmatpush.msra.mxu0 %v4041
    %6099 = vmatpush.msra.mxu0 %v4039
    %6100 = vmatpush.msra.mxu0 %v4037
    %6101 = vmatmul.f32.gmra.mxu0 %v3469
    %v6102 = vpop.f32.mrf.mxu0
    %v6103 = vadd.f32 %v6038, %v6102
    %6104 = vmatmul.f32.gmra.mxu0 %v3487
    %v6105 = vpop.f32.mrf.mxu0
    %v6106 = vadd.f32 %v6041, %v6105
    %6107 = vmatmul.f32.gmra.mxu0 %v3505
    %v6108 = vpop.f32.mrf.mxu0
    %v6109 = vadd.f32 %v6044, %v6108
    %6110 = vmatmul.f32.gmra.mxu0 %v3523
    %v6111 = vpop.f32.mrf.mxu0
    %v6112 = vadd.f32 %v6047, %v6111
    %6113 = vmatmul.f32.gmra.mxu0 %v3541
    %v6114 = vpop.f32.mrf.mxu0
    %v6115 = vadd.f32 %v6050, %v6114
    %6116 = vmatmul.f32.gmra.mxu0 %v3559
    %v6117 = vpop.f32.mrf.mxu0
    %v6118 = vadd.f32 %v6053, %v6117
    %6119 = vmatmul.f32.gmra.mxu0 %v3577
    %v6120 = vpop.f32.mrf.mxu0
    %v6121 = vadd.f32 %v6056, %v6120
    %6122 = vmatmul.f32.gmra.mxu0 %v3595
    %v6123 = vpop.f32.mrf.mxu0
    %v6124 = vadd.f32 %v6059, %v6123
    %6125 = vmatmul.f32.gmra.mxu0 %v3613
    %v6126 = vpop.f32.mrf.mxu0
    %v6127 = vadd.f32 %v6062, %v6126
    %6128 = vmatmul.f32.gmra.mxu0 %v3631
    %v6129 = vpop.f32.mrf.mxu0
    %v6130 = vadd.f32 %v6065, %v6129
    %6131 = vmatmul.f32.gmra.mxu0 %v3649
    %v6132 = vpop.f32.mrf.mxu0
    %v6133 = vadd.f32 %v6068, %v6132
    %6134 = vmatmul.f32.gmra.mxu0 %v3667
    %v6135 = vpop.f32.mrf.mxu0
    %v6136 = vadd.f32 %v6071, %v6135
    %6137 = vmatmul.f32.gmra.mxu0 %v3685
    %v6138 = vpop.f32.mrf.mxu0
    %v6139 = vadd.f32 %v6074, %v6138
    %6140 = vmatmul.f32.gmra.mxu0 %v3703
    %v6141 = vpop.f32.mrf.mxu0
    %v6142 = vadd.f32 %v6077, %v6141
    %6143 = vmatmul.f32.gmra.mxu0 %v3721
    %v6144 = vpop.f32.mrf.mxu0
    %v6145 = vadd.f32 %v6080, %v6144
    %6146 = vmatmul.f32.gmra.mxu0 %v3739
    %v6147 = vpop.f32.mrf.mxu0
    %v6148 = vadd.f32 %v6083, %v6147
    %6149 = vdwg.mxu0
    %6150 = vmatpush.msra.mxu0 %v4099
    %6151 = vmatpush.msra.mxu0 %v4097
    %6152 = vmatpush.msra.mxu0 %v4095
    %6153 = vmatpush.msra.mxu0 %v4093
    %6154 = vmatpush.msra.mxu0 %v4091
    %6155 = vmatpush.msra.mxu0 %v4089
    %6156 = vmatpush.msra.mxu0 %v4087
    %6157 = vmatpush.msra.mxu0 %v4085
    %6158 = vmatpush.msra.mxu0 %v4083
    %6159 = vmatpush.msra.mxu0 %v4081
    %6160 = vmatpush.msra.mxu0 %v4079
    %6161 = vmatpush.msra.mxu0 %v4077
    %6162 = vmatpush.msra.mxu0 %v4075
    %6163 = vmatpush.msra.mxu0 %v4073
    %6164 = vmatpush.msra.mxu0 %v4071
    %6165 = vmatpush.msra.mxu0 %v4069
    %6166 = vmatmul.f32.gmra.mxu0 %v3470
    %v6167 = vpop.f32.mrf.mxu0
    %v6168 = vadd.f32 %v6103, %v6167
    %6169 = vmatmul.f32.gmra.mxu0 %v3488
    %v6170 = vpop.f32.mrf.mxu0
    %v6171 = vadd.f32 %v6106, %v6170
    %6172 = vmatmul.f32.gmra.mxu0 %v3506
    %v6173 = vpop.f32.mrf.mxu0
    %v6174 = vadd.f32 %v6109, %v6173
    %6175 = vmatmul.f32.gmra.mxu0 %v3524
    %v6176 = vpop.f32.mrf.mxu0
    %v6177 = vadd.f32 %v6112, %v6176
    %6178 = vmatmul.f32.gmra.mxu0 %v3542
    %v6179 = vpop.f32.mrf.mxu0
    %v6180 = vadd.f32 %v6115, %v6179
    %6181 = vmatmul.f32.gmra.mxu0 %v3560
    %v6182 = vpop.f32.mrf.mxu0
    %v6183 = vadd.f32 %v6118, %v6182
    %6184 = vmatmul.f32.gmra.mxu0 %v3578
    %v6185 = vpop.f32.mrf.mxu0
    %v6186 = vadd.f32 %v6121, %v6185
    %6187 = vmatmul.f32.gmra.mxu0 %v3596
    %v6188 = vpop.f32.mrf.mxu0
    %v6189 = vadd.f32 %v6124, %v6188
    %6190 = vmatmul.f32.gmra.mxu0 %v3614
    %v6191 = vpop.f32.mrf.mxu0
    %v6192 = vadd.f32 %v6127, %v6191
    %6193 = vmatmul.f32.gmra.mxu0 %v3632
    %v6194 = vpop.f32.mrf.mxu0
    %v6195 = vadd.f32 %v6130, %v6194
    %6196 = vmatmul.f32.gmra.mxu0 %v3650
    %v6197 = vpop.f32.mrf.mxu0
    %v6198 = vadd.f32 %v6133, %v6197
    %6199 = vmatmul.f32.gmra.mxu0 %v3668
    %v6200 = vpop.f32.mrf.mxu0
    %v6201 = vadd.f32 %v6136, %v6200
    %6202 = vmatmul.f32.gmra.mxu0 %v3686
    %v6203 = vpop.f32.mrf.mxu0
    %v6204 = vadd.f32 %v6139, %v6203
    %6205 = vmatmul.f32.gmra.mxu0 %v3704
    %v6206 = vpop.f32.mrf.mxu0
    %v6207 = vadd.f32 %v6142, %v6206
    %6208 = vmatmul.f32.gmra.mxu0 %v3722
    %v6209 = vpop.f32.mrf.mxu0
    %v6210 = vadd.f32 %v6145, %v6209
    %6211 = vmatmul.f32.gmra.mxu0 %v3740
    %v6212 = vpop.f32.mrf.mxu0
    %v6213 = vadd.f32 %v6148, %v6212
    %6214 = vdwg.mxu0
    %6215 = vmatpush.msra.mxu0 %v4131
    %6216 = vmatpush.msra.mxu0 %v4129
    %6217 = vmatpush.msra.mxu0 %v4127
    %6218 = vmatpush.msra.mxu0 %v4125
    %6219 = vmatpush.msra.mxu0 %v4123
    %6220 = vmatpush.msra.mxu0 %v4121
    %6221 = vmatpush.msra.mxu0 %v4119
    %6222 = vmatpush.msra.mxu0 %v4117
    %6223 = vmatpush.msra.mxu0 %v4115
    %6224 = vmatpush.msra.mxu0 %v4113
    %6225 = vmatpush.msra.mxu0 %v4111
    %6226 = vmatpush.msra.mxu0 %v4109
    %6227 = vmatpush.msra.mxu0 %v4107
    %6228 = vmatpush.msra.mxu0 %v4105
    %6229 = vmatpush.msra.mxu0 %v4103
    %6230 = vmatpush.msra.mxu0 %v4101
    %6231 = vmatmul.f32.gmra.mxu0 %v3471
    %v6232 = vpop.f32.mrf.mxu0
    %v6233 = vadd.f32 %v6168, %v6232
    %6234 = vmatmul.f32.gmra.mxu0 %v3489
    %v6235 = vpop.f32.mrf.mxu0
    %v6236 = vadd.f32 %v6171, %v6235
    %6237 = vmatmul.f32.gmra.mxu0 %v3507
    %v6238 = vpop.f32.mrf.mxu0
    %v6239 = vadd.f32 %v6174, %v6238
    %6240 = vmatmul.f32.gmra.mxu0 %v3525
    %v6241 = vpop.f32.mrf.mxu0
    %v6242 = vadd.f32 %v6177, %v6241
    %6243 = vmatmul.f32.gmra.mxu0 %v3543
    %v6244 = vpop.f32.mrf.mxu0
    %v6245 = vadd.f32 %v6180, %v6244
    %6246 = vmatmul.f32.gmra.mxu0 %v3561
    %v6247 = vpop.f32.mrf.mxu0
    %v6248 = vadd.f32 %v6183, %v6247
    %6249 = vmatmul.f32.gmra.mxu0 %v3579
    %v6250 = vpop.f32.mrf.mxu0
    %v6251 = vadd.f32 %v6186, %v6250
    %6252 = vmatmul.f32.gmra.mxu0 %v3597
    %v6253 = vpop.f32.mrf.mxu0
    %v6254 = vadd.f32 %v6189, %v6253
    %6255 = vmatmul.f32.gmra.mxu0 %v3615
    %v6256 = vpop.f32.mrf.mxu0
    %v6257 = vadd.f32 %v6192, %v6256
    %6258 = vmatmul.f32.gmra.mxu0 %v3633
    %v6259 = vpop.f32.mrf.mxu0
    %v6260 = vadd.f32 %v6195, %v6259
    %6261 = vmatmul.f32.gmra.mxu0 %v3651
    %v6262 = vpop.f32.mrf.mxu0
    %v6263 = vadd.f32 %v6198, %v6262
    %6264 = vmatmul.f32.gmra.mxu0 %v3669
    %v6265 = vpop.f32.mrf.mxu0
    %v6266 = vadd.f32 %v6201, %v6265
    %6267 = vmatmul.f32.gmra.mxu0 %v3687
    %v6268 = vpop.f32.mrf.mxu0
    %v6269 = vadd.f32 %v6204, %v6268
    %6270 = vmatmul.f32.gmra.mxu0 %v3705
    %v6271 = vpop.f32.mrf.mxu0
    %v6272 = vadd.f32 %v6207, %v6271
    %6273 = vmatmul.f32.gmra.mxu0 %v3723
    %v6274 = vpop.f32.mrf.mxu0
    %v6275 = vadd.f32 %v6210, %v6274
    %6276 = vmatmul.f32.gmra.mxu0 %v3741
    %v6277 = vpop.f32.mrf.mxu0
    %v6278 = vadd.f32 %v6213, %v6277
    %6279 = vdwg.mxu0
    %6280 = vmatpush.msra.mxu0 %v4163
    %6281 = vmatpush.msra.mxu0 %v4161
    %6282 = vmatpush.msra.mxu0 %v4159
    %6283 = vmatpush.msra.mxu0 %v4157
    %6284 = vmatpush.msra.mxu0 %v4155
    %6285 = vmatpush.msra.mxu0 %v4153
    %6286 = vmatpush.msra.mxu0 %v4151
    %6287 = vmatpush.msra.mxu0 %v4149
    %6288 = vmatpush.msra.mxu0 %v4147
    %6289 = vmatpush.msra.mxu0 %v4145
    %6290 = vmatpush.msra.mxu0 %v4143
    %6291 = vmatpush.msra.mxu0 %v4141
    %6292 = vmatpush.msra.mxu0 %v4139
    %6293 = vmatpush.msra.mxu0 %v4137
    %6294 = vmatpush.msra.mxu0 %v4135
    %6295 = vmatpush.msra.mxu0 %v4133
    %6296 = vmatmul.f32.gmra.mxu0 %v3472
    %v6297 = vpop.f32.mrf.mxu0
    %v6298 = vadd.f32 %v6233, %v6297
    %6299 = vmatmul.f32.gmra.mxu0 %v3490
    %v6300 = vpop.f32.mrf.mxu0
    %v6301 = vadd.f32 %v6236, %v6300
    %6302 = vmatmul.f32.gmra.mxu0 %v3508
    %v6303 = vpop.f32.mrf.mxu0
    %v6304 = vadd.f32 %v6239, %v6303
    %6305 = vmatmul.f32.gmra.mxu0 %v3526
    %v6306 = vpop.f32.mrf.mxu0
    %v6307 = vadd.f32 %v6242, %v6306
    %6308 = vmatmul.f32.gmra.mxu0 %v3544
    %v6309 = vpop.f32.mrf.mxu0
    %v6310 = vadd.f32 %v6245, %v6309
    %6311 = vmatmul.f32.gmra.mxu0 %v3562
    %v6312 = vpop.f32.mrf.mxu0
    %v6313 = vadd.f32 %v6248, %v6312
    %6314 = vmatmul.f32.gmra.mxu0 %v3580
    %v6315 = vpop.f32.mrf.mxu0
    %v6316 = vadd.f32 %v6251, %v6315
    %6317 = vmatmul.f32.gmra.mxu0 %v3598
    %v6318 = vpop.f32.mrf.mxu0
    %v6319 = vadd.f32 %v6254, %v6318
    %6320 = vmatmul.f32.gmra.mxu0 %v3616
    %v6321 = vpop.f32.mrf.mxu0
    %v6322 = vadd.f32 %v6257, %v6321
    %6323 = vmatmul.f32.gmra.mxu0 %v3634
    %v6324 = vpop.f32.mrf.mxu0
    %v6325 = vadd.f32 %v6260, %v6324
    %6326 = vmatmul.f32.gmra.mxu0 %v3652
    %v6327 = vpop.f32.mrf.mxu0
    %v6328 = vadd.f32 %v6263, %v6327
    %6329 = vmatmul.f32.gmra.mxu0 %v3670
    %v6330 = vpop.f32.mrf.mxu0
    %v6331 = vadd.f32 %v6266, %v6330
    %6332 = vmatmul.f32.gmra.mxu0 %v3688
    %v6333 = vpop.f32.mrf.mxu0
    %v6334 = vadd.f32 %v6269, %v6333
    %6335 = vmatmul.f32.gmra.mxu0 %v3706
    %v6336 = vpop.f32.mrf.mxu0
    %v6337 = vadd.f32 %v6272, %v6336
    %6338 = vmatmul.f32.gmra.mxu0 %v3724
    %v6339 = vpop.f32.mrf.mxu0
    %v6340 = vadd.f32 %v6275, %v6339
    %6341 = vmatmul.f32.gmra.mxu0 %v3742
    %v6342 = vpop.f32.mrf.mxu0
    %v6343 = vadd.f32 %v6278, %v6342
    %6344 = vdwg.mxu0
    %6345 = vmatpush.msra.mxu0 %v4195
    %6346 = vmatpush.msra.mxu0 %v4193
    %6347 = vmatpush.msra.mxu0 %v4191
    %6348 = vmatpush.msra.mxu0 %v4189
    %6349 = vmatpush.msra.mxu0 %v4187
    %6350 = vmatpush.msra.mxu0 %v4185
    %6351 = vmatpush.msra.mxu0 %v4183
    %6352 = vmatpush.msra.mxu0 %v4181
    %6353 = vmatpush.msra.mxu0 %v4179
    %6354 = vmatpush.msra.mxu0 %v4177
    %6355 = vmatpush.msra.mxu0 %v4175
    %6356 = vmatpush.msra.mxu0 %v4173
    %6357 = vmatpush.msra.mxu0 %v4171
    %6358 = vmatpush.msra.mxu0 %v4169
    %6359 = vmatpush.msra.mxu0 %v4167
    %6360 = vmatpush.msra.mxu0 %v4165
    %6361 = vmatmul.f32.gmra.mxu0 %v3473
    %v6362 = vpop.f32.mrf.mxu0
    %v6363 = vadd.f32 %v6298, %v6362
    %6364 = vmatmul.f32.gmra.mxu0 %v3491
    %v6365 = vpop.f32.mrf.mxu0
    %v6366 = vadd.f32 %v6301, %v6365
    %6367 = vmatmul.f32.gmra.mxu0 %v3509
    %v6368 = vpop.f32.mrf.mxu0
    %v6369 = vadd.f32 %v6304, %v6368
    %6370 = vmatmul.f32.gmra.mxu0 %v3527
    %v6371 = vpop.f32.mrf.mxu0
    %v6372 = vadd.f32 %v6307, %v6371
    %6373 = vmatmul.f32.gmra.mxu0 %v3545
    %v6374 = vpop.f32.mrf.mxu0
    %v6375 = vadd.f32 %v6310, %v6374
    %6376 = vmatmul.f32.gmra.mxu0 %v3563
    %v6377 = vpop.f32.mrf.mxu0
    %v6378 = vadd.f32 %v6313, %v6377
    %6379 = vmatmul.f32.gmra.mxu0 %v3581
    %v6380 = vpop.f32.mrf.mxu0
    %v6381 = vadd.f32 %v6316, %v6380
    %6382 = vmatmul.f32.gmra.mxu0 %v3599
    %v6383 = vpop.f32.mrf.mxu0
    %v6384 = vadd.f32 %v6319, %v6383
    %6385 = vmatmul.f32.gmra.mxu0 %v3617
    %v6386 = vpop.f32.mrf.mxu0
    %v6387 = vadd.f32 %v6322, %v6386
    %6388 = vmatmul.f32.gmra.mxu0 %v3635
    %v6389 = vpop.f32.mrf.mxu0
    %v6390 = vadd.f32 %v6325, %v6389
    %6391 = vmatmul.f32.gmra.mxu0 %v3653
    %v6392 = vpop.f32.mrf.mxu0
    %v6393 = vadd.f32 %v6328, %v6392
    %6394 = vmatmul.f32.gmra.mxu0 %v3671
    %v6395 = vpop.f32.mrf.mxu0
    %v6396 = vadd.f32 %v6331, %v6395
    %6397 = vmatmul.f32.gmra.mxu0 %v3689
    %v6398 = vpop.f32.mrf.mxu0
    %v6399 = vadd.f32 %v6334, %v6398
    %6400 = vmatmul.f32.gmra.mxu0 %v3707
    %v6401 = vpop.f32.mrf.mxu0
    %v6402 = vadd.f32 %v6337, %v6401
    %6403 = vmatmul.f32.gmra.mxu0 %v3725
    %v6404 = vpop.f32.mrf.mxu0
    %v6405 = vadd.f32 %v6340, %v6404
    %6406 = vmatmul.f32.gmra.mxu0 %v3743
    %v6407 = vpop.f32.mrf.mxu0
    %v6408 = vadd.f32 %v6343, %v6407
    %6409 = vdwg.mxu0
    %6410 = vmatpush.msra.mxu0 %v4227
    %6411 = vmatpush.msra.mxu0 %v4225
    %6412 = vmatpush.msra.mxu0 %v4223
    %6413 = vmatpush.msra.mxu0 %v4221
    %6414 = vmatpush.msra.mxu0 %v4219
    %6415 = vmatpush.msra.mxu0 %v4217
    %6416 = vmatpush.msra.mxu0 %v4215
    %6417 = vmatpush.msra.mxu0 %v4213
    %6418 = vmatpush.msra.mxu0 %v4211
    %6419 = vmatpush.msra.mxu0 %v4209
    %6420 = vmatpush.msra.mxu0 %v4207
    %6421 = vmatpush.msra.mxu0 %v4205
    %6422 = vmatpush.msra.mxu0 %v4203
    %6423 = vmatpush.msra.mxu0 %v4201
    %6424 = vmatpush.msra.mxu0 %v4199
    %6425 = vmatpush.msra.mxu0 %v4197
    %6426 = vmatmul.f32.gmra.mxu0 %v3474
    %v6427 = vpop.f32.mrf.mxu0
    %v6428 = vadd.f32 %v6363, %v6427
    %6429 = vmatmul.f32.gmra.mxu0 %v3492
    %v6430 = vpop.f32.mrf.mxu0
    %v6431 = vadd.f32 %v6366, %v6430
    %6432 = vmatmul.f32.gmra.mxu0 %v3510
    %v6433 = vpop.f32.mrf.mxu0
    %v6434 = vadd.f32 %v6369, %v6433
    %6435 = vmatmul.f32.gmra.mxu0 %v3528
    %v6436 = vpop.f32.mrf.mxu0
    %v6437 = vadd.f32 %v6372, %v6436
    %6438 = vmatmul.f32.gmra.mxu0 %v3546
    %v6439 = vpop.f32.mrf.mxu0
    %v6440 = vadd.f32 %v6375, %v6439
    %6441 = vmatmul.f32.gmra.mxu0 %v3564
    %v6442 = vpop.f32.mrf.mxu0
    %v6443 = vadd.f32 %v6378, %v6442
    %6444 = vmatmul.f32.gmra.mxu0 %v3582
    %v6445 = vpop.f32.mrf.mxu0
    %v6446 = vadd.f32 %v6381, %v6445
    %6447 = vmatmul.f32.gmra.mxu0 %v3600
    %v6448 = vpop.f32.mrf.mxu0
    %v6449 = vadd.f32 %v6384, %v6448
    %6450 = vmatmul.f32.gmra.mxu0 %v3618
    %v6451 = vpop.f32.mrf.mxu0
    %v6452 = vadd.f32 %v6387, %v6451
    %6453 = vmatmul.f32.gmra.mxu0 %v3636
    %v6454 = vpop.f32.mrf.mxu0
    %v6455 = vadd.f32 %v6390, %v6454
    %6456 = vmatmul.f32.gmra.mxu0 %v3654
    %v6457 = vpop.f32.mrf.mxu0
    %v6458 = vadd.f32 %v6393, %v6457
    %6459 = vmatmul.f32.gmra.mxu0 %v3672
    %v6460 = vpop.f32.mrf.mxu0
    %v6461 = vadd.f32 %v6396, %v6460
    %6462 = vmatmul.f32.gmra.mxu0 %v3690
    %v6463 = vpop.f32.mrf.mxu0
    %v6464 = vadd.f32 %v6399, %v6463
    %6465 = vmatmul.f32.gmra.mxu0 %v3708
    %v6466 = vpop.f32.mrf.mxu0
    %v6467 = vadd.f32 %v6402, %v6466
    %6468 = vmatmul.f32.gmra.mxu0 %v3726
    %v6469 = vpop.f32.mrf.mxu0
    %v6470 = vadd.f32 %v6405, %v6469
    %6471 = vmatmul.f32.gmra.mxu0 %v3744
    %v6472 = vpop.f32.mrf.mxu0
    %v6473 = vadd.f32 %v6408, %v6472
    %6474 = vdwg.mxu0
    %6475 = vmatpush.msra.mxu0 %v4259
    %6476 = vmatpush.msra.mxu0 %v4257
    %6477 = vmatpush.msra.mxu0 %v4255
    %6478 = vmatpush.msra.mxu0 %v4253
    %6479 = vmatpush.msra.mxu0 %v4251
    %6480 = vmatpush.msra.mxu0 %v4249
    %6481 = vmatpush.msra.mxu0 %v4247
    %6482 = vmatpush.msra.mxu0 %v4245
    %6483 = vmatpush.msra.mxu0 %v4243
    %6484 = vmatpush.msra.mxu0 %v4241
    %6485 = vmatpush.msra.mxu0 %v4239
    %6486 = vmatpush.msra.mxu0 %v4237
    %6487 = vmatpush.msra.mxu0 %v4235
    %6488 = vmatpush.msra.mxu0 %v4233
    %6489 = vmatpush.msra.mxu0 %v4231
    %6490 = vmatpush.msra.mxu0 %v4229
    %6491 = vmatmul.f32.gmra.mxu0 %v3475
    %v6492 = vpop.f32.mrf.mxu0
    %v6493 = vadd.f32 %v6428, %v6492
    %6494 = vmatmul.f32.gmra.mxu0 %v3493
    %v6495 = vpop.f32.mrf.mxu0
    %v6496 = vadd.f32 %v6431, %v6495
    %6497 = vmatmul.f32.gmra.mxu0 %v3511
    %v6498 = vpop.f32.mrf.mxu0
    %v6499 = vadd.f32 %v6434, %v6498
    %6500 = vmatmul.f32.gmra.mxu0 %v3529
    %v6501 = vpop.f32.mrf.mxu0
    %v6502 = vadd.f32 %v6437, %v6501
    %6503 = vmatmul.f32.gmra.mxu0 %v3547
    %v6504 = vpop.f32.mrf.mxu0
    %v6505 = vadd.f32 %v6440, %v6504
    %6506 = vmatmul.f32.gmra.mxu0 %v3565
    %v6507 = vpop.f32.mrf.mxu0
    %v6508 = vadd.f32 %v6443, %v6507
    %6509 = vmatmul.f32.gmra.mxu0 %v3583
    %v6510 = vpop.f32.mrf.mxu0
    %v6511 = vadd.f32 %v6446, %v6510
    %6512 = vmatmul.f32.gmra.mxu0 %v3601
    %v6513 = vpop.f32.mrf.mxu0
    %v6514 = vadd.f32 %v6449, %v6513
    %6515 = vmatmul.f32.gmra.mxu0 %v3619
    %v6516 = vpop.f32.mrf.mxu0
    %v6517 = vadd.f32 %v6452, %v6516
    %6518 = vmatmul.f32.gmra.mxu0 %v3637
    %v6519 = vpop.f32.mrf.mxu0
    %v6520 = vadd.f32 %v6455, %v6519
    %6521 = vmatmul.f32.gmra.mxu0 %v3655
    %v6522 = vpop.f32.mrf.mxu0
    %v6523 = vadd.f32 %v6458, %v6522
    %6524 = vmatmul.f32.gmra.mxu0 %v3673
    %v6525 = vpop.f32.mrf.mxu0
    %v6526 = vadd.f32 %v6461, %v6525
    %6527 = vmatmul.f32.gmra.mxu0 %v3691
    %v6528 = vpop.f32.mrf.mxu0
    %v6529 = vadd.f32 %v6464, %v6528
    %6530 = vmatmul.f32.gmra.mxu0 %v3709
    %v6531 = vpop.f32.mrf.mxu0
    %v6532 = vadd.f32 %v6467, %v6531
    %6533 = vmatmul.f32.gmra.mxu0 %v3727
    %v6534 = vpop.f32.mrf.mxu0
    %v6535 = vadd.f32 %v6470, %v6534
    %6536 = vmatmul.f32.gmra.mxu0 %v3745
    %v6537 = vpop.f32.mrf.mxu0
    %v6538 = vadd.f32 %v6473, %v6537
    %6539 = vdwg.mxu0
    %6540 = vmatpush.msra.mxu0 %v4291
    %6541 = vmatpush.msra.mxu0 %v4289
    %6542 = vmatpush.msra.mxu0 %v4287
    %6543 = vmatpush.msra.mxu0 %v4285
    %6544 = vmatpush.msra.mxu0 %v4283
    %6545 = vmatpush.msra.mxu0 %v4281
    %6546 = vmatpush.msra.mxu0 %v4279
    %6547 = vmatpush.msra.mxu0 %v4277
    %6548 = vmatpush.msra.mxu0 %v4275
    %6549 = vmatpush.msra.mxu0 %v4273
    %6550 = vmatpush.msra.mxu0 %v4271
    %6551 = vmatpush.msra.mxu0 %v4269
    %6552 = vmatpush.msra.mxu0 %v4267
    %6553 = vmatpush.msra.mxu0 %v4265
    %6554 = vmatpush.msra.mxu0 %v4263
    %6555 = vmatpush.msra.mxu0 %v4261
    %6556 = vmatmul.f32.gmra.mxu0 %v3476
    %v6557 = vpop.f32.mrf.mxu0
    %v6558 = vadd.f32 %v6493, %v6557
    %6559 = vmatmul.f32.gmra.mxu0 %v3494
    %v6560 = vpop.f32.mrf.mxu0
    %v6561 = vadd.f32 %v6496, %v6560
    %6562 = vmatmul.f32.gmra.mxu0 %v3512
    %v6563 = vpop.f32.mrf.mxu0
    %v6564 = vadd.f32 %v6499, %v6563
    %6565 = vmatmul.f32.gmra.mxu0 %v3530
    %v6566 = vpop.f32.mrf.mxu0
    %v6567 = vadd.f32 %v6502, %v6566
    %6568 = vmatmul.f32.gmra.mxu0 %v3548
    %v6569 = vpop.f32.mrf.mxu0
    %v6570 = vadd.f32 %v6505, %v6569
    %6571 = vmatmul.f32.gmra.mxu0 %v3566
    %v6572 = vpop.f32.mrf.mxu0
    %v6573 = vadd.f32 %v6508, %v6572
    %6574 = vmatmul.f32.gmra.mxu0 %v3584
    %v6575 = vpop.f32.mrf.mxu0
    %v6576 = vadd.f32 %v6511, %v6575
    %6577 = vmatmul.f32.gmra.mxu0 %v3602
    %v6578 = vpop.f32.mrf.mxu0
    %v6579 = vadd.f32 %v6514, %v6578
    %6580 = vmatmul.f32.gmra.mxu0 %v3620
    %v6581 = vpop.f32.mrf.mxu0
    %v6582 = vadd.f32 %v6517, %v6581
    %6583 = vmatmul.f32.gmra.mxu0 %v3638
    %v6584 = vpop.f32.mrf.mxu0
    %v6585 = vadd.f32 %v6520, %v6584
    %6586 = vmatmul.f32.gmra.mxu0 %v3656
    %v6587 = vpop.f32.mrf.mxu0
    %v6588 = vadd.f32 %v6523, %v6587
    %6589 = vmatmul.f32.gmra.mxu0 %v3674
    %v6590 = vpop.f32.mrf.mxu0
    %v6591 = vadd.f32 %v6526, %v6590
    %6592 = vmatmul.f32.gmra.mxu0 %v3692
    %v6593 = vpop.f32.mrf.mxu0
    %v6594 = vadd.f32 %v6529, %v6593
    %6595 = vmatmul.f32.gmra.mxu0 %v3710
    %v6596 = vpop.f32.mrf.mxu0
    %v6597 = vadd.f32 %v6532, %v6596
    %6598 = vmatmul.f32.gmra.mxu0 %v3728
    %v6599 = vpop.f32.mrf.mxu0
    %v6600 = vadd.f32 %v6535, %v6599
    %6601 = vmatmul.f32.gmra.mxu0 %v3746
    %v6602 = vpop.f32.mrf.mxu0
    %v6603 = vadd.f32 %v6538, %v6602
    %6604 = vdwg.mxu0
    %6605 = vmatpush.msra.mxu0 %v4323
    %6606 = vmatpush.msra.mxu0 %v4321
    %6607 = vmatpush.msra.mxu0 %v4319
    %6608 = vmatpush.msra.mxu0 %v4317
    %6609 = vmatpush.msra.mxu0 %v4315
    %6610 = vmatpush.msra.mxu0 %v4313
    %6611 = vmatpush.msra.mxu0 %v4311
    %6612 = vmatpush.msra.mxu0 %v4309
    %6613 = vmatpush.msra.mxu0 %v4307
    %6614 = vmatpush.msra.mxu0 %v4305
    %6615 = vmatpush.msra.mxu0 %v4303
    %6616 = vmatpush.msra.mxu0 %v4301
    %6617 = vmatpush.msra.mxu0 %v4299
    %6618 = vmatpush.msra.mxu0 %v4297
    %6619 = vmatpush.msra.mxu0 %v4295
    %6620 = vmatpush.msra.mxu0 %v4293
    %6621 = vmatmul.f32.gmra.mxu0 %v3477
    %v6622 = vpop.f32.mrf.mxu0
    %v6623 = vadd.f32 %v6558, %v6622
    %6624 = vmatmul.f32.gmra.mxu0 %v3495
    %v6625 = vpop.f32.mrf.mxu0
    %v6626 = vadd.f32 %v6561, %v6625
    %6627 = vmatmul.f32.gmra.mxu0 %v3513
    %v6628 = vpop.f32.mrf.mxu0
    %v6629 = vadd.f32 %v6564, %v6628
    %6630 = vmatmul.f32.gmra.mxu0 %v3531
    %v6631 = vpop.f32.mrf.mxu0
    %v6632 = vadd.f32 %v6567, %v6631
    %6633 = vmatmul.f32.gmra.mxu0 %v3549
    %v6634 = vpop.f32.mrf.mxu0
    %v6635 = vadd.f32 %v6570, %v6634
    %6636 = vmatmul.f32.gmra.mxu0 %v3567
    %v6637 = vpop.f32.mrf.mxu0
    %v6638 = vadd.f32 %v6573, %v6637
    %6639 = vmatmul.f32.gmra.mxu0 %v3585
    %v6640 = vpop.f32.mrf.mxu0
    %v6641 = vadd.f32 %v6576, %v6640
    %6642 = vmatmul.f32.gmra.mxu0 %v3603
    %v6643 = vpop.f32.mrf.mxu0
    %v6644 = vadd.f32 %v6579, %v6643
    %6645 = vmatmul.f32.gmra.mxu0 %v3621
    %v6646 = vpop.f32.mrf.mxu0
    %v6647 = vadd.f32 %v6582, %v6646
    %6648 = vmatmul.f32.gmra.mxu0 %v3639
    %v6649 = vpop.f32.mrf.mxu0
    %v6650 = vadd.f32 %v6585, %v6649
    %6651 = vmatmul.f32.gmra.mxu0 %v3657
    %v6652 = vpop.f32.mrf.mxu0
    %v6653 = vadd.f32 %v6588, %v6652
    %6654 = vmatmul.f32.gmra.mxu0 %v3675
    %v6655 = vpop.f32.mrf.mxu0
    %v6656 = vadd.f32 %v6591, %v6655
    %6657 = vmatmul.f32.gmra.mxu0 %v3693
    %v6658 = vpop.f32.mrf.mxu0
    %v6659 = vadd.f32 %v6594, %v6658
    %6660 = vmatmul.f32.gmra.mxu0 %v3711
    %v6661 = vpop.f32.mrf.mxu0
    %v6662 = vadd.f32 %v6597, %v6661
    %6663 = vmatmul.f32.gmra.mxu0 %v3729
    %v6664 = vpop.f32.mrf.mxu0
    %v6665 = vadd.f32 %v6600, %v6664
    %6666 = vmatmul.f32.gmra.mxu0 %v3747
    %v6667 = vpop.f32.mrf.mxu0
    %v6668 = vadd.f32 %v6603, %v6667
    %6669 = vdwg.mxu0
    %v6670 = vmax.f32 %v5453, 0.0
    %v6671 = vmax.f32 %v6623, 0.0
    %v6672 = vmax.f32 %v5456, 0.0
    %v6673 = vmax.f32 %v6626, 0.0
    %v6674 = vmax.f32 %v5459, 0.0
    %v6675 = vmax.f32 %v6629, 0.0
    %v6676 = vmax.f32 %v5462, 0.0
    %v6677 = vmax.f32 %v6632, 0.0
    %v6678 = vmax.f32 %v5465, 0.0
    %v6679 = vmax.f32 %v6635, 0.0
    %v6680 = vmax.f32 %v5468, 0.0
    %v6681 = vmax.f32 %v6638, 0.0
    %v6682 = vmax.f32 %v5471, 0.0
    %v6683 = vmax.f32 %v6641, 0.0
    %v6684 = vmax.f32 %v5474, 0.0
    %v6685 = vmax.f32 %v6644, 0.0
    %v6686 = vmax.f32 %v5477, 0.0
    %v6687 = vmax.f32 %v6647, 0.0
    %v6688 = vmax.f32 %v5480, 0.0
    %v6689 = vmax.f32 %v6650, 0.0
    %v6690 = vmax.f32 %v5483, 0.0
    %v6691 = vmax.f32 %v6653, 0.0
    %v6692 = vmax.f32 %v5486, 0.0
    %v6693 = vmax.f32 %v6656, 0.0
    %v6694 = vmax.f32 %v5489, 0.0
    %v6695 = vmax.f32 %v6659, 0.0
    %v6696 = vmax.f32 %v5492, 0.0
    %v6697 = vmax.f32 %v6662, 0.0
    %v6698 = vmax.f32 %v5495, 0.0
    %v6699 = vmax.f32 %v6665, 0.0
    %v6700 = vmax.f32 %v5498, 0.0
    %v6701 = vmax.f32 %v6668, 0.0
    %v6702 = vadd.f32 %v6670, %v6672
    %v6703 = vadd.f32 %v6702, %v6674
    %v6704 = vadd.f32 %v6703, %v6676
    %v6705 = vadd.f32 %v6704, %v6678
    %v6706 = vadd.f32 %v6705, %v6680
    %v6707 = vadd.f32 %v6706, %v6682
    %v6708 = vadd.f32 %v6707, %v6684
    %v6709 = vrot.slane %v6708, 4
    %v6710 = vadd.f32 %v6708, %v6709
    %v6711 = vrot.slane %v6710, 2
    %v6712 = vadd.f32 %v6710, %v6711
    %v6713 = vrot.slane %v6712, 1
    %v6714 = vadd.f32 %v6712, %v6713
    %v6715 = vadd.f32 %v6671, %v6673
    %v6716 = vadd.f32 %v6715, %v6675
    %v6717 = vadd.f32 %v6716, %v6677
    %v6718 = vadd.f32 %v6717, %v6679
    %v6719 = vadd.f32 %v6718, %v6681
    %v6720 = vadd.f32 %v6719, %v6683
    %v6721 = vadd.f32 %v6720, %v6685
    %v6722 = vrot.slane %v6721, 4
    %v6723 = vadd.f32 %v6721, %v6722
    %v6724 = vrot.slane %v6723, 2
    %v6725 = vadd.f32 %v6723, %v6724
    %v6726 = vrot.slane %v6725, 1
    %v6727 = vadd.f32 %v6725, %v6726
    %v6728 = vadd.f32 %v6686, %v6688
    %v6729 = vadd.f32 %v6728, %v6690
    %v6730 = vadd.f32 %v6729, %v6692
    %v6731 = vadd.f32 %v6730, %v6694
    %v6732 = vadd.f32 %v6731, %v6696
    %v6733 = vadd.f32 %v6732, %v6698
    %v6734 = vadd.f32 %v6733, %v6700
    %v6735 = vrot.slane %v6734, 4
    %v6736 = vadd.f32 %v6734, %v6735
    %v6737 = vrot.slane %v6736, 2
    %v6738 = vadd.f32 %v6736, %v6737
    %v6739 = vrot.slane %v6738, 1
    %v6740 = vadd.f32 %v6738, %v6739
    %v6741 = vadd.f32 %v6687, %v6689
    %v6742 = vadd.f32 %v6741, %v6691
    %v6743 = vadd.f32 %v6742, %v6693
    %v6744 = vadd.f32 %v6743, %v6695
    %v6745 = vadd.f32 %v6744, %v6697
    %v6746 = vadd.f32 %v6745, %v6699
    %v6747 = vadd.f32 %v6746, %v6701
    %v6748 = vrot.slane %v6747, 4
    %v6749 = vadd.f32 %v6747, %v6748
    %v6750 = vrot.slane %v6749, 2
    %v6751 = vadd.f32 %v6749, %v6750
    %v6752 = vrot.slane %v6751, 1
    %v6753 = vadd.f32 %v6751, %v6752
    %v6754 = vld [vmem:[%s5] sm:$0xff]
    %v6755 = vld [vmem:[%s5 + $0x8] sm:$0xff]
    %v6756 = vld [vmem:[%s5 + $0x10] sm:$0xff]
    %v6757 = vld [vmem:[%s5 + $0x18] sm:$0xff]
    %v6758 = vld [vmem:[%s5 + $0x20] sm:$0xff]
    %v6759 = vld [vmem:[%s5 + $0x28] sm:$0xff]
    %v6760 = vld [vmem:[%s5 + $0x30] sm:$0xff]
    %v6761 = vld [vmem:[%s5 + $0x38] sm:$0xff]
    %v6762 = vld [vmem:[%s5 + $0x40] sm:$0xff]
    %v6763 = vld [vmem:[%s5 + $0x48] sm:$0xff]
    %v6764 = vld [vmem:[%s5 + $0x50] sm:$0xff]
    %v6765 = vld [vmem:[%s5 + $0x58] sm:$0xff]
    %v6766 = vld [vmem:[%s5 + $0x60] sm:$0xff]
    %v6767 = vld [vmem:[%s5 + $0x68] sm:$0xff]
    %v6768 = vld [vmem:[%s5 + $0x70] sm:$0xff]
    %v6769 = vld [vmem:[%s5 + $0x78] sm:$0xff]
    %v6770 = vld [vmem:[%s5 + $0x80] sm:$0xff]
    %v6771 = vld [vmem:[%s5 + $0x88] sm:$0xff]
    %v6772 = vld [vmem:[%s5 + $0x90] sm:$0xff]
    %v6773 = vld [vmem:[%s5 + $0x98] sm:$0xff]
    %v6774 = vld [vmem:[%s5 + $0xa0] sm:$0xff]
    %v6775 = vld [vmem:[%s5 + $0xa8] sm:$0xff]
    %v6776 = vld [vmem:[%s5 + $0xb0] sm:$0xff]
    %v6777 = vld [vmem:[%s5 + $0xb8] sm:$0xff]
    %v6778 = vld [vmem:[%s5 + $0xc0] sm:$0xff]
    %v6779 = vld [vmem:[%s5 + $0xc8] sm:$0xff]
    %v6780 = vld [vmem:[%s5 + $0xd0] sm:$0xff]
    %v6781 = vld [vmem:[%s5 + $0xd8] sm:$0xff]
    %v6782 = vld [vmem:[%s5 + $0xe0] sm:$0xff]
    %v6783 = vld [vmem:[%s5 + $0xe8] sm:$0xff]
    %v6784 = vld [vmem:[%s5 + $0xf0] sm:$0xff]
    %v6785 = vld [vmem:[%s5 + $0xf8] sm:$0xff]
    %v6786 = vld [vmem:[#allocation15] sm:$0x1]
    %v6788 = vperm.slane %v6786, 0
    %vm6794 = vcmask 1041409
    %v6795 = vsel %vm6794, %v6740, %v6714
    %v6796 = vsel %vm6794, %v6753, %v6727
    %6799 = vmatpush.msra.mxu0 %v6769
    %6800 = vmatpush.msra.mxu0 %v6768
    %6801 = vmatpush.msra.mxu0 %v6767
    %6802 = vmatpush.msra.mxu0 %v6766
    %6803 = vmatpush.msra.mxu0 %v6765
    %6804 = vmatpush.msra.mxu0 %v6764
    %6805 = vmatpush.msra.mxu0 %v6763
    %6806 = vmatpush.msra.mxu0 %v6762
    %6807 = vmatpush.msra.mxu0 %v6761
    %6808 = vmatpush.msra.mxu0 %v6760
    %6809 = vmatpush.msra.mxu0 %v6759
    %6810 = vmatpush.msra.mxu0 %v6758
    %6811 = vmatpush.msra.mxu0 %v6757
    %6812 = vmatpush.msra.mxu0 %v6756
    %6813 = vmatpush.msra.mxu0 %v6755
    %6814 = vmatpush.msra.mxu0 %v6754
    %6815 = vmatmul.f32.gmra.mxu0 %v6795
    %v6816 = vpop.f32.mrf.mxu0
    %v6817 = vadd.f32 %v6788, %v6816
    %6818 = vdwg.mxu0
    %6819 = vmatpush.msra.mxu0 %v6785
    %6820 = vmatpush.msra.mxu0 %v6784
    %6821 = vmatpush.msra.mxu0 %v6783
    %6822 = vmatpush.msra.mxu0 %v6782
    %6823 = vmatpush.msra.mxu0 %v6781
    %6824 = vmatpush.msra.mxu0 %v6780
    %6825 = vmatpush.msra.mxu0 %v6779
    %6826 = vmatpush.msra.mxu0 %v6778
    %6827 = vmatpush.msra.mxu0 %v6777
    %6828 = vmatpush.msra.mxu0 %v6776
    %6829 = vmatpush.msra.mxu0 %v6775
    %6830 = vmatpush.msra.mxu0 %v6774
    %6831 = vmatpush.msra.mxu0 %v6773
    %6832 = vmatpush.msra.mxu0 %v6772
    %6833 = vmatpush.msra.mxu0 %v6771
    %6834 = vmatpush.msra.mxu0 %v6770
    %6835 = vmatmul.f32.gmra.mxu0 %v6796
    %v6836 = vpop.f32.mrf.mxu0
    %v6837 = vadd.f32 %v6817, %v6836
    %6838 = vdwg.mxu0
    %vm6839 = vcmask 9216
    %6840 = vst.msk [vmem:[#allocation17] sm:$0x3] %vm6839, %v6837
    // Predicated region
    $region54: #{_forward_impl.1} parent=1 // pred_check
      _
    $region55: #{_forward_impl.1} parent=1 // pred_check_branch
      %6842 = sbr.rel (0) target = $region57
    $region56: #{_forward_impl.1} parent=1 // pred_region
      %6844 = vsyncadd [#allocation8], 0
      %s6846 = sshll.u32 [#allocation17], 4
      %s6847 = int_to_ptr.vmem [resolvable:$true] %s6846
      %s6848 = sshll.u32 %s7, 4
      %s6849 = int_to_ptr.hbm [resolvable:$true] %s6848
      %6851 = dma.vmem_to_hbm [thread:$0]  %s6847, 32, %s6849, [#allocation8]
    $region57: #{_forward_impl.1} parent=1 // pred_fallthru
      _
    // Predicated region
    $region58: #{_forward_impl.1} parent=1 // pred_check
      _
    $region59: #{_forward_impl.1} parent=1 // pred_check_branch
      %6853 = sbr.rel (0) target = $region61
    $region60: #{_forward_impl.1} parent=1 // pred_region
      %6855 = dma.done [#allocation8], 32
    $region61: #{_forward_impl.1} parent=1 // pred_fallthru
      _
    %6856 = vsyncpa [#allocation7], 1
    %6857 = vsyncpa [#allocation10], 1
    %6858 = vsyncpa [#allocation13], 1
    %6859 = vsyncpa [#allocation16], 1
    %6860 = vsyncpa [#allocation8], 1

</llo_original>
